<compile_context>
chip_gen: v7x
topology: tpu7x:2x2x1
jax: 0.10.0
libtpu: 0.0.40
codegen_flags: <defaults>
</compile_context>

<pallas_src>
import functools

import jax
import jax.numpy as jnp
import numpy as np
from jax import lax
from jax.experimental import pallas as pl
from jax.experimental.pallas import tpu as pltpu


def _round_up(x, m):
    return ((x + m - 1) // m) * m


def _make_kernel(kmax, dilation, t_out, cout):
    def kernel(x_ref, w_ref, b_ref, o_ref):
        x = x_ref[...]                                   # (tile_bn, T, cin) bf16
        tb = x.shape[0]
        bias = b_ref[...].astype(jnp.float32)            # (1, cout)
        # Init accumulator with broadcast bias (saves a zero-fill + add).
        acc = jnp.broadcast_to(bias[:, None, :], (tb, t_out, cout))
        # One matmul per global tap, full-cout lane width each.
        for g in range(kmax):                            # static tap loop (kmax taps)
            xs = x[:, g * dilation:g * dilation + t_out, :]   # (tb, T_out, cin)
            wg = w_ref[g]                                     # (cin, cout)
            acc = acc + jnp.einsum(
                "btc,cd->btd", xs, wg,
                preferred_element_type=jnp.float32)
        # Single lane-dense store of the whole output tile.
        o_ref[...] = acc.astype(o_ref.dtype)

    return kernel


def dilated_inception(x, weights, biases, kernel_set, dilation,
                      *, tile_bn=256, compute_dtype=jnp.bfloat16):
    """x: (B, cin, N, T) float32.  weights[i]: (cout_per, cin, 1, k_i)."""
    B, cin, N, T = x.shape
    kmax = max(kernel_set)
    t_out = T - dilation * (kmax - 1)
    assert t_out > 0
    cout_per = weights[0].shape[0]
    n_kern = len(kernel_set)
    cout = n_kern * cout_per

    # Merge all branches into one weight per global tap: (kmax, cin, cout).
    # Branch i (kernel size k) at local tap j lands at global tap g = kmax-k+j
    # and occupies output lanes [i*cout_per, (i+1)*cout_per); zero elsewhere.
    w_global = np.zeros((kmax, cin, cout), np.float32)
    for i, (k, w) in enumerate(zip(kernel_set, weights)):
        w_np = np.asarray(w)                              # (cout_per, cin, 1, k)
        for j in range(k):
            g = (kmax - k) + j
            w_global[g, :, i * cout_per:(i + 1) * cout_per] = w_np[:, :, 0, j].T
    w_global = jnp.asarray(w_global, compute_dtype)
    b_all = jnp.concatenate(
        [jnp.asarray(b, jnp.float32) for b in biases]).reshape(1, cout)

    # NCHW -> (B*N, T, cin) channels-last rows (bf16 for MXU, f32 accumulate).
    # NOTE: keeping the model channels-last end-to-end would remove these two
    # transposes (extra HBM pass each); done in the wrapper here for parity
    # with the NCHW PyTorch interface.
    x_rows = jnp.transpose(x, (0, 2, 3, 1)).reshape(B * N, T, cin)
    x_rows = x_rows.astype(compute_dtype)

    bn = B * N
    tile = min(tile_bn, _round_up(bn, 8))
    bn_pad = _round_up(bn, tile)
    if bn_pad != bn:
        x_rows = jnp.pad(x_rows, ((0, bn_pad - bn), (0, 0), (0, 0)))

    kern = _make_kernel(kmax, dilation, t_out, cout)

    out_rows = pl.pallas_call(
        kern,
        out_shape=jax.ShapeDtypeStruct((bn_pad, t_out, cout), jnp.float32),
        grid=(bn_pad // tile,),
        in_specs=[
            pl.BlockSpec((tile, T, cin), lambda i: (i, 0, 0)),          # x tile
            pl.BlockSpec((kmax, cin, cout), lambda i: (0, 0, 0)),       # weights (resident)
            pl.BlockSpec((1, cout), lambda i: (0, 0)),                  # bias (resident)
        ],
        out_specs=pl.BlockSpec((tile, t_out, cout), lambda i: (i, 0, 0)),
        compiler_params=pltpu.CompilerParams(
            dimension_semantics=("parallel",)),
    )(x_rows, w_global, b_all)

    # (B*N, T_out, cout) -> (B, cout, N, T_out)
    out = out_rows[:bn].reshape(B, N, t_out, cout)
    return jnp.transpose(out, (0, 3, 1, 2))


def _reference(x, weights, biases, kernel_set, dilation):
    """Pure-JAX f32 reference mirroring the PyTorch forward."""
    kmax = max(kernel_set)
    T = x.shape[-1]
    t_out = T - dilation * (kmax - 1)
    outs = []
    for w, b in zip(weights, biases):
        y = lax.conv_general_dilated(
            x, w, window_strides=(1, 1), padding="VALID",
            rhs_dilation=(1, dilation),
            dimension_numbers=("NCHW", "OIHW", "NCHW"))
        y = y + b[None, :, None, None]
        outs.append(y[..., -t_out:])
    return jnp.concatenate(outs, axis=1)


if __name__ == "__main__":
    # Small deterministic setup consistent with the module.
    B, cin, N, T = 2, 4, 8, 19
    cout_total = 8                      # divisible by len(kernel_set)
    kernel_set = [2, 3, 6, 7]
    dilation = 2
    cout_per = cout_total // len(kernel_set)

    key = jax.random.PRNGKey(0)
    key, kx = jax.random.split(key)
    x = jax.random.normal(kx, (B, cin, N, T), dtype=jnp.float32)

    weights, biases = [], []
    for k in kernel_set:
        key, kw, kb = jax.random.split(key, 3)
        fan_in = cin * k
        bound = 1.0 / np.sqrt(fan_in)
        weights.append(jax.random.uniform(
            kw, (cout_per, cin, 1, k), jnp.float32, -bound, bound))
        biases.append(jax.random.uniform(
            kb, (cout_per,), jnp.float32, -bound, bound))

    out = dilated_inception(x, weights, biases, kernel_set, dilation)
    out = jax.block_until_ready(out)

    ref = _reference(x, weights, biases, kernel_set, dilation)
    ref = jax.block_until_ready(ref)

    assert out.shape == ref.shape, (out.shape, ref.shape)
    # bf16 inputs/weights with f32 accumulation vs f32 reference.
    np.testing.assert_allclose(np.asarray(out), np.asarray(ref),
                               rtol=3e-2, atol=3e-2)
    print("KERNEL_OK")
</pallas_src>

<mosaic_0001>
module attributes {stable_mosaic.version = 11 : i64} {
  func.func @kernel(%arg0: i32, %arg1: memref<16x19x4xbf16, #tpu.memory_space<vmem>>, %arg2: memref<7x4x8xbf16, #tpu.memory_space<vmem>>, %arg3: memref<1x8xf32, #tpu.memory_space<vmem>>, %arg4: memref<16x7x8xf32, #tpu.memory_space<vmem>>) attributes {dimension_semantics = [#tpu.dimension_semantics<parallel>], iteration_bounds = array<i64: 1>, scalar_prefetch = 0 : i64, scratch_operands = 0 : i64, tpu.core_type = #tpu.core_type<tc>, window_params = [{transform_indices = @transform_0, window_bounds = array<i64: 16, 19, 4>}, {pipeline_mode = #tpu.pipeline_mode<synchronous>, transform_indices = @transform_1, window_bounds = array<i64: 7, 4, 8>}, {pipeline_mode = #tpu.pipeline_mode<synchronous>, transform_indices = @transform_2, window_bounds = array<i64: 1, 8>}, {transform_indices = @transform_3, window_bounds = array<i64: 16, 7, 8>}]} {
    %c0 = arith.constant 0 : index
    %c0_0 = arith.constant 0 : index
    %c0_1 = arith.constant 0 : index
    %0 = vector.load %arg1[%c0, %c0_0, %c0_1] : memref<16x19x4xbf16, #tpu.memory_space<vmem>>, vector<16x19x4xbf16>
    %c0_2 = arith.constant 0 : index
    %c0_3 = arith.constant 0 : index
    %1 = vector.load %arg3[%c0_2, %c0_3] : memref<1x8xf32, #tpu.memory_space<vmem>>, vector<1x8xf32>
    %2 = vector.shape_cast %1 : vector<1x8xf32> to vector<1x1x8xf32>
    %3 = vector.shape_cast %2 : vector<1x1x8xf32> to vector<1x1x8xf32>
    %4 = vector.broadcast %3 : vector<1x1x8xf32> to vector<16x7x8xf32>
    %5 = vector.extract_strided_slice %0 {offsets = [0, 0, 0], sizes = [16, 7, 4], strides = [1, 1, 1]} : vector<16x19x4xbf16> to vector<16x7x4xbf16>
    %c0_4 = arith.constant 0 : index
    %c0_5 = arith.constant 0 : index
    %c0_6 = arith.constant 0 : index
    %6 = vector.load %arg2[%c0_4, %c0_5, %c0_6] : memref<7x4x8xbf16, #tpu.memory_space<vmem>>, vector<1x4x8xbf16>
    %7 = vector.shape_cast %6 : vector<1x4x8xbf16> to vector<4x8xbf16>
    "tpu.trace_start"() <{level = 10 : i32, message = "btc,cd->btd"}> : () -> ()
    %cst = arith.constant dense<0.000000e+00> : vector<16x7x8xf32>
    %8 = tpu.matmul %5, %7, %cst {dimension_numbers = #tpu.dot_dimension_numbers<[2], [0], [0, 1], [1], [0, 0, 0, 1, 1, 1], [], []>} : vector<16x7x4xbf16>, vector<4x8xbf16>, vector<16x7x8xf32> -> vector<16x7x8xf32>
    "tpu.trace_stop"() : () -> ()
    %9 = arith.addf %4, %8 : vector<16x7x8xf32>
    %10 = vector.extract_strided_slice %0 {offsets = [0, 2, 0], sizes = [16, 7, 4], strides = [1, 1, 1]} : vector<16x19x4xbf16> to vector<16x7x4xbf16>
    %c1 = arith.constant 1 : index
    %c0_7 = arith.constant 0 : index
    %c0_8 = arith.constant 0 : index
    %11 = vector.load %arg2[%c1, %c0_7, %c0_8] : memref<7x4x8xbf16, #tpu.memory_space<vmem>>, vector<1x4x8xbf16>
    %12 = vector.shape_cast %11 : vector<1x4x8xbf16> to vector<4x8xbf16>
    "tpu.trace_start"() <{level = 10 : i32, message = "btc,cd->btd"}> : () -> ()
    %cst_9 = arith.constant dense<0.000000e+00> : vector<16x7x8xf32>
    %13 = tpu.matmul %10, %12, %cst_9 {dimension_numbers = #tpu.dot_dimension_numbers<[2], [0], [0, 1], [1], [0, 0, 0, 1, 1, 1], [], []>} : vector<16x7x4xbf16>, vector<4x8xbf16>, vector<16x7x8xf32> -> vector<16x7x8xf32>
    "tpu.trace_stop"() : () -> ()
    %14 = arith.addf %9, %13 : vector<16x7x8xf32>
    %15 = vector.extract_strided_slice %0 {offsets = [0, 4, 0], sizes = [16, 7, 4], strides = [1, 1, 1]} : vector<16x19x4xbf16> to vector<16x7x4xbf16>
    %c2 = arith.constant 2 : index
    %c0_10 = arith.constant 0 : index
    %c0_11 = arith.constant 0 : index
    %16 = vector.load %arg2[%c2, %c0_10, %c0_11] : memref<7x4x8xbf16, #tpu.memory_space<vmem>>, vector<1x4x8xbf16>
    %17 = vector.shape_cast %16 : vector<1x4x8xbf16> to vector<4x8xbf16>
    "tpu.trace_start"() <{level = 10 : i32, message = "btc,cd->btd"}> : () -> ()
    %cst_12 = arith.constant dense<0.000000e+00> : vector<16x7x8xf32>
    %18 = tpu.matmul %15, %17, %cst_12 {dimension_numbers = #tpu.dot_dimension_numbers<[2], [0], [0, 1], [1], [0, 0, 0, 1, 1, 1], [], []>} : vector<16x7x4xbf16>, vector<4x8xbf16>, vector<16x7x8xf32> -> vector<16x7x8xf32>
    "tpu.trace_stop"() : () -> ()
    %19 = arith.addf %14, %18 : vector<16x7x8xf32>
    %20 = vector.extract_strided_slice %0 {offsets = [0, 6, 0], sizes = [16, 7, 4], strides = [1, 1, 1]} : vector<16x19x4xbf16> to vector<16x7x4xbf16>
    %c3 = arith.constant 3 : index
    %c0_13 = arith.constant 0 : index
    %c0_14 = arith.constant 0 : index
    %21 = vector.load %arg2[%c3, %c0_13, %c0_14] : memref<7x4x8xbf16, #tpu.memory_space<vmem>>, vector<1x4x8xbf16>
    %22 = vector.shape_cast %21 : vector<1x4x8xbf16> to vector<4x8xbf16>
    "tpu.trace_start"() <{level = 10 : i32, message = "btc,cd->btd"}> : () -> ()
    %cst_15 = arith.constant dense<0.000000e+00> : vector<16x7x8xf32>
    %23 = tpu.matmul %20, %22, %cst_15 {dimension_numbers = #tpu.dot_dimension_numbers<[2], [0], [0, 1], [1], [0, 0, 0, 1, 1, 1], [], []>} : vector<16x7x4xbf16>, vector<4x8xbf16>, vector<16x7x8xf32> -> vector<16x7x8xf32>
    "tpu.trace_stop"() : () -> ()
    %24 = arith.addf %19, %23 : vector<16x7x8xf32>
    %25 = vector.extract_strided_slice %0 {offsets = [0, 8, 0], sizes = [16, 7, 4], strides = [1, 1, 1]} : vector<16x19x4xbf16> to vector<16x7x4xbf16>
    %c4 = arith.constant 4 : index
    %c0_16 = arith.constant 0 : index
    %c0_17 = arith.constant 0 : index
    %26 = vector.load %arg2[%c4, %c0_16, %c0_17] : memref<7x4x8xbf16, #tpu.memory_space<vmem>>, vector<1x4x8xbf16>
    %27 = vector.shape_cast %26 : vector<1x4x8xbf16> to vector<4x8xbf16>
    "tpu.trace_start"() <{level = 10 : i32, message = "btc,cd->btd"}> : () -> ()
    %cst_18 = arith.constant dense<0.000000e+00> : vector<16x7x8xf32>
    %28 = tpu.matmul %25, %27, %cst_18 {dimension_numbers = #tpu.dot_dimension_numbers<[2], [0], [0, 1], [1], [0, 0, 0, 1, 1, 1], [], []>} : vector<16x7x4xbf16>, vector<4x8xbf16>, vector<16x7x8xf32> -> vector<16x7x8xf32>
    "tpu.trace_stop"() : () -> ()
    %29 = arith.addf %24, %28 : vector<16x7x8xf32>
    %30 = vector.extract_strided_slice %0 {offsets = [0, 10, 0], sizes = [16, 7, 4], strides = [1, 1, 1]} : vector<16x19x4xbf16> to vector<16x7x4xbf16>
    %c5 = arith.constant 5 : index
    %c0_19 = arith.constant 0 : index
    %c0_20 = arith.constant 0 : index
    %31 = vector.load %arg2[%c5, %c0_19, %c0_20] : memref<7x4x8xbf16, #tpu.memory_space<vmem>>, vector<1x4x8xbf16>
    %32 = vector.shape_cast %31 : vector<1x4x8xbf16> to vector<4x8xbf16>
    "tpu.trace_start"() <{level = 10 : i32, message = "btc,cd->btd"}> : () -> ()
    %cst_21 = arith.constant dense<0.000000e+00> : vector<16x7x8xf32>
    %33 = tpu.matmul %30, %32, %cst_21 {dimension_numbers = #tpu.dot_dimension_numbers<[2], [0], [0, 1], [1], [0, 0, 0, 1, 1, 1], [], []>} : vector<16x7x4xbf16>, vector<4x8xbf16>, vector<16x7x8xf32> -> vector<16x7x8xf32>
    "tpu.trace_stop"() : () -> ()
    %34 = arith.addf %29, %33 : vector<16x7x8xf32>
    %35 = vector.extract_strided_slice %0 {offsets = [0, 12, 0], sizes = [16, 7, 4], strides = [1, 1, 1]} : vector<16x19x4xbf16> to vector<16x7x4xbf16>
    %c6 = arith.constant 6 : index
    %c0_22 = arith.constant 0 : index
    %c0_23 = arith.constant 0 : index
    %36 = vector.load %arg2[%c6, %c0_22, %c0_23] : memref<7x4x8xbf16, #tpu.memory_space<vmem>>, vector<1x4x8xbf16>
    %37 = vector.shape_cast %36 : vector<1x4x8xbf16> to vector<4x8xbf16>
    "tpu.trace_start"() <{level = 10 : i32, message = "btc,cd->btd"}> : () -> ()
    %cst_24 = arith.constant dense<0.000000e+00> : vector<16x7x8xf32>
    %38 = tpu.matmul %35, %37, %cst_24 {dimension_numbers = #tpu.dot_dimension_numbers<[2], [0], [0, 1], [1], [0, 0, 0, 1, 1, 1], [], []>} : vector<16x7x4xbf16>, vector<4x8xbf16>, vector<16x7x8xf32> -> vector<16x7x8xf32>
    "tpu.trace_stop"() : () -> ()
    %39 = arith.addf %34, %38 : vector<16x7x8xf32>
    %c0_25 = arith.constant 0 : index
    %c0_26 = arith.constant 0 : index
    %c0_27 = arith.constant 0 : index
    %40 = vector.load %arg4[%c0_25, %c0_26, %c0_27] : memref<16x7x8xf32, #tpu.memory_space<vmem>>, vector<16x7x8xf32>
    tpu.vector_store %arg4[%c0_25, %c0_26, %c0_27], %39 {strides = array<i32>} : memref<16x7x8xf32, #tpu.memory_space<vmem>>, vector<16x7x8xf32>,
    return
  }
  func.func @transform_0(%arg0: i32) -> (i32, i32, i32) {
    %c0_i32 = arith.constant 0 : i32
    %c0_i32_0 = arith.constant 0 : i32
    %c0_i32_1 = arith.constant 0 : i32
    return %arg0, %c0_i32, %c0_i32_0 : i32, i32, i32
  }
  func.func @transform_1(%arg0: i32) -> (i32, i32, i32) {
    %c0_i32 = arith.constant 0 : i32
    %c0_i32_0 = arith.constant 0 : i32
    %c0_i32_1 = arith.constant 0 : i32
    %c0_i32_2 = arith.constant 0 : i32
    return %c0_i32, %c0_i32_0, %c0_i32_1 : i32, i32, i32
  }
  func.func @transform_2(%arg0: i32) -> (i32, i32) {
    %c0_i32 = arith.constant 0 : i32
    %c0_i32_0 = arith.constant 0 : i32
    %c0_i32_1 = arith.constant 0 : i32
    return %c0_i32, %c0_i32_0 : i32, i32
  }
  func.func @transform_3(%arg0: i32) -> (i32, i32, i32) {
    %c0_i32 = arith.constant 0 : i32
    %c0_i32_0 = arith.constant 0 : i32
    %c0_i32_1 = arith.constant 0 : i32
    return %arg0, %c0_i32, %c0_i32_0 : i32, i32, i32
  }
}

</mosaic_0001>

<llo_original>
// kernel: tpu_custom_call.1
$region0: #{tpu_custom_call.1}
  #allocation0 [shape = 'u32[]', space=smem, size = 0x4, offset = 0x4, fixed_abs, tag = 'smem constant byte address 0x4 - core index']
  #allocation1 [shape = 'u32[144,128]{1,0:T(1,128)}', space=vmem, size = 0x12000, scoped, tag = 'internal scratch']
  %s0 = inlined_call_operand.vmem [shape: bf16[16,19,4], index: 0, kind: input, shape index: {}]
  %s1 = inlined_call_operand.vmem [shape: bf16[7,4,8], index: 1, kind: input, shape index: {}]
  %s2 = inlined_call_operand.vmem [shape: f32[1,8], index: 2, kind: input, shape index: {}]
  %s3 = inlined_call_operand.vmem [shape: f32[16,7,8], index: 3, kind: output, shape index: {}]
  %s4 = sld [smem:[#allocation0]]
  $region22: #{tpu_custom_call.1} parent=0
    _
  %s6 = ssub.s32 1, %s4
  %s7 = scalar_select 0, %s6, %s4
  // Predicated region
  $region2: #{tpu_custom_call.1} parent=0 // pred_check
    _
  $region3: #{tpu_custom_call.1} parent=0 // pred_check_branch
    %9 = sbr.rel (0) target = $region5
  $region4: #{tpu_custom_call.1} parent=0 // pred_region
    _
  $region5: #{tpu_custom_call.1} parent=0 // pred_fallthru
    _
  // Predicated region
  $region6: #{tpu_custom_call.1} parent=0 // pred_check
    _
  $region7: #{tpu_custom_call.1} parent=0 // pred_check_branch
    %11 = sbr.rel (0) target = $region9
  $region8: #{tpu_custom_call.1} parent=0 // pred_region
    _
  $region9: #{tpu_custom_call.1} parent=0 // pred_fallthru
    _
  // Predicated region
  $region10: #{tpu_custom_call.1} parent=0 // pred_check
    _
  $region11: #{tpu_custom_call.1} parent=0 // pred_check_branch
    %13 = sbr.rel (0) target = $region13
  $region12: #{tpu_custom_call.1} parent=0 // pred_region
    _
  $region13: #{tpu_custom_call.1} parent=0 // pred_fallthru
    _
  %v15 = vld [vmem:[%s0] sm:$0xf]
  %v16 = vld [vmem:[%s0 + $0x4] sm:$0xf]
  %v17 = vld [vmem:[%s0 + $0x8] sm:$0x3]
  %v18 = vld [vmem:[%s0 + $0xc] sm:$0xf]
  %v19 = vld [vmem:[%s0 + $0x10] sm:$0xf]
  %v20 = vld [vmem:[%s0 + $0x14] sm:$0x3]
  %v21 = vld [vmem:[%s0 + $0x18] sm:$0xf]
  %v22 = vld [vmem:[%s0 + $0x1c] sm:$0xf]
  %v23 = vld [vmem:[%s0 + $0x20] sm:$0x3]
  %v24 = vld [vmem:[%s0 + $0x24] sm:$0xf]
  %v25 = vld [vmem:[%s0 + $0x28] sm:$0xf]
  %v26 = vld [vmem:[%s0 + $0x2c] sm:$0x3]
  %v27 = vld [vmem:[%s0 + $0x30] sm:$0xf]
  %v28 = vld [vmem:[%s0 + $0x34] sm:$0xf]
  %v29 = vld [vmem:[%s0 + $0x38] sm:$0x3]
  %v30 = vld [vmem:[%s0 + $0x3c] sm:$0xf]
  %v31 = vld [vmem:[%s0 + $0x40] sm:$0xf]
  %v32 = vld [vmem:[%s0 + $0x44] sm:$0x3]
  %v33 = vld [vmem:[%s0 + $0x48] sm:$0xf]
  %v34 = vld [vmem:[%s0 + $0x4c] sm:$0xf]
  %v35 = vld [vmem:[%s0 + $0x50] sm:$0x3]
  %v36 = vld [vmem:[%s0 + $0x54] sm:$0xf]
  %v37 = vld [vmem:[%s0 + $0x58] sm:$0xf]
  %v38 = vld [vmem:[%s0 + $0x5c] sm:$0x3]
  %v39 = vld [vmem:[%s0 + $0x60] sm:$0xf]
  %v40 = vld [vmem:[%s0 + $0x64] sm:$0xf]
  %v41 = vld [vmem:[%s0 + $0x68] sm:$0x3]
  %v42 = vld [vmem:[%s0 + $0x6c] sm:$0xf]
  %v43 = vld [vmem:[%s0 + $0x70] sm:$0xf]
  %v44 = vld [vmem:[%s0 + $0x74] sm:$0x3]
  %v45 = vld [vmem:[%s0 + $0x78] sm:$0xf]
  %v46 = vld [vmem:[%s0 + $0x7c] sm:$0xf]
  %v47 = vld [vmem:[%s0 + $0x80] sm:$0x3]
  %v48 = vld [vmem:[%s0 + $0x84] sm:$0xf]
  %v49 = vld [vmem:[%s0 + $0x88] sm:$0xf]
  %v50 = vld [vmem:[%s0 + $0x8c] sm:$0x3]
  %v51 = vld [vmem:[%s0 + $0x90] sm:$0xf]
  %v52 = vld [vmem:[%s0 + $0x94] sm:$0xf]
  %v53 = vld [vmem:[%s0 + $0x98] sm:$0x3]
  %v54 = vld [vmem:[%s0 + $0x9c] sm:$0xf]
  %v55 = vld [vmem:[%s0 + $0xa0] sm:$0xf]
  %v56 = vld [vmem:[%s0 + $0xa4] sm:$0x3]
  %v57 = vld [vmem:[%s0 + $0xa8] sm:$0xf]
  %v58 = vld [vmem:[%s0 + $0xac] sm:$0xf]
  %v59 = vld [vmem:[%s0 + $0xb0] sm:$0x3]
  %v60 = vld [vmem:[%s0 + $0xb4] sm:$0xf]
  %v61 = vld [vmem:[%s0 + $0xb8] sm:$0xf]
  %v62 = vld [vmem:[%s0 + $0xbc] sm:$0x3]
  %v63 = vld [vmem:[%s2] sm:$0x1]
  %v65 = vlaneseq
  %v66 = vshrl.u32 %v65, 7
  %v67 = vsub.s32 0, %v66
  %v68 = vrot.slane %v63, %v67
  %v70 = vld [vmem:[%s1] sm:$0x3]
  %v88 = vunpack.c.l.s4 1966171168
  %v89 = vunpack.c.0.s8 %v88
  %v90 = vlaneseq
  %v91 = vshrl.u32 %v90, 7
  %v92 = vsub.s32 %v89, %v91
  %v93 = vrot.slane %v15, %v92
  %v94 = vcombine.high %v93, %v93
  %v96 = vunpack.c.l.s4 1966171168
  %v97 = vunpack.c.0.s8 %v96
  %v98 = vlaneseq
  %v99 = vshrl.u32 %v98, 7
  %v100 = vsub.s32 %v97, %v99
  %v101 = vrot.slane %v93, %v100
  %v103 = vunpack.c.l.s4 1966171168
  %v104 = vunpack.c.0.s8 %v103
  %v105 = vlaneseq
  %v106 = vshrl.u32 %v105, 7
  %v107 = vsub.s32 %v104, %v106
  %v108 = vrot.slane %v94, %v107
  %v109 = vcombine.high %v101, %v101
  %v110 = vcombine.high %v108, %v108
  %v112 = vunpack.c.l.s4 1966171168
  %v113 = vunpack.c.0.s8 %v112
  %v114 = vlaneseq
  %v115 = vshrl.u32 %v114, 7
  %v116 = vsub.s32 %v113, %v115
  %v117 = vrot.slane %v18, %v116
  %v118 = vcombine.high %v117, %v117
  %v120 = vunpack.c.l.s4 1966171168
  %v121 = vunpack.c.0.s8 %v120
  %v122 = vlaneseq
  %v123 = vshrl.u32 %v122, 7
  %v124 = vsub.s32 %v121, %v123
  %v125 = vrot.slane %v117, %v124
  %v127 = vunpack.c.l.s4 1966171168
  %v128 = vunpack.c.0.s8 %v127
  %v129 = vlaneseq
  %v130 = vshrl.u32 %v129, 7
  %v131 = vsub.s32 %v128, %v130
  %v132 = vrot.slane %v118, %v131
  %v133 = vcombine.high %v125, %v125
  %v134 = vcombine.high %v132, %v132
  %v136 = vunpack.c.l.s4 1966171168
  %v137 = vunpack.c.0.s8 %v136
  %v138 = vlaneseq
  %v139 = vshrl.u32 %v138, 7
  %v140 = vsub.s32 %v137, %v139
  %v141 = vrot.slane %v21, %v140
  %v142 = vcombine.high %v141, %v141
  %v144 = vunpack.c.l.s4 1966171168
  %v145 = vunpack.c.0.s8 %v144
  %v146 = vlaneseq
  %v147 = vshrl.u32 %v146, 7
  %v148 = vsub.s32 %v145, %v147
  %v149 = vrot.slane %v141, %v148
  %v151 = vunpack.c.l.s4 1966171168
  %v152 = vunpack.c.0.s8 %v151
  %v153 = vlaneseq
  %v154 = vshrl.u32 %v153, 7
  %v155 = vsub.s32 %v152, %v154
  %v156 = vrot.slane %v142, %v155
  %v157 = vcombine.high %v149, %v149
  %v158 = vcombine.high %v156, %v156
  %v160 = vunpack.c.l.s4 1966171168
  %v161 = vunpack.c.0.s8 %v160
  %v162 = vlaneseq
  %v163 = vshrl.u32 %v162, 7
  %v164 = vsub.s32 %v161, %v163
  %v165 = vrot.slane %v24, %v164
  %v166 = vcombine.high %v165, %v165
  %v168 = vunpack.c.l.s4 1966171168
  %v169 = vunpack.c.0.s8 %v168
  %v170 = vlaneseq
  %v171 = vshrl.u32 %v170, 7
  %v172 = vsub.s32 %v169, %v171
  %v173 = vrot.slane %v165, %v172
  %v175 = vunpack.c.l.s4 1966171168
  %v176 = vunpack.c.0.s8 %v175
  %v177 = vlaneseq
  %v178 = vshrl.u32 %v177, 7
  %v179 = vsub.s32 %v176, %v178
  %v180 = vrot.slane %v166, %v179
  %v181 = vcombine.high %v173, %v173
  %v182 = vcombine.high %v180, %v180
  %v184 = vunpack.c.l.s4 1966171168
  %v185 = vunpack.c.0.s8 %v184
  %v186 = vlaneseq
  %v187 = vshrl.u32 %v186, 7
  %v188 = vsub.s32 %v185, %v187
  %v189 = vrot.slane %v27, %v188
  %v190 = vcombine.high %v189, %v189
  %v192 = vunpack.c.l.s4 1966171168
  %v193 = vunpack.c.0.s8 %v192
  %v194 = vlaneseq
  %v195 = vshrl.u32 %v194, 7
  %v196 = vsub.s32 %v193, %v195
  %v197 = vrot.slane %v189, %v196
  %v199 = vunpack.c.l.s4 1966171168
  %v200 = vunpack.c.0.s8 %v199
  %v201 = vlaneseq
  %v202 = vshrl.u32 %v201, 7
  %v203 = vsub.s32 %v200, %v202
  %v204 = vrot.slane %v190, %v203
  %v205 = vcombine.high %v197, %v197
  %v206 = vcombine.high %v204, %v204
  %v208 = vunpack.c.l.s4 1966171168
  %v209 = vunpack.c.0.s8 %v208
  %v210 = vlaneseq
  %v211 = vshrl.u32 %v210, 7
  %v212 = vsub.s32 %v209, %v211
  %v213 = vrot.slane %v30, %v212
  %v214 = vcombine.high %v213, %v213
  %v216 = vunpack.c.l.s4 1966171168
  %v217 = vunpack.c.0.s8 %v216
  %v218 = vlaneseq
  %v219 = vshrl.u32 %v218, 7
  %v220 = vsub.s32 %v217, %v219
  %v221 = vrot.slane %v213, %v220
  %v223 = vunpack.c.l.s4 1966171168
  %v224 = vunpack.c.0.s8 %v223
  %v225 = vlaneseq
  %v226 = vshrl.u32 %v225, 7
  %v227 = vsub.s32 %v224, %v226
  %v228 = vrot.slane %v214, %v227
  %v229 = vcombine.high %v221, %v221
  %v230 = vcombine.high %v228, %v228
  %v232 = vunpack.c.l.s4 1966171168
  %v233 = vunpack.c.0.s8 %v232
  %v234 = vlaneseq
  %v235 = vshrl.u32 %v234, 7
  %v236 = vsub.s32 %v233, %v235
  %v237 = vrot.slane %v33, %v236
  %v238 = vcombine.high %v237, %v237
  %v240 = vunpack.c.l.s4 1966171168
  %v241 = vunpack.c.0.s8 %v240
  %v242 = vlaneseq
  %v243 = vshrl.u32 %v242, 7
  %v244 = vsub.s32 %v241, %v243
  %v245 = vrot.slane %v237, %v244
  %v247 = vunpack.c.l.s4 1966171168
  %v248 = vunpack.c.0.s8 %v247
  %v249 = vlaneseq
  %v250 = vshrl.u32 %v249, 7
  %v251 = vsub.s32 %v248, %v250
  %v252 = vrot.slane %v238, %v251
  %v253 = vcombine.high %v245, %v245
  %v254 = vcombine.high %v252, %v252
  %v256 = vunpack.c.l.s4 1966171168
  %v257 = vunpack.c.0.s8 %v256
  %v258 = vlaneseq
  %v259 = vshrl.u32 %v258, 7
  %v260 = vsub.s32 %v257, %v259
  %v261 = vrot.slane %v36, %v260
  %v262 = vcombine.high %v261, %v261
  %v264 = vunpack.c.l.s4 1966171168
  %v265 = vunpack.c.0.s8 %v264
  %v266 = vlaneseq
  %v267 = vshrl.u32 %v266, 7
  %v268 = vsub.s32 %v265, %v267
  %v269 = vrot.slane %v261, %v268
  %v271 = vunpack.c.l.s4 1966171168
  %v272 = vunpack.c.0.s8 %v271
  %v273 = vlaneseq
  %v274 = vshrl.u32 %v273, 7
  %v275 = vsub.s32 %v272, %v274
  %v276 = vrot.slane %v262, %v275
  %v277 = vcombine.high %v269, %v269
  %v278 = vcombine.high %v276, %v276
  %v280 = vunpack.c.l.s4 1966171168
  %v281 = vunpack.c.0.s8 %v280
  %v282 = vlaneseq
  %v283 = vshrl.u32 %v282, 7
  %v284 = vsub.s32 %v281, %v283
  %v285 = vrot.slane %v39, %v284
  %v286 = vcombine.high %v285, %v285
  %v288 = vunpack.c.l.s4 1966171168
  %v289 = vunpack.c.0.s8 %v288
  %v290 = vlaneseq
  %v291 = vshrl.u32 %v290, 7
  %v292 = vsub.s32 %v289, %v291
  %v293 = vrot.slane %v285, %v292
  %v295 = vunpack.c.l.s4 1966171168
  %v296 = vunpack.c.0.s8 %v295
  %v297 = vlaneseq
  %v298 = vshrl.u32 %v297, 7
  %v299 = vsub.s32 %v296, %v298
  %v300 = vrot.slane %v286, %v299
  %v301 = vcombine.high %v293, %v293
  %v302 = vcombine.high %v300, %v300
  %v304 = vunpack.c.l.s4 1966171168
  %v305 = vunpack.c.0.s8 %v304
  %v306 = vlaneseq
  %v307 = vshrl.u32 %v306, 7
  %v308 = vsub.s32 %v305, %v307
  %v309 = vrot.slane %v42, %v308
  %v310 = vcombine.high %v309, %v309
  %v312 = vunpack.c.l.s4 1966171168
  %v313 = vunpack.c.0.s8 %v312
  %v314 = vlaneseq
  %v315 = vshrl.u32 %v314, 7
  %v316 = vsub.s32 %v313, %v315
  %v317 = vrot.slane %v309, %v316
  %v319 = vunpack.c.l.s4 1966171168
  %v320 = vunpack.c.0.s8 %v319
  %v321 = vlaneseq
  %v322 = vshrl.u32 %v321, 7
  %v323 = vsub.s32 %v320, %v322
  %v324 = vrot.slane %v310, %v323
  %v325 = vcombine.high %v317, %v317
  %v326 = vcombine.high %v324, %v324
  %v328 = vunpack.c.l.s4 1966171168
  %v329 = vunpack.c.0.s8 %v328
  %v330 = vlaneseq
  %v331 = vshrl.u32 %v330, 7
  %v332 = vsub.s32 %v329, %v331
  %v333 = vrot.slane %v45, %v332
  %v334 = vcombine.high %v333, %v333
  %v336 = vunpack.c.l.s4 1966171168
  %v337 = vunpack.c.0.s8 %v336
  %v338 = vlaneseq
  %v339 = vshrl.u32 %v338, 7
  %v340 = vsub.s32 %v337, %v339
  %v341 = vrot.slane %v333, %v340
  %v343 = vunpack.c.l.s4 1966171168
  %v344 = vunpack.c.0.s8 %v343
  %v345 = vlaneseq
  %v346 = vshrl.u32 %v345, 7
  %v347 = vsub.s32 %v344, %v346
  %v348 = vrot.slane %v334, %v347
  %v349 = vcombine.high %v341, %v341
  %v350 = vcombine.high %v348, %v348
  %v352 = vunpack.c.l.s4 1966171168
  %v353 = vunpack.c.0.s8 %v352
  %v354 = vlaneseq
  %v355 = vshrl.u32 %v354, 7
  %v356 = vsub.s32 %v353, %v355
  %v357 = vrot.slane %v48, %v356
  %v358 = vcombine.high %v357, %v357
  %v360 = vunpack.c.l.s4 1966171168
  %v361 = vunpack.c.0.s8 %v360
  %v362 = vlaneseq
  %v363 = vshrl.u32 %v362, 7
  %v364 = vsub.s32 %v361, %v363
  %v365 = vrot.slane %v357, %v364
  %v367 = vunpack.c.l.s4 1966171168
  %v368 = vunpack.c.0.s8 %v367
  %v369 = vlaneseq
  %v370 = vshrl.u32 %v369, 7
  %v371 = vsub.s32 %v368, %v370
  %v372 = vrot.slane %v358, %v371
  %v373 = vcombine.high %v365, %v365
  %v374 = vcombine.high %v372, %v372
  %v376 = vunpack.c.l.s4 1966171168
  %v377 = vunpack.c.0.s8 %v376
  %v378 = vlaneseq
  %v379 = vshrl.u32 %v378, 7
  %v380 = vsub.s32 %v377, %v379
  %v381 = vrot.slane %v51, %v380
  %v382 = vcombine.high %v381, %v381
  %v384 = vunpack.c.l.s4 1966171168
  %v385 = vunpack.c.0.s8 %v384
  %v386 = vlaneseq
  %v387 = vshrl.u32 %v386, 7
  %v388 = vsub.s32 %v385, %v387
  %v389 = vrot.slane %v381, %v388
  %v391 = vunpack.c.l.s4 1966171168
  %v392 = vunpack.c.0.s8 %v391
  %v393 = vlaneseq
  %v394 = vshrl.u32 %v393, 7
  %v395 = vsub.s32 %v392, %v394
  %v396 = vrot.slane %v382, %v395
  %v397 = vcombine.high %v389, %v389
  %v398 = vcombine.high %v396, %v396
  %v400 = vunpack.c.l.s4 1966171168
  %v401 = vunpack.c.0.s8 %v400
  %v402 = vlaneseq
  %v403 = vshrl.u32 %v402, 7
  %v404 = vsub.s32 %v401, %v403
  %v405 = vrot.slane %v54, %v404
  %v406 = vcombine.high %v405, %v405
  %v408 = vunpack.c.l.s4 1966171168
  %v409 = vunpack.c.0.s8 %v408
  %v410 = vlaneseq
  %v411 = vshrl.u32 %v410, 7
  %v412 = vsub.s32 %v409, %v411
  %v413 = vrot.slane %v405, %v412
  %v415 = vunpack.c.l.s4 1966171168
  %v416 = vunpack.c.0.s8 %v415
  %v417 = vlaneseq
  %v418 = vshrl.u32 %v417, 7
  %v419 = vsub.s32 %v416, %v418
  %v420 = vrot.slane %v406, %v419
  %v421 = vcombine.high %v413, %v413
  %v422 = vcombine.high %v420, %v420
  %v424 = vunpack.c.l.s4 1966171168
  %v425 = vunpack.c.0.s8 %v424
  %v426 = vlaneseq
  %v427 = vshrl.u32 %v426, 7
  %v428 = vsub.s32 %v425, %v427
  %v429 = vrot.slane %v57, %v428
  %v430 = vcombine.high %v429, %v429
  %v432 = vunpack.c.l.s4 1966171168
  %v433 = vunpack.c.0.s8 %v432
  %v434 = vlaneseq
  %v435 = vshrl.u32 %v434, 7
  %v436 = vsub.s32 %v433, %v435
  %v437 = vrot.slane %v429, %v436
  %v439 = vunpack.c.l.s4 1966171168
  %v440 = vunpack.c.0.s8 %v439
  %v441 = vlaneseq
  %v442 = vshrl.u32 %v441, 7
  %v443 = vsub.s32 %v440, %v442
  %v444 = vrot.slane %v430, %v443
  %v445 = vcombine.high %v437, %v437
  %v446 = vcombine.high %v444, %v444
  %v448 = vunpack.c.l.s4 1966171168
  %v449 = vunpack.c.0.s8 %v448
  %v450 = vlaneseq
  %v451 = vshrl.u32 %v450, 7
  %v452 = vsub.s32 %v449, %v451
  %v453 = vrot.slane %v60, %v452
  %v454 = vcombine.high %v453, %v453
  %v456 = vunpack.c.l.s4 1966171168
  %v457 = vunpack.c.0.s8 %v456
  %v458 = vlaneseq
  %v459 = vshrl.u32 %v458, 7
  %v460 = vsub.s32 %v457, %v459
  %v461 = vrot.slane %v453, %v460
  %v463 = vunpack.c.l.s4 1966171168
  %v464 = vunpack.c.0.s8 %v463
  %v465 = vlaneseq
  %v466 = vshrl.u32 %v465, 7
  %v467 = vsub.s32 %v464, %v466
  %v468 = vrot.slane %v454, %v467
  %v469 = vcombine.high %v461, %v461
  %v470 = vcombine.high %v468, %v468
  %v471 = vunpack.i.l.s16 %v101
  %v472 = vunpack.i.h.s16 %v101
  %v473 = vunpack.i.l.s16 %v108
  %v474 = vunpack.i.h.s16 %v108
  %v475 = vunpack.i.l.s16 %v109
  %v476 = vunpack.i.h.s16 %v109
  %v477 = vunpack.i.l.s16 %v110
  %v478 = vunpack.i.l.s16 %v125
  %v479 = vunpack.i.h.s16 %v125
  %v480 = vunpack.i.l.s16 %v132
  %v481 = vunpack.i.h.s16 %v132
  %v482 = vunpack.i.l.s16 %v133
  %v483 = vunpack.i.h.s16 %v133
  %v484 = vunpack.i.l.s16 %v134
  %v485 = vunpack.i.l.s16 %v149
  %v486 = vunpack.i.h.s16 %v149
  %v487 = vunpack.i.l.s16 %v156
  %v488 = vunpack.i.h.s16 %v156
  %v489 = vunpack.i.l.s16 %v157
  %v490 = vunpack.i.h.s16 %v157
  %v491 = vunpack.i.l.s16 %v158
  %v492 = vunpack.i.l.s16 %v173
  %v493 = vunpack.i.h.s16 %v173
  %v494 = vunpack.i.l.s16 %v180
  %v495 = vunpack.i.h.s16 %v180
  %v496 = vunpack.i.l.s16 %v181
  %v497 = vunpack.i.h.s16 %v181
  %v498 = vunpack.i.l.s16 %v182
  %v499 = vunpack.i.l.s16 %v197
  %v500 = vunpack.i.h.s16 %v197
  %v501 = vunpack.i.l.s16 %v204
  %v502 = vunpack.i.h.s16 %v204
  %v503 = vunpack.i.l.s16 %v205
  %v504 = vunpack.i.h.s16 %v205
  %v505 = vunpack.i.l.s16 %v206
  %v506 = vunpack.i.l.s16 %v221
  %v507 = vunpack.i.h.s16 %v221
  %v508 = vunpack.i.l.s16 %v228
  %v509 = vunpack.i.h.s16 %v228
  %v510 = vunpack.i.l.s16 %v229
  %v511 = vunpack.i.h.s16 %v229
  %v512 = vunpack.i.l.s16 %v230
  %v513 = vunpack.i.l.s16 %v245
  %v514 = vunpack.i.h.s16 %v245
  %v515 = vunpack.i.l.s16 %v252
  %v516 = vunpack.i.h.s16 %v252
  %v517 = vunpack.i.l.s16 %v253
  %v518 = vunpack.i.h.s16 %v253
  %v519 = vunpack.i.l.s16 %v254
  %v520 = vunpack.i.l.s16 %v269
  %v521 = vunpack.i.h.s16 %v269
  %v522 = vunpack.i.l.s16 %v276
  %v523 = vunpack.i.h.s16 %v276
  %v524 = vunpack.i.l.s16 %v277
  %v525 = vunpack.i.h.s16 %v277
  %v526 = vunpack.i.l.s16 %v278
  %v527 = vunpack.i.l.s16 %v293
  %v528 = vunpack.i.h.s16 %v293
  %v529 = vunpack.i.l.s16 %v300
  %v530 = vunpack.i.h.s16 %v300
  %v531 = vunpack.i.l.s16 %v301
  %v532 = vunpack.i.h.s16 %v301
  %v533 = vunpack.i.l.s16 %v302
  %v534 = vunpack.i.l.s16 %v317
  %v535 = vunpack.i.h.s16 %v317
  %v536 = vunpack.i.l.s16 %v324
  %v537 = vunpack.i.h.s16 %v324
  %v538 = vunpack.i.l.s16 %v325
  %v539 = vunpack.i.h.s16 %v325
  %v540 = vunpack.i.l.s16 %v326
  %v541 = vunpack.i.l.s16 %v341
  %v542 = vunpack.i.h.s16 %v341
  %v543 = vunpack.i.l.s16 %v348
  %v544 = vunpack.i.h.s16 %v348
  %v545 = vunpack.i.l.s16 %v349
  %v546 = vunpack.i.h.s16 %v349
  %v547 = vunpack.i.l.s16 %v350
  %v548 = vunpack.i.l.s16 %v365
  %v549 = vunpack.i.h.s16 %v365
  %v550 = vunpack.i.l.s16 %v372
  %v551 = vunpack.i.h.s16 %v372
  %v552 = vunpack.i.l.s16 %v373
  %v553 = vunpack.i.h.s16 %v373
  %v554 = vunpack.i.l.s16 %v374
  %v555 = vunpack.i.l.s16 %v389
  %v556 = vunpack.i.h.s16 %v389
  %v557 = vunpack.i.l.s16 %v396
  %v558 = vunpack.i.h.s16 %v396
  %v559 = vunpack.i.l.s16 %v397
  %v560 = vunpack.i.h.s16 %v397
  %v561 = vunpack.i.l.s16 %v398
  %v562 = vunpack.i.l.s16 %v413
  %v563 = vunpack.i.h.s16 %v413
  %v564 = vunpack.i.l.s16 %v420
  %v565 = vunpack.i.h.s16 %v420
  %v566 = vunpack.i.l.s16 %v421
  %v567 = vunpack.i.h.s16 %v421
  %v568 = vunpack.i.l.s16 %v422
  %v569 = vunpack.i.l.s16 %v437
  %v570 = vunpack.i.h.s16 %v437
  %v571 = vunpack.i.l.s16 %v444
  %v572 = vunpack.i.h.s16 %v444
  %v573 = vunpack.i.l.s16 %v445
  %v574 = vunpack.i.h.s16 %v445
  %v575 = vunpack.i.l.s16 %v446
  %v576 = vunpack.i.l.s16 %v461
  %v577 = vunpack.i.h.s16 %v461
  %v578 = vunpack.i.l.s16 %v468
  %v579 = vunpack.i.h.s16 %v468
  %v580 = vunpack.i.l.s16 %v469
  %v581 = vunpack.i.h.s16 %v469
  %v582 = vunpack.i.l.s16 %v470
  %v583 = vpack.i.b16 %v472, %v471
  %v584 = vpack.i.b16 %v474, %v473
  %v585 = vpack.i.b16 %v476, %v475
  %v586 = vpack.i.b16 %v478, %v477
  %v587 = vpack.i.b16 %v480, %v479
  %v588 = vpack.i.b16 %v482, %v481
  %v589 = vpack.i.b16 %v484, %v483
  %v590 = vpack.i.b16 %v486, %v485
  %v591 = vpack.i.b16 %v488, %v487
  %v592 = vpack.i.b16 %v490, %v489
  %v593 = vpack.i.b16 %v492, %v491
  %v594 = vpack.i.b16 %v494, %v493
  %v595 = vpack.i.b16 %v496, %v495
  %v596 = vpack.i.b16 %v498, %v497
  %v597 = vpack.i.b16 %v500, %v499
  %v598 = vpack.i.b16 %v502, %v501
  %v599 = vpack.i.b16 %v504, %v503
  %v600 = vpack.i.b16 %v506, %v505
  %v601 = vpack.i.b16 %v508, %v507
  %v602 = vpack.i.b16 %v510, %v509
  %v603 = vpack.i.b16 %v512, %v511
  %v604 = vpack.i.b16 %v514, %v513
  %v605 = vpack.i.b16 %v516, %v515
  %v606 = vpack.i.b16 %v518, %v517
  %v607 = vpack.i.b16 %v520, %v519
  %v608 = vpack.i.b16 %v522, %v521
  %v609 = vpack.i.b16 %v524, %v523
  %v610 = vpack.i.b16 %v526, %v525
  %v611 = vpack.i.b16 %v528, %v527
  %v612 = vpack.i.b16 %v530, %v529
  %v613 = vpack.i.b16 %v532, %v531
  %v614 = vpack.i.b16 %v534, %v533
  %v615 = vpack.i.b16 %v536, %v535
  %v616 = vpack.i.b16 %v538, %v537
  %v617 = vpack.i.b16 %v540, %v539
  %v618 = vpack.i.b16 %v542, %v541
  %v619 = vpack.i.b16 %v544, %v543
  %v620 = vpack.i.b16 %v546, %v545
  %v621 = vpack.i.b16 %v548, %v547
  %v622 = vpack.i.b16 %v550, %v549
  %v623 = vpack.i.b16 %v552, %v551
  %v624 = vpack.i.b16 %v554, %v553
  %v625 = vpack.i.b16 %v556, %v555
  %v626 = vpack.i.b16 %v558, %v557
  %v627 = vpack.i.b16 %v560, %v559
  %v628 = vpack.i.b16 %v562, %v561
  %v629 = vpack.i.b16 %v564, %v563
  %v630 = vpack.i.b16 %v566, %v565
  %v631 = vpack.i.b16 %v568, %v567
  %v632 = vpack.i.b16 %v570, %v569
  %v633 = vpack.i.b16 %v572, %v571
  %v634 = vpack.i.b16 %v574, %v573
  %v635 = vpack.i.b16 %v576, %v575
  %v636 = vpack.i.b16 %v578, %v577
  %v637 = vpack.i.b16 %v580, %v579
  %v638 = vpack.i.b16 %v582, %v581
  %v639 = vcombine.low %v583, %v584
  %v640 = vcombine.low %v585, %v586
  %v641 = vcombine.low %v587, %v588
  %v642 = vcombine.low %v589, %v590
  %v644 = vunpack.c.l.s4 1966171168
  %v645 = vunpack.c.0.s8 %v644
  %v646 = vlaneseq
  %v647 = vshrl.u32 %v646, 7
  %v648 = vsub.s32 %v645, %v647
  %v649 = vrot.slane %v639, %v648
  %v651 = vunpack.c.l.s4 1966171168
  %v652 = vunpack.c.0.s8 %v651
  %v653 = vlaneseq
  %v654 = vshrl.u32 %v653, 7
  %v655 = vsub.s32 %v652, %v654
  %v656 = vrot.slane %v640, %v655
  %v658 = vunpack.c.l.s4 1966171168
  %v659 = vunpack.c.0.s8 %v658
  %v660 = vlaneseq
  %v661 = vshrl.u32 %v660, 7
  %v662 = vsub.s32 %v659, %v661
  %v663 = vrot.slane %v641, %v662
  %v665 = vunpack.c.l.s4 1966171168
  %v666 = vunpack.c.0.s8 %v665
  %v667 = vlaneseq
  %v668 = vshrl.u32 %v667, 7
  %v669 = vsub.s32 %v666, %v668
  %v670 = vrot.slane %v642, %v669
  %v671 = vcombine.low %v649, %v656
  %v672 = vcombine.low %v663, %v670
  %v674 = vunpack.c.l.s4 1966171168
  %v675 = vunpack.c.0.s8 %v674
  %v676 = vlaneseq
  %v677 = vshrl.u32 %v676, 7
  %v678 = vsub.s32 %v675, %v677
  %v679 = vrot.slane %v671, %v678
  %v681 = vunpack.c.l.s4 1966171168
  %v682 = vunpack.c.0.s8 %v681
  %v683 = vlaneseq
  %v684 = vshrl.u32 %v683, 7
  %v685 = vsub.s32 %v682, %v684
  %v686 = vrot.slane %v672, %v685
  %v687 = vcombine.low %v679, %v686
  %v688 = vcombine.low %v591, %v592
  %v689 = vcombine.low %v593, %v594
  %v690 = vcombine.low %v595, %v596
  %v691 = vcombine.low %v597, %v598
  %v693 = vunpack.c.l.s4 1966171168
  %v694 = vunpack.c.0.s8 %v693
  %v695 = vlaneseq
  %v696 = vshrl.u32 %v695, 7
  %v697 = vsub.s32 %v694, %v696
  %v698 = vrot.slane %v688, %v697
  %v700 = vunpack.c.l.s4 1966171168
  %v701 = vunpack.c.0.s8 %v700
  %v702 = vlaneseq
  %v703 = vshrl.u32 %v702, 7
  %v704 = vsub.s32 %v701, %v703
  %v705 = vrot.slane %v689, %v704
  %v707 = vunpack.c.l.s4 1966171168
  %v708 = vunpack.c.0.s8 %v707
  %v709 = vlaneseq
  %v710 = vshrl.u32 %v709, 7
  %v711 = vsub.s32 %v708, %v710
  %v712 = vrot.slane %v690, %v711
  %v714 = vunpack.c.l.s4 1966171168
  %v715 = vunpack.c.0.s8 %v714
  %v716 = vlaneseq
  %v717 = vshrl.u32 %v716, 7
  %v718 = vsub.s32 %v715, %v717
  %v719 = vrot.slane %v691, %v718
  %v720 = vcombine.low %v698, %v705
  %v721 = vcombine.low %v712, %v719
  %v723 = vunpack.c.l.s4 1966171168
  %v724 = vunpack.c.0.s8 %v723
  %v725 = vlaneseq
  %v726 = vshrl.u32 %v725, 7
  %v727 = vsub.s32 %v724, %v726
  %v728 = vrot.slane %v720, %v727
  %v730 = vunpack.c.l.s4 1966171168
  %v731 = vunpack.c.0.s8 %v730
  %v732 = vlaneseq
  %v733 = vshrl.u32 %v732, 7
  %v734 = vsub.s32 %v731, %v733
  %v735 = vrot.slane %v721, %v734
  %v736 = vcombine.low %v728, %v735
  %v737 = vcombine.low %v599, %v600
  %v738 = vcombine.low %v601, %v602
  %v739 = vcombine.low %v603, %v604
  %v740 = vcombine.low %v605, %v606
  %v742 = vunpack.c.l.s4 1966171168
  %v743 = vunpack.c.0.s8 %v742
  %v744 = vlaneseq
  %v745 = vshrl.u32 %v744, 7
  %v746 = vsub.s32 %v743, %v745
  %v747 = vrot.slane %v737, %v746
  %v749 = vunpack.c.l.s4 1966171168
  %v750 = vunpack.c.0.s8 %v749
  %v751 = vlaneseq
  %v752 = vshrl.u32 %v751, 7
  %v753 = vsub.s32 %v750, %v752
  %v754 = vrot.slane %v738, %v753
  %v756 = vunpack.c.l.s4 1966171168
  %v757 = vunpack.c.0.s8 %v756
  %v758 = vlaneseq
  %v759 = vshrl.u32 %v758, 7
  %v760 = vsub.s32 %v757, %v759
  %v761 = vrot.slane %v739, %v760
  %v763 = vunpack.c.l.s4 1966171168
  %v764 = vunpack.c.0.s8 %v763
  %v765 = vlaneseq
  %v766 = vshrl.u32 %v765, 7
  %v767 = vsub.s32 %v764, %v766
  %v768 = vrot.slane %v740, %v767
  %v769 = vcombine.low %v747, %v754
  %v770 = vcombine.low %v761, %v768
  %v772 = vunpack.c.l.s4 1966171168
  %v773 = vunpack.c.0.s8 %v772
  %v774 = vlaneseq
  %v775 = vshrl.u32 %v774, 7
  %v776 = vsub.s32 %v773, %v775
  %v777 = vrot.slane %v769, %v776
  %v779 = vunpack.c.l.s4 1966171168
  %v780 = vunpack.c.0.s8 %v779
  %v781 = vlaneseq
  %v782 = vshrl.u32 %v781, 7
  %v783 = vsub.s32 %v780, %v782
  %v784 = vrot.slane %v770, %v783
  %v785 = vcombine.low %v777, %v784
  %v786 = vcombine.low %v607, %v608
  %v787 = vcombine.low %v609, %v610
  %v788 = vcombine.low %v611, %v612
  %v789 = vcombine.low %v613, %v614
  %v791 = vunpack.c.l.s4 1966171168
  %v792 = vunpack.c.0.s8 %v791
  %v793 = vlaneseq
  %v794 = vshrl.u32 %v793, 7
  %v795 = vsub.s32 %v792, %v794
  %v796 = vrot.slane %v786, %v795
  %v798 = vunpack.c.l.s4 1966171168
  %v799 = vunpack.c.0.s8 %v798
  %v800 = vlaneseq
  %v801 = vshrl.u32 %v800, 7
  %v802 = vsub.s32 %v799, %v801
  %v803 = vrot.slane %v787, %v802
  %v805 = vunpack.c.l.s4 1966171168
  %v806 = vunpack.c.0.s8 %v805
  %v807 = vlaneseq
  %v808 = vshrl.u32 %v807, 7
  %v809 = vsub.s32 %v806, %v808
  %v810 = vrot.slane %v788, %v809
  %v812 = vunpack.c.l.s4 1966171168
  %v813 = vunpack.c.0.s8 %v812
  %v814 = vlaneseq
  %v815 = vshrl.u32 %v814, 7
  %v816 = vsub.s32 %v813, %v815
  %v817 = vrot.slane %v789, %v816
  %v818 = vcombine.low %v796, %v803
  %v819 = vcombine.low %v810, %v817
  %v821 = vunpack.c.l.s4 1966171168
  %v822 = vunpack.c.0.s8 %v821
  %v823 = vlaneseq
  %v824 = vshrl.u32 %v823, 7
  %v825 = vsub.s32 %v822, %v824
  %v826 = vrot.slane %v818, %v825
  %v828 = vunpack.c.l.s4 1966171168
  %v829 = vunpack.c.0.s8 %v828
  %v830 = vlaneseq
  %v831 = vshrl.u32 %v830, 7
  %v832 = vsub.s32 %v829, %v831
  %v833 = vrot.slane %v819, %v832
  %v834 = vcombine.low %v826, %v833
  %v835 = vcombine.low %v615, %v616
  %v836 = vcombine.low %v617, %v618
  %v837 = vcombine.low %v619, %v620
  %v838 = vcombine.low %v621, %v622
  %v840 = vunpack.c.l.s4 1966171168
  %v841 = vunpack.c.0.s8 %v840
  %v842 = vlaneseq
  %v843 = vshrl.u32 %v842, 7
  %v844 = vsub.s32 %v841, %v843
  %v845 = vrot.slane %v835, %v844
  %v847 = vunpack.c.l.s4 1966171168
  %v848 = vunpack.c.0.s8 %v847
  %v849 = vlaneseq
  %v850 = vshrl.u32 %v849, 7
  %v851 = vsub.s32 %v848, %v850
  %v852 = vrot.slane %v836, %v851
  %v854 = vunpack.c.l.s4 1966171168
  %v855 = vunpack.c.0.s8 %v854
  %v856 = vlaneseq
  %v857 = vshrl.u32 %v856, 7
  %v858 = vsub.s32 %v855, %v857
  %v859 = vrot.slane %v837, %v858
  %v861 = vunpack.c.l.s4 1966171168
  %v862 = vunpack.c.0.s8 %v861
  %v863 = vlaneseq
  %v864 = vshrl.u32 %v863, 7
  %v865 = vsub.s32 %v862, %v864
  %v866 = vrot.slane %v838, %v865
  %v867 = vcombine.low %v845, %v852
  %v868 = vcombine.low %v859, %v866
  %v870 = vunpack.c.l.s4 1966171168
  %v871 = vunpack.c.0.s8 %v870
  %v872 = vlaneseq
  %v873 = vshrl.u32 %v872, 7
  %v874 = vsub.s32 %v871, %v873
  %v875 = vrot.slane %v867, %v874
  %v877 = vunpack.c.l.s4 1966171168
  %v878 = vunpack.c.0.s8 %v877
  %v879 = vlaneseq
  %v880 = vshrl.u32 %v879, 7
  %v881 = vsub.s32 %v878, %v880
  %v882 = vrot.slane %v868, %v881
  %v883 = vcombine.low %v875, %v882
  %v884 = vcombine.low %v623, %v624
  %v885 = vcombine.low %v625, %v626
  %v886 = vcombine.low %v627, %v628
  %v887 = vcombine.low %v629, %v630
  %v889 = vunpack.c.l.s4 1966171168
  %v890 = vunpack.c.0.s8 %v889
  %v891 = vlaneseq
  %v892 = vshrl.u32 %v891, 7
  %v893 = vsub.s32 %v890, %v892
  %v894 = vrot.slane %v884, %v893
  %v896 = vunpack.c.l.s4 1966171168
  %v897 = vunpack.c.0.s8 %v896
  %v898 = vlaneseq
  %v899 = vshrl.u32 %v898, 7
  %v900 = vsub.s32 %v897, %v899
  %v901 = vrot.slane %v885, %v900
  %v903 = vunpack.c.l.s4 1966171168
  %v904 = vunpack.c.0.s8 %v903
  %v905 = vlaneseq
  %v906 = vshrl.u32 %v905, 7
  %v907 = vsub.s32 %v904, %v906
  %v908 = vrot.slane %v886, %v907
  %v910 = vunpack.c.l.s4 1966171168
  %v911 = vunpack.c.0.s8 %v910
  %v912 = vlaneseq
  %v913 = vshrl.u32 %v912, 7
  %v914 = vsub.s32 %v911, %v913
  %v915 = vrot.slane %v887, %v914
  %v916 = vcombine.low %v894, %v901
  %v917 = vcombine.low %v908, %v915
  %v919 = vunpack.c.l.s4 1966171168
  %v920 = vunpack.c.0.s8 %v919
  %v921 = vlaneseq
  %v922 = vshrl.u32 %v921, 7
  %v923 = vsub.s32 %v920, %v922
  %v924 = vrot.slane %v916, %v923
  %v926 = vunpack.c.l.s4 1966171168
  %v927 = vunpack.c.0.s8 %v926
  %v928 = vlaneseq
  %v929 = vshrl.u32 %v928, 7
  %v930 = vsub.s32 %v927, %v929
  %v931 = vrot.slane %v917, %v930
  %v932 = vcombine.low %v924, %v931
  %v933 = vcombine.low %v631, %v632
  %v934 = vcombine.low %v633, %v634
  %v935 = vcombine.low %v635, %v636
  %v936 = vcombine.low %v637, %v638
  %v938 = vunpack.c.l.s4 1966171168
  %v939 = vunpack.c.0.s8 %v938
  %v940 = vlaneseq
  %v941 = vshrl.u32 %v940, 7
  %v942 = vsub.s32 %v939, %v941
  %v943 = vrot.slane %v933, %v942
  %v945 = vunpack.c.l.s4 1966171168
  %v946 = vunpack.c.0.s8 %v945
  %v947 = vlaneseq
  %v948 = vshrl.u32 %v947, 7
  %v949 = vsub.s32 %v946, %v948
  %v950 = vrot.slane %v934, %v949
  %v952 = vunpack.c.l.s4 1966171168
  %v953 = vunpack.c.0.s8 %v952
  %v954 = vlaneseq
  %v955 = vshrl.u32 %v954, 7
  %v956 = vsub.s32 %v953, %v955
  %v957 = vrot.slane %v935, %v956
  %v959 = vunpack.c.l.s4 1966171168
  %v960 = vunpack.c.0.s8 %v959
  %v961 = vlaneseq
  %v962 = vshrl.u32 %v961, 7
  %v963 = vsub.s32 %v960, %v962
  %v964 = vrot.slane %v936, %v963
  %v965 = vcombine.low %v943, %v950
  %v966 = vcombine.low %v957, %v964
  %v968 = vunpack.c.l.s4 1966171168
  %v969 = vunpack.c.0.s8 %v968
  %v970 = vlaneseq
  %v971 = vshrl.u32 %v970, 7
  %v972 = vsub.s32 %v969, %v971
  %v973 = vrot.slane %v965, %v972
  %v975 = vunpack.c.l.s4 1966171168
  %v976 = vunpack.c.0.s8 %v975
  %v977 = vlaneseq
  %v978 = vshrl.u32 %v977, 7
  %v979 = vsub.s32 %v976, %v978
  %v980 = vrot.slane %v966, %v979
  %v981 = vcombine.low %v973, %v980
  %vm982 = vcmask 31744
  %v984 = vsel %vm982, %v687, 0
  %v987 = vsel %vm982, %v736, 0
  %v990 = vsel %vm982, %v785, 0
  %v993 = vsel %vm982, %v834, 0
  %v996 = vsel %vm982, %v883, 0
  %v999 = vsel %vm982, %v932, 0
  %v1002 = vsel %vm982, %v981, 0
  %vm1004 = vcmask 1041408
  %v1006 = vsel %vm1004, %v70, 0
  %1008 = vmatprep.subr.bf16.mxu0 0
  %1009 = vmatpush1.bf16.msra.mxu0 %v1006
  %1010 = vmatprep.subr.bf16.mxu0 0
  %1011 = vmatpush1.bf16.msra.mxu0 0
  %1012 = vmatprep.subr.bf16.mxu0 0
  %1013 = vmatpush1.bf16.msra.mxu0 0
  %1014 = vmatprep.subr.bf16.mxu0 0
  %1015 = vmatpush1.bf16.msra.mxu0 0
  %1016 = vmatprep.subr.bf16.mxu0 0
  %1017 = vmatpush1.bf16.msra.mxu0 0
  %1018 = vmatprep.subr.bf16.mxu0 0
  %1019 = vmatpush1.bf16.msra.mxu0 0
  %1020 = vmatprep.subr.bf16.mxu0 0
  %1021 = vmatpush1.bf16.msra.mxu0 0
  %1022 = vmatprep.subr.bf16.mxu0 0
  %1023 = vmatpush1.bf16.msra.mxu0 0
  %1024 = vmatprep.subr.bf16.mxu0 0
  %1025 = vmatpush1.bf16.msra.mxu0 0
  %1026 = vmatprep.subr.bf16.mxu0 0
  %1027 = vmatpush1.bf16.msra.mxu0 0
  %1028 = vmatprep.subr.bf16.mxu0 0
  %1029 = vmatpush1.bf16.msra.mxu0 0
  %1030 = vmatprep.subr.bf16.mxu0 0
  %1031 = vmatpush1.bf16.msra.mxu0 0
  %1032 = vmatprep.subr.bf16.mxu0 0
  %1033 = vmatpush1.bf16.msra.mxu0 0
  %1034 = vmatprep.subr.bf16.mxu0 0
  %1035 = vmatpush1.bf16.msra.mxu0 0
  %1036 = vmatprep.subr.bf16.mxu0 0
  %1037 = vmatpush1.bf16.msra.mxu0 0
  %1038 = vmatprep.subr.bf16.mxu0 0
  %1039 = vmatpush1.bf16.msra.mxu0 0
  %1040 = vmatprep.mubr.bf16.mxu0 0
  %1041 = vmatmul.mubr.bf16.gmra.mrb[0].mxu0 %v984
  %v1042 = vpop.f32.mrb[0].mxu0
  %v1043 = vadd.f32 0.0, %v1042
  %v1044 = vpop.f32.mrb[0].mxu0
  %v1045 = vpop.f32.mrb[0].mxu0
  %v1046 = vadd.f32 0.0, %v1045
  %v1047 = vpop.f32.mrb[0].mxu0
  %1048 = vmatprep.mubr.bf16.mxu0 0
  %1049 = vmatmul.mubr.bf16.gmra.mrb[0].mxu0 %v987
  %v1050 = vpop.f32.mrb[0].mxu0
  %v1051 = vadd.f32 0.0, %v1050
  %v1052 = vpop.f32.mrb[0].mxu0
  %v1053 = vpop.f32.mrb[0].mxu0
  %v1054 = vadd.f32 0.0, %v1053
  %v1055 = vpop.f32.mrb[0].mxu0
  %1056 = vmatprep.mubr.bf16.mxu0 0
  %1057 = vmatmul.mubr.bf16.gmra.mrb[0].mxu0 %v990
  %v1058 = vpop.f32.mrb[0].mxu0
  %v1059 = vadd.f32 0.0, %v1058
  %v1060 = vpop.f32.mrb[0].mxu0
  %v1061 = vpop.f32.mrb[0].mxu0
  %v1062 = vadd.f32 0.0, %v1061
  %v1063 = vpop.f32.mrb[0].mxu0
  %1064 = vmatprep.mubr.bf16.mxu0 0
  %1065 = vmatmul.mubr.bf16.gmra.mrb[0].mxu0 %v993
  %v1066 = vpop.f32.mrb[0].mxu0
  %v1067 = vadd.f32 0.0, %v1066
  %v1068 = vpop.f32.mrb[0].mxu0
  %v1069 = vpop.f32.mrb[0].mxu0
  %v1070 = vadd.f32 0.0, %v1069
  %v1071 = vpop.f32.mrb[0].mxu0
  %1072 = vmatprep.mubr.bf16.mxu0 0
  %1073 = vmatmul.mubr.bf16.gmra.mrb[0].mxu0 %v996
  %v1074 = vpop.f32.mrb[0].mxu0
  %v1075 = vadd.f32 0.0, %v1074
  %v1076 = vpop.f32.mrb[0].mxu0
  %v1077 = vpop.f32.mrb[0].mxu0
  %v1078 = vadd.f32 0.0, %v1077
  %v1079 = vpop.f32.mrb[0].mxu0
  %1080 = vmatprep.mubr.bf16.mxu0 0
  %1081 = vmatmul.mubr.bf16.gmra.mrb[0].mxu0 %v999
  %v1082 = vpop.f32.mrb[0].mxu0
  %v1083 = vadd.f32 0.0, %v1082
  %v1084 = vpop.f32.mrb[0].mxu0
  %v1085 = vpop.f32.mrb[0].mxu0
  %v1086 = vadd.f32 0.0, %v1085
  %v1087 = vpop.f32.mrb[0].mxu0
  %1088 = vmatprep.mubr.bf16.mxu0 0
  %1089 = vmatmul.mubr.bf16.gmra.mrb[0].mxu0 %v1002
  %v1090 = vpop.f32.mrb[0].mxu0
  %v1091 = vadd.f32 0.0, %v1090
  %v1092 = vpop.f32.mrb[0].mxu0
  %v1093 = vpop.f32.mrb[0].mxu0
  %v1094 = vadd.f32 0.0, %v1093
  %v1095 = vpop.f32.mrb[0].mxu0
  %1096 = vdwg.mxu0
  %v1111 = vcombine.high %v1043, %v1043
  %v1113 = vunpack.c.l.s4 1966171168
  %v1114 = vunpack.c.0.s8 %v1113
  %v1115 = vlaneseq
  %v1116 = vshrl.u32 %v1115, 7
  %v1117 = vsub.s32 %v1114, %v1116
  %v1118 = vrot.slane %v1043, %v1117
  %v1120 = vunpack.c.l.s4 1966171168
  %v1121 = vunpack.c.0.s8 %v1120
  %v1122 = vlaneseq
  %v1123 = vshrl.u32 %v1122, 7
  %v1124 = vsub.s32 %v1121, %v1123
  %v1125 = vrot.slane %v1111, %v1124
  %v1126 = vcombine.high %v1118, %v1118
  %v1127 = vcombine.high %v1125, %v1125
  %v1129 = vunpack.c.l.s4 1966171168
  %v1130 = vunpack.c.0.s8 %v1129
  %v1131 = vlaneseq
  %v1132 = vshrl.u32 %v1131, 7
  %v1133 = vsub.s32 %v1130, %v1132
  %v1134 = vrot.slane %v1118, %v1133
  %v1136 = vunpack.c.l.s4 1966171168
  %v1137 = vunpack.c.0.s8 %v1136
  %v1138 = vlaneseq
  %v1139 = vshrl.u32 %v1138, 7
  %v1140 = vsub.s32 %v1137, %v1139
  %v1141 = vrot.slane %v1125, %v1140
  %v1143 = vunpack.c.l.s4 1966171168
  %v1144 = vunpack.c.0.s8 %v1143
  %v1145 = vlaneseq
  %v1146 = vshrl.u32 %v1145, 7
  %v1147 = vsub.s32 %v1144, %v1146
  %v1148 = vrot.slane %v1126, %v1147
  %v1150 = vunpack.c.l.s4 1966171168
  %v1151 = vunpack.c.0.s8 %v1150
  %v1152 = vlaneseq
  %v1153 = vshrl.u32 %v1152, 7
  %v1154 = vsub.s32 %v1151, %v1153
  %v1155 = vrot.slane %v1127, %v1154
  %v1156 = vcombine.high %v1134, %v1134
  %v1157 = vcombine.high %v1141, %v1141
  %v1158 = vcombine.high %v1148, %v1148
  %v1159 = vcombine.high %v1155, %v1155
  %v1160 = vcombine.high %v1046, %v1046
  %v1162 = vunpack.c.l.s4 1966171168
  %v1163 = vunpack.c.0.s8 %v1162
  %v1164 = vlaneseq
  %v1165 = vshrl.u32 %v1164, 7
  %v1166 = vsub.s32 %v1163, %v1165
  %v1167 = vrot.slane %v1046, %v1166
  %v1169 = vunpack.c.l.s4 1966171168
  %v1170 = vunpack.c.0.s8 %v1169
  %v1171 = vlaneseq
  %v1172 = vshrl.u32 %v1171, 7
  %v1173 = vsub.s32 %v1170, %v1172
  %v1174 = vrot.slane %v1160, %v1173
  %v1175 = vcombine.high %v1167, %v1167
  %v1176 = vcombine.high %v1174, %v1174
  %v1178 = vunpack.c.l.s4 1966171168
  %v1179 = vunpack.c.0.s8 %v1178
  %v1180 = vlaneseq
  %v1181 = vshrl.u32 %v1180, 7
  %v1182 = vsub.s32 %v1179, %v1181
  %v1183 = vrot.slane %v1167, %v1182
  %v1185 = vunpack.c.l.s4 1966171168
  %v1186 = vunpack.c.0.s8 %v1185
  %v1187 = vlaneseq
  %v1188 = vshrl.u32 %v1187, 7
  %v1189 = vsub.s32 %v1186, %v1188
  %v1190 = vrot.slane %v1174, %v1189
  %v1192 = vunpack.c.l.s4 1966171168
  %v1193 = vunpack.c.0.s8 %v1192
  %v1194 = vlaneseq
  %v1195 = vshrl.u32 %v1194, 7
  %v1196 = vsub.s32 %v1193, %v1195
  %v1197 = vrot.slane %v1175, %v1196
  %v1199 = vunpack.c.l.s4 1966171168
  %v1200 = vunpack.c.0.s8 %v1199
  %v1201 = vlaneseq
  %v1202 = vshrl.u32 %v1201, 7
  %v1203 = vsub.s32 %v1200, %v1202
  %v1204 = vrot.slane %v1176, %v1203
  %v1205 = vcombine.high %v1183, %v1183
  %v1206 = vcombine.high %v1190, %v1190
  %v1207 = vcombine.high %v1197, %v1197
  %v1208 = vcombine.high %v1204, %v1204
  %v1209 = vcombine.high %v1051, %v1051
  %v1211 = vunpack.c.l.s4 1966171168
  %v1212 = vunpack.c.0.s8 %v1211
  %v1213 = vlaneseq
  %v1214 = vshrl.u32 %v1213, 7
  %v1215 = vsub.s32 %v1212, %v1214
  %v1216 = vrot.slane %v1051, %v1215
  %v1218 = vunpack.c.l.s4 1966171168
  %v1219 = vunpack.c.0.s8 %v1218
  %v1220 = vlaneseq
  %v1221 = vshrl.u32 %v1220, 7
  %v1222 = vsub.s32 %v1219, %v1221
  %v1223 = vrot.slane %v1209, %v1222
  %v1224 = vcombine.high %v1216, %v1216
  %v1225 = vcombine.high %v1223, %v1223
  %v1227 = vunpack.c.l.s4 1966171168
  %v1228 = vunpack.c.0.s8 %v1227
  %v1229 = vlaneseq
  %v1230 = vshrl.u32 %v1229, 7
  %v1231 = vsub.s32 %v1228, %v1230
  %v1232 = vrot.slane %v1216, %v1231
  %v1234 = vunpack.c.l.s4 1966171168
  %v1235 = vunpack.c.0.s8 %v1234
  %v1236 = vlaneseq
  %v1237 = vshrl.u32 %v1236, 7
  %v1238 = vsub.s32 %v1235, %v1237
  %v1239 = vrot.slane %v1223, %v1238
  %v1241 = vunpack.c.l.s4 1966171168
  %v1242 = vunpack.c.0.s8 %v1241
  %v1243 = vlaneseq
  %v1244 = vshrl.u32 %v1243, 7
  %v1245 = vsub.s32 %v1242, %v1244
  %v1246 = vrot.slane %v1224, %v1245
  %v1248 = vunpack.c.l.s4 1966171168
  %v1249 = vunpack.c.0.s8 %v1248
  %v1250 = vlaneseq
  %v1251 = vshrl.u32 %v1250, 7
  %v1252 = vsub.s32 %v1249, %v1251
  %v1253 = vrot.slane %v1225, %v1252
  %v1254 = vcombine.high %v1232, %v1232
  %v1255 = vcombine.high %v1239, %v1239
  %v1256 = vcombine.high %v1246, %v1246
  %v1257 = vcombine.high %v1253, %v1253
  %v1258 = vcombine.high %v1054, %v1054
  %v1260 = vunpack.c.l.s4 1966171168
  %v1261 = vunpack.c.0.s8 %v1260
  %v1262 = vlaneseq
  %v1263 = vshrl.u32 %v1262, 7
  %v1264 = vsub.s32 %v1261, %v1263
  %v1265 = vrot.slane %v1054, %v1264
  %v1267 = vunpack.c.l.s4 1966171168
  %v1268 = vunpack.c.0.s8 %v1267
  %v1269 = vlaneseq
  %v1270 = vshrl.u32 %v1269, 7
  %v1271 = vsub.s32 %v1268, %v1270
  %v1272 = vrot.slane %v1258, %v1271
  %v1273 = vcombine.high %v1265, %v1265
  %v1274 = vcombine.high %v1272, %v1272
  %v1276 = vunpack.c.l.s4 1966171168
  %v1277 = vunpack.c.0.s8 %v1276
  %v1278 = vlaneseq
  %v1279 = vshrl.u32 %v1278, 7
  %v1280 = vsub.s32 %v1277, %v1279
  %v1281 = vrot.slane %v1265, %v1280
  %v1283 = vunpack.c.l.s4 1966171168
  %v1284 = vunpack.c.0.s8 %v1283
  %v1285 = vlaneseq
  %v1286 = vshrl.u32 %v1285, 7
  %v1287 = vsub.s32 %v1284, %v1286
  %v1288 = vrot.slane %v1272, %v1287
  %v1290 = vunpack.c.l.s4 1966171168
  %v1291 = vunpack.c.0.s8 %v1290
  %v1292 = vlaneseq
  %v1293 = vshrl.u32 %v1292, 7
  %v1294 = vsub.s32 %v1291, %v1293
  %v1295 = vrot.slane %v1273, %v1294
  %v1297 = vunpack.c.l.s4 1966171168
  %v1298 = vunpack.c.0.s8 %v1297
  %v1299 = vlaneseq
  %v1300 = vshrl.u32 %v1299, 7
  %v1301 = vsub.s32 %v1298, %v1300
  %v1302 = vrot.slane %v1274, %v1301
  %v1303 = vcombine.high %v1281, %v1281
  %v1304 = vcombine.high %v1288, %v1288
  %v1305 = vcombine.high %v1295, %v1295
  %v1306 = vcombine.high %v1302, %v1302
  %v1307 = vcombine.high %v1059, %v1059
  %v1309 = vunpack.c.l.s4 1966171168
  %v1310 = vunpack.c.0.s8 %v1309
  %v1311 = vlaneseq
  %v1312 = vshrl.u32 %v1311, 7
  %v1313 = vsub.s32 %v1310, %v1312
  %v1314 = vrot.slane %v1059, %v1313
  %v1316 = vunpack.c.l.s4 1966171168
  %v1317 = vunpack.c.0.s8 %v1316
  %v1318 = vlaneseq
  %v1319 = vshrl.u32 %v1318, 7
  %v1320 = vsub.s32 %v1317, %v1319
  %v1321 = vrot.slane %v1307, %v1320
  %v1322 = vcombine.high %v1314, %v1314
  %v1323 = vcombine.high %v1321, %v1321
  %v1325 = vunpack.c.l.s4 1966171168
  %v1326 = vunpack.c.0.s8 %v1325
  %v1327 = vlaneseq
  %v1328 = vshrl.u32 %v1327, 7
  %v1329 = vsub.s32 %v1326, %v1328
  %v1330 = vrot.slane %v1314, %v1329
  %v1332 = vunpack.c.l.s4 1966171168
  %v1333 = vunpack.c.0.s8 %v1332
  %v1334 = vlaneseq
  %v1335 = vshrl.u32 %v1334, 7
  %v1336 = vsub.s32 %v1333, %v1335
  %v1337 = vrot.slane %v1321, %v1336
  %v1339 = vunpack.c.l.s4 1966171168
  %v1340 = vunpack.c.0.s8 %v1339
  %v1341 = vlaneseq
  %v1342 = vshrl.u32 %v1341, 7
  %v1343 = vsub.s32 %v1340, %v1342
  %v1344 = vrot.slane %v1322, %v1343
  %v1346 = vunpack.c.l.s4 1966171168
  %v1347 = vunpack.c.0.s8 %v1346
  %v1348 = vlaneseq
  %v1349 = vshrl.u32 %v1348, 7
  %v1350 = vsub.s32 %v1347, %v1349
  %v1351 = vrot.slane %v1323, %v1350
  %v1352 = vcombine.high %v1330, %v1330
  %v1353 = vcombine.high %v1337, %v1337
  %v1354 = vcombine.high %v1344, %v1344
  %v1355 = vcombine.high %v1351, %v1351
  %v1356 = vcombine.high %v1062, %v1062
  %v1358 = vunpack.c.l.s4 1966171168
  %v1359 = vunpack.c.0.s8 %v1358
  %v1360 = vlaneseq
  %v1361 = vshrl.u32 %v1360, 7
  %v1362 = vsub.s32 %v1359, %v1361
  %v1363 = vrot.slane %v1062, %v1362
  %v1365 = vunpack.c.l.s4 1966171168
  %v1366 = vunpack.c.0.s8 %v1365
  %v1367 = vlaneseq
  %v1368 = vshrl.u32 %v1367, 7
  %v1369 = vsub.s32 %v1366, %v1368
  %v1370 = vrot.slane %v1356, %v1369
  %v1371 = vcombine.high %v1363, %v1363
  %v1372 = vcombine.high %v1370, %v1370
  %v1374 = vunpack.c.l.s4 1966171168
  %v1375 = vunpack.c.0.s8 %v1374
  %v1376 = vlaneseq
  %v1377 = vshrl.u32 %v1376, 7
  %v1378 = vsub.s32 %v1375, %v1377
  %v1379 = vrot.slane %v1363, %v1378
  %v1381 = vunpack.c.l.s4 1966171168
  %v1382 = vunpack.c.0.s8 %v1381
  %v1383 = vlaneseq
  %v1384 = vshrl.u32 %v1383, 7
  %v1385 = vsub.s32 %v1382, %v1384
  %v1386 = vrot.slane %v1370, %v1385
  %v1388 = vunpack.c.l.s4 1966171168
  %v1389 = vunpack.c.0.s8 %v1388
  %v1390 = vlaneseq
  %v1391 = vshrl.u32 %v1390, 7
  %v1392 = vsub.s32 %v1389, %v1391
  %v1393 = vrot.slane %v1371, %v1392
  %v1395 = vunpack.c.l.s4 1966171168
  %v1396 = vunpack.c.0.s8 %v1395
  %v1397 = vlaneseq
  %v1398 = vshrl.u32 %v1397, 7
  %v1399 = vsub.s32 %v1396, %v1398
  %v1400 = vrot.slane %v1372, %v1399
  %v1401 = vcombine.high %v1379, %v1379
  %v1402 = vcombine.high %v1386, %v1386
  %v1403 = vcombine.high %v1393, %v1393
  %v1404 = vcombine.high %v1400, %v1400
  %v1405 = vcombine.high %v1067, %v1067
  %v1407 = vunpack.c.l.s4 1966171168
  %v1408 = vunpack.c.0.s8 %v1407
  %v1409 = vlaneseq
  %v1410 = vshrl.u32 %v1409, 7
  %v1411 = vsub.s32 %v1408, %v1410
  %v1412 = vrot.slane %v1067, %v1411
  %v1414 = vunpack.c.l.s4 1966171168
  %v1415 = vunpack.c.0.s8 %v1414
  %v1416 = vlaneseq
  %v1417 = vshrl.u32 %v1416, 7
  %v1418 = vsub.s32 %v1415, %v1417
  %v1419 = vrot.slane %v1405, %v1418
  %v1420 = vcombine.high %v1412, %v1412
  %v1421 = vcombine.high %v1419, %v1419
  %v1423 = vunpack.c.l.s4 1966171168
  %v1424 = vunpack.c.0.s8 %v1423
  %v1425 = vlaneseq
  %v1426 = vshrl.u32 %v1425, 7
  %v1427 = vsub.s32 %v1424, %v1426
  %v1428 = vrot.slane %v1412, %v1427
  %v1430 = vunpack.c.l.s4 1966171168
  %v1431 = vunpack.c.0.s8 %v1430
  %v1432 = vlaneseq
  %v1433 = vshrl.u32 %v1432, 7
  %v1434 = vsub.s32 %v1431, %v1433
  %v1435 = vrot.slane %v1419, %v1434
  %v1437 = vunpack.c.l.s4 1966171168
  %v1438 = vunpack.c.0.s8 %v1437
  %v1439 = vlaneseq
  %v1440 = vshrl.u32 %v1439, 7
  %v1441 = vsub.s32 %v1438, %v1440
  %v1442 = vrot.slane %v1420, %v1441
  %v1444 = vunpack.c.l.s4 1966171168
  %v1445 = vunpack.c.0.s8 %v1444
  %v1446 = vlaneseq
  %v1447 = vshrl.u32 %v1446, 7
  %v1448 = vsub.s32 %v1445, %v1447
  %v1449 = vrot.slane %v1421, %v1448
  %v1450 = vcombine.high %v1428, %v1428
  %v1451 = vcombine.high %v1435, %v1435
  %v1452 = vcombine.high %v1442, %v1442
  %v1453 = vcombine.high %v1449, %v1449
  %v1454 = vcombine.high %v1070, %v1070
  %v1456 = vunpack.c.l.s4 1966171168
  %v1457 = vunpack.c.0.s8 %v1456
  %v1458 = vlaneseq
  %v1459 = vshrl.u32 %v1458, 7
  %v1460 = vsub.s32 %v1457, %v1459
  %v1461 = vrot.slane %v1070, %v1460
  %v1463 = vunpack.c.l.s4 1966171168
  %v1464 = vunpack.c.0.s8 %v1463
  %v1465 = vlaneseq
  %v1466 = vshrl.u32 %v1465, 7
  %v1467 = vsub.s32 %v1464, %v1466
  %v1468 = vrot.slane %v1454, %v1467
  %v1469 = vcombine.high %v1461, %v1461
  %v1470 = vcombine.high %v1468, %v1468
  %v1472 = vunpack.c.l.s4 1966171168
  %v1473 = vunpack.c.0.s8 %v1472
  %v1474 = vlaneseq
  %v1475 = vshrl.u32 %v1474, 7
  %v1476 = vsub.s32 %v1473, %v1475
  %v1477 = vrot.slane %v1461, %v1476
  %v1479 = vunpack.c.l.s4 1966171168
  %v1480 = vunpack.c.0.s8 %v1479
  %v1481 = vlaneseq
  %v1482 = vshrl.u32 %v1481, 7
  %v1483 = vsub.s32 %v1480, %v1482
  %v1484 = vrot.slane %v1468, %v1483
  %v1486 = vunpack.c.l.s4 1966171168
  %v1487 = vunpack.c.0.s8 %v1486
  %v1488 = vlaneseq
  %v1489 = vshrl.u32 %v1488, 7
  %v1490 = vsub.s32 %v1487, %v1489
  %v1491 = vrot.slane %v1469, %v1490
  %v1493 = vunpack.c.l.s4 1966171168
  %v1494 = vunpack.c.0.s8 %v1493
  %v1495 = vlaneseq
  %v1496 = vshrl.u32 %v1495, 7
  %v1497 = vsub.s32 %v1494, %v1496
  %v1498 = vrot.slane %v1470, %v1497
  %v1499 = vcombine.high %v1477, %v1477
  %v1500 = vcombine.high %v1484, %v1484
  %v1501 = vcombine.high %v1491, %v1491
  %v1502 = vcombine.high %v1498, %v1498
  %v1503 = vcombine.high %v1075, %v1075
  %v1505 = vunpack.c.l.s4 1966171168
  %v1506 = vunpack.c.0.s8 %v1505
  %v1507 = vlaneseq
  %v1508 = vshrl.u32 %v1507, 7
  %v1509 = vsub.s32 %v1506, %v1508
  %v1510 = vrot.slane %v1075, %v1509
  %v1512 = vunpack.c.l.s4 1966171168
  %v1513 = vunpack.c.0.s8 %v1512
  %v1514 = vlaneseq
  %v1515 = vshrl.u32 %v1514, 7
  %v1516 = vsub.s32 %v1513, %v1515
  %v1517 = vrot.slane %v1503, %v1516
  %v1518 = vcombine.high %v1510, %v1510
  %v1519 = vcombine.high %v1517, %v1517
  %v1521 = vunpack.c.l.s4 1966171168
  %v1522 = vunpack.c.0.s8 %v1521
  %v1523 = vlaneseq
  %v1524 = vshrl.u32 %v1523, 7
  %v1525 = vsub.s32 %v1522, %v1524
  %v1526 = vrot.slane %v1510, %v1525
  %v1528 = vunpack.c.l.s4 1966171168
  %v1529 = vunpack.c.0.s8 %v1528
  %v1530 = vlaneseq
  %v1531 = vshrl.u32 %v1530, 7
  %v1532 = vsub.s32 %v1529, %v1531
  %v1533 = vrot.slane %v1517, %v1532
  %v1535 = vunpack.c.l.s4 1966171168
  %v1536 = vunpack.c.0.s8 %v1535
  %v1537 = vlaneseq
  %v1538 = vshrl.u32 %v1537, 7
  %v1539 = vsub.s32 %v1536, %v1538
  %v1540 = vrot.slane %v1518, %v1539
  %v1542 = vunpack.c.l.s4 1966171168
  %v1543 = vunpack.c.0.s8 %v1542
  %v1544 = vlaneseq
  %v1545 = vshrl.u32 %v1544, 7
  %v1546 = vsub.s32 %v1543, %v1545
  %v1547 = vrot.slane %v1519, %v1546
  %v1548 = vcombine.high %v1526, %v1526
  %v1549 = vcombine.high %v1533, %v1533
  %v1550 = vcombine.high %v1540, %v1540
  %v1551 = vcombine.high %v1547, %v1547
  %v1552 = vcombine.high %v1078, %v1078
  %v1554 = vunpack.c.l.s4 1966171168
  %v1555 = vunpack.c.0.s8 %v1554
  %v1556 = vlaneseq
  %v1557 = vshrl.u32 %v1556, 7
  %v1558 = vsub.s32 %v1555, %v1557
  %v1559 = vrot.slane %v1078, %v1558
  %v1561 = vunpack.c.l.s4 1966171168
  %v1562 = vunpack.c.0.s8 %v1561
  %v1563 = vlaneseq
  %v1564 = vshrl.u32 %v1563, 7
  %v1565 = vsub.s32 %v1562, %v1564
  %v1566 = vrot.slane %v1552, %v1565
  %v1567 = vcombine.high %v1559, %v1559
  %v1568 = vcombine.high %v1566, %v1566
  %v1570 = vunpack.c.l.s4 1966171168
  %v1571 = vunpack.c.0.s8 %v1570
  %v1572 = vlaneseq
  %v1573 = vshrl.u32 %v1572, 7
  %v1574 = vsub.s32 %v1571, %v1573
  %v1575 = vrot.slane %v1559, %v1574
  %v1577 = vunpack.c.l.s4 1966171168
  %v1578 = vunpack.c.0.s8 %v1577
  %v1579 = vlaneseq
  %v1580 = vshrl.u32 %v1579, 7
  %v1581 = vsub.s32 %v1578, %v1580
  %v1582 = vrot.slane %v1566, %v1581
  %v1584 = vunpack.c.l.s4 1966171168
  %v1585 = vunpack.c.0.s8 %v1584
  %v1586 = vlaneseq
  %v1587 = vshrl.u32 %v1586, 7
  %v1588 = vsub.s32 %v1585, %v1587
  %v1589 = vrot.slane %v1567, %v1588
  %v1591 = vunpack.c.l.s4 1966171168
  %v1592 = vunpack.c.0.s8 %v1591
  %v1593 = vlaneseq
  %v1594 = vshrl.u32 %v1593, 7
  %v1595 = vsub.s32 %v1592, %v1594
  %v1596 = vrot.slane %v1568, %v1595
  %v1597 = vcombine.high %v1575, %v1575
  %v1598 = vcombine.high %v1582, %v1582
  %v1599 = vcombine.high %v1589, %v1589
  %v1600 = vcombine.high %v1596, %v1596
  %v1601 = vcombine.high %v1083, %v1083
  %v1603 = vunpack.c.l.s4 1966171168
  %v1604 = vunpack.c.0.s8 %v1603
  %v1605 = vlaneseq
  %v1606 = vshrl.u32 %v1605, 7
  %v1607 = vsub.s32 %v1604, %v1606
  %v1608 = vrot.slane %v1083, %v1607
  %v1610 = vunpack.c.l.s4 1966171168
  %v1611 = vunpack.c.0.s8 %v1610
  %v1612 = vlaneseq
  %v1613 = vshrl.u32 %v1612, 7
  %v1614 = vsub.s32 %v1611, %v1613
  %v1615 = vrot.slane %v1601, %v1614
  %v1616 = vcombine.high %v1608, %v1608
  %v1617 = vcombine.high %v1615, %v1615
  %v1619 = vunpack.c.l.s4 1966171168
  %v1620 = vunpack.c.0.s8 %v1619
  %v1621 = vlaneseq
  %v1622 = vshrl.u32 %v1621, 7
  %v1623 = vsub.s32 %v1620, %v1622
  %v1624 = vrot.slane %v1608, %v1623
  %v1626 = vunpack.c.l.s4 1966171168
  %v1627 = vunpack.c.0.s8 %v1626
  %v1628 = vlaneseq
  %v1629 = vshrl.u32 %v1628, 7
  %v1630 = vsub.s32 %v1627, %v1629
  %v1631 = vrot.slane %v1615, %v1630
  %v1633 = vunpack.c.l.s4 1966171168
  %v1634 = vunpack.c.0.s8 %v1633
  %v1635 = vlaneseq
  %v1636 = vshrl.u32 %v1635, 7
  %v1637 = vsub.s32 %v1634, %v1636
  %v1638 = vrot.slane %v1616, %v1637
  %v1640 = vunpack.c.l.s4 1966171168
  %v1641 = vunpack.c.0.s8 %v1640
  %v1642 = vlaneseq
  %v1643 = vshrl.u32 %v1642, 7
  %v1644 = vsub.s32 %v1641, %v1643
  %v1645 = vrot.slane %v1617, %v1644
  %v1646 = vcombine.high %v1624, %v1624
  %v1647 = vcombine.high %v1631, %v1631
  %v1648 = vcombine.high %v1638, %v1638
  %v1649 = vcombine.high %v1645, %v1645
  %v1650 = vcombine.high %v1086, %v1086
  %v1652 = vunpack.c.l.s4 1966171168
  %v1653 = vunpack.c.0.s8 %v1652
  %v1654 = vlaneseq
  %v1655 = vshrl.u32 %v1654, 7
  %v1656 = vsub.s32 %v1653, %v1655
  %v1657 = vrot.slane %v1086, %v1656
  %v1659 = vunpack.c.l.s4 1966171168
  %v1660 = vunpack.c.0.s8 %v1659
  %v1661 = vlaneseq
  %v1662 = vshrl.u32 %v1661, 7
  %v1663 = vsub.s32 %v1660, %v1662
  %v1664 = vrot.slane %v1650, %v1663
  %v1665 = vcombine.high %v1657, %v1657
  %v1666 = vcombine.high %v1664, %v1664
  %v1668 = vunpack.c.l.s4 1966171168
  %v1669 = vunpack.c.0.s8 %v1668
  %v1670 = vlaneseq
  %v1671 = vshrl.u32 %v1670, 7
  %v1672 = vsub.s32 %v1669, %v1671
  %v1673 = vrot.slane %v1657, %v1672
  %v1675 = vunpack.c.l.s4 1966171168
  %v1676 = vunpack.c.0.s8 %v1675
  %v1677 = vlaneseq
  %v1678 = vshrl.u32 %v1677, 7
  %v1679 = vsub.s32 %v1676, %v1678
  %v1680 = vrot.slane %v1664, %v1679
  %v1682 = vunpack.c.l.s4 1966171168
  %v1683 = vunpack.c.0.s8 %v1682
  %v1684 = vlaneseq
  %v1685 = vshrl.u32 %v1684, 7
  %v1686 = vsub.s32 %v1683, %v1685
  %v1687 = vrot.slane %v1665, %v1686
  %v1689 = vunpack.c.l.s4 1966171168
  %v1690 = vunpack.c.0.s8 %v1689
  %v1691 = vlaneseq
  %v1692 = vshrl.u32 %v1691, 7
  %v1693 = vsub.s32 %v1690, %v1692
  %v1694 = vrot.slane %v1666, %v1693
  %v1695 = vcombine.high %v1673, %v1673
  %v1696 = vcombine.high %v1680, %v1680
  %v1697 = vcombine.high %v1687, %v1687
  %v1698 = vcombine.high %v1694, %v1694
  %v1699 = vcombine.high %v1091, %v1091
  %v1701 = vunpack.c.l.s4 1966171168
  %v1702 = vunpack.c.0.s8 %v1701
  %v1703 = vlaneseq
  %v1704 = vshrl.u32 %v1703, 7
  %v1705 = vsub.s32 %v1702, %v1704
  %v1706 = vrot.slane %v1091, %v1705
  %v1708 = vunpack.c.l.s4 1966171168
  %v1709 = vunpack.c.0.s8 %v1708
  %v1710 = vlaneseq
  %v1711 = vshrl.u32 %v1710, 7
  %v1712 = vsub.s32 %v1709, %v1711
  %v1713 = vrot.slane %v1699, %v1712
  %v1714 = vcombine.high %v1706, %v1706
  %v1715 = vcombine.high %v1713, %v1713
  %v1717 = vunpack.c.l.s4 1966171168
  %v1718 = vunpack.c.0.s8 %v1717
  %v1719 = vlaneseq
  %v1720 = vshrl.u32 %v1719, 7
  %v1721 = vsub.s32 %v1718, %v1720
  %v1722 = vrot.slane %v1706, %v1721
  %v1724 = vunpack.c.l.s4 1966171168
  %v1725 = vunpack.c.0.s8 %v1724
  %v1726 = vlaneseq
  %v1727 = vshrl.u32 %v1726, 7
  %v1728 = vsub.s32 %v1725, %v1727
  %v1729 = vrot.slane %v1713, %v1728
  %v1731 = vunpack.c.l.s4 1966171168
  %v1732 = vunpack.c.0.s8 %v1731
  %v1733 = vlaneseq
  %v1734 = vshrl.u32 %v1733, 7
  %v1735 = vsub.s32 %v1732, %v1734
  %v1736 = vrot.slane %v1714, %v1735
  %v1738 = vunpack.c.l.s4 1966171168
  %v1739 = vunpack.c.0.s8 %v1738
  %v1740 = vlaneseq
  %v1741 = vshrl.u32 %v1740, 7
  %v1742 = vsub.s32 %v1739, %v1741
  %v1743 = vrot.slane %v1715, %v1742
  %v1744 = vcombine.high %v1722, %v1722
  %v1745 = vcombine.high %v1729, %v1729
  %v1746 = vcombine.high %v1736, %v1736
  %v1747 = vcombine.high %v1743, %v1743
  %v1748 = vcombine.high %v1094, %v1094
  %v1750 = vunpack.c.l.s4 1966171168
  %v1751 = vunpack.c.0.s8 %v1750
  %v1752 = vlaneseq
  %v1753 = vshrl.u32 %v1752, 7
  %v1754 = vsub.s32 %v1751, %v1753
  %v1755 = vrot.slane %v1094, %v1754
  %v1757 = vunpack.c.l.s4 1966171168
  %v1758 = vunpack.c.0.s8 %v1757
  %v1759 = vlaneseq
  %v1760 = vshrl.u32 %v1759, 7
  %v1761 = vsub.s32 %v1758, %v1760
  %v1762 = vrot.slane %v1748, %v1761
  %v1763 = vcombine.high %v1755, %v1755
  %v1764 = vcombine.high %v1762, %v1762
  %v1766 = vunpack.c.l.s4 1966171168
  %v1767 = vunpack.c.0.s8 %v1766
  %v1768 = vlaneseq
  %v1769 = vshrl.u32 %v1768, 7
  %v1770 = vsub.s32 %v1767, %v1769
  %v1771 = vrot.slane %v1755, %v1770
  %v1773 = vunpack.c.l.s4 1966171168
  %v1774 = vunpack.c.0.s8 %v1773
  %v1775 = vlaneseq
  %v1776 = vshrl.u32 %v1775, 7
  %v1777 = vsub.s32 %v1774, %v1776
  %v1778 = vrot.slane %v1762, %v1777
  %v1780 = vunpack.c.l.s4 1966171168
  %v1781 = vunpack.c.0.s8 %v1780
  %v1782 = vlaneseq
  %v1783 = vshrl.u32 %v1782, 7
  %v1784 = vsub.s32 %v1781, %v1783
  %v1785 = vrot.slane %v1763, %v1784
  %v1787 = vunpack.c.l.s4 1966171168
  %v1788 = vunpack.c.0.s8 %v1787
  %v1789 = vlaneseq
  %v1790 = vshrl.u32 %v1789, 7
  %v1791 = vsub.s32 %v1788, %v1790
  %v1792 = vrot.slane %v1764, %v1791
  %v1793 = vcombine.high %v1771, %v1771
  %v1794 = vcombine.high %v1778, %v1778
  %v1795 = vcombine.high %v1785, %v1785
  %v1796 = vcombine.high %v1792, %v1792
  %v1797 = vcombine.low %v1134, %v1148
  %v1798 = vcombine.low %v1156, %v1158
  %v1799 = vcombine.low %v1141, %v1155
  %v1801 = vunpack.c.l.s4 1966171168
  %v1802 = vunpack.c.0.s8 %v1801
  %v1803 = vlaneseq
  %v1804 = vshrl.u32 %v1803, 7
  %v1805 = vsub.s32 %v1802, %v1804
  %v1806 = vrot.slane %v1797, %v1805
  %v1808 = vunpack.c.l.s4 1966171168
  %v1809 = vunpack.c.0.s8 %v1808
  %v1810 = vlaneseq
  %v1811 = vshrl.u32 %v1810, 7
  %v1812 = vsub.s32 %v1809, %v1811
  %v1813 = vrot.slane %v1798, %v1812
  %v1815 = vunpack.c.l.s4 1966171168
  %v1816 = vunpack.c.0.s8 %v1815
  %v1817 = vlaneseq
  %v1818 = vshrl.u32 %v1817, 7
  %v1819 = vsub.s32 %v1816, %v1818
  %v1820 = vrot.slane %v1799, %v1819
  %v1822 = vunpack.c.l.s4 1966171168
  %v1823 = vunpack.c.0.s8 %v1822
  %v1824 = vlaneseq
  %v1825 = vshrl.u32 %v1824, 7
  %v1826 = vsub.s32 %v1823, %v1825
  %v1827 = vrot.slane %v1157, %v1826
  %v1828 = vcombine.low %v1806, %v1813
  %v1829 = vcombine.low %v1820, %v1827
  %v1831 = vunpack.c.l.s4 1966171168
  %v1832 = vunpack.c.0.s8 %v1831
  %v1833 = vlaneseq
  %v1834 = vshrl.u32 %v1833, 7
  %v1835 = vsub.s32 %v1832, %v1834
  %v1836 = vrot.slane %v1828, %v1835
  %v1838 = vunpack.c.l.s4 1966171168
  %v1839 = vunpack.c.0.s8 %v1838
  %v1840 = vlaneseq
  %v1841 = vshrl.u32 %v1840, 7
  %v1842 = vsub.s32 %v1839, %v1841
  %v1843 = vrot.slane %v1829, %v1842
  %v1844 = vcombine.low %v1836, %v1843
  %v1845 = vcombine.low %v1159, %v1183
  %v1846 = vcombine.low %v1197, %v1205
  %v1847 = vcombine.low %v1207, %v1190
  %v1849 = vunpack.c.l.s4 1966171168
  %v1850 = vunpack.c.0.s8 %v1849
  %v1851 = vlaneseq
  %v1852 = vshrl.u32 %v1851, 7
  %v1853 = vsub.s32 %v1850, %v1852
  %v1854 = vrot.slane %v1845, %v1853
  %v1856 = vunpack.c.l.s4 1966171168
  %v1857 = vunpack.c.0.s8 %v1856
  %v1858 = vlaneseq
  %v1859 = vshrl.u32 %v1858, 7
  %v1860 = vsub.s32 %v1857, %v1859
  %v1861 = vrot.slane %v1846, %v1860
  %v1863 = vunpack.c.l.s4 1966171168
  %v1864 = vunpack.c.0.s8 %v1863
  %v1865 = vlaneseq
  %v1866 = vshrl.u32 %v1865, 7
  %v1867 = vsub.s32 %v1864, %v1866
  %v1868 = vrot.slane %v1847, %v1867
  %v1870 = vunpack.c.l.s4 1966171168
  %v1871 = vunpack.c.0.s8 %v1870
  %v1872 = vlaneseq
  %v1873 = vshrl.u32 %v1872, 7
  %v1874 = vsub.s32 %v1871, %v1873
  %v1875 = vrot.slane %v1204, %v1874
  %v1876 = vcombine.low %v1854, %v1861
  %v1877 = vcombine.low %v1868, %v1875
  %v1879 = vunpack.c.l.s4 1966171168
  %v1880 = vunpack.c.0.s8 %v1879
  %v1881 = vlaneseq
  %v1882 = vshrl.u32 %v1881, 7
  %v1883 = vsub.s32 %v1880, %v1882
  %v1884 = vrot.slane %v1876, %v1883
  %v1886 = vunpack.c.l.s4 1966171168
  %v1887 = vunpack.c.0.s8 %v1886
  %v1888 = vlaneseq
  %v1889 = vshrl.u32 %v1888, 7
  %v1890 = vsub.s32 %v1887, %v1889
  %v1891 = vrot.slane %v1877, %v1890
  %v1892 = vcombine.low %v1884, %v1891
  %v1893 = vcombine.low %v1206, %v1208
  %v1894 = vcombine.low %v1232, %v1246
  %v1895 = vcombine.low %v1254, %v1256
  %v1897 = vunpack.c.l.s4 1966171168
  %v1898 = vunpack.c.0.s8 %v1897
  %v1899 = vlaneseq
  %v1900 = vshrl.u32 %v1899, 7
  %v1901 = vsub.s32 %v1898, %v1900
  %v1902 = vrot.slane %v1893, %v1901
  %v1904 = vunpack.c.l.s4 1966171168
  %v1905 = vunpack.c.0.s8 %v1904
  %v1906 = vlaneseq
  %v1907 = vshrl.u32 %v1906, 7
  %v1908 = vsub.s32 %v1905, %v1907
  %v1909 = vrot.slane %v1894, %v1908
  %v1911 = vunpack.c.l.s4 1966171168
  %v1912 = vunpack.c.0.s8 %v1911
  %v1913 = vlaneseq
  %v1914 = vshrl.u32 %v1913, 7
  %v1915 = vsub.s32 %v1912, %v1914
  %v1916 = vrot.slane %v1895, %v1915
  %v1918 = vunpack.c.l.s4 1966171168
  %v1919 = vunpack.c.0.s8 %v1918
  %v1920 = vlaneseq
  %v1921 = vshrl.u32 %v1920, 7
  %v1922 = vsub.s32 %v1919, %v1921
  %v1923 = vrot.slane %v1239, %v1922
  %v1924 = vcombine.low %v1902, %v1909
  %v1925 = vcombine.low %v1916, %v1923
  %v1927 = vunpack.c.l.s4 1966171168
  %v1928 = vunpack.c.0.s8 %v1927
  %v1929 = vlaneseq
  %v1930 = vshrl.u32 %v1929, 7
  %v1931 = vsub.s32 %v1928, %v1930
  %v1932 = vrot.slane %v1924, %v1931
  %v1934 = vunpack.c.l.s4 1966171168
  %v1935 = vunpack.c.0.s8 %v1934
  %v1936 = vlaneseq
  %v1937 = vshrl.u32 %v1936, 7
  %v1938 = vsub.s32 %v1935, %v1937
  %v1939 = vrot.slane %v1925, %v1938
  %v1940 = vcombine.low %v1932, %v1939
  %v1941 = vcombine.low %v1253, %v1255
  %v1942 = vcombine.low %v1257, %v1281
  %v1943 = vcombine.low %v1295, %v1303
  %v1945 = vunpack.c.l.s4 1966171168
  %v1946 = vunpack.c.0.s8 %v1945
  %v1947 = vlaneseq
  %v1948 = vshrl.u32 %v1947, 7
  %v1949 = vsub.s32 %v1946, %v1948
  %v1950 = vrot.slane %v1941, %v1949
  %v1952 = vunpack.c.l.s4 1966171168
  %v1953 = vunpack.c.0.s8 %v1952
  %v1954 = vlaneseq
  %v1955 = vshrl.u32 %v1954, 7
  %v1956 = vsub.s32 %v1953, %v1955
  %v1957 = vrot.slane %v1942, %v1956
  %v1959 = vunpack.c.l.s4 1966171168
  %v1960 = vunpack.c.0.s8 %v1959
  %v1961 = vlaneseq
  %v1962 = vshrl.u32 %v1961, 7
  %v1963 = vsub.s32 %v1960, %v1962
  %v1964 = vrot.slane %v1943, %v1963
  %v1966 = vunpack.c.l.s4 1966171168
  %v1967 = vunpack.c.0.s8 %v1966
  %v1968 = vlaneseq
  %v1969 = vshrl.u32 %v1968, 7
  %v1970 = vsub.s32 %v1967, %v1969
  %v1971 = vrot.slane %v1305, %v1970
  %v1972 = vcombine.low %v1950, %v1957
  %v1973 = vcombine.low %v1964, %v1971
  %v1975 = vunpack.c.l.s4 1966171168
  %v1976 = vunpack.c.0.s8 %v1975
  %v1977 = vlaneseq
  %v1978 = vshrl.u32 %v1977, 7
  %v1979 = vsub.s32 %v1976, %v1978
  %v1980 = vrot.slane %v1972, %v1979
  %v1982 = vunpack.c.l.s4 1966171168
  %v1983 = vunpack.c.0.s8 %v1982
  %v1984 = vlaneseq
  %v1985 = vshrl.u32 %v1984, 7
  %v1986 = vsub.s32 %v1983, %v1985
  %v1987 = vrot.slane %v1973, %v1986
  %v1988 = vcombine.low %v1980, %v1987
  %v1989 = vcombine.low %v1288, %v1302
  %v1990 = vcombine.low %v1304, %v1306
  %v1991 = vcombine.low %v1330, %v1344
  %v1993 = vunpack.c.l.s4 1966171168
  %v1994 = vunpack.c.0.s8 %v1993
  %v1995 = vlaneseq
  %v1996 = vshrl.u32 %v1995, 7
  %v1997 = vsub.s32 %v1994, %v1996
  %v1998 = vrot.slane %v1989, %v1997
  %v2000 = vunpack.c.l.s4 1966171168
  %v2001 = vunpack.c.0.s8 %v2000
  %v2002 = vlaneseq
  %v2003 = vshrl.u32 %v2002, 7
  %v2004 = vsub.s32 %v2001, %v2003
  %v2005 = vrot.slane %v1990, %v2004
  %v2007 = vunpack.c.l.s4 1966171168
  %v2008 = vunpack.c.0.s8 %v2007
  %v2009 = vlaneseq
  %v2010 = vshrl.u32 %v2009, 7
  %v2011 = vsub.s32 %v2008, %v2010
  %v2012 = vrot.slane %v1991, %v2011
  %v2014 = vunpack.c.l.s4 1966171168
  %v2015 = vunpack.c.0.s8 %v2014
  %v2016 = vlaneseq
  %v2017 = vshrl.u32 %v2016, 7
  %v2018 = vsub.s32 %v2015, %v2017
  %v2019 = vrot.slane %v1352, %v2018
  %v2020 = vcombine.low %v1998, %v2005
  %v2021 = vcombine.low %v2012, %v2019
  %v2023 = vunpack.c.l.s4 1966171168
  %v2024 = vunpack.c.0.s8 %v2023
  %v2025 = vlaneseq
  %v2026 = vshrl.u32 %v2025, 7
  %v2027 = vsub.s32 %v2024, %v2026
  %v2028 = vrot.slane %v2020, %v2027
  %v2030 = vunpack.c.l.s4 1966171168
  %v2031 = vunpack.c.0.s8 %v2030
  %v2032 = vlaneseq
  %v2033 = vshrl.u32 %v2032, 7
  %v2034 = vsub.s32 %v2031, %v2033
  %v2035 = vrot.slane %v2021, %v2034
  %v2036 = vcombine.low %v2028, %v2035
  %v2037 = vcombine.low %v1354, %v1337
  %v2038 = vcombine.low %v1351, %v1353
  %v2039 = vcombine.low %v1355, %v1379
  %v2041 = vunpack.c.l.s4 1966171168
  %v2042 = vunpack.c.0.s8 %v2041
  %v2043 = vlaneseq
  %v2044 = vshrl.u32 %v2043, 7
  %v2045 = vsub.s32 %v2042, %v2044
  %v2046 = vrot.slane %v2037, %v2045
  %v2048 = vunpack.c.l.s4 1966171168
  %v2049 = vunpack.c.0.s8 %v2048
  %v2050 = vlaneseq
  %v2051 = vshrl.u32 %v2050, 7
  %v2052 = vsub.s32 %v2049, %v2051
  %v2053 = vrot.slane %v2038, %v2052
  %v2055 = vunpack.c.l.s4 1966171168
  %v2056 = vunpack.c.0.s8 %v2055
  %v2057 = vlaneseq
  %v2058 = vshrl.u32 %v2057, 7
  %v2059 = vsub.s32 %v2056, %v2058
  %v2060 = vrot.slane %v2039, %v2059
  %v2062 = vunpack.c.l.s4 1966171168
  %v2063 = vunpack.c.0.s8 %v2062
  %v2064 = vlaneseq
  %v2065 = vshrl.u32 %v2064, 7
  %v2066 = vsub.s32 %v2063, %v2065
  %v2067 = vrot.slane %v1393, %v2066
  %v2068 = vcombine.low %v2046, %v2053
  %v2069 = vcombine.low %v2060, %v2067
  %v2071 = vunpack.c.l.s4 1966171168
  %v2072 = vunpack.c.0.s8 %v2071
  %v2073 = vlaneseq
  %v2074 = vshrl.u32 %v2073, 7
  %v2075 = vsub.s32 %v2072, %v2074
  %v2076 = vrot.slane %v2068, %v2075
  %v2078 = vunpack.c.l.s4 1966171168
  %v2079 = vunpack.c.0.s8 %v2078
  %v2080 = vlaneseq
  %v2081 = vshrl.u32 %v2080, 7
  %v2082 = vsub.s32 %v2079, %v2081
  %v2083 = vrot.slane %v2069, %v2082
  %v2084 = vcombine.low %v2076, %v2083
  %v2085 = vcombine.low %v1401, %v1403
  %v2086 = vcombine.low %v1386, %v1400
  %v2087 = vcombine.low %v1402, %v1404
  %v2089 = vunpack.c.l.s4 1966171168
  %v2090 = vunpack.c.0.s8 %v2089
  %v2091 = vlaneseq
  %v2092 = vshrl.u32 %v2091, 7
  %v2093 = vsub.s32 %v2090, %v2092
  %v2094 = vrot.slane %v2085, %v2093
  %v2096 = vunpack.c.l.s4 1966171168
  %v2097 = vunpack.c.0.s8 %v2096
  %v2098 = vlaneseq
  %v2099 = vshrl.u32 %v2098, 7
  %v2100 = vsub.s32 %v2097, %v2099
  %v2101 = vrot.slane %v2086, %v2100
  %v2103 = vunpack.c.l.s4 1966171168
  %v2104 = vunpack.c.0.s8 %v2103
  %v2105 = vlaneseq
  %v2106 = vshrl.u32 %v2105, 7
  %v2107 = vsub.s32 %v2104, %v2106
  %v2108 = vrot.slane %v2087, %v2107
  %v2110 = vunpack.c.l.s4 1966171168
  %v2111 = vunpack.c.0.s8 %v2110
  %v2112 = vlaneseq
  %v2113 = vshrl.u32 %v2112, 7
  %v2114 = vsub.s32 %v2111, %v2113
  %v2115 = vrot.slane %v1428, %v2114
  %v2116 = vcombine.low %v2094, %v2101
  %v2117 = vcombine.low %v2108, %v2115
  %v2119 = vunpack.c.l.s4 1966171168
  %v2120 = vunpack.c.0.s8 %v2119
  %v2121 = vlaneseq
  %v2122 = vshrl.u32 %v2121, 7
  %v2123 = vsub.s32 %v2120, %v2122
  %v2124 = vrot.slane %v2116, %v2123
  %v2126 = vunpack.c.l.s4 1966171168
  %v2127 = vunpack.c.0.s8 %v2126
  %v2128 = vlaneseq
  %v2129 = vshrl.u32 %v2128, 7
  %v2130 = vsub.s32 %v2127, %v2129
  %v2131 = vrot.slane %v2117, %v2130
  %v2132 = vcombine.low %v2124, %v2131
  %v2133 = vcombine.low %v1442, %v1450
  %v2134 = vcombine.low %v1452, %v1435
  %v2135 = vcombine.low %v1449, %v1451
  %v2137 = vunpack.c.l.s4 1966171168
  %v2138 = vunpack.c.0.s8 %v2137
  %v2139 = vlaneseq
  %v2140 = vshrl.u32 %v2139, 7
  %v2141 = vsub.s32 %v2138, %v2140
  %v2142 = vrot.slane %v2133, %v2141
  %v2144 = vunpack.c.l.s4 1966171168
  %v2145 = vunpack.c.0.s8 %v2144
  %v2146 = vlaneseq
  %v2147 = vshrl.u32 %v2146, 7
  %v2148 = vsub.s32 %v2145, %v2147
  %v2149 = vrot.slane %v2134, %v2148
  %v2151 = vunpack.c.l.s4 1966171168
  %v2152 = vunpack.c.0.s8 %v2151
  %v2153 = vlaneseq
  %v2154 = vshrl.u32 %v2153, 7
  %v2155 = vsub.s32 %v2152, %v2154
  %v2156 = vrot.slane %v2135, %v2155
  %v2158 = vunpack.c.l.s4 1966171168
  %v2159 = vunpack.c.0.s8 %v2158
  %v2160 = vlaneseq
  %v2161 = vshrl.u32 %v2160, 7
  %v2162 = vsub.s32 %v2159, %v2161
  %v2163 = vrot.slane %v1453, %v2162
  %v2164 = vcombine.low %v2142, %v2149
  %v2165 = vcombine.low %v2156, %v2163
  %v2167 = vunpack.c.l.s4 1966171168
  %v2168 = vunpack.c.0.s8 %v2167
  %v2169 = vlaneseq
  %v2170 = vshrl.u32 %v2169, 7
  %v2171 = vsub.s32 %v2168, %v2170
  %v2172 = vrot.slane %v2164, %v2171
  %v2174 = vunpack.c.l.s4 1966171168
  %v2175 = vunpack.c.0.s8 %v2174
  %v2176 = vlaneseq
  %v2177 = vshrl.u32 %v2176, 7
  %v2178 = vsub.s32 %v2175, %v2177
  %v2179 = vrot.slane %v2165, %v2178
  %v2180 = vcombine.low %v2172, %v2179
  %v2181 = vcombine.low %v1477, %v1491
  %v2182 = vcombine.low %v1499, %v1501
  %v2183 = vcombine.low %v1484, %v1498
  %v2185 = vunpack.c.l.s4 1966171168
  %v2186 = vunpack.c.0.s8 %v2185
  %v2187 = vlaneseq
  %v2188 = vshrl.u32 %v2187, 7
  %v2189 = vsub.s32 %v2186, %v2188
  %v2190 = vrot.slane %v2181, %v2189
  %v2192 = vunpack.c.l.s4 1966171168
  %v2193 = vunpack.c.0.s8 %v2192
  %v2194 = vlaneseq
  %v2195 = vshrl.u32 %v2194, 7
  %v2196 = vsub.s32 %v2193, %v2195
  %v2197 = vrot.slane %v2182, %v2196
  %v2199 = vunpack.c.l.s4 1966171168
  %v2200 = vunpack.c.0.s8 %v2199
  %v2201 = vlaneseq
  %v2202 = vshrl.u32 %v2201, 7
  %v2203 = vsub.s32 %v2200, %v2202
  %v2204 = vrot.slane %v2183, %v2203
  %v2206 = vunpack.c.l.s4 1966171168
  %v2207 = vunpack.c.0.s8 %v2206
  %v2208 = vlaneseq
  %v2209 = vshrl.u32 %v2208, 7
  %v2210 = vsub.s32 %v2207, %v2209
  %v2211 = vrot.slane %v1500, %v2210
  %v2212 = vcombine.low %v2190, %v2197
  %v2213 = vcombine.low %v2204, %v2211
  %v2215 = vunpack.c.l.s4 1966171168
  %v2216 = vunpack.c.0.s8 %v2215
  %v2217 = vlaneseq
  %v2218 = vshrl.u32 %v2217, 7
  %v2219 = vsub.s32 %v2216, %v2218
  %v2220 = vrot.slane %v2212, %v2219
  %v2222 = vunpack.c.l.s4 1966171168
  %v2223 = vunpack.c.0.s8 %v2222
  %v2224 = vlaneseq
  %v2225 = vshrl.u32 %v2224, 7
  %v2226 = vsub.s32 %v2223, %v2225
  %v2227 = vrot.slane %v2213, %v2226
  %v2228 = vcombine.low %v2220, %v2227
  %v2229 = vcombine.low %v1502, %v1526
  %v2230 = vcombine.low %v1540, %v1548
  %v2231 = vcombine.low %v1550, %v1533
  %v2233 = vunpack.c.l.s4 1966171168
  %v2234 = vunpack.c.0.s8 %v2233
  %v2235 = vlaneseq
  %v2236 = vshrl.u32 %v2235, 7
  %v2237 = vsub.s32 %v2234, %v2236
  %v2238 = vrot.slane %v2229, %v2237
  %v2240 = vunpack.c.l.s4 1966171168
  %v2241 = vunpack.c.0.s8 %v2240
  %v2242 = vlaneseq
  %v2243 = vshrl.u32 %v2242, 7
  %v2244 = vsub.s32 %v2241, %v2243
  %v2245 = vrot.slane %v2230, %v2244
  %v2247 = vunpack.c.l.s4 1966171168
  %v2248 = vunpack.c.0.s8 %v2247
  %v2249 = vlaneseq
  %v2250 = vshrl.u32 %v2249, 7
  %v2251 = vsub.s32 %v2248, %v2250
  %v2252 = vrot.slane %v2231, %v2251
  %v2254 = vunpack.c.l.s4 1966171168
  %v2255 = vunpack.c.0.s8 %v2254
  %v2256 = vlaneseq
  %v2257 = vshrl.u32 %v2256, 7
  %v2258 = vsub.s32 %v2255, %v2257
  %v2259 = vrot.slane %v1547, %v2258
  %v2260 = vcombine.low %v2238, %v2245
  %v2261 = vcombine.low %v2252, %v2259
  %v2263 = vunpack.c.l.s4 1966171168
  %v2264 = vunpack.c.0.s8 %v2263
  %v2265 = vlaneseq
  %v2266 = vshrl.u32 %v2265, 7
  %v2267 = vsub.s32 %v2264, %v2266
  %v2268 = vrot.slane %v2260, %v2267
  %v2270 = vunpack.c.l.s4 1966171168
  %v2271 = vunpack.c.0.s8 %v2270
  %v2272 = vlaneseq
  %v2273 = vshrl.u32 %v2272, 7
  %v2274 = vsub.s32 %v2271, %v2273
  %v2275 = vrot.slane %v2261, %v2274
  %v2276 = vcombine.low %v2268, %v2275
  %v2277 = vcombine.low %v1549, %v1551
  %v2278 = vcombine.low %v1575, %v1589
  %v2279 = vcombine.low %v1597, %v1599
  %v2281 = vunpack.c.l.s4 1966171168
  %v2282 = vunpack.c.0.s8 %v2281
  %v2283 = vlaneseq
  %v2284 = vshrl.u32 %v2283, 7
  %v2285 = vsub.s32 %v2282, %v2284
  %v2286 = vrot.slane %v2277, %v2285
  %v2288 = vunpack.c.l.s4 1966171168
  %v2289 = vunpack.c.0.s8 %v2288
  %v2290 = vlaneseq
  %v2291 = vshrl.u32 %v2290, 7
  %v2292 = vsub.s32 %v2289, %v2291
  %v2293 = vrot.slane %v2278, %v2292
  %v2295 = vunpack.c.l.s4 1966171168
  %v2296 = vunpack.c.0.s8 %v2295
  %v2297 = vlaneseq
  %v2298 = vshrl.u32 %v2297, 7
  %v2299 = vsub.s32 %v2296, %v2298
  %v2300 = vrot.slane %v2279, %v2299
  %v2302 = vunpack.c.l.s4 1966171168
  %v2303 = vunpack.c.0.s8 %v2302
  %v2304 = vlaneseq
  %v2305 = vshrl.u32 %v2304, 7
  %v2306 = vsub.s32 %v2303, %v2305
  %v2307 = vrot.slane %v1582, %v2306
  %v2308 = vcombine.low %v2286, %v2293
  %v2309 = vcombine.low %v2300, %v2307
  %v2311 = vunpack.c.l.s4 1966171168
  %v2312 = vunpack.c.0.s8 %v2311
  %v2313 = vlaneseq
  %v2314 = vshrl.u32 %v2313, 7
  %v2315 = vsub.s32 %v2312, %v2314
  %v2316 = vrot.slane %v2308, %v2315
  %v2318 = vunpack.c.l.s4 1966171168
  %v2319 = vunpack.c.0.s8 %v2318
  %v2320 = vlaneseq
  %v2321 = vshrl.u32 %v2320, 7
  %v2322 = vsub.s32 %v2319, %v2321
  %v2323 = vrot.slane %v2309, %v2322
  %v2324 = vcombine.low %v2316, %v2323
  %v2325 = vcombine.low %v1596, %v1598
  %v2326 = vcombine.low %v1600, %v1624
  %v2327 = vcombine.low %v1638, %v1646
  %v2329 = vunpack.c.l.s4 1966171168
  %v2330 = vunpack.c.0.s8 %v2329
  %v2331 = vlaneseq
  %v2332 = vshrl.u32 %v2331, 7
  %v2333 = vsub.s32 %v2330, %v2332
  %v2334 = vrot.slane %v2325, %v2333
  %v2336 = vunpack.c.l.s4 1966171168
  %v2337 = vunpack.c.0.s8 %v2336
  %v2338 = vlaneseq
  %v2339 = vshrl.u32 %v2338, 7
  %v2340 = vsub.s32 %v2337, %v2339
  %v2341 = vrot.slane %v2326, %v2340
  %v2343 = vunpack.c.l.s4 1966171168
  %v2344 = vunpack.c.0.s8 %v2343
  %v2345 = vlaneseq
  %v2346 = vshrl.u32 %v2345, 7
  %v2347 = vsub.s32 %v2344, %v2346
  %v2348 = vrot.slane %v2327, %v2347
  %v2350 = vunpack.c.l.s4 1966171168
  %v2351 = vunpack.c.0.s8 %v2350
  %v2352 = vlaneseq
  %v2353 = vshrl.u32 %v2352, 7
  %v2354 = vsub.s32 %v2351, %v2353
  %v2355 = vrot.slane %v1648, %v2354
  %v2356 = vcombine.low %v2334, %v2341
  %v2357 = vcombine.low %v2348, %v2355
  %v2359 = vunpack.c.l.s4 1966171168
  %v2360 = vunpack.c.0.s8 %v2359
  %v2361 = vlaneseq
  %v2362 = vshrl.u32 %v2361, 7
  %v2363 = vsub.s32 %v2360, %v2362
  %v2364 = vrot.slane %v2356, %v2363
  %v2366 = vunpack.c.l.s4 1966171168
  %v2367 = vunpack.c.0.s8 %v2366
  %v2368 = vlaneseq
  %v2369 = vshrl.u32 %v2368, 7
  %v2370 = vsub.s32 %v2367, %v2369
  %v2371 = vrot.slane %v2357, %v2370
  %v2372 = vcombine.low %v2364, %v2371
  %v2373 = vcombine.low %v1631, %v1645
  %v2374 = vcombine.low %v1647, %v1649
  %v2375 = vcombine.low %v1673, %v1687
  %v2377 = vunpack.c.l.s4 1966171168
  %v2378 = vunpack.c.0.s8 %v2377
  %v2379 = vlaneseq
  %v2380 = vshrl.u32 %v2379, 7
  %v2381 = vsub.s32 %v2378, %v2380
  %v2382 = vrot.slane %v2373, %v2381
  %v2384 = vunpack.c.l.s4 1966171168
  %v2385 = vunpack.c.0.s8 %v2384
  %v2386 = vlaneseq
  %v2387 = vshrl.u32 %v2386, 7
  %v2388 = vsub.s32 %v2385, %v2387
  %v2389 = vrot.slane %v2374, %v2388
  %v2391 = vunpack.c.l.s4 1966171168
  %v2392 = vunpack.c.0.s8 %v2391
  %v2393 = vlaneseq
  %v2394 = vshrl.u32 %v2393, 7
  %v2395 = vsub.s32 %v2392, %v2394
  %v2396 = vrot.slane %v2375, %v2395
  %v2398 = vunpack.c.l.s4 1966171168
  %v2399 = vunpack.c.0.s8 %v2398
  %v2400 = vlaneseq
  %v2401 = vshrl.u32 %v2400, 7
  %v2402 = vsub.s32 %v2399, %v2401
  %v2403 = vrot.slane %v1695, %v2402
  %v2404 = vcombine.low %v2382, %v2389
  %v2405 = vcombine.low %v2396, %v2403
  %v2407 = vunpack.c.l.s4 1966171168
  %v2408 = vunpack.c.0.s8 %v2407
  %v2409 = vlaneseq
  %v2410 = vshrl.u32 %v2409, 7
  %v2411 = vsub.s32 %v2408, %v2410
  %v2412 = vrot.slane %v2404, %v2411
  %v2414 = vunpack.c.l.s4 1966171168
  %v2415 = vunpack.c.0.s8 %v2414
  %v2416 = vlaneseq
  %v2417 = vshrl.u32 %v2416, 7
  %v2418 = vsub.s32 %v2415, %v2417
  %v2419 = vrot.slane %v2405, %v2418
  %v2420 = vcombine.low %v2412, %v2419
  %v2421 = vcombine.low %v1697, %v1680
  %v2422 = vcombine.low %v1694, %v1696
  %v2423 = vcombine.low %v1698, %v1722
  %v2425 = vunpack.c.l.s4 1966171168
  %v2426 = vunpack.c.0.s8 %v2425
  %v2427 = vlaneseq
  %v2428 = vshrl.u32 %v2427, 7
  %v2429 = vsub.s32 %v2426, %v2428
  %v2430 = vrot.slane %v2421, %v2429
  %v2432 = vunpack.c.l.s4 1966171168
  %v2433 = vunpack.c.0.s8 %v2432
  %v2434 = vlaneseq
  %v2435 = vshrl.u32 %v2434, 7
  %v2436 = vsub.s32 %v2433, %v2435
  %v2437 = vrot.slane %v2422, %v2436
  %v2439 = vunpack.c.l.s4 1966171168
  %v2440 = vunpack.c.0.s8 %v2439
  %v2441 = vlaneseq
  %v2442 = vshrl.u32 %v2441, 7
  %v2443 = vsub.s32 %v2440, %v2442
  %v2444 = vrot.slane %v2423, %v2443
  %v2446 = vunpack.c.l.s4 1966171168
  %v2447 = vunpack.c.0.s8 %v2446
  %v2448 = vlaneseq
  %v2449 = vshrl.u32 %v2448, 7
  %v2450 = vsub.s32 %v2447, %v2449
  %v2451 = vrot.slane %v1736, %v2450
  %v2452 = vcombine.low %v2430, %v2437
  %v2453 = vcombine.low %v2444, %v2451
  %v2455 = vunpack.c.l.s4 1966171168
  %v2456 = vunpack.c.0.s8 %v2455
  %v2457 = vlaneseq
  %v2458 = vshrl.u32 %v2457, 7
  %v2459 = vsub.s32 %v2456, %v2458
  %v2460 = vrot.slane %v2452, %v2459
  %v2462 = vunpack.c.l.s4 1966171168
  %v2463 = vunpack.c.0.s8 %v2462
  %v2464 = vlaneseq
  %v2465 = vshrl.u32 %v2464, 7
  %v2466 = vsub.s32 %v2463, %v2465
  %v2467 = vrot.slane %v2453, %v2466
  %v2468 = vcombine.low %v2460, %v2467
  %v2469 = vcombine.low %v1744, %v1746
  %v2470 = vcombine.low %v1729, %v1743
  %v2471 = vcombine.low %v1745, %v1747
  %v2473 = vunpack.c.l.s4 1966171168
  %v2474 = vunpack.c.0.s8 %v2473
  %v2475 = vlaneseq
  %v2476 = vshrl.u32 %v2475, 7
  %v2477 = vsub.s32 %v2474, %v2476
  %v2478 = vrot.slane %v2469, %v2477
  %v2480 = vunpack.c.l.s4 1966171168
  %v2481 = vunpack.c.0.s8 %v2480
  %v2482 = vlaneseq
  %v2483 = vshrl.u32 %v2482, 7
  %v2484 = vsub.s32 %v2481, %v2483
  %v2485 = vrot.slane %v2470, %v2484
  %v2487 = vunpack.c.l.s4 1966171168
  %v2488 = vunpack.c.0.s8 %v2487
  %v2489 = vlaneseq
  %v2490 = vshrl.u32 %v2489, 7
  %v2491 = vsub.s32 %v2488, %v2490
  %v2492 = vrot.slane %v2471, %v2491
  %v2494 = vunpack.c.l.s4 1966171168
  %v2495 = vunpack.c.0.s8 %v2494
  %v2496 = vlaneseq
  %v2497 = vshrl.u32 %v2496, 7
  %v2498 = vsub.s32 %v2495, %v2497
  %v2499 = vrot.slane %v1771, %v2498
  %v2500 = vcombine.low %v2478, %v2485
  %v2501 = vcombine.low %v2492, %v2499
  %v2503 = vunpack.c.l.s4 1966171168
  %v2504 = vunpack.c.0.s8 %v2503
  %v2505 = vlaneseq
  %v2506 = vshrl.u32 %v2505, 7
  %v2507 = vsub.s32 %v2504, %v2506
  %v2508 = vrot.slane %v2500, %v2507
  %v2510 = vunpack.c.l.s4 1966171168
  %v2511 = vunpack.c.0.s8 %v2510
  %v2512 = vlaneseq
  %v2513 = vshrl.u32 %v2512, 7
  %v2514 = vsub.s32 %v2511, %v2513
  %v2515 = vrot.slane %v2501, %v2514
  %v2516 = vcombine.low %v2508, %v2515
  %v2517 = vcombine.low %v1785, %v1793
  %v2518 = vcombine.low %v1795, %v1778
  %v2519 = vcombine.low %v1792, %v1794
  %v2521 = vunpack.c.l.s4 1966171168
  %v2522 = vunpack.c.0.s8 %v2521
  %v2523 = vlaneseq
  %v2524 = vshrl.u32 %v2523, 7
  %v2525 = vsub.s32 %v2522, %v2524
  %v2526 = vrot.slane %v2517, %v2525
  %v2528 = vunpack.c.l.s4 1966171168
  %v2529 = vunpack.c.0.s8 %v2528
  %v2530 = vlaneseq
  %v2531 = vshrl.u32 %v2530, 7
  %v2532 = vsub.s32 %v2529, %v2531
  %v2533 = vrot.slane %v2518, %v2532
  %v2535 = vunpack.c.l.s4 1966171168
  %v2536 = vunpack.c.0.s8 %v2535
  %v2537 = vlaneseq
  %v2538 = vshrl.u32 %v2537, 7
  %v2539 = vsub.s32 %v2536, %v2538
  %v2540 = vrot.slane %v2519, %v2539
  %v2542 = vunpack.c.l.s4 1966171168
  %v2543 = vunpack.c.0.s8 %v2542
  %v2544 = vlaneseq
  %v2545 = vshrl.u32 %v2544, 7
  %v2546 = vsub.s32 %v2543, %v2545
  %v2547 = vrot.slane %v1796, %v2546
  %v2548 = vcombine.low %v2526, %v2533
  %v2549 = vcombine.low %v2540, %v2547
  %v2551 = vunpack.c.l.s4 1966171168
  %v2552 = vunpack.c.0.s8 %v2551
  %v2553 = vlaneseq
  %v2554 = vshrl.u32 %v2553, 7
  %v2555 = vsub.s32 %v2552, %v2554
  %v2556 = vrot.slane %v2548, %v2555
  %v2558 = vunpack.c.l.s4 1966171168
  %v2559 = vunpack.c.0.s8 %v2558
  %v2560 = vlaneseq
  %v2561 = vshrl.u32 %v2560, 7
  %v2562 = vsub.s32 %v2559, %v2561
  %v2563 = vrot.slane %v2549, %v2562
  %v2564 = vcombine.low %v2556, %v2563
  %v2581 = vadd.f32 %v68, %v1844
  %v2582 = vadd.f32 %v68, %v1892
  %v2583 = vadd.f32 %v68, %v1940
  %v2584 = vadd.f32 %v68, %v1988
  %v2585 = vadd.f32 %v68, %v2036
  %v2586 = vadd.f32 %v68, %v2084
  %v2587 = vadd.f32 %v68, %v2132
  %v2588 = vadd.f32 %v68, %v2180
  %v2589 = vadd.f32 %v68, %v2228
  %v2590 = vadd.f32 %v68, %v2276
  %v2591 = vadd.f32 %v68, %v2324
  %v2592 = vadd.f32 %v68, %v2372
  %v2593 = vadd.f32 %v68, %v2420
  %v2594 = vadd.f32 %v68, %v2468
  %v2595 = vadd.f32 %v68, %v2516
  %v2596 = vadd.f32 %v68, %v2564
  %s2597 = scalar_lea.vmem %s1, 2
  %v2598 = vld [vmem:[%s2597] sm:$0x3]
  %v2616 = vunpack.c.l.s4 1966171168
  %v2617 = vunpack.c.0.s8 %v2616
  %v2618 = vlaneseq
  %v2619 = vshrl.u32 %v2618, 7
  %v2620 = vsub.s32 %v2617, %v2619
  %v2621 = vrot.slane %v16, %v2620
  %v2623 = vunpack.c.l.s4 1966171168
  %v2624 = vunpack.c.0.s8 %v2623
  %v2625 = vlaneseq
  %v2626 = vshrl.u32 %v2625, 7
  %v2627 = vsub.s32 %v2624, %v2626
  %v2628 = vrot.slane %v2621, %v2627
  %v2630 = vunpack.c.l.s4 1966171168
  %v2631 = vunpack.c.0.s8 %v2630
  %v2632 = vlaneseq
  %v2633 = vshrl.u32 %v2632, 7
  %v2634 = vsub.s32 %v2631, %v2633
  %v2635 = vrot.slane %v19, %v2634
  %v2637 = vunpack.c.l.s4 1966171168
  %v2638 = vunpack.c.0.s8 %v2637
  %v2639 = vlaneseq
  %v2640 = vshrl.u32 %v2639, 7
  %v2641 = vsub.s32 %v2638, %v2640
  %v2642 = vrot.slane %v2635, %v2641
  %v2644 = vunpack.c.l.s4 1966171168
  %v2645 = vunpack.c.0.s8 %v2644
  %v2646 = vlaneseq
  %v2647 = vshrl.u32 %v2646, 7
  %v2648 = vsub.s32 %v2645, %v2647
  %v2649 = vrot.slane %v22, %v2648
  %v2651 = vunpack.c.l.s4 1966171168
  %v2652 = vunpack.c.0.s8 %v2651
  %v2653 = vlaneseq
  %v2654 = vshrl.u32 %v2653, 7
  %v2655 = vsub.s32 %v2652, %v2654
  %v2656 = vrot.slane %v2649, %v2655
  %v2658 = vunpack.c.l.s4 1966171168
  %v2659 = vunpack.c.0.s8 %v2658
  %v2660 = vlaneseq
  %v2661 = vshrl.u32 %v2660, 7
  %v2662 = vsub.s32 %v2659, %v2661
  %v2663 = vrot.slane %v25, %v2662
  %v2665 = vunpack.c.l.s4 1966171168
  %v2666 = vunpack.c.0.s8 %v2665
  %v2667 = vlaneseq
  %v2668 = vshrl.u32 %v2667, 7
  %v2669 = vsub.s32 %v2666, %v2668
  %v2670 = vrot.slane %v2663, %v2669
  %v2672 = vunpack.c.l.s4 1966171168
  %v2673 = vunpack.c.0.s8 %v2672
  %v2674 = vlaneseq
  %v2675 = vshrl.u32 %v2674, 7
  %v2676 = vsub.s32 %v2673, %v2675
  %v2677 = vrot.slane %v28, %v2676
  %v2679 = vunpack.c.l.s4 1966171168
  %v2680 = vunpack.c.0.s8 %v2679
  %v2681 = vlaneseq
  %v2682 = vshrl.u32 %v2681, 7
  %v2683 = vsub.s32 %v2680, %v2682
  %v2684 = vrot.slane %v2677, %v2683
  %v2686 = vunpack.c.l.s4 1966171168
  %v2687 = vunpack.c.0.s8 %v2686
  %v2688 = vlaneseq
  %v2689 = vshrl.u32 %v2688, 7
  %v2690 = vsub.s32 %v2687, %v2689
  %v2691 = vrot.slane %v31, %v2690
  %v2693 = vunpack.c.l.s4 1966171168
  %v2694 = vunpack.c.0.s8 %v2693
  %v2695 = vlaneseq
  %v2696 = vshrl.u32 %v2695, 7
  %v2697 = vsub.s32 %v2694, %v2696
  %v2698 = vrot.slane %v2691, %v2697
  %v2700 = vunpack.c.l.s4 1966171168
  %v2701 = vunpack.c.0.s8 %v2700
  %v2702 = vlaneseq
  %v2703 = vshrl.u32 %v2702, 7
  %v2704 = vsub.s32 %v2701, %v2703
  %v2705 = vrot.slane %v34, %v2704
  %v2707 = vunpack.c.l.s4 1966171168
  %v2708 = vunpack.c.0.s8 %v2707
  %v2709 = vlaneseq
  %v2710 = vshrl.u32 %v2709, 7
  %v2711 = vsub.s32 %v2708, %v2710
  %v2712 = vrot.slane %v2705, %v2711
  %v2714 = vunpack.c.l.s4 1966171168
  %v2715 = vunpack.c.0.s8 %v2714
  %v2716 = vlaneseq
  %v2717 = vshrl.u32 %v2716, 7
  %v2718 = vsub.s32 %v2715, %v2717
  %v2719 = vrot.slane %v37, %v2718
  %v2721 = vunpack.c.l.s4 1966171168
  %v2722 = vunpack.c.0.s8 %v2721
  %v2723 = vlaneseq
  %v2724 = vshrl.u32 %v2723, 7
  %v2725 = vsub.s32 %v2722, %v2724
  %v2726 = vrot.slane %v2719, %v2725
  %v2728 = vunpack.c.l.s4 1966171168
  %v2729 = vunpack.c.0.s8 %v2728
  %v2730 = vlaneseq
  %v2731 = vshrl.u32 %v2730, 7
  %v2732 = vsub.s32 %v2729, %v2731
  %v2733 = vrot.slane %v40, %v2732
  %v2735 = vunpack.c.l.s4 1966171168
  %v2736 = vunpack.c.0.s8 %v2735
  %v2737 = vlaneseq
  %v2738 = vshrl.u32 %v2737, 7
  %v2739 = vsub.s32 %v2736, %v2738
  %v2740 = vrot.slane %v2733, %v2739
  %v2742 = vunpack.c.l.s4 1966171168
  %v2743 = vunpack.c.0.s8 %v2742
  %v2744 = vlaneseq
  %v2745 = vshrl.u32 %v2744, 7
  %v2746 = vsub.s32 %v2743, %v2745
  %v2747 = vrot.slane %v43, %v2746
  %v2749 = vunpack.c.l.s4 1966171168
  %v2750 = vunpack.c.0.s8 %v2749
  %v2751 = vlaneseq
  %v2752 = vshrl.u32 %v2751, 7
  %v2753 = vsub.s32 %v2750, %v2752
  %v2754 = vrot.slane %v2747, %v2753
  %v2756 = vunpack.c.l.s4 1966171168
  %v2757 = vunpack.c.0.s8 %v2756
  %v2758 = vlaneseq
  %v2759 = vshrl.u32 %v2758, 7
  %v2760 = vsub.s32 %v2757, %v2759
  %v2761 = vrot.slane %v46, %v2760
  %v2763 = vunpack.c.l.s4 1966171168
  %v2764 = vunpack.c.0.s8 %v2763
  %v2765 = vlaneseq
  %v2766 = vshrl.u32 %v2765, 7
  %v2767 = vsub.s32 %v2764, %v2766
  %v2768 = vrot.slane %v2761, %v2767
  %v2770 = vunpack.c.l.s4 1966171168
  %v2771 = vunpack.c.0.s8 %v2770
  %v2772 = vlaneseq
  %v2773 = vshrl.u32 %v2772, 7
  %v2774 = vsub.s32 %v2771, %v2773
  %v2775 = vrot.slane %v49, %v2774
  %v2777 = vunpack.c.l.s4 1966171168
  %v2778 = vunpack.c.0.s8 %v2777
  %v2779 = vlaneseq
  %v2780 = vshrl.u32 %v2779, 7
  %v2781 = vsub.s32 %v2778, %v2780
  %v2782 = vrot.slane %v2775, %v2781
  %v2784 = vunpack.c.l.s4 1966171168
  %v2785 = vunpack.c.0.s8 %v2784
  %v2786 = vlaneseq
  %v2787 = vshrl.u32 %v2786, 7
  %v2788 = vsub.s32 %v2785, %v2787
  %v2789 = vrot.slane %v52, %v2788
  %v2791 = vunpack.c.l.s4 1966171168
  %v2792 = vunpack.c.0.s8 %v2791
  %v2793 = vlaneseq
  %v2794 = vshrl.u32 %v2793, 7
  %v2795 = vsub.s32 %v2792, %v2794
  %v2796 = vrot.slane %v2789, %v2795
  %v2798 = vunpack.c.l.s4 1966171168
  %v2799 = vunpack.c.0.s8 %v2798
  %v2800 = vlaneseq
  %v2801 = vshrl.u32 %v2800, 7
  %v2802 = vsub.s32 %v2799, %v2801
  %v2803 = vrot.slane %v55, %v2802
  %v2805 = vunpack.c.l.s4 1966171168
  %v2806 = vunpack.c.0.s8 %v2805
  %v2807 = vlaneseq
  %v2808 = vshrl.u32 %v2807, 7
  %v2809 = vsub.s32 %v2806, %v2808
  %v2810 = vrot.slane %v2803, %v2809
  %v2812 = vunpack.c.l.s4 1966171168
  %v2813 = vunpack.c.0.s8 %v2812
  %v2814 = vlaneseq
  %v2815 = vshrl.u32 %v2814, 7
  %v2816 = vsub.s32 %v2813, %v2815
  %v2817 = vrot.slane %v58, %v2816
  %v2819 = vunpack.c.l.s4 1966171168
  %v2820 = vunpack.c.0.s8 %v2819
  %v2821 = vlaneseq
  %v2822 = vshrl.u32 %v2821, 7
  %v2823 = vsub.s32 %v2820, %v2822
  %v2824 = vrot.slane %v2817, %v2823
  %v2826 = vunpack.c.l.s4 1966171168
  %v2827 = vunpack.c.0.s8 %v2826
  %v2828 = vlaneseq
  %v2829 = vshrl.u32 %v2828, 7
  %v2830 = vsub.s32 %v2827, %v2829
  %v2831 = vrot.slane %v61, %v2830
  %v2833 = vunpack.c.l.s4 1966171168
  %v2834 = vunpack.c.0.s8 %v2833
  %v2835 = vlaneseq
  %v2836 = vshrl.u32 %v2835, 7
  %v2837 = vsub.s32 %v2834, %v2836
  %v2838 = vrot.slane %v2831, %v2837
  %v2839 = vunpack.i.h.s16 %v110
  %v2840 = vunpack.i.l.s16 %v2628
  %v2841 = vunpack.i.h.s16 %v134
  %v2842 = vunpack.i.l.s16 %v2642
  %v2843 = vunpack.i.h.s16 %v158
  %v2844 = vunpack.i.l.s16 %v2656
  %v2845 = vunpack.i.h.s16 %v182
  %v2846 = vunpack.i.l.s16 %v2670
  %v2847 = vunpack.i.h.s16 %v206
  %v2848 = vunpack.i.l.s16 %v2684
  %v2849 = vunpack.i.h.s16 %v230
  %v2850 = vunpack.i.l.s16 %v2698
  %v2851 = vunpack.i.h.s16 %v254
  %v2852 = vunpack.i.l.s16 %v2712
  %v2853 = vunpack.i.h.s16 %v278
  %v2854 = vunpack.i.l.s16 %v2726
  %v2855 = vunpack.i.h.s16 %v302
  %v2856 = vunpack.i.l.s16 %v2740
  %v2857 = vunpack.i.h.s16 %v326
  %v2858 = vunpack.i.l.s16 %v2754
  %v2859 = vunpack.i.h.s16 %v350
  %v2860 = vunpack.i.l.s16 %v2768
  %v2861 = vunpack.i.h.s16 %v374
  %v2862 = vunpack.i.l.s16 %v2782
  %v2863 = vunpack.i.h.s16 %v398
  %v2864 = vunpack.i.l.s16 %v2796
  %v2865 = vunpack.i.h.s16 %v422
  %v2866 = vunpack.i.l.s16 %v2810
  %v2867 = vunpack.i.h.s16 %v446
  %v2868 = vunpack.i.l.s16 %v2824
  %v2869 = vunpack.i.h.s16 %v470
  %v2870 = vunpack.i.l.s16 %v2838
  %v2871 = vpack.i.b16 %v2839, %v477
  %v2872 = vpack.i.b16 %v480, %v2840
  %v2873 = vpack.i.b16 %v2842, %v2841
  %v2874 = vpack.i.b16 %v2843, %v491
  %v2875 = vpack.i.b16 %v494, %v2844
  %v2876 = vpack.i.b16 %v2846, %v2845
  %v2877 = vpack.i.b16 %v2847, %v505
  %v2878 = vpack.i.b16 %v508, %v2848
  %v2879 = vpack.i.b16 %v2850, %v2849
  %v2880 = vpack.i.b16 %v2851, %v519
  %v2881 = vpack.i.b16 %v522, %v2852
  %v2882 = vpack.i.b16 %v2854, %v2853
  %v2883 = vpack.i.b16 %v2855, %v533
  %v2884 = vpack.i.b16 %v536, %v2856
  %v2885 = vpack.i.b16 %v2858, %v2857
  %v2886 = vpack.i.b16 %v2859, %v547
  %v2887 = vpack.i.b16 %v550, %v2860
  %v2888 = vpack.i.b16 %v2862, %v2861
  %v2889 = vpack.i.b16 %v2863, %v561
  %v2890 = vpack.i.b16 %v564, %v2864
  %v2891 = vpack.i.b16 %v2866, %v2865
  %v2892 = vpack.i.b16 %v2867, %v575
  %v2893 = vpack.i.b16 %v578, %v2868
  %v2894 = vpack.i.b16 %v2870, %v2869
  %v2895 = vcombine.low %v584, %v585
  %v2896 = vcombine.low %v2871, %v2872
  %v2897 = vcombine.low %v588, %v589
  %v2898 = vcombine.low %v2873, %v591
  %v2900 = vunpack.c.l.s4 1966171168
  %v2901 = vunpack.c.0.s8 %v2900
  %v2902 = vlaneseq
  %v2903 = vshrl.u32 %v2902, 7
  %v2904 = vsub.s32 %v2901, %v2903
  %v2905 = vrot.slane %v2895, %v2904
  %v2907 = vunpack.c.l.s4 1966171168
  %v2908 = vunpack.c.0.s8 %v2907
  %v2909 = vlaneseq
  %v2910 = vshrl.u32 %v2909, 7
  %v2911 = vsub.s32 %v2908, %v2910
  %v2912 = vrot.slane %v2896, %v2911
  %v2914 = vunpack.c.l.s4 1966171168
  %v2915 = vunpack.c.0.s8 %v2914
  %v2916 = vlaneseq
  %v2917 = vshrl.u32 %v2916, 7
  %v2918 = vsub.s32 %v2915, %v2917
  %v2919 = vrot.slane %v2897, %v2918
  %v2921 = vunpack.c.l.s4 1966171168
  %v2922 = vunpack.c.0.s8 %v2921
  %v2923 = vlaneseq
  %v2924 = vshrl.u32 %v2923, 7
  %v2925 = vsub.s32 %v2922, %v2924
  %v2926 = vrot.slane %v2898, %v2925
  %v2927 = vcombine.low %v2905, %v2912
  %v2928 = vcombine.low %v2919, %v2926
  %v2930 = vunpack.c.l.s4 1966171168
  %v2931 = vunpack.c.0.s8 %v2930
  %v2932 = vlaneseq
  %v2933 = vshrl.u32 %v2932, 7
  %v2934 = vsub.s32 %v2931, %v2933
  %v2935 = vrot.slane %v2927, %v2934
  %v2937 = vunpack.c.l.s4 1966171168
  %v2938 = vunpack.c.0.s8 %v2937
  %v2939 = vlaneseq
  %v2940 = vshrl.u32 %v2939, 7
  %v2941 = vsub.s32 %v2938, %v2940
  %v2942 = vrot.slane %v2928, %v2941
  %v2943 = vcombine.low %v2935, %v2942
  %v2944 = vcombine.low %v592, %v2874
  %v2945 = vcombine.low %v2875, %v595
  %v2946 = vcombine.low %v596, %v2876
  %v2947 = vcombine.low %v598, %v599
  %v2949 = vunpack.c.l.s4 1966171168
  %v2950 = vunpack.c.0.s8 %v2949
  %v2951 = vlaneseq
  %v2952 = vshrl.u32 %v2951, 7
  %v2953 = vsub.s32 %v2950, %v2952
  %v2954 = vrot.slane %v2944, %v2953
  %v2956 = vunpack.c.l.s4 1966171168
  %v2957 = vunpack.c.0.s8 %v2956
  %v2958 = vlaneseq
  %v2959 = vshrl.u32 %v2958, 7
  %v2960 = vsub.s32 %v2957, %v2959
  %v2961 = vrot.slane %v2945, %v2960
  %v2963 = vunpack.c.l.s4 1966171168
  %v2964 = vunpack.c.0.s8 %v2963
  %v2965 = vlaneseq
  %v2966 = vshrl.u32 %v2965, 7
  %v2967 = vsub.s32 %v2964, %v2966
  %v2968 = vrot.slane %v2946, %v2967
  %v2970 = vunpack.c.l.s4 1966171168
  %v2971 = vunpack.c.0.s8 %v2970
  %v2972 = vlaneseq
  %v2973 = vshrl.u32 %v2972, 7
  %v2974 = vsub.s32 %v2971, %v2973
  %v2975 = vrot.slane %v2947, %v2974
  %v2976 = vcombine.low %v2954, %v2961
  %v2977 = vcombine.low %v2968, %v2975
  %v2979 = vunpack.c.l.s4 1966171168
  %v2980 = vunpack.c.0.s8 %v2979
  %v2981 = vlaneseq
  %v2982 = vshrl.u32 %v2981, 7
  %v2983 = vsub.s32 %v2980, %v2982
  %v2984 = vrot.slane %v2976, %v2983
  %v2986 = vunpack.c.l.s4 1966171168
  %v2987 = vunpack.c.0.s8 %v2986
  %v2988 = vlaneseq
  %v2989 = vshrl.u32 %v2988, 7
  %v2990 = vsub.s32 %v2987, %v2989
  %v2991 = vrot.slane %v2977, %v2990
  %v2992 = vcombine.low %v2984, %v2991
  %v2993 = vcombine.low %v2877, %v2878
  %v2994 = vcombine.low %v602, %v603
  %v2995 = vcombine.low %v2879, %v605
  %v2996 = vcombine.low %v606, %v2880
  %v2998 = vunpack.c.l.s4 1966171168
  %v2999 = vunpack.c.0.s8 %v2998
  %v3000 = vlaneseq
  %v3001 = vshrl.u32 %v3000, 7
  %v3002 = vsub.s32 %v2999, %v3001
  %v3003 = vrot.slane %v2993, %v3002
  %v3005 = vunpack.c.l.s4 1966171168
  %v3006 = vunpack.c.0.s8 %v3005
  %v3007 = vlaneseq
  %v3008 = vshrl.u32 %v3007, 7
  %v3009 = vsub.s32 %v3006, %v3008
  %v3010 = vrot.slane %v2994, %v3009
  %v3012 = vunpack.c.l.s4 1966171168
  %v3013 = vunpack.c.0.s8 %v3012
  %v3014 = vlaneseq
  %v3015 = vshrl.u32 %v3014, 7
  %v3016 = vsub.s32 %v3013, %v3015
  %v3017 = vrot.slane %v2995, %v3016
  %v3019 = vunpack.c.l.s4 1966171168
  %v3020 = vunpack.c.0.s8 %v3019
  %v3021 = vlaneseq
  %v3022 = vshrl.u32 %v3021, 7
  %v3023 = vsub.s32 %v3020, %v3022
  %v3024 = vrot.slane %v2996, %v3023
  %v3025 = vcombine.low %v3003, %v3010
  %v3026 = vcombine.low %v3017, %v3024
  %v3028 = vunpack.c.l.s4 1966171168
  %v3029 = vunpack.c.0.s8 %v3028
  %v3030 = vlaneseq
  %v3031 = vshrl.u32 %v3030, 7
  %v3032 = vsub.s32 %v3029, %v3031
  %v3033 = vrot.slane %v3025, %v3032
  %v3035 = vunpack.c.l.s4 1966171168
  %v3036 = vunpack.c.0.s8 %v3035
  %v3037 = vlaneseq
  %v3038 = vshrl.u32 %v3037, 7
  %v3039 = vsub.s32 %v3036, %v3038
  %v3040 = vrot.slane %v3026, %v3039
  %v3041 = vcombine.low %v3033, %v3040
  %v3042 = vcombine.low %v2881, %v609
  %v3043 = vcombine.low %v610, %v2882
  %v3044 = vcombine.low %v612, %v613
  %v3045 = vcombine.low %v2883, %v2884
  %v3047 = vunpack.c.l.s4 1966171168
  %v3048 = vunpack.c.0.s8 %v3047
  %v3049 = vlaneseq
  %v3050 = vshrl.u32 %v3049, 7
  %v3051 = vsub.s32 %v3048, %v3050
  %v3052 = vrot.slane %v3042, %v3051
  %v3054 = vunpack.c.l.s4 1966171168
  %v3055 = vunpack.c.0.s8 %v3054
  %v3056 = vlaneseq
  %v3057 = vshrl.u32 %v3056, 7
  %v3058 = vsub.s32 %v3055, %v3057
  %v3059 = vrot.slane %v3043, %v3058
  %v3061 = vunpack.c.l.s4 1966171168
  %v3062 = vunpack.c.0.s8 %v3061
  %v3063 = vlaneseq
  %v3064 = vshrl.u32 %v3063, 7
  %v3065 = vsub.s32 %v3062, %v3064
  %v3066 = vrot.slane %v3044, %v3065
  %v3068 = vunpack.c.l.s4 1966171168
  %v3069 = vunpack.c.0.s8 %v3068
  %v3070 = vlaneseq
  %v3071 = vshrl.u32 %v3070, 7
  %v3072 = vsub.s32 %v3069, %v3071
  %v3073 = vrot.slane %v3045, %v3072
  %v3074 = vcombine.low %v3052, %v3059
  %v3075 = vcombine.low %v3066, %v3073
  %v3077 = vunpack.c.l.s4 1966171168
  %v3078 = vunpack.c.0.s8 %v3077
  %v3079 = vlaneseq
  %v3080 = vshrl.u32 %v3079, 7
  %v3081 = vsub.s32 %v3078, %v3080
  %v3082 = vrot.slane %v3074, %v3081
  %v3084 = vunpack.c.l.s4 1966171168
  %v3085 = vunpack.c.0.s8 %v3084
  %v3086 = vlaneseq
  %v3087 = vshrl.u32 %v3086, 7
  %v3088 = vsub.s32 %v3085, %v3087
  %v3089 = vrot.slane %v3075, %v3088
  %v3090 = vcombine.low %v3082, %v3089
  %v3091 = vcombine.low %v616, %v617
  %v3092 = vcombine.low %v2885, %v619
  %v3093 = vcombine.low %v620, %v2886
  %v3094 = vcombine.low %v2887, %v623
  %v3096 = vunpack.c.l.s4 1966171168
  %v3097 = vunpack.c.0.s8 %v3096
  %v3098 = vlaneseq
  %v3099 = vshrl.u32 %v3098, 7
  %v3100 = vsub.s32 %v3097, %v3099
  %v3101 = vrot.slane %v3091, %v3100
  %v3103 = vunpack.c.l.s4 1966171168
  %v3104 = vunpack.c.0.s8 %v3103
  %v3105 = vlaneseq
  %v3106 = vshrl.u32 %v3105, 7
  %v3107 = vsub.s32 %v3104, %v3106
  %v3108 = vrot.slane %v3092, %v3107
  %v3110 = vunpack.c.l.s4 1966171168
  %v3111 = vunpack.c.0.s8 %v3110
  %v3112 = vlaneseq
  %v3113 = vshrl.u32 %v3112, 7
  %v3114 = vsub.s32 %v3111, %v3113
  %v3115 = vrot.slane %v3093, %v3114
  %v3117 = vunpack.c.l.s4 1966171168
  %v3118 = vunpack.c.0.s8 %v3117
  %v3119 = vlaneseq
  %v3120 = vshrl.u32 %v3119, 7
  %v3121 = vsub.s32 %v3118, %v3120
  %v3122 = vrot.slane %v3094, %v3121
  %v3123 = vcombine.low %v3101, %v3108
  %v3124 = vcombine.low %v3115, %v3122
  %v3126 = vunpack.c.l.s4 1966171168
  %v3127 = vunpack.c.0.s8 %v3126
  %v3128 = vlaneseq
  %v3129 = vshrl.u32 %v3128, 7
  %v3130 = vsub.s32 %v3127, %v3129
  %v3131 = vrot.slane %v3123, %v3130
  %v3133 = vunpack.c.l.s4 1966171168
  %v3134 = vunpack.c.0.s8 %v3133
  %v3135 = vlaneseq
  %v3136 = vshrl.u32 %v3135, 7
  %v3137 = vsub.s32 %v3134, %v3136
  %v3138 = vrot.slane %v3124, %v3137
  %v3139 = vcombine.low %v3131, %v3138
  %v3140 = vcombine.low %v624, %v2888
  %v3141 = vcombine.low %v626, %v627
  %v3142 = vcombine.low %v2889, %v2890
  %v3143 = vcombine.low %v630, %v631
  %v3145 = vunpack.c.l.s4 1966171168
  %v3146 = vunpack.c.0.s8 %v3145
  %v3147 = vlaneseq
  %v3148 = vshrl.u32 %v3147, 7
  %v3149 = vsub.s32 %v3146, %v3148
  %v3150 = vrot.slane %v3140, %v3149
  %v3152 = vunpack.c.l.s4 1966171168
  %v3153 = vunpack.c.0.s8 %v3152
  %v3154 = vlaneseq
  %v3155 = vshrl.u32 %v3154, 7
  %v3156 = vsub.s32 %v3153, %v3155
  %v3157 = vrot.slane %v3141, %v3156
  %v3159 = vunpack.c.l.s4 1966171168
  %v3160 = vunpack.c.0.s8 %v3159
  %v3161 = vlaneseq
  %v3162 = vshrl.u32 %v3161, 7
  %v3163 = vsub.s32 %v3160, %v3162
  %v3164 = vrot.slane %v3142, %v3163
  %v3166 = vunpack.c.l.s4 1966171168
  %v3167 = vunpack.c.0.s8 %v3166
  %v3168 = vlaneseq
  %v3169 = vshrl.u32 %v3168, 7
  %v3170 = vsub.s32 %v3167, %v3169
  %v3171 = vrot.slane %v3143, %v3170
  %v3172 = vcombine.low %v3150, %v3157
  %v3173 = vcombine.low %v3164, %v3171
  %v3175 = vunpack.c.l.s4 1966171168
  %v3176 = vunpack.c.0.s8 %v3175
  %v3177 = vlaneseq
  %v3178 = vshrl.u32 %v3177, 7
  %v3179 = vsub.s32 %v3176, %v3178
  %v3180 = vrot.slane %v3172, %v3179
  %v3182 = vunpack.c.l.s4 1966171168
  %v3183 = vunpack.c.0.s8 %v3182
  %v3184 = vlaneseq
  %v3185 = vshrl.u32 %v3184, 7
  %v3186 = vsub.s32 %v3183, %v3185
  %v3187 = vrot.slane %v3173, %v3186
  %v3188 = vcombine.low %v3180, %v3187
  %v3189 = vcombine.low %v2891, %v633
  %v3190 = vcombine.low %v634, %v2892
  %v3191 = vcombine.low %v2893, %v637
  %v3192 = vcombine.low %v638, %v2894
  %v3194 = vunpack.c.l.s4 1966171168
  %v3195 = vunpack.c.0.s8 %v3194
  %v3196 = vlaneseq
  %v3197 = vshrl.u32 %v3196, 7
  %v3198 = vsub.s32 %v3195, %v3197
  %v3199 = vrot.slane %v3189, %v3198
  %v3201 = vunpack.c.l.s4 1966171168
  %v3202 = vunpack.c.0.s8 %v3201
  %v3203 = vlaneseq
  %v3204 = vshrl.u32 %v3203, 7
  %v3205 = vsub.s32 %v3202, %v3204
  %v3206 = vrot.slane %v3190, %v3205
  %v3208 = vunpack.c.l.s4 1966171168
  %v3209 = vunpack.c.0.s8 %v3208
  %v3210 = vlaneseq
  %v3211 = vshrl.u32 %v3210, 7
  %v3212 = vsub.s32 %v3209, %v3211
  %v3213 = vrot.slane %v3191, %v3212
  %v3215 = vunpack.c.l.s4 1966171168
  %v3216 = vunpack.c.0.s8 %v3215
  %v3217 = vlaneseq
  %v3218 = vshrl.u32 %v3217, 7
  %v3219 = vsub.s32 %v3216, %v3218
  %v3220 = vrot.slane %v3192, %v3219
  %v3221 = vcombine.low %v3199, %v3206
  %v3222 = vcombine.low %v3213, %v3220
  %v3224 = vunpack.c.l.s4 1966171168
  %v3225 = vunpack.c.0.s8 %v3224
  %v3226 = vlaneseq
  %v3227 = vshrl.u32 %v3226, 7
  %v3228 = vsub.s32 %v3225, %v3227
  %v3229 = vrot.slane %v3221, %v3228
  %v3231 = vunpack.c.l.s4 1966171168
  %v3232 = vunpack.c.0.s8 %v3231
  %v3233 = vlaneseq
  %v3234 = vshrl.u32 %v3233, 7
  %v3235 = vsub.s32 %v3232, %v3234
  %v3236 = vrot.slane %v3222, %v3235
  %v3237 = vcombine.low %v3229, %v3236
  %v3239 = vsel %vm982, %v2943, 0
  %v3242 = vsel %vm982, %v2992, 0
  %v3245 = vsel %vm982, %v3041, 0
  %v3248 = vsel %vm982, %v3090, 0
  %v3251 = vsel %vm982, %v3139, 0
  %v3254 = vsel %vm982, %v3188, 0
  %v3257 = vsel %vm982, %v3237, 0
  %v3260 = vsel %vm1004, %v2598, 0
  %3262 = vmatprep.subr.bf16.mxu0 0
  %3263 = vmatpush1.bf16.msra.mxu0 %v3260
  %3264 = vmatprep.subr.bf16.mxu0 0
  %3265 = vmatpush1.bf16.msra.mxu0 0
  %3266 = vmatprep.subr.bf16.mxu0 0
  %3267 = vmatpush1.bf16.msra.mxu0 0
  %3268 = vmatprep.subr.bf16.mxu0 0
  %3269 = vmatpush1.bf16.msra.mxu0 0
  %3270 = vmatprep.subr.bf16.mxu0 0
  %3271 = vmatpush1.bf16.msra.mxu0 0
  %3272 = vmatprep.subr.bf16.mxu0 0
  %3273 = vmatpush1.bf16.msra.mxu0 0
  %3274 = vmatprep.subr.bf16.mxu0 0
  %3275 = vmatpush1.bf16.msra.mxu0 0
  %3276 = vmatprep.subr.bf16.mxu0 0
  %3277 = vmatpush1.bf16.msra.mxu0 0
  %3278 = vmatprep.subr.bf16.mxu0 0
  %3279 = vmatpush1.bf16.msra.mxu0 0
  %3280 = vmatprep.subr.bf16.mxu0 0
  %3281 = vmatpush1.bf16.msra.mxu0 0
  %3282 = vmatprep.subr.bf16.mxu0 0
  %3283 = vmatpush1.bf16.msra.mxu0 0
  %3284 = vmatprep.subr.bf16.mxu0 0
  %3285 = vmatpush1.bf16.msra.mxu0 0
  %3286 = vmatprep.subr.bf16.mxu0 0
  %3287 = vmatpush1.bf16.msra.mxu0 0
  %3288 = vmatprep.subr.bf16.mxu0 0
  %3289 = vmatpush1.bf16.msra.mxu0 0
  %3290 = vmatprep.subr.bf16.mxu0 0
  %3291 = vmatpush1.bf16.msra.mxu0 0
  %3292 = vmatprep.subr.bf16.mxu0 0
  %3293 = vmatpush1.bf16.msra.mxu0 0
  %3294 = vmatprep.mubr.bf16.mxu0 0
  %3295 = vmatmul.mubr.bf16.gmra.mrb[0].mxu0 %v3239
  %v3296 = vpop.f32.mrb[0].mxu0
  %v3297 = vadd.f32 0.0, %v3296
  %v3298 = vpop.f32.mrb[0].mxu0
  %v3299 = vpop.f32.mrb[0].mxu0
  %v3300 = vadd.f32 0.0, %v3299
  %v3301 = vpop.f32.mrb[0].mxu0
  %3302 = vmatprep.mubr.bf16.mxu0 0
  %3303 = vmatmul.mubr.bf16.gmra.mrb[0].mxu0 %v3242
  %v3304 = vpop.f32.mrb[0].mxu0
  %v3305 = vadd.f32 0.0, %v3304
  %v3306 = vpop.f32.mrb[0].mxu0
  %v3307 = vpop.f32.mrb[0].mxu0
  %v3308 = vadd.f32 0.0, %v3307
  %v3309 = vpop.f32.mrb[0].mxu0
  %3310 = vmatprep.mubr.bf16.mxu0 0
  %3311 = vmatmul.mubr.bf16.gmra.mrb[0].mxu0 %v3245
  %v3312 = vpop.f32.mrb[0].mxu0
  %v3313 = vadd.f32 0.0, %v3312
  %v3314 = vpop.f32.mrb[0].mxu0
  %v3315 = vpop.f32.mrb[0].mxu0
  %v3316 = vadd.f32 0.0, %v3315
  %v3317 = vpop.f32.mrb[0].mxu0
  %3318 = vmatprep.mubr.bf16.mxu0 0
  %3319 = vmatmul.mubr.bf16.gmra.mrb[0].mxu0 %v3248
  %v3320 = vpop.f32.mrb[0].mxu0
  %v3321 = vadd.f32 0.0, %v3320
  %v3322 = vpop.f32.mrb[0].mxu0
  %v3323 = vpop.f32.mrb[0].mxu0
  %v3324 = vadd.f32 0.0, %v3323
  %v3325 = vpop.f32.mrb[0].mxu0
  %3326 = vmatprep.mubr.bf16.mxu0 0
  %3327 = vmatmul.mubr.bf16.gmra.mrb[0].mxu0 %v3251
  %v3328 = vpop.f32.mrb[0].mxu0
  %v3329 = vadd.f32 0.0, %v3328
  %v3330 = vpop.f32.mrb[0].mxu0
  %v3331 = vpop.f32.mrb[0].mxu0
  %v3332 = vadd.f32 0.0, %v3331
  %v3333 = vpop.f32.mrb[0].mxu0
  %3334 = vmatprep.mubr.bf16.mxu0 0
  %3335 = vmatmul.mubr.bf16.gmra.mrb[0].mxu0 %v3254
  %v3336 = vpop.f32.mrb[0].mxu0
  %v3337 = vadd.f32 0.0, %v3336
  %v3338 = vpop.f32.mrb[0].mxu0
  %v3339 = vpop.f32.mrb[0].mxu0
  %v3340 = vadd.f32 0.0, %v3339
  %v3341 = vpop.f32.mrb[0].mxu0
  %3342 = vmatprep.mubr.bf16.mxu0 0
  %3343 = vmatmul.mubr.bf16.gmra.mrb[0].mxu0 %v3257
  %v3344 = vpop.f32.mrb[0].mxu0
  %v3345 = vadd.f32 0.0, %v3344
  %v3346 = vpop.f32.mrb[0].mxu0
  %v3347 = vpop.f32.mrb[0].mxu0
  %v3348 = vadd.f32 0.0, %v3347
  %v3349 = vpop.f32.mrb[0].mxu0
  %3350 = vdwg.mxu0
  %v3365 = vcombine.high %v3297, %v3297
  %v3367 = vunpack.c.l.s4 1966171168
  %v3368 = vunpack.c.0.s8 %v3367
  %v3369 = vlaneseq
  %v3370 = vshrl.u32 %v3369, 7
  %v3371 = vsub.s32 %v3368, %v3370
  %v3372 = vrot.slane %v3297, %v3371
  %v3374 = vunpack.c.l.s4 1966171168
  %v3375 = vunpack.c.0.s8 %v3374
  %v3376 = vlaneseq
  %v3377 = vshrl.u32 %v3376, 7
  %v3378 = vsub.s32 %v3375, %v3377
  %v3379 = vrot.slane %v3365, %v3378
  %v3380 = vcombine.high %v3372, %v3372
  %v3381 = vcombine.high %v3379, %v3379
  %v3383 = vunpack.c.l.s4 1966171168
  %v3384 = vunpack.c.0.s8 %v3383
  %v3385 = vlaneseq
  %v3386 = vshrl.u32 %v3385, 7
  %v3387 = vsub.s32 %v3384, %v3386
  %v3388 = vrot.slane %v3372, %v3387
  %v3390 = vunpack.c.l.s4 1966171168
  %v3391 = vunpack.c.0.s8 %v3390
  %v3392 = vlaneseq
  %v3393 = vshrl.u32 %v3392, 7
  %v3394 = vsub.s32 %v3391, %v3393
  %v3395 = vrot.slane %v3379, %v3394
  %v3397 = vunpack.c.l.s4 1966171168
  %v3398 = vunpack.c.0.s8 %v3397
  %v3399 = vlaneseq
  %v3400 = vshrl.u32 %v3399, 7
  %v3401 = vsub.s32 %v3398, %v3400
  %v3402 = vrot.slane %v3380, %v3401
  %v3404 = vunpack.c.l.s4 1966171168
  %v3405 = vunpack.c.0.s8 %v3404
  %v3406 = vlaneseq
  %v3407 = vshrl.u32 %v3406, 7
  %v3408 = vsub.s32 %v3405, %v3407
  %v3409 = vrot.slane %v3381, %v3408
  %v3410 = vcombine.high %v3388, %v3388
  %v3411 = vcombine.high %v3395, %v3395
  %v3412 = vcombine.high %v3402, %v3402
  %v3413 = vcombine.high %v3409, %v3409
  %v3414 = vcombine.high %v3300, %v3300
  %v3416 = vunpack.c.l.s4 1966171168
  %v3417 = vunpack.c.0.s8 %v3416
  %v3418 = vlaneseq
  %v3419 = vshrl.u32 %v3418, 7
  %v3420 = vsub.s32 %v3417, %v3419
  %v3421 = vrot.slane %v3300, %v3420
  %v3423 = vunpack.c.l.s4 1966171168
  %v3424 = vunpack.c.0.s8 %v3423
  %v3425 = vlaneseq
  %v3426 = vshrl.u32 %v3425, 7
  %v3427 = vsub.s32 %v3424, %v3426
  %v3428 = vrot.slane %v3414, %v3427
  %v3429 = vcombine.high %v3421, %v3421
  %v3430 = vcombine.high %v3428, %v3428
  %v3432 = vunpack.c.l.s4 1966171168
  %v3433 = vunpack.c.0.s8 %v3432
  %v3434 = vlaneseq
  %v3435 = vshrl.u32 %v3434, 7
  %v3436 = vsub.s32 %v3433, %v3435
  %v3437 = vrot.slane %v3421, %v3436
  %v3439 = vunpack.c.l.s4 1966171168
  %v3440 = vunpack.c.0.s8 %v3439
  %v3441 = vlaneseq
  %v3442 = vshrl.u32 %v3441, 7
  %v3443 = vsub.s32 %v3440, %v3442
  %v3444 = vrot.slane %v3428, %v3443
  %v3446 = vunpack.c.l.s4 1966171168
  %v3447 = vunpack.c.0.s8 %v3446
  %v3448 = vlaneseq
  %v3449 = vshrl.u32 %v3448, 7
  %v3450 = vsub.s32 %v3447, %v3449
  %v3451 = vrot.slane %v3429, %v3450
  %v3453 = vunpack.c.l.s4 1966171168
  %v3454 = vunpack.c.0.s8 %v3453
  %v3455 = vlaneseq
  %v3456 = vshrl.u32 %v3455, 7
  %v3457 = vsub.s32 %v3454, %v3456
  %v3458 = vrot.slane %v3430, %v3457
  %v3459 = vcombine.high %v3437, %v3437
  %v3460 = vcombine.high %v3444, %v3444
  %v3461 = vcombine.high %v3451, %v3451
  %v3462 = vcombine.high %v3458, %v3458
  %v3463 = vcombine.high %v3305, %v3305
  %v3465 = vunpack.c.l.s4 1966171168
  %v3466 = vunpack.c.0.s8 %v3465
  %v3467 = vlaneseq
  %v3468 = vshrl.u32 %v3467, 7
  %v3469 = vsub.s32 %v3466, %v3468
  %v3470 = vrot.slane %v3305, %v3469
  %v3472 = vunpack.c.l.s4 1966171168
  %v3473 = vunpack.c.0.s8 %v3472
  %v3474 = vlaneseq
  %v3475 = vshrl.u32 %v3474, 7
  %v3476 = vsub.s32 %v3473, %v3475
  %v3477 = vrot.slane %v3463, %v3476
  %v3478 = vcombine.high %v3470, %v3470
  %v3479 = vcombine.high %v3477, %v3477
  %v3481 = vunpack.c.l.s4 1966171168
  %v3482 = vunpack.c.0.s8 %v3481
  %v3483 = vlaneseq
  %v3484 = vshrl.u32 %v3483, 7
  %v3485 = vsub.s32 %v3482, %v3484
  %v3486 = vrot.slane %v3470, %v3485
  %v3488 = vunpack.c.l.s4 1966171168
  %v3489 = vunpack.c.0.s8 %v3488
  %v3490 = vlaneseq
  %v3491 = vshrl.u32 %v3490, 7
  %v3492 = vsub.s32 %v3489, %v3491
  %v3493 = vrot.slane %v3477, %v3492
  %v3495 = vunpack.c.l.s4 1966171168
  %v3496 = vunpack.c.0.s8 %v3495
  %v3497 = vlaneseq
  %v3498 = vshrl.u32 %v3497, 7
  %v3499 = vsub.s32 %v3496, %v3498
  %v3500 = vrot.slane %v3478, %v3499
  %v3502 = vunpack.c.l.s4 1966171168
  %v3503 = vunpack.c.0.s8 %v3502
  %v3504 = vlaneseq
  %v3505 = vshrl.u32 %v3504, 7
  %v3506 = vsub.s32 %v3503, %v3505
  %v3507 = vrot.slane %v3479, %v3506
  %v3508 = vcombine.high %v3486, %v3486
  %v3509 = vcombine.high %v3493, %v3493
  %v3510 = vcombine.high %v3500, %v3500
  %v3511 = vcombine.high %v3507, %v3507
  %v3512 = vcombine.high %v3308, %v3308
  %v3514 = vunpack.c.l.s4 1966171168
  %v3515 = vunpack.c.0.s8 %v3514
  %v3516 = vlaneseq
  %v3517 = vshrl.u32 %v3516, 7
  %v3518 = vsub.s32 %v3515, %v3517
  %v3519 = vrot.slane %v3308, %v3518
  %v3521 = vunpack.c.l.s4 1966171168
  %v3522 = vunpack.c.0.s8 %v3521
  %v3523 = vlaneseq
  %v3524 = vshrl.u32 %v3523, 7
  %v3525 = vsub.s32 %v3522, %v3524
  %v3526 = vrot.slane %v3512, %v3525
  %v3527 = vcombine.high %v3519, %v3519
  %v3528 = vcombine.high %v3526, %v3526
  %v3530 = vunpack.c.l.s4 1966171168
  %v3531 = vunpack.c.0.s8 %v3530
  %v3532 = vlaneseq
  %v3533 = vshrl.u32 %v3532, 7
  %v3534 = vsub.s32 %v3531, %v3533
  %v3535 = vrot.slane %v3519, %v3534
  %v3537 = vunpack.c.l.s4 1966171168
  %v3538 = vunpack.c.0.s8 %v3537
  %v3539 = vlaneseq
  %v3540 = vshrl.u32 %v3539, 7
  %v3541 = vsub.s32 %v3538, %v3540
  %v3542 = vrot.slane %v3526, %v3541
  %v3544 = vunpack.c.l.s4 1966171168
  %v3545 = vunpack.c.0.s8 %v3544
  %v3546 = vlaneseq
  %v3547 = vshrl.u32 %v3546, 7
  %v3548 = vsub.s32 %v3545, %v3547
  %v3549 = vrot.slane %v3527, %v3548
  %v3551 = vunpack.c.l.s4 1966171168
  %v3552 = vunpack.c.0.s8 %v3551
  %v3553 = vlaneseq
  %v3554 = vshrl.u32 %v3553, 7
  %v3555 = vsub.s32 %v3552, %v3554
  %v3556 = vrot.slane %v3528, %v3555
  %v3557 = vcombine.high %v3535, %v3535
  %v3558 = vcombine.high %v3542, %v3542
  %v3559 = vcombine.high %v3549, %v3549
  %v3560 = vcombine.high %v3556, %v3556
  %v3561 = vcombine.high %v3313, %v3313
  %v3563 = vunpack.c.l.s4 1966171168
  %v3564 = vunpack.c.0.s8 %v3563
  %v3565 = vlaneseq
  %v3566 = vshrl.u32 %v3565, 7
  %v3567 = vsub.s32 %v3564, %v3566
  %v3568 = vrot.slane %v3313, %v3567
  %v3570 = vunpack.c.l.s4 1966171168
  %v3571 = vunpack.c.0.s8 %v3570
  %v3572 = vlaneseq
  %v3573 = vshrl.u32 %v3572, 7
  %v3574 = vsub.s32 %v3571, %v3573
  %v3575 = vrot.slane %v3561, %v3574
  %v3576 = vcombine.high %v3568, %v3568
  %v3577 = vcombine.high %v3575, %v3575
  %v3579 = vunpack.c.l.s4 1966171168
  %v3580 = vunpack.c.0.s8 %v3579
  %v3581 = vlaneseq
  %v3582 = vshrl.u32 %v3581, 7
  %v3583 = vsub.s32 %v3580, %v3582
  %v3584 = vrot.slane %v3568, %v3583
  %v3586 = vunpack.c.l.s4 1966171168
  %v3587 = vunpack.c.0.s8 %v3586
  %v3588 = vlaneseq
  %v3589 = vshrl.u32 %v3588, 7
  %v3590 = vsub.s32 %v3587, %v3589
  %v3591 = vrot.slane %v3575, %v3590
  %v3593 = vunpack.c.l.s4 1966171168
  %v3594 = vunpack.c.0.s8 %v3593
  %v3595 = vlaneseq
  %v3596 = vshrl.u32 %v3595, 7
  %v3597 = vsub.s32 %v3594, %v3596
  %v3598 = vrot.slane %v3576, %v3597
  %v3600 = vunpack.c.l.s4 1966171168
  %v3601 = vunpack.c.0.s8 %v3600
  %v3602 = vlaneseq
  %v3603 = vshrl.u32 %v3602, 7
  %v3604 = vsub.s32 %v3601, %v3603
  %v3605 = vrot.slane %v3577, %v3604
  %v3606 = vcombine.high %v3584, %v3584
  %v3607 = vcombine.high %v3591, %v3591
  %v3608 = vcombine.high %v3598, %v3598
  %v3609 = vcombine.high %v3605, %v3605
  %v3610 = vcombine.high %v3316, %v3316
  %v3612 = vunpack.c.l.s4 1966171168
  %v3613 = vunpack.c.0.s8 %v3612
  %v3614 = vlaneseq
  %v3615 = vshrl.u32 %v3614, 7
  %v3616 = vsub.s32 %v3613, %v3615
  %v3617 = vrot.slane %v3316, %v3616
  %v3619 = vunpack.c.l.s4 1966171168
  %v3620 = vunpack.c.0.s8 %v3619
  %v3621 = vlaneseq
  %v3622 = vshrl.u32 %v3621, 7
  %v3623 = vsub.s32 %v3620, %v3622
  %v3624 = vrot.slane %v3610, %v3623
  %v3625 = vcombine.high %v3617, %v3617
  %v3626 = vcombine.high %v3624, %v3624
  %v3628 = vunpack.c.l.s4 1966171168
  %v3629 = vunpack.c.0.s8 %v3628
  %v3630 = vlaneseq
  %v3631 = vshrl.u32 %v3630, 7
  %v3632 = vsub.s32 %v3629, %v3631
  %v3633 = vrot.slane %v3617, %v3632
  %v3635 = vunpack.c.l.s4 1966171168
  %v3636 = vunpack.c.0.s8 %v3635
  %v3637 = vlaneseq
  %v3638 = vshrl.u32 %v3637, 7
  %v3639 = vsub.s32 %v3636, %v3638
  %v3640 = vrot.slane %v3624, %v3639
  %v3642 = vunpack.c.l.s4 1966171168
  %v3643 = vunpack.c.0.s8 %v3642
  %v3644 = vlaneseq
  %v3645 = vshrl.u32 %v3644, 7
  %v3646 = vsub.s32 %v3643, %v3645
  %v3647 = vrot.slane %v3625, %v3646
  %v3649 = vunpack.c.l.s4 1966171168
  %v3650 = vunpack.c.0.s8 %v3649
  %v3651 = vlaneseq
  %v3652 = vshrl.u32 %v3651, 7
  %v3653 = vsub.s32 %v3650, %v3652
  %v3654 = vrot.slane %v3626, %v3653
  %v3655 = vcombine.high %v3633, %v3633
  %v3656 = vcombine.high %v3640, %v3640
  %v3657 = vcombine.high %v3647, %v3647
  %v3658 = vcombine.high %v3654, %v3654
  %v3659 = vcombine.high %v3321, %v3321
  %v3661 = vunpack.c.l.s4 1966171168
  %v3662 = vunpack.c.0.s8 %v3661
  %v3663 = vlaneseq
  %v3664 = vshrl.u32 %v3663, 7
  %v3665 = vsub.s32 %v3662, %v3664
  %v3666 = vrot.slane %v3321, %v3665
  %v3668 = vunpack.c.l.s4 1966171168
  %v3669 = vunpack.c.0.s8 %v3668
  %v3670 = vlaneseq
  %v3671 = vshrl.u32 %v3670, 7
  %v3672 = vsub.s32 %v3669, %v3671
  %v3673 = vrot.slane %v3659, %v3672
  %v3674 = vcombine.high %v3666, %v3666
  %v3675 = vcombine.high %v3673, %v3673
  %v3677 = vunpack.c.l.s4 1966171168
  %v3678 = vunpack.c.0.s8 %v3677
  %v3679 = vlaneseq
  %v3680 = vshrl.u32 %v3679, 7
  %v3681 = vsub.s32 %v3678, %v3680
  %v3682 = vrot.slane %v3666, %v3681
  %v3684 = vunpack.c.l.s4 1966171168
  %v3685 = vunpack.c.0.s8 %v3684
  %v3686 = vlaneseq
  %v3687 = vshrl.u32 %v3686, 7
  %v3688 = vsub.s32 %v3685, %v3687
  %v3689 = vrot.slane %v3673, %v3688
  %v3691 = vunpack.c.l.s4 1966171168
  %v3692 = vunpack.c.0.s8 %v3691
  %v3693 = vlaneseq
  %v3694 = vshrl.u32 %v3693, 7
  %v3695 = vsub.s32 %v3692, %v3694
  %v3696 = vrot.slane %v3674, %v3695
  %v3698 = vunpack.c.l.s4 1966171168
  %v3699 = vunpack.c.0.s8 %v3698
  %v3700 = vlaneseq
  %v3701 = vshrl.u32 %v3700, 7
  %v3702 = vsub.s32 %v3699, %v3701
  %v3703 = vrot.slane %v3675, %v3702
  %v3704 = vcombine.high %v3682, %v3682
  %v3705 = vcombine.high %v3689, %v3689
  %v3706 = vcombine.high %v3696, %v3696
  %v3707 = vcombine.high %v3703, %v3703
  %v3708 = vcombine.high %v3324, %v3324
  %v3710 = vunpack.c.l.s4 1966171168
  %v3711 = vunpack.c.0.s8 %v3710
  %v3712 = vlaneseq
  %v3713 = vshrl.u32 %v3712, 7
  %v3714 = vsub.s32 %v3711, %v3713
  %v3715 = vrot.slane %v3324, %v3714
  %v3717 = vunpack.c.l.s4 1966171168
  %v3718 = vunpack.c.0.s8 %v3717
  %v3719 = vlaneseq
  %v3720 = vshrl.u32 %v3719, 7
  %v3721 = vsub.s32 %v3718, %v3720
  %v3722 = vrot.slane %v3708, %v3721
  %v3723 = vcombine.high %v3715, %v3715
  %v3724 = vcombine.high %v3722, %v3722
  %v3726 = vunpack.c.l.s4 1966171168
  %v3727 = vunpack.c.0.s8 %v3726
  %v3728 = vlaneseq
  %v3729 = vshrl.u32 %v3728, 7
  %v3730 = vsub.s32 %v3727, %v3729
  %v3731 = vrot.slane %v3715, %v3730
  %v3733 = vunpack.c.l.s4 1966171168
  %v3734 = vunpack.c.0.s8 %v3733
  %v3735 = vlaneseq
  %v3736 = vshrl.u32 %v3735, 7
  %v3737 = vsub.s32 %v3734, %v3736
  %v3738 = vrot.slane %v3722, %v3737
  %v3740 = vunpack.c.l.s4 1966171168
  %v3741 = vunpack.c.0.s8 %v3740
  %v3742 = vlaneseq
  %v3743 = vshrl.u32 %v3742, 7
  %v3744 = vsub.s32 %v3741, %v3743
  %v3745 = vrot.slane %v3723, %v3744
  %v3747 = vunpack.c.l.s4 1966171168
  %v3748 = vunpack.c.0.s8 %v3747
  %v3749 = vlaneseq
  %v3750 = vshrl.u32 %v3749, 7
  %v3751 = vsub.s32 %v3748, %v3750
  %v3752 = vrot.slane %v3724, %v3751
  %v3753 = vcombine.high %v3731, %v3731
  %v3754 = vcombine.high %v3738, %v3738
  %v3755 = vcombine.high %v3745, %v3745
  %v3756 = vcombine.high %v3752, %v3752
  %v3757 = vcombine.high %v3329, %v3329
  %v3759 = vunpack.c.l.s4 1966171168
  %v3760 = vunpack.c.0.s8 %v3759
  %v3761 = vlaneseq
  %v3762 = vshrl.u32 %v3761, 7
  %v3763 = vsub.s32 %v3760, %v3762
  %v3764 = vrot.slane %v3329, %v3763
  %v3766 = vunpack.c.l.s4 1966171168
  %v3767 = vunpack.c.0.s8 %v3766
  %v3768 = vlaneseq
  %v3769 = vshrl.u32 %v3768, 7
  %v3770 = vsub.s32 %v3767, %v3769
  %v3771 = vrot.slane %v3757, %v3770
  %v3772 = vcombine.high %v3764, %v3764
  %v3773 = vcombine.high %v3771, %v3771
  %v3775 = vunpack.c.l.s4 1966171168
  %v3776 = vunpack.c.0.s8 %v3775
  %v3777 = vlaneseq
  %v3778 = vshrl.u32 %v3777, 7
  %v3779 = vsub.s32 %v3776, %v3778
  %v3780 = vrot.slane %v3764, %v3779
  %v3782 = vunpack.c.l.s4 1966171168
  %v3783 = vunpack.c.0.s8 %v3782
  %v3784 = vlaneseq
  %v3785 = vshrl.u32 %v3784, 7
  %v3786 = vsub.s32 %v3783, %v3785
  %v3787 = vrot.slane %v3771, %v3786
  %v3789 = vunpack.c.l.s4 1966171168
  %v3790 = vunpack.c.0.s8 %v3789
  %v3791 = vlaneseq
  %v3792 = vshrl.u32 %v3791, 7
  %v3793 = vsub.s32 %v3790, %v3792
  %v3794 = vrot.slane %v3772, %v3793
  %v3796 = vunpack.c.l.s4 1966171168
  %v3797 = vunpack.c.0.s8 %v3796
  %v3798 = vlaneseq
  %v3799 = vshrl.u32 %v3798, 7
  %v3800 = vsub.s32 %v3797, %v3799
  %v3801 = vrot.slane %v3773, %v3800
  %v3802 = vcombine.high %v3780, %v3780
  %v3803 = vcombine.high %v3787, %v3787
  %v3804 = vcombine.high %v3794, %v3794
  %v3805 = vcombine.high %v3801, %v3801
  %v3806 = vcombine.high %v3332, %v3332
  %v3808 = vunpack.c.l.s4 1966171168
  %v3809 = vunpack.c.0.s8 %v3808
  %v3810 = vlaneseq
  %v3811 = vshrl.u32 %v3810, 7
  %v3812 = vsub.s32 %v3809, %v3811
  %v3813 = vrot.slane %v3332, %v3812
  %v3815 = vunpack.c.l.s4 1966171168
  %v3816 = vunpack.c.0.s8 %v3815
  %v3817 = vlaneseq
  %v3818 = vshrl.u32 %v3817, 7
  %v3819 = vsub.s32 %v3816, %v3818
  %v3820 = vrot.slane %v3806, %v3819
  %v3821 = vcombine.high %v3813, %v3813
  %v3822 = vcombine.high %v3820, %v3820
  %v3824 = vunpack.c.l.s4 1966171168
  %v3825 = vunpack.c.0.s8 %v3824
  %v3826 = vlaneseq
  %v3827 = vshrl.u32 %v3826, 7
  %v3828 = vsub.s32 %v3825, %v3827
  %v3829 = vrot.slane %v3813, %v3828
  %v3831 = vunpack.c.l.s4 1966171168
  %v3832 = vunpack.c.0.s8 %v3831
  %v3833 = vlaneseq
  %v3834 = vshrl.u32 %v3833, 7
  %v3835 = vsub.s32 %v3832, %v3834
  %v3836 = vrot.slane %v3820, %v3835
  %v3838 = vunpack.c.l.s4 1966171168
  %v3839 = vunpack.c.0.s8 %v3838
  %v3840 = vlaneseq
  %v3841 = vshrl.u32 %v3840, 7
  %v3842 = vsub.s32 %v3839, %v3841
  %v3843 = vrot.slane %v3821, %v3842
  %v3845 = vunpack.c.l.s4 1966171168
  %v3846 = vunpack.c.0.s8 %v3845
  %v3847 = vlaneseq
  %v3848 = vshrl.u32 %v3847, 7
  %v3849 = vsub.s32 %v3846, %v3848
  %v3850 = vrot.slane %v3822, %v3849
  %v3851 = vcombine.high %v3829, %v3829
  %v3852 = vcombine.high %v3836, %v3836
  %v3853 = vcombine.high %v3843, %v3843
  %v3854 = vcombine.high %v3850, %v3850
  %v3855 = vcombine.high %v3337, %v3337
  %v3857 = vunpack.c.l.s4 1966171168
  %v3858 = vunpack.c.0.s8 %v3857
  %v3859 = vlaneseq
  %v3860 = vshrl.u32 %v3859, 7
  %v3861 = vsub.s32 %v3858, %v3860
  %v3862 = vrot.slane %v3337, %v3861
  %v3864 = vunpack.c.l.s4 1966171168
  %v3865 = vunpack.c.0.s8 %v3864
  %v3866 = vlaneseq
  %v3867 = vshrl.u32 %v3866, 7
  %v3868 = vsub.s32 %v3865, %v3867
  %v3869 = vrot.slane %v3855, %v3868
  %v3870 = vcombine.high %v3862, %v3862
  %v3871 = vcombine.high %v3869, %v3869
  %v3873 = vunpack.c.l.s4 1966171168
  %v3874 = vunpack.c.0.s8 %v3873
  %v3875 = vlaneseq
  %v3876 = vshrl.u32 %v3875, 7
  %v3877 = vsub.s32 %v3874, %v3876
  %v3878 = vrot.slane %v3862, %v3877
  %v3880 = vunpack.c.l.s4 1966171168
  %v3881 = vunpack.c.0.s8 %v3880
  %v3882 = vlaneseq
  %v3883 = vshrl.u32 %v3882, 7
  %v3884 = vsub.s32 %v3881, %v3883
  %v3885 = vrot.slane %v3869, %v3884
  %v3887 = vunpack.c.l.s4 1966171168
  %v3888 = vunpack.c.0.s8 %v3887
  %v3889 = vlaneseq
  %v3890 = vshrl.u32 %v3889, 7
  %v3891 = vsub.s32 %v3888, %v3890
  %v3892 = vrot.slane %v3870, %v3891
  %v3894 = vunpack.c.l.s4 1966171168
  %v3895 = vunpack.c.0.s8 %v3894
  %v3896 = vlaneseq
  %v3897 = vshrl.u32 %v3896, 7
  %v3898 = vsub.s32 %v3895, %v3897
  %v3899 = vrot.slane %v3871, %v3898
  %v3900 = vcombine.high %v3878, %v3878
  %v3901 = vcombine.high %v3885, %v3885
  %v3902 = vcombine.high %v3892, %v3892
  %v3903 = vcombine.high %v3899, %v3899
  %v3904 = vcombine.high %v3340, %v3340
  %v3906 = vunpack.c.l.s4 1966171168
  %v3907 = vunpack.c.0.s8 %v3906
  %v3908 = vlaneseq
  %v3909 = vshrl.u32 %v3908, 7
  %v3910 = vsub.s32 %v3907, %v3909
  %v3911 = vrot.slane %v3340, %v3910
  %v3913 = vunpack.c.l.s4 1966171168
  %v3914 = vunpack.c.0.s8 %v3913
  %v3915 = vlaneseq
  %v3916 = vshrl.u32 %v3915, 7
  %v3917 = vsub.s32 %v3914, %v3916
  %v3918 = vrot.slane %v3904, %v3917
  %v3919 = vcombine.high %v3911, %v3911
  %v3920 = vcombine.high %v3918, %v3918
  %v3922 = vunpack.c.l.s4 1966171168
  %v3923 = vunpack.c.0.s8 %v3922
  %v3924 = vlaneseq
  %v3925 = vshrl.u32 %v3924, 7
  %v3926 = vsub.s32 %v3923, %v3925
  %v3927 = vrot.slane %v3911, %v3926
  %v3929 = vunpack.c.l.s4 1966171168
  %v3930 = vunpack.c.0.s8 %v3929
  %v3931 = vlaneseq
  %v3932 = vshrl.u32 %v3931, 7
  %v3933 = vsub.s32 %v3930, %v3932
  %v3934 = vrot.slane %v3918, %v3933
  %v3936 = vunpack.c.l.s4 1966171168
  %v3937 = vunpack.c.0.s8 %v3936
  %v3938 = vlaneseq
  %v3939 = vshrl.u32 %v3938, 7
  %v3940 = vsub.s32 %v3937, %v3939
  %v3941 = vrot.slane %v3919, %v3940
  %v3943 = vunpack.c.l.s4 1966171168
  %v3944 = vunpack.c.0.s8 %v3943
  %v3945 = vlaneseq
  %v3946 = vshrl.u32 %v3945, 7
  %v3947 = vsub.s32 %v3944, %v3946
  %v3948 = vrot.slane %v3920, %v3947
  %v3949 = vcombine.high %v3927, %v3927
  %v3950 = vcombine.high %v3934, %v3934
  %v3951 = vcombine.high %v3941, %v3941
  %v3952 = vcombine.high %v3948, %v3948
  %v3953 = vcombine.high %v3345, %v3345
  %v3955 = vunpack.c.l.s4 1966171168
  %v3956 = vunpack.c.0.s8 %v3955
  %v3957 = vlaneseq
  %v3958 = vshrl.u32 %v3957, 7
  %v3959 = vsub.s32 %v3956, %v3958
  %v3960 = vrot.slane %v3345, %v3959
  %v3962 = vunpack.c.l.s4 1966171168
  %v3963 = vunpack.c.0.s8 %v3962
  %v3964 = vlaneseq
  %v3965 = vshrl.u32 %v3964, 7
  %v3966 = vsub.s32 %v3963, %v3965
  %v3967 = vrot.slane %v3953, %v3966
  %v3968 = vcombine.high %v3960, %v3960
  %v3969 = vcombine.high %v3967, %v3967
  %v3971 = vunpack.c.l.s4 1966171168
  %v3972 = vunpack.c.0.s8 %v3971
  %v3973 = vlaneseq
  %v3974 = vshrl.u32 %v3973, 7
  %v3975 = vsub.s32 %v3972, %v3974
  %v3976 = vrot.slane %v3960, %v3975
  %v3978 = vunpack.c.l.s4 1966171168
  %v3979 = vunpack.c.0.s8 %v3978
  %v3980 = vlaneseq
  %v3981 = vshrl.u32 %v3980, 7
  %v3982 = vsub.s32 %v3979, %v3981
  %v3983 = vrot.slane %v3967, %v3982
  %v3985 = vunpack.c.l.s4 1966171168
  %v3986 = vunpack.c.0.s8 %v3985
  %v3987 = vlaneseq
  %v3988 = vshrl.u32 %v3987, 7
  %v3989 = vsub.s32 %v3986, %v3988
  %v3990 = vrot.slane %v3968, %v3989
  %v3992 = vunpack.c.l.s4 1966171168
  %v3993 = vunpack.c.0.s8 %v3992
  %v3994 = vlaneseq
  %v3995 = vshrl.u32 %v3994, 7
  %v3996 = vsub.s32 %v3993, %v3995
  %v3997 = vrot.slane %v3969, %v3996
  %v3998 = vcombine.high %v3976, %v3976
  %v3999 = vcombine.high %v3983, %v3983
  %v4000 = vcombine.high %v3990, %v3990
  %v4001 = vcombine.high %v3997, %v3997
  %v4002 = vcombine.high %v3348, %v3348
  %v4004 = vunpack.c.l.s4 1966171168
  %v4005 = vunpack.c.0.s8 %v4004
  %v4006 = vlaneseq
  %v4007 = vshrl.u32 %v4006, 7
  %v4008 = vsub.s32 %v4005, %v4007
  %v4009 = vrot.slane %v3348, %v4008
  %v4011 = vunpack.c.l.s4 1966171168
  %v4012 = vunpack.c.0.s8 %v4011
  %v4013 = vlaneseq
  %v4014 = vshrl.u32 %v4013, 7
  %v4015 = vsub.s32 %v4012, %v4014
  %v4016 = vrot.slane %v4002, %v4015
  %v4017 = vcombine.high %v4009, %v4009
  %v4018 = vcombine.high %v4016, %v4016
  %v4020 = vunpack.c.l.s4 1966171168
  %v4021 = vunpack.c.0.s8 %v4020
  %v4022 = vlaneseq
  %v4023 = vshrl.u32 %v4022, 7
  %v4024 = vsub.s32 %v4021, %v4023
  %v4025 = vrot.slane %v4009, %v4024
  %v4027 = vunpack.c.l.s4 1966171168
  %v4028 = vunpack.c.0.s8 %v4027
  %v4029 = vlaneseq
  %v4030 = vshrl.u32 %v4029, 7
  %v4031 = vsub.s32 %v4028, %v4030
  %v4032 = vrot.slane %v4016, %v4031
  %v4034 = vunpack.c.l.s4 1966171168
  %v4035 = vunpack.c.0.s8 %v4034
  %v4036 = vlaneseq
  %v4037 = vshrl.u32 %v4036, 7
  %v4038 = vsub.s32 %v4035, %v4037
  %v4039 = vrot.slane %v4017, %v4038
  %v4041 = vunpack.c.l.s4 1966171168
  %v4042 = vunpack.c.0.s8 %v4041
  %v4043 = vlaneseq
  %v4044 = vshrl.u32 %v4043, 7
  %v4045 = vsub.s32 %v4042, %v4044
  %v4046 = vrot.slane %v4018, %v4045
  %v4047 = vcombine.high %v4025, %v4025
  %v4048 = vcombine.high %v4032, %v4032
  %v4049 = vcombine.high %v4039, %v4039
  %v4050 = vcombine.high %v4046, %v4046
  %v4051 = vcombine.low %v3388, %v3402
  %v4052 = vcombine.low %v3410, %v3412
  %v4053 = vcombine.low %v3395, %v3409
  %v4055 = vunpack.c.l.s4 1966171168
  %v4056 = vunpack.c.0.s8 %v4055
  %v4057 = vlaneseq
  %v4058 = vshrl.u32 %v4057, 7
  %v4059 = vsub.s32 %v4056, %v4058
  %v4060 = vrot.slane %v4051, %v4059
  %v4062 = vunpack.c.l.s4 1966171168
  %v4063 = vunpack.c.0.s8 %v4062
  %v4064 = vlaneseq
  %v4065 = vshrl.u32 %v4064, 7
  %v4066 = vsub.s32 %v4063, %v4065
  %v4067 = vrot.slane %v4052, %v4066
  %v4069 = vunpack.c.l.s4 1966171168
  %v4070 = vunpack.c.0.s8 %v4069
  %v4071 = vlaneseq
  %v4072 = vshrl.u32 %v4071, 7
  %v4073 = vsub.s32 %v4070, %v4072
  %v4074 = vrot.slane %v4053, %v4073
  %v4076 = vunpack.c.l.s4 1966171168
  %v4077 = vunpack.c.0.s8 %v4076
  %v4078 = vlaneseq
  %v4079 = vshrl.u32 %v4078, 7
  %v4080 = vsub.s32 %v4077, %v4079
  %v4081 = vrot.slane %v3411, %v4080
  %v4082 = vcombine.low %v4060, %v4067
  %v4083 = vcombine.low %v4074, %v4081
  %v4085 = vunpack.c.l.s4 1966171168
  %v4086 = vunpack.c.0.s8 %v4085
  %v4087 = vlaneseq
  %v4088 = vshrl.u32 %v4087, 7
  %v4089 = vsub.s32 %v4086, %v4088
  %v4090 = vrot.slane %v4082, %v4089
  %v4092 = vunpack.c.l.s4 1966171168
  %v4093 = vunpack.c.0.s8 %v4092
  %v4094 = vlaneseq
  %v4095 = vshrl.u32 %v4094, 7
  %v4096 = vsub.s32 %v4093, %v4095
  %v4097 = vrot.slane %v4083, %v4096
  %v4098 = vcombine.low %v4090, %v4097
  %v4099 = vcombine.low %v3413, %v3437
  %v4100 = vcombine.low %v3451, %v3459
  %v4101 = vcombine.low %v3461, %v3444
  %v4103 = vunpack.c.l.s4 1966171168
  %v4104 = vunpack.c.0.s8 %v4103
  %v4105 = vlaneseq
  %v4106 = vshrl.u32 %v4105, 7
  %v4107 = vsub.s32 %v4104, %v4106
  %v4108 = vrot.slane %v4099, %v4107
  %v4110 = vunpack.c.l.s4 1966171168
  %v4111 = vunpack.c.0.s8 %v4110
  %v4112 = vlaneseq
  %v4113 = vshrl.u32 %v4112, 7
  %v4114 = vsub.s32 %v4111, %v4113
  %v4115 = vrot.slane %v4100, %v4114
  %v4117 = vunpack.c.l.s4 1966171168
  %v4118 = vunpack.c.0.s8 %v4117
  %v4119 = vlaneseq
  %v4120 = vshrl.u32 %v4119, 7
  %v4121 = vsub.s32 %v4118, %v4120
  %v4122 = vrot.slane %v4101, %v4121
  %v4124 = vunpack.c.l.s4 1966171168
  %v4125 = vunpack.c.0.s8 %v4124
  %v4126 = vlaneseq
  %v4127 = vshrl.u32 %v4126, 7
  %v4128 = vsub.s32 %v4125, %v4127
  %v4129 = vrot.slane %v3458, %v4128
  %v4130 = vcombine.low %v4108, %v4115
  %v4131 = vcombine.low %v4122, %v4129
  %v4133 = vunpack.c.l.s4 1966171168
  %v4134 = vunpack.c.0.s8 %v4133
  %v4135 = vlaneseq
  %v4136 = vshrl.u32 %v4135, 7
  %v4137 = vsub.s32 %v4134, %v4136
  %v4138 = vrot.slane %v4130, %v4137
  %v4140 = vunpack.c.l.s4 1966171168
  %v4141 = vunpack.c.0.s8 %v4140
  %v4142 = vlaneseq
  %v4143 = vshrl.u32 %v4142, 7
  %v4144 = vsub.s32 %v4141, %v4143
  %v4145 = vrot.slane %v4131, %v4144
  %v4146 = vcombine.low %v4138, %v4145
  %v4147 = vcombine.low %v3460, %v3462
  %v4148 = vcombine.low %v3486, %v3500
  %v4149 = vcombine.low %v3508, %v3510
  %v4151 = vunpack.c.l.s4 1966171168
  %v4152 = vunpack.c.0.s8 %v4151
  %v4153 = vlaneseq
  %v4154 = vshrl.u32 %v4153, 7
  %v4155 = vsub.s32 %v4152, %v4154
  %v4156 = vrot.slane %v4147, %v4155
  %v4158 = vunpack.c.l.s4 1966171168
  %v4159 = vunpack.c.0.s8 %v4158
  %v4160 = vlaneseq
  %v4161 = vshrl.u32 %v4160, 7
  %v4162 = vsub.s32 %v4159, %v4161
  %v4163 = vrot.slane %v4148, %v4162
  %v4165 = vunpack.c.l.s4 1966171168
  %v4166 = vunpack.c.0.s8 %v4165
  %v4167 = vlaneseq
  %v4168 = vshrl.u32 %v4167, 7
  %v4169 = vsub.s32 %v4166, %v4168
  %v4170 = vrot.slane %v4149, %v4169
  %v4172 = vunpack.c.l.s4 1966171168
  %v4173 = vunpack.c.0.s8 %v4172
  %v4174 = vlaneseq
  %v4175 = vshrl.u32 %v4174, 7
  %v4176 = vsub.s32 %v4173, %v4175
  %v4177 = vrot.slane %v3493, %v4176
  %v4178 = vcombine.low %v4156, %v4163
  %v4179 = vcombine.low %v4170, %v4177
  %v4181 = vunpack.c.l.s4 1966171168
  %v4182 = vunpack.c.0.s8 %v4181
  %v4183 = vlaneseq
  %v4184 = vshrl.u32 %v4183, 7
  %v4185 = vsub.s32 %v4182, %v4184
  %v4186 = vrot.slane %v4178, %v4185
  %v4188 = vunpack.c.l.s4 1966171168
  %v4189 = vunpack.c.0.s8 %v4188
  %v4190 = vlaneseq
  %v4191 = vshrl.u32 %v4190, 7
  %v4192 = vsub.s32 %v4189, %v4191
  %v4193 = vrot.slane %v4179, %v4192
  %v4194 = vcombine.low %v4186, %v4193
  %v4195 = vcombine.low %v3507, %v3509
  %v4196 = vcombine.low %v3511, %v3535
  %v4197 = vcombine.low %v3549, %v3557
  %v4199 = vunpack.c.l.s4 1966171168
  %v4200 = vunpack.c.0.s8 %v4199
  %v4201 = vlaneseq
  %v4202 = vshrl.u32 %v4201, 7
  %v4203 = vsub.s32 %v4200, %v4202
  %v4204 = vrot.slane %v4195, %v4203
  %v4206 = vunpack.c.l.s4 1966171168
  %v4207 = vunpack.c.0.s8 %v4206
  %v4208 = vlaneseq
  %v4209 = vshrl.u32 %v4208, 7
  %v4210 = vsub.s32 %v4207, %v4209
  %v4211 = vrot.slane %v4196, %v4210
  %v4213 = vunpack.c.l.s4 1966171168
  %v4214 = vunpack.c.0.s8 %v4213
  %v4215 = vlaneseq
  %v4216 = vshrl.u32 %v4215, 7
  %v4217 = vsub.s32 %v4214, %v4216
  %v4218 = vrot.slane %v4197, %v4217
  %v4220 = vunpack.c.l.s4 1966171168
  %v4221 = vunpack.c.0.s8 %v4220
  %v4222 = vlaneseq
  %v4223 = vshrl.u32 %v4222, 7
  %v4224 = vsub.s32 %v4221, %v4223
  %v4225 = vrot.slane %v3559, %v4224
  %v4226 = vcombine.low %v4204, %v4211
  %v4227 = vcombine.low %v4218, %v4225
  %v4229 = vunpack.c.l.s4 1966171168
  %v4230 = vunpack.c.0.s8 %v4229
  %v4231 = vlaneseq
  %v4232 = vshrl.u32 %v4231, 7
  %v4233 = vsub.s32 %v4230, %v4232
  %v4234 = vrot.slane %v4226, %v4233
  %v4236 = vunpack.c.l.s4 1966171168
  %v4237 = vunpack.c.0.s8 %v4236
  %v4238 = vlaneseq
  %v4239 = vshrl.u32 %v4238, 7
  %v4240 = vsub.s32 %v4237, %v4239
  %v4241 = vrot.slane %v4227, %v4240
  %v4242 = vcombine.low %v4234, %v4241
  %v4243 = vcombine.low %v3542, %v3556
  %v4244 = vcombine.low %v3558, %v3560
  %v4245 = vcombine.low %v3584, %v3598
  %v4247 = vunpack.c.l.s4 1966171168
  %v4248 = vunpack.c.0.s8 %v4247
  %v4249 = vlaneseq
  %v4250 = vshrl.u32 %v4249, 7
  %v4251 = vsub.s32 %v4248, %v4250
  %v4252 = vrot.slane %v4243, %v4251
  %v4254 = vunpack.c.l.s4 1966171168
  %v4255 = vunpack.c.0.s8 %v4254
  %v4256 = vlaneseq
  %v4257 = vshrl.u32 %v4256, 7
  %v4258 = vsub.s32 %v4255, %v4257
  %v4259 = vrot.slane %v4244, %v4258
  %v4261 = vunpack.c.l.s4 1966171168
  %v4262 = vunpack.c.0.s8 %v4261
  %v4263 = vlaneseq
  %v4264 = vshrl.u32 %v4263, 7
  %v4265 = vsub.s32 %v4262, %v4264
  %v4266 = vrot.slane %v4245, %v4265
  %v4268 = vunpack.c.l.s4 1966171168
  %v4269 = vunpack.c.0.s8 %v4268
  %v4270 = vlaneseq
  %v4271 = vshrl.u32 %v4270, 7
  %v4272 = vsub.s32 %v4269, %v4271
  %v4273 = vrot.slane %v3606, %v4272
  %v4274 = vcombine.low %v4252, %v4259
  %v4275 = vcombine.low %v4266, %v4273
  %v4277 = vunpack.c.l.s4 1966171168
  %v4278 = vunpack.c.0.s8 %v4277
  %v4279 = vlaneseq
  %v4280 = vshrl.u32 %v4279, 7
  %v4281 = vsub.s32 %v4278, %v4280
  %v4282 = vrot.slane %v4274, %v4281
  %v4284 = vunpack.c.l.s4 1966171168
  %v4285 = vunpack.c.0.s8 %v4284
  %v4286 = vlaneseq
  %v4287 = vshrl.u32 %v4286, 7
  %v4288 = vsub.s32 %v4285, %v4287
  %v4289 = vrot.slane %v4275, %v4288
  %v4290 = vcombine.low %v4282, %v4289
  %v4291 = vcombine.low %v3608, %v3591
  %v4292 = vcombine.low %v3605, %v3607
  %v4293 = vcombine.low %v3609, %v3633
  %v4295 = vunpack.c.l.s4 1966171168
  %v4296 = vunpack.c.0.s8 %v4295
  %v4297 = vlaneseq
  %v4298 = vshrl.u32 %v4297, 7
  %v4299 = vsub.s32 %v4296, %v4298
  %v4300 = vrot.slane %v4291, %v4299
  %v4302 = vunpack.c.l.s4 1966171168
  %v4303 = vunpack.c.0.s8 %v4302
  %v4304 = vlaneseq
  %v4305 = vshrl.u32 %v4304, 7
  %v4306 = vsub.s32 %v4303, %v4305
  %v4307 = vrot.slane %v4292, %v4306
  %v4309 = vunpack.c.l.s4 1966171168
  %v4310 = vunpack.c.0.s8 %v4309
  %v4311 = vlaneseq
  %v4312 = vshrl.u32 %v4311, 7
  %v4313 = vsub.s32 %v4310, %v4312
  %v4314 = vrot.slane %v4293, %v4313
  %v4316 = vunpack.c.l.s4 1966171168
  %v4317 = vunpack.c.0.s8 %v4316
  %v4318 = vlaneseq
  %v4319 = vshrl.u32 %v4318, 7
  %v4320 = vsub.s32 %v4317, %v4319
  %v4321 = vrot.slane %v3647, %v4320
  %v4322 = vcombine.low %v4300, %v4307
  %v4323 = vcombine.low %v4314, %v4321
  %v4325 = vunpack.c.l.s4 1966171168
  %v4326 = vunpack.c.0.s8 %v4325
  %v4327 = vlaneseq
  %v4328 = vshrl.u32 %v4327, 7
  %v4329 = vsub.s32 %v4326, %v4328
  %v4330 = vrot.slane %v4322, %v4329
  %v4332 = vunpack.c.l.s4 1966171168
  %v4333 = vunpack.c.0.s8 %v4332
  %v4334 = vlaneseq
  %v4335 = vshrl.u32 %v4334, 7
  %v4336 = vsub.s32 %v4333, %v4335
  %v4337 = vrot.slane %v4323, %v4336
  %v4338 = vcombine.low %v4330, %v4337
  %v4339 = vcombine.low %v3655, %v3657
  %v4340 = vcombine.low %v3640, %v3654
  %v4341 = vcombine.low %v3656, %v3658
  %v4343 = vunpack.c.l.s4 1966171168
  %v4344 = vunpack.c.0.s8 %v4343
  %v4345 = vlaneseq
  %v4346 = vshrl.u32 %v4345, 7
  %v4347 = vsub.s32 %v4344, %v4346
  %v4348 = vrot.slane %v4339, %v4347
  %v4350 = vunpack.c.l.s4 1966171168
  %v4351 = vunpack.c.0.s8 %v4350
  %v4352 = vlaneseq
  %v4353 = vshrl.u32 %v4352, 7
  %v4354 = vsub.s32 %v4351, %v4353
  %v4355 = vrot.slane %v4340, %v4354
  %v4357 = vunpack.c.l.s4 1966171168
  %v4358 = vunpack.c.0.s8 %v4357
  %v4359 = vlaneseq
  %v4360 = vshrl.u32 %v4359, 7
  %v4361 = vsub.s32 %v4358, %v4360
  %v4362 = vrot.slane %v4341, %v4361
  %v4364 = vunpack.c.l.s4 1966171168
  %v4365 = vunpack.c.0.s8 %v4364
  %v4366 = vlaneseq
  %v4367 = vshrl.u32 %v4366, 7
  %v4368 = vsub.s32 %v4365, %v4367
  %v4369 = vrot.slane %v3682, %v4368
  %v4370 = vcombine.low %v4348, %v4355
  %v4371 = vcombine.low %v4362, %v4369
  %v4373 = vunpack.c.l.s4 1966171168
  %v4374 = vunpack.c.0.s8 %v4373
  %v4375 = vlaneseq
  %v4376 = vshrl.u32 %v4375, 7
  %v4377 = vsub.s32 %v4374, %v4376
  %v4378 = vrot.slane %v4370, %v4377
  %v4380 = vunpack.c.l.s4 1966171168
  %v4381 = vunpack.c.0.s8 %v4380
  %v4382 = vlaneseq
  %v4383 = vshrl.u32 %v4382, 7
  %v4384 = vsub.s32 %v4381, %v4383
  %v4385 = vrot.slane %v4371, %v4384
  %v4386 = vcombine.low %v4378, %v4385
  %v4387 = vcombine.low %v3696, %v3704
  %v4388 = vcombine.low %v3706, %v3689
  %v4389 = vcombine.low %v3703, %v3705
  %v4391 = vunpack.c.l.s4 1966171168
  %v4392 = vunpack.c.0.s8 %v4391
  %v4393 = vlaneseq
  %v4394 = vshrl.u32 %v4393, 7
  %v4395 = vsub.s32 %v4392, %v4394
  %v4396 = vrot.slane %v4387, %v4395
  %v4398 = vunpack.c.l.s4 1966171168
  %v4399 = vunpack.c.0.s8 %v4398
  %v4400 = vlaneseq
  %v4401 = vshrl.u32 %v4400, 7
  %v4402 = vsub.s32 %v4399, %v4401
  %v4403 = vrot.slane %v4388, %v4402
  %v4405 = vunpack.c.l.s4 1966171168
  %v4406 = vunpack.c.0.s8 %v4405
  %v4407 = vlaneseq
  %v4408 = vshrl.u32 %v4407, 7
  %v4409 = vsub.s32 %v4406, %v4408
  %v4410 = vrot.slane %v4389, %v4409
  %v4412 = vunpack.c.l.s4 1966171168
  %v4413 = vunpack.c.0.s8 %v4412
  %v4414 = vlaneseq
  %v4415 = vshrl.u32 %v4414, 7
  %v4416 = vsub.s32 %v4413, %v4415
  %v4417 = vrot.slane %v3707, %v4416
  %v4418 = vcombine.low %v4396, %v4403
  %v4419 = vcombine.low %v4410, %v4417
  %v4421 = vunpack.c.l.s4 1966171168
  %v4422 = vunpack.c.0.s8 %v4421
  %v4423 = vlaneseq
  %v4424 = vshrl.u32 %v4423, 7
  %v4425 = vsub.s32 %v4422, %v4424
  %v4426 = vrot.slane %v4418, %v4425
  %v4428 = vunpack.c.l.s4 1966171168
  %v4429 = vunpack.c.0.s8 %v4428
  %v4430 = vlaneseq
  %v4431 = vshrl.u32 %v4430, 7
  %v4432 = vsub.s32 %v4429, %v4431
  %v4433 = vrot.slane %v4419, %v4432
  %v4434 = vcombine.low %v4426, %v4433
  %v4435 = vcombine.low %v3731, %v3745
  %v4436 = vcombine.low %v3753, %v3755
  %v4437 = vcombine.low %v3738, %v3752
  %v4439 = vunpack.c.l.s4 1966171168
  %v4440 = vunpack.c.0.s8 %v4439
  %v4441 = vlaneseq
  %v4442 = vshrl.u32 %v4441, 7
  %v4443 = vsub.s32 %v4440, %v4442
  %v4444 = vrot.slane %v4435, %v4443
  %v4446 = vunpack.c.l.s4 1966171168
  %v4447 = vunpack.c.0.s8 %v4446
  %v4448 = vlaneseq
  %v4449 = vshrl.u32 %v4448, 7
  %v4450 = vsub.s32 %v4447, %v4449
  %v4451 = vrot.slane %v4436, %v4450
  %v4453 = vunpack.c.l.s4 1966171168
  %v4454 = vunpack.c.0.s8 %v4453
  %v4455 = vlaneseq
  %v4456 = vshrl.u32 %v4455, 7
  %v4457 = vsub.s32 %v4454, %v4456
  %v4458 = vrot.slane %v4437, %v4457
  %v4460 = vunpack.c.l.s4 1966171168
  %v4461 = vunpack.c.0.s8 %v4460
  %v4462 = vlaneseq
  %v4463 = vshrl.u32 %v4462, 7
  %v4464 = vsub.s32 %v4461, %v4463
  %v4465 = vrot.slane %v3754, %v4464
  %v4466 = vcombine.low %v4444, %v4451
  %v4467 = vcombine.low %v4458, %v4465
  %v4469 = vunpack.c.l.s4 1966171168
  %v4470 = vunpack.c.0.s8 %v4469
  %v4471 = vlaneseq
  %v4472 = vshrl.u32 %v4471, 7
  %v4473 = vsub.s32 %v4470, %v4472
  %v4474 = vrot.slane %v4466, %v4473
  %v4476 = vunpack.c.l.s4 1966171168
  %v4477 = vunpack.c.0.s8 %v4476
  %v4478 = vlaneseq
  %v4479 = vshrl.u32 %v4478, 7
  %v4480 = vsub.s32 %v4477, %v4479
  %v4481 = vrot.slane %v4467, %v4480
  %v4482 = vcombine.low %v4474, %v4481
  %v4483 = vcombine.low %v3756, %v3780
  %v4484 = vcombine.low %v3794, %v3802
  %v4485 = vcombine.low %v3804, %v3787
  %v4487 = vunpack.c.l.s4 1966171168
  %v4488 = vunpack.c.0.s8 %v4487
  %v4489 = vlaneseq
  %v4490 = vshrl.u32 %v4489, 7
  %v4491 = vsub.s32 %v4488, %v4490
  %v4492 = vrot.slane %v4483, %v4491
  %v4494 = vunpack.c.l.s4 1966171168
  %v4495 = vunpack.c.0.s8 %v4494
  %v4496 = vlaneseq
  %v4497 = vshrl.u32 %v4496, 7
  %v4498 = vsub.s32 %v4495, %v4497
  %v4499 = vrot.slane %v4484, %v4498
  %v4501 = vunpack.c.l.s4 1966171168
  %v4502 = vunpack.c.0.s8 %v4501
  %v4503 = vlaneseq
  %v4504 = vshrl.u32 %v4503, 7
  %v4505 = vsub.s32 %v4502, %v4504
  %v4506 = vrot.slane %v4485, %v4505
  %v4508 = vunpack.c.l.s4 1966171168
  %v4509 = vunpack.c.0.s8 %v4508
  %v4510 = vlaneseq
  %v4511 = vshrl.u32 %v4510, 7
  %v4512 = vsub.s32 %v4509, %v4511
  %v4513 = vrot.slane %v3801, %v4512
  %v4514 = vcombine.low %v4492, %v4499
  %v4515 = vcombine.low %v4506, %v4513
  %v4517 = vunpack.c.l.s4 1966171168
  %v4518 = vunpack.c.0.s8 %v4517
  %v4519 = vlaneseq
  %v4520 = vshrl.u32 %v4519, 7
  %v4521 = vsub.s32 %v4518, %v4520
  %v4522 = vrot.slane %v4514, %v4521
  %v4524 = vunpack.c.l.s4 1966171168
  %v4525 = vunpack.c.0.s8 %v4524
  %v4526 = vlaneseq
  %v4527 = vshrl.u32 %v4526, 7
  %v4528 = vsub.s32 %v4525, %v4527
  %v4529 = vrot.slane %v4515, %v4528
  %v4530 = vcombine.low %v4522, %v4529
  %v4531 = vcombine.low %v3803, %v3805
  %v4532 = vcombine.low %v3829, %v3843
  %v4533 = vcombine.low %v3851, %v3853
  %v4535 = vunpack.c.l.s4 1966171168
  %v4536 = vunpack.c.0.s8 %v4535
  %v4537 = vlaneseq
  %v4538 = vshrl.u32 %v4537, 7
  %v4539 = vsub.s32 %v4536, %v4538
  %v4540 = vrot.slane %v4531, %v4539
  %v4542 = vunpack.c.l.s4 1966171168
  %v4543 = vunpack.c.0.s8 %v4542
  %v4544 = vlaneseq
  %v4545 = vshrl.u32 %v4544, 7
  %v4546 = vsub.s32 %v4543, %v4545
  %v4547 = vrot.slane %v4532, %v4546
  %v4549 = vunpack.c.l.s4 1966171168
  %v4550 = vunpack.c.0.s8 %v4549
  %v4551 = vlaneseq
  %v4552 = vshrl.u32 %v4551, 7
  %v4553 = vsub.s32 %v4550, %v4552
  %v4554 = vrot.slane %v4533, %v4553
  %v4556 = vunpack.c.l.s4 1966171168
  %v4557 = vunpack.c.0.s8 %v4556
  %v4558 = vlaneseq
  %v4559 = vshrl.u32 %v4558, 7
  %v4560 = vsub.s32 %v4557, %v4559
  %v4561 = vrot.slane %v3836, %v4560
  %v4562 = vcombine.low %v4540, %v4547
  %v4563 = vcombine.low %v4554, %v4561
  %v4565 = vunpack.c.l.s4 1966171168
  %v4566 = vunpack.c.0.s8 %v4565
  %v4567 = vlaneseq
  %v4568 = vshrl.u32 %v4567, 7
  %v4569 = vsub.s32 %v4566, %v4568
  %v4570 = vrot.slane %v4562, %v4569
  %v4572 = vunpack.c.l.s4 1966171168
  %v4573 = vunpack.c.0.s8 %v4572
  %v4574 = vlaneseq
  %v4575 = vshrl.u32 %v4574, 7
  %v4576 = vsub.s32 %v4573, %v4575
  %v4577 = vrot.slane %v4563, %v4576
  %v4578 = vcombine.low %v4570, %v4577
  %v4579 = vcombine.low %v3850, %v3852
  %v4580 = vcombine.low %v3854, %v3878
  %v4581 = vcombine.low %v3892, %v3900
  %v4583 = vunpack.c.l.s4 1966171168
  %v4584 = vunpack.c.0.s8 %v4583
  %v4585 = vlaneseq
  %v4586 = vshrl.u32 %v4585, 7
  %v4587 = vsub.s32 %v4584, %v4586
  %v4588 = vrot.slane %v4579, %v4587
  %v4590 = vunpack.c.l.s4 1966171168
  %v4591 = vunpack.c.0.s8 %v4590
  %v4592 = vlaneseq
  %v4593 = vshrl.u32 %v4592, 7
  %v4594 = vsub.s32 %v4591, %v4593
  %v4595 = vrot.slane %v4580, %v4594
  %v4597 = vunpack.c.l.s4 1966171168
  %v4598 = vunpack.c.0.s8 %v4597
  %v4599 = vlaneseq
  %v4600 = vshrl.u32 %v4599, 7
  %v4601 = vsub.s32 %v4598, %v4600
  %v4602 = vrot.slane %v4581, %v4601
  %v4604 = vunpack.c.l.s4 1966171168
  %v4605 = vunpack.c.0.s8 %v4604
  %v4606 = vlaneseq
  %v4607 = vshrl.u32 %v4606, 7
  %v4608 = vsub.s32 %v4605, %v4607
  %v4609 = vrot.slane %v3902, %v4608
  %v4610 = vcombine.low %v4588, %v4595
  %v4611 = vcombine.low %v4602, %v4609
  %v4613 = vunpack.c.l.s4 1966171168
  %v4614 = vunpack.c.0.s8 %v4613
  %v4615 = vlaneseq
  %v4616 = vshrl.u32 %v4615, 7
  %v4617 = vsub.s32 %v4614, %v4616
  %v4618 = vrot.slane %v4610, %v4617
  %v4620 = vunpack.c.l.s4 1966171168
  %v4621 = vunpack.c.0.s8 %v4620
  %v4622 = vlaneseq
  %v4623 = vshrl.u32 %v4622, 7
  %v4624 = vsub.s32 %v4621, %v4623
  %v4625 = vrot.slane %v4611, %v4624
  %v4626 = vcombine.low %v4618, %v4625
  %v4627 = vcombine.low %v3885, %v3899
  %v4628 = vcombine.low %v3901, %v3903
  %v4629 = vcombine.low %v3927, %v3941
  %v4631 = vunpack.c.l.s4 1966171168
  %v4632 = vunpack.c.0.s8 %v4631
  %v4633 = vlaneseq
  %v4634 = vshrl.u32 %v4633, 7
  %v4635 = vsub.s32 %v4632, %v4634
  %v4636 = vrot.slane %v4627, %v4635
  %v4638 = vunpack.c.l.s4 1966171168
  %v4639 = vunpack.c.0.s8 %v4638
  %v4640 = vlaneseq
  %v4641 = vshrl.u32 %v4640, 7
  %v4642 = vsub.s32 %v4639, %v4641
  %v4643 = vrot.slane %v4628, %v4642
  %v4645 = vunpack.c.l.s4 1966171168
  %v4646 = vunpack.c.0.s8 %v4645
  %v4647 = vlaneseq
  %v4648 = vshrl.u32 %v4647, 7
  %v4649 = vsub.s32 %v4646, %v4648
  %v4650 = vrot.slane %v4629, %v4649
  %v4652 = vunpack.c.l.s4 1966171168
  %v4653 = vunpack.c.0.s8 %v4652
  %v4654 = vlaneseq
  %v4655 = vshrl.u32 %v4654, 7
  %v4656 = vsub.s32 %v4653, %v4655
  %v4657 = vrot.slane %v3949, %v4656
  %v4658 = vcombine.low %v4636, %v4643
  %v4659 = vcombine.low %v4650, %v4657
  %v4661 = vunpack.c.l.s4 1966171168
  %v4662 = vunpack.c.0.s8 %v4661
  %v4663 = vlaneseq
  %v4664 = vshrl.u32 %v4663, 7
  %v4665 = vsub.s32 %v4662, %v4664
  %v4666 = vrot.slane %v4658, %v4665
  %v4668 = vunpack.c.l.s4 1966171168
  %v4669 = vunpack.c.0.s8 %v4668
  %v4670 = vlaneseq
  %v4671 = vshrl.u32 %v4670, 7
  %v4672 = vsub.s32 %v4669, %v4671
  %v4673 = vrot.slane %v4659, %v4672
  %v4674 = vcombine.low %v4666, %v4673
  %v4675 = vcombine.low %v3951, %v3934
  %v4676 = vcombine.low %v3948, %v3950
  %v4677 = vcombine.low %v3952, %v3976
  %v4679 = vunpack.c.l.s4 1966171168
  %v4680 = vunpack.c.0.s8 %v4679
  %v4681 = vlaneseq
  %v4682 = vshrl.u32 %v4681, 7
  %v4683 = vsub.s32 %v4680, %v4682
  %v4684 = vrot.slane %v4675, %v4683
  %v4686 = vunpack.c.l.s4 1966171168
  %v4687 = vunpack.c.0.s8 %v4686
  %v4688 = vlaneseq
  %v4689 = vshrl.u32 %v4688, 7
  %v4690 = vsub.s32 %v4687, %v4689
  %v4691 = vrot.slane %v4676, %v4690
  %v4693 = vunpack.c.l.s4 1966171168
  %v4694 = vunpack.c.0.s8 %v4693
  %v4695 = vlaneseq
  %v4696 = vshrl.u32 %v4695, 7
  %v4697 = vsub.s32 %v4694, %v4696
  %v4698 = vrot.slane %v4677, %v4697
  %v4700 = vunpack.c.l.s4 1966171168
  %v4701 = vunpack.c.0.s8 %v4700
  %v4702 = vlaneseq
  %v4703 = vshrl.u32 %v4702, 7
  %v4704 = vsub.s32 %v4701, %v4703
  %v4705 = vrot.slane %v3990, %v4704
  %v4706 = vcombine.low %v4684, %v4691
  %v4707 = vcombine.low %v4698, %v4705
  %v4709 = vunpack.c.l.s4 1966171168
  %v4710 = vunpack.c.0.s8 %v4709
  %v4711 = vlaneseq
  %v4712 = vshrl.u32 %v4711, 7
  %v4713 = vsub.s32 %v4710, %v4712
  %v4714 = vrot.slane %v4706, %v4713
  %v4716 = vunpack.c.l.s4 1966171168
  %v4717 = vunpack.c.0.s8 %v4716
  %v4718 = vlaneseq
  %v4719 = vshrl.u32 %v4718, 7
  %v4720 = vsub.s32 %v4717, %v4719
  %v4721 = vrot.slane %v4707, %v4720
  %v4722 = vcombine.low %v4714, %v4721
  %v4723 = vcombine.low %v3998, %v4000
  %v4724 = vcombine.low %v3983, %v3997
  %v4725 = vcombine.low %v3999, %v4001
  %v4727 = vunpack.c.l.s4 1966171168
  %v4728 = vunpack.c.0.s8 %v4727
  %v4729 = vlaneseq
  %v4730 = vshrl.u32 %v4729, 7
  %v4731 = vsub.s32 %v4728, %v4730
  %v4732 = vrot.slane %v4723, %v4731
  %v4734 = vunpack.c.l.s4 1966171168
  %v4735 = vunpack.c.0.s8 %v4734
  %v4736 = vlaneseq
  %v4737 = vshrl.u32 %v4736, 7
  %v4738 = vsub.s32 %v4735, %v4737
  %v4739 = vrot.slane %v4724, %v4738
  %v4741 = vunpack.c.l.s4 1966171168
  %v4742 = vunpack.c.0.s8 %v4741
  %v4743 = vlaneseq
  %v4744 = vshrl.u32 %v4743, 7
  %v4745 = vsub.s32 %v4742, %v4744
  %v4746 = vrot.slane %v4725, %v4745
  %v4748 = vunpack.c.l.s4 1966171168
  %v4749 = vunpack.c.0.s8 %v4748
  %v4750 = vlaneseq
  %v4751 = vshrl.u32 %v4750, 7
  %v4752 = vsub.s32 %v4749, %v4751
  %v4753 = vrot.slane %v4025, %v4752
  %v4754 = vcombine.low %v4732, %v4739
  %v4755 = vcombine.low %v4746, %v4753
  %v4757 = vunpack.c.l.s4 1966171168
  %v4758 = vunpack.c.0.s8 %v4757
  %v4759 = vlaneseq
  %v4760 = vshrl.u32 %v4759, 7
  %v4761 = vsub.s32 %v4758, %v4760
  %v4762 = vrot.slane %v4754, %v4761
  %v4764 = vunpack.c.l.s4 1966171168
  %v4765 = vunpack.c.0.s8 %v4764
  %v4766 = vlaneseq
  %v4767 = vshrl.u32 %v4766, 7
  %v4768 = vsub.s32 %v4765, %v4767
  %v4769 = vrot.slane %v4755, %v4768
  %v4770 = vcombine.low %v4762, %v4769
  %v4771 = vcombine.low %v4039, %v4047
  %v4772 = vcombine.low %v4049, %v4032
  %v4773 = vcombine.low %v4046, %v4048
  %v4775 = vunpack.c.l.s4 1966171168
  %v4776 = vunpack.c.0.s8 %v4775
  %v4777 = vlaneseq
  %v4778 = vshrl.u32 %v4777, 7
  %v4779 = vsub.s32 %v4776, %v4778
  %v4780 = vrot.slane %v4771, %v4779
  %v4782 = vunpack.c.l.s4 1966171168
  %v4783 = vunpack.c.0.s8 %v4782
  %v4784 = vlaneseq
  %v4785 = vshrl.u32 %v4784, 7
  %v4786 = vsub.s32 %v4783, %v4785
  %v4787 = vrot.slane %v4772, %v4786
  %v4789 = vunpack.c.l.s4 1966171168
  %v4790 = vunpack.c.0.s8 %v4789
  %v4791 = vlaneseq
  %v4792 = vshrl.u32 %v4791, 7
  %v4793 = vsub.s32 %v4790, %v4792
  %v4794 = vrot.slane %v4773, %v4793
  %v4796 = vunpack.c.l.s4 1966171168
  %v4797 = vunpack.c.0.s8 %v4796
  %v4798 = vlaneseq
  %v4799 = vshrl.u32 %v4798, 7
  %v4800 = vsub.s32 %v4797, %v4799
  %v4801 = vrot.slane %v4050, %v4800
  %v4802 = vcombine.low %v4780, %v4787
  %v4803 = vcombine.low %v4794, %v4801
  %v4805 = vunpack.c.l.s4 1966171168
  %v4806 = vunpack.c.0.s8 %v4805
  %v4807 = vlaneseq
  %v4808 = vshrl.u32 %v4807, 7
  %v4809 = vsub.s32 %v4806, %v4808
  %v4810 = vrot.slane %v4802, %v4809
  %v4812 = vunpack.c.l.s4 1966171168
  %v4813 = vunpack.c.0.s8 %v4812
  %v4814 = vlaneseq
  %v4815 = vshrl.u32 %v4814, 7
  %v4816 = vsub.s32 %v4813, %v4815
  %v4817 = vrot.slane %v4803, %v4816
  %v4818 = vcombine.low %v4810, %v4817
  %v4835 = vadd.f32 %v2581, %v4098
  %v4836 = vadd.f32 %v2582, %v4146
  %v4837 = vadd.f32 %v2583, %v4194
  %v4838 = vadd.f32 %v2584, %v4242
  %v4839 = vadd.f32 %v2585, %v4290
  %v4840 = vadd.f32 %v2586, %v4338
  %v4841 = vadd.f32 %v2587, %v4386
  %v4842 = vadd.f32 %v2588, %v4434
  %v4843 = vadd.f32 %v2589, %v4482
  %v4844 = vadd.f32 %v2590, %v4530
  %v4845 = vadd.f32 %v2591, %v4578
  %v4846 = vadd.f32 %v2592, %v4626
  %v4847 = vadd.f32 %v2593, %v4674
  %v4848 = vadd.f32 %v2594, %v4722
  %v4849 = vadd.f32 %v2595, %v4770
  %v4850 = vadd.f32 %v2596, %v4818
  %s4851 = scalar_lea.vmem %s1, 4
  %v4852 = vld [vmem:[%s4851] sm:$0x3]
  %v4853 = vcombine.high %v2621, %v2621
  %v4855 = vunpack.c.l.s4 1966171168
  %v4856 = vunpack.c.0.s8 %v4855
  %v4857 = vlaneseq
  %v4858 = vshrl.u32 %v4857, 7
  %v4859 = vsub.s32 %v4856, %v4858
  %v4860 = vrot.slane %v4853, %v4859
  %v4861 = vcombine.high %v2635, %v2635
  %v4863 = vunpack.c.l.s4 1966171168
  %v4864 = vunpack.c.0.s8 %v4863
  %v4865 = vlaneseq
  %v4866 = vshrl.u32 %v4865, 7
  %v4867 = vsub.s32 %v4864, %v4866
  %v4868 = vrot.slane %v4861, %v4867
  %v4869 = vcombine.high %v2649, %v2649
  %v4871 = vunpack.c.l.s4 1966171168
  %v4872 = vunpack.c.0.s8 %v4871
  %v4873 = vlaneseq
  %v4874 = vshrl.u32 %v4873, 7
  %v4875 = vsub.s32 %v4872, %v4874
  %v4876 = vrot.slane %v4869, %v4875
  %v4877 = vcombine.high %v2663, %v2663
  %v4879 = vunpack.c.l.s4 1966171168
  %v4880 = vunpack.c.0.s8 %v4879
  %v4881 = vlaneseq
  %v4882 = vshrl.u32 %v4881, 7
  %v4883 = vsub.s32 %v4880, %v4882
  %v4884 = vrot.slane %v4877, %v4883
  %v4885 = vcombine.high %v2677, %v2677
  %v4887 = vunpack.c.l.s4 1966171168
  %v4888 = vunpack.c.0.s8 %v4887
  %v4889 = vlaneseq
  %v4890 = vshrl.u32 %v4889, 7
  %v4891 = vsub.s32 %v4888, %v4890
  %v4892 = vrot.slane %v4885, %v4891
  %v4893 = vcombine.high %v2691, %v2691
  %v4895 = vunpack.c.l.s4 1966171168
  %v4896 = vunpack.c.0.s8 %v4895
  %v4897 = vlaneseq
  %v4898 = vshrl.u32 %v4897, 7
  %v4899 = vsub.s32 %v4896, %v4898
  %v4900 = vrot.slane %v4893, %v4899
  %v4901 = vcombine.high %v2705, %v2705
  %v4903 = vunpack.c.l.s4 1966171168
  %v4904 = vunpack.c.0.s8 %v4903
  %v4905 = vlaneseq
  %v4906 = vshrl.u32 %v4905, 7
  %v4907 = vsub.s32 %v4904, %v4906
  %v4908 = vrot.slane %v4901, %v4907
  %v4909 = vcombine.high %v2719, %v2719
  %v4911 = vunpack.c.l.s4 1966171168
  %v4912 = vunpack.c.0.s8 %v4911
  %v4913 = vlaneseq
  %v4914 = vshrl.u32 %v4913, 7
  %v4915 = vsub.s32 %v4912, %v4914
  %v4916 = vrot.slane %v4909, %v4915
  %v4917 = vcombine.high %v2733, %v2733
  %v4919 = vunpack.c.l.s4 1966171168
  %v4920 = vunpack.c.0.s8 %v4919
  %v4921 = vlaneseq
  %v4922 = vshrl.u32 %v4921, 7
  %v4923 = vsub.s32 %v4920, %v4922
  %v4924 = vrot.slane %v4917, %v4923
  %v4925 = vcombine.high %v2747, %v2747
  %v4927 = vunpack.c.l.s4 1966171168
  %v4928 = vunpack.c.0.s8 %v4927
  %v4929 = vlaneseq
  %v4930 = vshrl.u32 %v4929, 7
  %v4931 = vsub.s32 %v4928, %v4930
  %v4932 = vrot.slane %v4925, %v4931
  %v4933 = vcombine.high %v2761, %v2761
  %v4935 = vunpack.c.l.s4 1966171168
  %v4936 = vunpack.c.0.s8 %v4935
  %v4937 = vlaneseq
  %v4938 = vshrl.u32 %v4937, 7
  %v4939 = vsub.s32 %v4936, %v4938
  %v4940 = vrot.slane %v4933, %v4939
  %v4941 = vcombine.high %v2775, %v2775
  %v4943 = vunpack.c.l.s4 1966171168
  %v4944 = vunpack.c.0.s8 %v4943
  %v4945 = vlaneseq
  %v4946 = vshrl.u32 %v4945, 7
  %v4947 = vsub.s32 %v4944, %v4946
  %v4948 = vrot.slane %v4941, %v4947
  %v4949 = vcombine.high %v2789, %v2789
  %v4951 = vunpack.c.l.s4 1966171168
  %v4952 = vunpack.c.0.s8 %v4951
  %v4953 = vlaneseq
  %v4954 = vshrl.u32 %v4953, 7
  %v4955 = vsub.s32 %v4952, %v4954
  %v4956 = vrot.slane %v4949, %v4955
  %v4957 = vcombine.high %v2803, %v2803
  %v4959 = vunpack.c.l.s4 1966171168
  %v4960 = vunpack.c.0.s8 %v4959
  %v4961 = vlaneseq
  %v4962 = vshrl.u32 %v4961, 7
  %v4963 = vsub.s32 %v4960, %v4962
  %v4964 = vrot.slane %v4957, %v4963
  %v4965 = vcombine.high %v2817, %v2817
  %v4967 = vunpack.c.l.s4 1966171168
  %v4968 = vunpack.c.0.s8 %v4967
  %v4969 = vlaneseq
  %v4970 = vshrl.u32 %v4969, 7
  %v4971 = vsub.s32 %v4968, %v4970
  %v4972 = vrot.slane %v4965, %v4971
  %v4973 = vcombine.high %v2831, %v2831
  %v4975 = vunpack.c.l.s4 1966171168
  %v4976 = vunpack.c.0.s8 %v4975
  %v4977 = vlaneseq
  %v4978 = vshrl.u32 %v4977, 7
  %v4979 = vsub.s32 %v4976, %v4978
  %v4980 = vrot.slane %v4973, %v4979
  %v4981 = vunpack.i.h.s16 %v2628
  %v4982 = vunpack.i.l.s16 %v4860
  %v4983 = vunpack.i.h.s16 %v2642
  %v4984 = vunpack.i.l.s16 %v4868
  %v4985 = vunpack.i.h.s16 %v2656
  %v4986 = vunpack.i.l.s16 %v4876
  %v4987 = vunpack.i.h.s16 %v2670
  %v4988 = vunpack.i.l.s16 %v4884
  %v4989 = vunpack.i.h.s16 %v2684
  %v4990 = vunpack.i.l.s16 %v4892
  %v4991 = vunpack.i.h.s16 %v2698
  %v4992 = vunpack.i.l.s16 %v4900
  %v4993 = vunpack.i.h.s16 %v2712
  %v4994 = vunpack.i.l.s16 %v4908
  %v4995 = vunpack.i.h.s16 %v2726
  %v4996 = vunpack.i.l.s16 %v4916
  %v4997 = vunpack.i.h.s16 %v2740
  %v4998 = vunpack.i.l.s16 %v4924
  %v4999 = vunpack.i.h.s16 %v2754
  %v5000 = vunpack.i.l.s16 %v4932
  %v5001 = vunpack.i.h.s16 %v2768
  %v5002 = vunpack.i.l.s16 %v4940
  %v5003 = vunpack.i.h.s16 %v2782
  %v5004 = vunpack.i.l.s16 %v4948
  %v5005 = vunpack.i.h.s16 %v2796
  %v5006 = vunpack.i.l.s16 %v4956
  %v5007 = vunpack.i.h.s16 %v2810
  %v5008 = vunpack.i.l.s16 %v4964
  %v5009 = vunpack.i.h.s16 %v2824
  %v5010 = vunpack.i.l.s16 %v4972
  %v5011 = vunpack.i.h.s16 %v2838
  %v5012 = vunpack.i.l.s16 %v4980
  %v5013 = vpack.i.b16 %v4981, %v2840
  %v5014 = vpack.i.b16 %v482, %v4982
  %v5015 = vpack.i.b16 %v4984, %v4983
  %v5016 = vpack.i.b16 %v4985, %v2844
  %v5017 = vpack.i.b16 %v496, %v4986
  %v5018 = vpack.i.b16 %v4988, %v4987
  %v5019 = vpack.i.b16 %v4989, %v2848
  %v5020 = vpack.i.b16 %v510, %v4990
  %v5021 = vpack.i.b16 %v4992, %v4991
  %v5022 = vpack.i.b16 %v4993, %v2852
  %v5023 = vpack.i.b16 %v524, %v4994
  %v5024 = vpack.i.b16 %v4996, %v4995
  %v5025 = vpack.i.b16 %v4997, %v2856
  %v5026 = vpack.i.b16 %v538, %v4998
  %v5027 = vpack.i.b16 %v5000, %v4999
  %v5028 = vpack.i.b16 %v5001, %v2860
  %v5029 = vpack.i.b16 %v552, %v5002
  %v5030 = vpack.i.b16 %v5004, %v5003
  %v5031 = vpack.i.b16 %v5005, %v2864
  %v5032 = vpack.i.b16 %v566, %v5006
  %v5033 = vpack.i.b16 %v5008, %v5007
  %v5034 = vpack.i.b16 %v5009, %v2868
  %v5035 = vpack.i.b16 %v580, %v5010
  %v5036 = vpack.i.b16 %v5012, %v5011
  %v5037 = vcombine.low %v585, %v2871
  %v5038 = vcombine.low %v5013, %v5014
  %v5039 = vcombine.low %v589, %v2873
  %v5040 = vcombine.low %v5015, %v592
  %v5042 = vunpack.c.l.s4 1966171168
  %v5043 = vunpack.c.0.s8 %v5042
  %v5044 = vlaneseq
  %v5045 = vshrl.u32 %v5044, 7
  %v5046 = vsub.s32 %v5043, %v5045
  %v5047 = vrot.slane %v5037, %v5046
  %v5049 = vunpack.c.l.s4 1966171168
  %v5050 = vunpack.c.0.s8 %v5049
  %v5051 = vlaneseq
  %v5052 = vshrl.u32 %v5051, 7
  %v5053 = vsub.s32 %v5050, %v5052
  %v5054 = vrot.slane %v5038, %v5053
  %v5056 = vunpack.c.l.s4 1966171168
  %v5057 = vunpack.c.0.s8 %v5056
  %v5058 = vlaneseq
  %v5059 = vshrl.u32 %v5058, 7
  %v5060 = vsub.s32 %v5057, %v5059
  %v5061 = vrot.slane %v5039, %v5060
  %v5063 = vunpack.c.l.s4 1966171168
  %v5064 = vunpack.c.0.s8 %v5063
  %v5065 = vlaneseq
  %v5066 = vshrl.u32 %v5065, 7
  %v5067 = vsub.s32 %v5064, %v5066
  %v5068 = vrot.slane %v5040, %v5067
  %v5069 = vcombine.low %v5047, %v5054
  %v5070 = vcombine.low %v5061, %v5068
  %v5072 = vunpack.c.l.s4 1966171168
  %v5073 = vunpack.c.0.s8 %v5072
  %v5074 = vlaneseq
  %v5075 = vshrl.u32 %v5074, 7
  %v5076 = vsub.s32 %v5073, %v5075
  %v5077 = vrot.slane %v5069, %v5076
  %v5079 = vunpack.c.l.s4 1966171168
  %v5080 = vunpack.c.0.s8 %v5079
  %v5081 = vlaneseq
  %v5082 = vshrl.u32 %v5081, 7
  %v5083 = vsub.s32 %v5080, %v5082
  %v5084 = vrot.slane %v5070, %v5083
  %v5085 = vcombine.low %v5077, %v5084
  %v5086 = vcombine.low %v2874, %v5016
  %v5087 = vcombine.low %v5017, %v596
  %v5088 = vcombine.low %v2876, %v5018
  %v5089 = vcombine.low %v599, %v2877
  %v5091 = vunpack.c.l.s4 1966171168
  %v5092 = vunpack.c.0.s8 %v5091
  %v5093 = vlaneseq
  %v5094 = vshrl.u32 %v5093, 7
  %v5095 = vsub.s32 %v5092, %v5094
  %v5096 = vrot.slane %v5086, %v5095
  %v5098 = vunpack.c.l.s4 1966171168
  %v5099 = vunpack.c.0.s8 %v5098
  %v5100 = vlaneseq
  %v5101 = vshrl.u32 %v5100, 7
  %v5102 = vsub.s32 %v5099, %v5101
  %v5103 = vrot.slane %v5087, %v5102
  %v5105 = vunpack.c.l.s4 1966171168
  %v5106 = vunpack.c.0.s8 %v5105
  %v5107 = vlaneseq
  %v5108 = vshrl.u32 %v5107, 7
  %v5109 = vsub.s32 %v5106, %v5108
  %v5110 = vrot.slane %v5088, %v5109
  %v5112 = vunpack.c.l.s4 1966171168
  %v5113 = vunpack.c.0.s8 %v5112
  %v5114 = vlaneseq
  %v5115 = vshrl.u32 %v5114, 7
  %v5116 = vsub.s32 %v5113, %v5115
  %v5117 = vrot.slane %v5089, %v5116
  %v5118 = vcombine.low %v5096, %v5103
  %v5119 = vcombine.low %v5110, %v5117
  %v5121 = vunpack.c.l.s4 1966171168
  %v5122 = vunpack.c.0.s8 %v5121
  %v5123 = vlaneseq
  %v5124 = vshrl.u32 %v5123, 7
  %v5125 = vsub.s32 %v5122, %v5124
  %v5126 = vrot.slane %v5118, %v5125
  %v5128 = vunpack.c.l.s4 1966171168
  %v5129 = vunpack.c.0.s8 %v5128
  %v5130 = vlaneseq
  %v5131 = vshrl.u32 %v5130, 7
  %v5132 = vsub.s32 %v5129, %v5131
  %v5133 = vrot.slane %v5119, %v5132
  %v5134 = vcombine.low %v5126, %v5133
  %v5135 = vcombine.low %v5019, %v5020
  %v5136 = vcombine.low %v603, %v2879
  %v5137 = vcombine.low %v5021, %v606
  %v5138 = vcombine.low %v2880, %v5022
  %v5140 = vunpack.c.l.s4 1966171168
  %v5141 = vunpack.c.0.s8 %v5140
  %v5142 = vlaneseq
  %v5143 = vshrl.u32 %v5142, 7
  %v5144 = vsub.s32 %v5141, %v5143
  %v5145 = vrot.slane %v5135, %v5144
  %v5147 = vunpack.c.l.s4 1966171168
  %v5148 = vunpack.c.0.s8 %v5147
  %v5149 = vlaneseq
  %v5150 = vshrl.u32 %v5149, 7
  %v5151 = vsub.s32 %v5148, %v5150
  %v5152 = vrot.slane %v5136, %v5151
  %v5154 = vunpack.c.l.s4 1966171168
  %v5155 = vunpack.c.0.s8 %v5154
  %v5156 = vlaneseq
  %v5157 = vshrl.u32 %v5156, 7
  %v5158 = vsub.s32 %v5155, %v5157
  %v5159 = vrot.slane %v5137, %v5158
  %v5161 = vunpack.c.l.s4 1966171168
  %v5162 = vunpack.c.0.s8 %v5161
  %v5163 = vlaneseq
  %v5164 = vshrl.u32 %v5163, 7
  %v5165 = vsub.s32 %v5162, %v5164
  %v5166 = vrot.slane %v5138, %v5165
  %v5167 = vcombine.low %v5145, %v5152
  %v5168 = vcombine.low %v5159, %v5166
  %v5170 = vunpack.c.l.s4 1966171168
  %v5171 = vunpack.c.0.s8 %v5170
  %v5172 = vlaneseq
  %v5173 = vshrl.u32 %v5172, 7
  %v5174 = vsub.s32 %v5171, %v5173
  %v5175 = vrot.slane %v5167, %v5174
  %v5177 = vunpack.c.l.s4 1966171168
  %v5178 = vunpack.c.0.s8 %v5177
  %v5179 = vlaneseq
  %v5180 = vshrl.u32 %v5179, 7
  %v5181 = vsub.s32 %v5178, %v5180
  %v5182 = vrot.slane %v5168, %v5181
  %v5183 = vcombine.low %v5175, %v5182
  %v5184 = vcombine.low %v5023, %v610
  %v5185 = vcombine.low %v2882, %v5024
  %v5186 = vcombine.low %v613, %v2883
  %v5187 = vcombine.low %v5025, %v5026
  %v5189 = vunpack.c.l.s4 1966171168
  %v5190 = vunpack.c.0.s8 %v5189
  %v5191 = vlaneseq
  %v5192 = vshrl.u32 %v5191, 7
  %v5193 = vsub.s32 %v5190, %v5192
  %v5194 = vrot.slane %v5184, %v5193
  %v5196 = vunpack.c.l.s4 1966171168
  %v5197 = vunpack.c.0.s8 %v5196
  %v5198 = vlaneseq
  %v5199 = vshrl.u32 %v5198, 7
  %v5200 = vsub.s32 %v5197, %v5199
  %v5201 = vrot.slane %v5185, %v5200
  %v5203 = vunpack.c.l.s4 1966171168
  %v5204 = vunpack.c.0.s8 %v5203
  %v5205 = vlaneseq
  %v5206 = vshrl.u32 %v5205, 7
  %v5207 = vsub.s32 %v5204, %v5206
  %v5208 = vrot.slane %v5186, %v5207
  %v5210 = vunpack.c.l.s4 1966171168
  %v5211 = vunpack.c.0.s8 %v5210
  %v5212 = vlaneseq
  %v5213 = vshrl.u32 %v5212, 7
  %v5214 = vsub.s32 %v5211, %v5213
  %v5215 = vrot.slane %v5187, %v5214
  %v5216 = vcombine.low %v5194, %v5201
  %v5217 = vcombine.low %v5208, %v5215
  %v5219 = vunpack.c.l.s4 1966171168
  %v5220 = vunpack.c.0.s8 %v5219
  %v5221 = vlaneseq
  %v5222 = vshrl.u32 %v5221, 7
  %v5223 = vsub.s32 %v5220, %v5222
  %v5224 = vrot.slane %v5216, %v5223
  %v5226 = vunpack.c.l.s4 1966171168
  %v5227 = vunpack.c.0.s8 %v5226
  %v5228 = vlaneseq
  %v5229 = vshrl.u32 %v5228, 7
  %v5230 = vsub.s32 %v5227, %v5229
  %v5231 = vrot.slane %v5217, %v5230
  %v5232 = vcombine.low %v5224, %v5231
  %v5233 = vcombine.low %v617, %v2885
  %v5234 = vcombine.low %v5027, %v620
  %v5235 = vcombine.low %v2886, %v5028
  %v5236 = vcombine.low %v5029, %v624
  %v5238 = vunpack.c.l.s4 1966171168
  %v5239 = vunpack.c.0.s8 %v5238
  %v5240 = vlaneseq
  %v5241 = vshrl.u32 %v5240, 7
  %v5242 = vsub.s32 %v5239, %v5241
  %v5243 = vrot.slane %v5233, %v5242
  %v5245 = vunpack.c.l.s4 1966171168
  %v5246 = vunpack.c.0.s8 %v5245
  %v5247 = vlaneseq
  %v5248 = vshrl.u32 %v5247, 7
  %v5249 = vsub.s32 %v5246, %v5248
  %v5250 = vrot.slane %v5234, %v5249
  %v5252 = vunpack.c.l.s4 1966171168
  %v5253 = vunpack.c.0.s8 %v5252
  %v5254 = vlaneseq
  %v5255 = vshrl.u32 %v5254, 7
  %v5256 = vsub.s32 %v5253, %v5255
  %v5257 = vrot.slane %v5235, %v5256
  %v5259 = vunpack.c.l.s4 1966171168
  %v5260 = vunpack.c.0.s8 %v5259
  %v5261 = vlaneseq
  %v5262 = vshrl.u32 %v5261, 7
  %v5263 = vsub.s32 %v5260, %v5262
  %v5264 = vrot.slane %v5236, %v5263
  %v5265 = vcombine.low %v5243, %v5250
  %v5266 = vcombine.low %v5257, %v5264
  %v5268 = vunpack.c.l.s4 1966171168
  %v5269 = vunpack.c.0.s8 %v5268
  %v5270 = vlaneseq
  %v5271 = vshrl.u32 %v5270, 7
  %v5272 = vsub.s32 %v5269, %v5271
  %v5273 = vrot.slane %v5265, %v5272
  %v5275 = vunpack.c.l.s4 1966171168
  %v5276 = vunpack.c.0.s8 %v5275
  %v5277 = vlaneseq
  %v5278 = vshrl.u32 %v5277, 7
  %v5279 = vsub.s32 %v5276, %v5278
  %v5280 = vrot.slane %v5266, %v5279
  %v5281 = vcombine.low %v5273, %v5280
  %v5282 = vcombine.low %v2888, %v5030
  %v5283 = vcombine.low %v627, %v2889
  %v5284 = vcombine.low %v5031, %v5032
  %v5285 = vcombine.low %v631, %v2891
  %v5287 = vunpack.c.l.s4 1966171168
  %v5288 = vunpack.c.0.s8 %v5287
  %v5289 = vlaneseq
  %v5290 = vshrl.u32 %v5289, 7
  %v5291 = vsub.s32 %v5288, %v5290
  %v5292 = vrot.slane %v5282, %v5291
  %v5294 = vunpack.c.l.s4 1966171168
  %v5295 = vunpack.c.0.s8 %v5294
  %v5296 = vlaneseq
  %v5297 = vshrl.u32 %v5296, 7
  %v5298 = vsub.s32 %v5295, %v5297
  %v5299 = vrot.slane %v5283, %v5298
  %v5301 = vunpack.c.l.s4 1966171168
  %v5302 = vunpack.c.0.s8 %v5301
  %v5303 = vlaneseq
  %v5304 = vshrl.u32 %v5303, 7
  %v5305 = vsub.s32 %v5302, %v5304
  %v5306 = vrot.slane %v5284, %v5305
  %v5308 = vunpack.c.l.s4 1966171168
  %v5309 = vunpack.c.0.s8 %v5308
  %v5310 = vlaneseq
  %v5311 = vshrl.u32 %v5310, 7
  %v5312 = vsub.s32 %v5309, %v5311
  %v5313 = vrot.slane %v5285, %v5312
  %v5314 = vcombine.low %v5292, %v5299
  %v5315 = vcombine.low %v5306, %v5313
  %v5317 = vunpack.c.l.s4 1966171168
  %v5318 = vunpack.c.0.s8 %v5317
  %v5319 = vlaneseq
  %v5320 = vshrl.u32 %v5319, 7
  %v5321 = vsub.s32 %v5318, %v5320
  %v5322 = vrot.slane %v5314, %v5321
  %v5324 = vunpack.c.l.s4 1966171168
  %v5325 = vunpack.c.0.s8 %v5324
  %v5326 = vlaneseq
  %v5327 = vshrl.u32 %v5326, 7
  %v5328 = vsub.s32 %v5325, %v5327
  %v5329 = vrot.slane %v5315, %v5328
  %v5330 = vcombine.low %v5322, %v5329
  %v5331 = vcombine.low %v5033, %v634
  %v5332 = vcombine.low %v2892, %v5034
  %v5333 = vcombine.low %v5035, %v638
  %v5334 = vcombine.low %v2894, %v5036
  %v5336 = vunpack.c.l.s4 1966171168
  %v5337 = vunpack.c.0.s8 %v5336
  %v5338 = vlaneseq
  %v5339 = vshrl.u32 %v5338, 7
  %v5340 = vsub.s32 %v5337, %v5339
  %v5341 = vrot.slane %v5331, %v5340
  %v5343 = vunpack.c.l.s4 1966171168
  %v5344 = vunpack.c.0.s8 %v5343
  %v5345 = vlaneseq
  %v5346 = vshrl.u32 %v5345, 7
  %v5347 = vsub.s32 %v5344, %v5346
  %v5348 = vrot.slane %v5332, %v5347
  %v5350 = vunpack.c.l.s4 1966171168
  %v5351 = vunpack.c.0.s8 %v5350
  %v5352 = vlaneseq
  %v5353 = vshrl.u32 %v5352, 7
  %v5354 = vsub.s32 %v5351, %v5353
  %v5355 = vrot.slane %v5333, %v5354
  %v5357 = vunpack.c.l.s4 1966171168
  %v5358 = vunpack.c.0.s8 %v5357
  %v5359 = vlaneseq
  %v5360 = vshrl.u32 %v5359, 7
  %v5361 = vsub.s32 %v5358, %v5360
  %v5362 = vrot.slane %v5334, %v5361
  %v5363 = vcombine.low %v5341, %v5348
  %v5364 = vcombine.low %v5355, %v5362
  %v5366 = vunpack.c.l.s4 1966171168
  %v5367 = vunpack.c.0.s8 %v5366
  %v5368 = vlaneseq
  %v5369 = vshrl.u32 %v5368, 7
  %v5370 = vsub.s32 %v5367, %v5369
  %v5371 = vrot.slane %v5363, %v5370
  %v5373 = vunpack.c.l.s4 1966171168
  %v5374 = vunpack.c.0.s8 %v5373
  %v5375 = vlaneseq
  %v5376 = vshrl.u32 %v5375, 7
  %v5377 = vsub.s32 %v5374, %v5376
  %v5378 = vrot.slane %v5364, %v5377
  %v5379 = vcombine.low %v5371, %v5378
  %v5381 = vsel %vm982, %v5085, 0
  %v5384 = vsel %vm982, %v5134, 0
  %v5387 = vsel %vm982, %v5183, 0
  %v5390 = vsel %vm982, %v5232, 0
  %v5393 = vsel %vm982, %v5281, 0
  %v5396 = vsel %vm982, %v5330, 0
  %v5399 = vsel %vm982, %v5379, 0
  %v5402 = vsel %vm1004, %v4852, 0
  %5404 = vmatprep.subr.bf16.mxu0 0
  %5405 = vmatpush1.bf16.msra.mxu0 %v5402
  %5406 = vmatprep.subr.bf16.mxu0 0
  %5407 = vmatpush1.bf16.msra.mxu0 0
  %5408 = vmatprep.subr.bf16.mxu0 0
  %5409 = vmatpush1.bf16.msra.mxu0 0
  %5410 = vmatprep.subr.bf16.mxu0 0
  %5411 = vmatpush1.bf16.msra.mxu0 0
  %5412 = vmatprep.subr.bf16.mxu0 0
  %5413 = vmatpush1.bf16.msra.mxu0 0
  %5414 = vmatprep.subr.bf16.mxu0 0
  %5415 = vmatpush1.bf16.msra.mxu0 0
  %5416 = vmatprep.subr.bf16.mxu0 0
  %5417 = vmatpush1.bf16.msra.mxu0 0
  %5418 = vmatprep.subr.bf16.mxu0 0
  %5419 = vmatpush1.bf16.msra.mxu0 0
  %5420 = vmatprep.subr.bf16.mxu0 0
  %5421 = vmatpush1.bf16.msra.mxu0 0
  %5422 = vmatprep.subr.bf16.mxu0 0
  %5423 = vmatpush1.bf16.msra.mxu0 0
  %5424 = vmatprep.subr.bf16.mxu0 0
  %5425 = vmatpush1.bf16.msra.mxu0 0
  %5426 = vmatprep.subr.bf16.mxu0 0
  %5427 = vmatpush1.bf16.msra.mxu0 0
  %5428 = vmatprep.subr.bf16.mxu0 0
  %5429 = vmatpush1.bf16.msra.mxu0 0
  %5430 = vmatprep.subr.bf16.mxu0 0
  %5431 = vmatpush1.bf16.msra.mxu0 0
  %5432 = vmatprep.subr.bf16.mxu0 0
  %5433 = vmatpush1.bf16.msra.mxu0 0
  %5434 = vmatprep.subr.bf16.mxu0 0
  %5435 = vmatpush1.bf16.msra.mxu0 0
  %5436 = vmatprep.mubr.bf16.mxu0 0
  %5437 = vmatmul.mubr.bf16.gmra.mrb[0].mxu0 %v5381
  %v5438 = vpop.f32.mrb[0].mxu0
  %v5439 = vadd.f32 0.0, %v5438
  %v5440 = vpop.f32.mrb[0].mxu0
  %v5441 = vpop.f32.mrb[0].mxu0
  %v5442 = vadd.f32 0.0, %v5441
  %v5443 = vpop.f32.mrb[0].mxu0
  %5444 = vmatprep.mubr.bf16.mxu0 0
  %5445 = vmatmul.mubr.bf16.gmra.mrb[0].mxu0 %v5384
  %v5446 = vpop.f32.mrb[0].mxu0
  %v5447 = vadd.f32 0.0, %v5446
  %v5448 = vpop.f32.mrb[0].mxu0
  %v5449 = vpop.f32.mrb[0].mxu0
  %v5450 = vadd.f32 0.0, %v5449
  %v5451 = vpop.f32.mrb[0].mxu0
  %5452 = vmatprep.mubr.bf16.mxu0 0
  %5453 = vmatmul.mubr.bf16.gmra.mrb[0].mxu0 %v5387
  %v5454 = vpop.f32.mrb[0].mxu0
  %v5455 = vadd.f32 0.0, %v5454
  %v5456 = vpop.f32.mrb[0].mxu0
  %v5457 = vpop.f32.mrb[0].mxu0
  %v5458 = vadd.f32 0.0, %v5457
  %v5459 = vpop.f32.mrb[0].mxu0
  %5460 = vmatprep.mubr.bf16.mxu0 0
  %5461 = vmatmul.mubr.bf16.gmra.mrb[0].mxu0 %v5390
  %v5462 = vpop.f32.mrb[0].mxu0
  %v5463 = vadd.f32 0.0, %v5462
  %v5464 = vpop.f32.mrb[0].mxu0
  %v5465 = vpop.f32.mrb[0].mxu0
  %v5466 = vadd.f32 0.0, %v5465
  %v5467 = vpop.f32.mrb[0].mxu0
  %5468 = vmatprep.mubr.bf16.mxu0 0
  %5469 = vmatmul.mubr.bf16.gmra.mrb[0].mxu0 %v5393
  %v5470 = vpop.f32.mrb[0].mxu0
  %v5471 = vadd.f32 0.0, %v5470
  %v5472 = vpop.f32.mrb[0].mxu0
  %v5473 = vpop.f32.mrb[0].mxu0
  %v5474 = vadd.f32 0.0, %v5473
  %v5475 = vpop.f32.mrb[0].mxu0
  %5476 = vmatprep.mubr.bf16.mxu0 0
  %5477 = vmatmul.mubr.bf16.gmra.mrb[0].mxu0 %v5396
  %v5478 = vpop.f32.mrb[0].mxu0
  %v5479 = vadd.f32 0.0, %v5478
  %v5480 = vpop.f32.mrb[0].mxu0
  %v5481 = vpop.f32.mrb[0].mxu0
  %v5482 = vadd.f32 0.0, %v5481
  %v5483 = vpop.f32.mrb[0].mxu0
  %5484 = vmatprep.mubr.bf16.mxu0 0
  %5485 = vmatmul.mubr.bf16.gmra.mrb[0].mxu0 %v5399
  %v5486 = vpop.f32.mrb[0].mxu0
  %v5487 = vadd.f32 0.0, %v5486
  %v5488 = vpop.f32.mrb[0].mxu0
  %v5489 = vpop.f32.mrb[0].mxu0
  %v5490 = vadd.f32 0.0, %v5489
  %v5491 = vpop.f32.mrb[0].mxu0
  %5492 = vdwg.mxu0
  %v5507 = vcombine.high %v5439, %v5439
  %v5509 = vunpack.c.l.s4 1966171168
  %v5510 = vunpack.c.0.s8 %v5509
  %v5511 = vlaneseq
  %v5512 = vshrl.u32 %v5511, 7
  %v5513 = vsub.s32 %v5510, %v5512
  %v5514 = vrot.slane %v5439, %v5513
  %v5516 = vunpack.c.l.s4 1966171168
  %v5517 = vunpack.c.0.s8 %v5516
  %v5518 = vlaneseq
  %v5519 = vshrl.u32 %v5518, 7
  %v5520 = vsub.s32 %v5517, %v5519
  %v5521 = vrot.slane %v5507, %v5520
  %v5522 = vcombine.high %v5514, %v5514
  %v5523 = vcombine.high %v5521, %v5521
  %v5525 = vunpack.c.l.s4 1966171168
  %v5526 = vunpack.c.0.s8 %v5525
  %v5527 = vlaneseq
  %v5528 = vshrl.u32 %v5527, 7
  %v5529 = vsub.s32 %v5526, %v5528
  %v5530 = vrot.slane %v5514, %v5529
  %v5532 = vunpack.c.l.s4 1966171168
  %v5533 = vunpack.c.0.s8 %v5532
  %v5534 = vlaneseq
  %v5535 = vshrl.u32 %v5534, 7
  %v5536 = vsub.s32 %v5533, %v5535
  %v5537 = vrot.slane %v5521, %v5536
  %v5539 = vunpack.c.l.s4 1966171168
  %v5540 = vunpack.c.0.s8 %v5539
  %v5541 = vlaneseq
  %v5542 = vshrl.u32 %v5541, 7
  %v5543 = vsub.s32 %v5540, %v5542
  %v5544 = vrot.slane %v5522, %v5543
  %v5546 = vunpack.c.l.s4 1966171168
  %v5547 = vunpack.c.0.s8 %v5546
  %v5548 = vlaneseq
  %v5549 = vshrl.u32 %v5548, 7
  %v5550 = vsub.s32 %v5547, %v5549
  %v5551 = vrot.slane %v5523, %v5550
  %v5552 = vcombine.high %v5530, %v5530
  %v5553 = vcombine.high %v5537, %v5537
  %v5554 = vcombine.high %v5544, %v5544
  %v5555 = vcombine.high %v5551, %v5551
  %v5556 = vcombine.high %v5442, %v5442
  %v5558 = vunpack.c.l.s4 1966171168
  %v5559 = vunpack.c.0.s8 %v5558
  %v5560 = vlaneseq
  %v5561 = vshrl.u32 %v5560, 7
  %v5562 = vsub.s32 %v5559, %v5561
  %v5563 = vrot.slane %v5442, %v5562
  %v5565 = vunpack.c.l.s4 1966171168
  %v5566 = vunpack.c.0.s8 %v5565
  %v5567 = vlaneseq
  %v5568 = vshrl.u32 %v5567, 7
  %v5569 = vsub.s32 %v5566, %v5568
  %v5570 = vrot.slane %v5556, %v5569
  %v5571 = vcombine.high %v5563, %v5563
  %v5572 = vcombine.high %v5570, %v5570
  %v5574 = vunpack.c.l.s4 1966171168
  %v5575 = vunpack.c.0.s8 %v5574
  %v5576 = vlaneseq
  %v5577 = vshrl.u32 %v5576, 7
  %v5578 = vsub.s32 %v5575, %v5577
  %v5579 = vrot.slane %v5563, %v5578
  %v5581 = vunpack.c.l.s4 1966171168
  %v5582 = vunpack.c.0.s8 %v5581
  %v5583 = vlaneseq
  %v5584 = vshrl.u32 %v5583, 7
  %v5585 = vsub.s32 %v5582, %v5584
  %v5586 = vrot.slane %v5570, %v5585
  %v5588 = vunpack.c.l.s4 1966171168
  %v5589 = vunpack.c.0.s8 %v5588
  %v5590 = vlaneseq
  %v5591 = vshrl.u32 %v5590, 7
  %v5592 = vsub.s32 %v5589, %v5591
  %v5593 = vrot.slane %v5571, %v5592
  %v5595 = vunpack.c.l.s4 1966171168
  %v5596 = vunpack.c.0.s8 %v5595
  %v5597 = vlaneseq
  %v5598 = vshrl.u32 %v5597, 7
  %v5599 = vsub.s32 %v5596, %v5598
  %v5600 = vrot.slane %v5572, %v5599
  %v5601 = vcombine.high %v5579, %v5579
  %v5602 = vcombine.high %v5586, %v5586
  %v5603 = vcombine.high %v5593, %v5593
  %v5604 = vcombine.high %v5600, %v5600
  %v5605 = vcombine.high %v5447, %v5447
  %v5607 = vunpack.c.l.s4 1966171168
  %v5608 = vunpack.c.0.s8 %v5607
  %v5609 = vlaneseq
  %v5610 = vshrl.u32 %v5609, 7
  %v5611 = vsub.s32 %v5608, %v5610
  %v5612 = vrot.slane %v5447, %v5611
  %v5614 = vunpack.c.l.s4 1966171168
  %v5615 = vunpack.c.0.s8 %v5614
  %v5616 = vlaneseq
  %v5617 = vshrl.u32 %v5616, 7
  %v5618 = vsub.s32 %v5615, %v5617
  %v5619 = vrot.slane %v5605, %v5618
  %v5620 = vcombine.high %v5612, %v5612
  %v5621 = vcombine.high %v5619, %v5619
  %v5623 = vunpack.c.l.s4 1966171168
  %v5624 = vunpack.c.0.s8 %v5623
  %v5625 = vlaneseq
  %v5626 = vshrl.u32 %v5625, 7
  %v5627 = vsub.s32 %v5624, %v5626
  %v5628 = vrot.slane %v5612, %v5627
  %v5630 = vunpack.c.l.s4 1966171168
  %v5631 = vunpack.c.0.s8 %v5630
  %v5632 = vlaneseq
  %v5633 = vshrl.u32 %v5632, 7
  %v5634 = vsub.s32 %v5631, %v5633
  %v5635 = vrot.slane %v5619, %v5634
  %v5637 = vunpack.c.l.s4 1966171168
  %v5638 = vunpack.c.0.s8 %v5637
  %v5639 = vlaneseq
  %v5640 = vshrl.u32 %v5639, 7
  %v5641 = vsub.s32 %v5638, %v5640
  %v5642 = vrot.slane %v5620, %v5641
  %v5644 = vunpack.c.l.s4 1966171168
  %v5645 = vunpack.c.0.s8 %v5644
  %v5646 = vlaneseq
  %v5647 = vshrl.u32 %v5646, 7
  %v5648 = vsub.s32 %v5645, %v5647
  %v5649 = vrot.slane %v5621, %v5648
  %v5650 = vcombine.high %v5628, %v5628
  %v5651 = vcombine.high %v5635, %v5635
  %v5652 = vcombine.high %v5642, %v5642
  %v5653 = vcombine.high %v5649, %v5649
  %v5654 = vcombine.high %v5450, %v5450
  %v5656 = vunpack.c.l.s4 1966171168
  %v5657 = vunpack.c.0.s8 %v5656
  %v5658 = vlaneseq
  %v5659 = vshrl.u32 %v5658, 7
  %v5660 = vsub.s32 %v5657, %v5659
  %v5661 = vrot.slane %v5450, %v5660
  %v5663 = vunpack.c.l.s4 1966171168
  %v5664 = vunpack.c.0.s8 %v5663
  %v5665 = vlaneseq
  %v5666 = vshrl.u32 %v5665, 7
  %v5667 = vsub.s32 %v5664, %v5666
  %v5668 = vrot.slane %v5654, %v5667
  %v5669 = vcombine.high %v5661, %v5661
  %v5670 = vcombine.high %v5668, %v5668
  %v5672 = vunpack.c.l.s4 1966171168
  %v5673 = vunpack.c.0.s8 %v5672
  %v5674 = vlaneseq
  %v5675 = vshrl.u32 %v5674, 7
  %v5676 = vsub.s32 %v5673, %v5675
  %v5677 = vrot.slane %v5661, %v5676
  %v5679 = vunpack.c.l.s4 1966171168
  %v5680 = vunpack.c.0.s8 %v5679
  %v5681 = vlaneseq
  %v5682 = vshrl.u32 %v5681, 7
  %v5683 = vsub.s32 %v5680, %v5682
  %v5684 = vrot.slane %v5668, %v5683
  %v5686 = vunpack.c.l.s4 1966171168
  %v5687 = vunpack.c.0.s8 %v5686
  %v5688 = vlaneseq
  %v5689 = vshrl.u32 %v5688, 7
  %v5690 = vsub.s32 %v5687, %v5689
  %v5691 = vrot.slane %v5669, %v5690
  %v5693 = vunpack.c.l.s4 1966171168
  %v5694 = vunpack.c.0.s8 %v5693
  %v5695 = vlaneseq
  %v5696 = vshrl.u32 %v5695, 7
  %v5697 = vsub.s32 %v5694, %v5696
  %v5698 = vrot.slane %v5670, %v5697
  %v5699 = vcombine.high %v5677, %v5677
  %v5700 = vcombine.high %v5684, %v5684
  %v5701 = vcombine.high %v5691, %v5691
  %v5702 = vcombine.high %v5698, %v5698
  %v5703 = vcombine.high %v5455, %v5455
  %v5705 = vunpack.c.l.s4 1966171168
  %v5706 = vunpack.c.0.s8 %v5705
  %v5707 = vlaneseq
  %v5708 = vshrl.u32 %v5707, 7
  %v5709 = vsub.s32 %v5706, %v5708
  %v5710 = vrot.slane %v5455, %v5709
  %v5712 = vunpack.c.l.s4 1966171168
  %v5713 = vunpack.c.0.s8 %v5712
  %v5714 = vlaneseq
  %v5715 = vshrl.u32 %v5714, 7
  %v5716 = vsub.s32 %v5713, %v5715
  %v5717 = vrot.slane %v5703, %v5716
  %v5718 = vcombine.high %v5710, %v5710
  %v5719 = vcombine.high %v5717, %v5717
  %v5721 = vunpack.c.l.s4 1966171168
  %v5722 = vunpack.c.0.s8 %v5721
  %v5723 = vlaneseq
  %v5724 = vshrl.u32 %v5723, 7
  %v5725 = vsub.s32 %v5722, %v5724
  %v5726 = vrot.slane %v5710, %v5725
  %v5728 = vunpack.c.l.s4 1966171168
  %v5729 = vunpack.c.0.s8 %v5728
  %v5730 = vlaneseq
  %v5731 = vshrl.u32 %v5730, 7
  %v5732 = vsub.s32 %v5729, %v5731
  %v5733 = vrot.slane %v5717, %v5732
  %v5735 = vunpack.c.l.s4 1966171168
  %v5736 = vunpack.c.0.s8 %v5735
  %v5737 = vlaneseq
  %v5738 = vshrl.u32 %v5737, 7
  %v5739 = vsub.s32 %v5736, %v5738
  %v5740 = vrot.slane %v5718, %v5739
  %v5742 = vunpack.c.l.s4 1966171168
  %v5743 = vunpack.c.0.s8 %v5742
  %v5744 = vlaneseq
  %v5745 = vshrl.u32 %v5744, 7
  %v5746 = vsub.s32 %v5743, %v5745
  %v5747 = vrot.slane %v5719, %v5746
  %v5748 = vcombine.high %v5726, %v5726
  %v5749 = vcombine.high %v5733, %v5733
  %v5750 = vcombine.high %v5740, %v5740
  %v5751 = vcombine.high %v5747, %v5747
  %v5752 = vcombine.high %v5458, %v5458
  %v5754 = vunpack.c.l.s4 1966171168
  %v5755 = vunpack.c.0.s8 %v5754
  %v5756 = vlaneseq
  %v5757 = vshrl.u32 %v5756, 7
  %v5758 = vsub.s32 %v5755, %v5757
  %v5759 = vrot.slane %v5458, %v5758
  %v5761 = vunpack.c.l.s4 1966171168
  %v5762 = vunpack.c.0.s8 %v5761
  %v5763 = vlaneseq
  %v5764 = vshrl.u32 %v5763, 7
  %v5765 = vsub.s32 %v5762, %v5764
  %v5766 = vrot.slane %v5752, %v5765
  %v5767 = vcombine.high %v5759, %v5759
  %v5768 = vcombine.high %v5766, %v5766
  %v5770 = vunpack.c.l.s4 1966171168
  %v5771 = vunpack.c.0.s8 %v5770
  %v5772 = vlaneseq
  %v5773 = vshrl.u32 %v5772, 7
  %v5774 = vsub.s32 %v5771, %v5773
  %v5775 = vrot.slane %v5759, %v5774
  %v5777 = vunpack.c.l.s4 1966171168
  %v5778 = vunpack.c.0.s8 %v5777
  %v5779 = vlaneseq
  %v5780 = vshrl.u32 %v5779, 7
  %v5781 = vsub.s32 %v5778, %v5780
  %v5782 = vrot.slane %v5766, %v5781
  %v5784 = vunpack.c.l.s4 1966171168
  %v5785 = vunpack.c.0.s8 %v5784
  %v5786 = vlaneseq
  %v5787 = vshrl.u32 %v5786, 7
  %v5788 = vsub.s32 %v5785, %v5787
  %v5789 = vrot.slane %v5767, %v5788
  %v5791 = vunpack.c.l.s4 1966171168
  %v5792 = vunpack.c.0.s8 %v5791
  %v5793 = vlaneseq
  %v5794 = vshrl.u32 %v5793, 7
  %v5795 = vsub.s32 %v5792, %v5794
  %v5796 = vrot.slane %v5768, %v5795
  %v5797 = vcombine.high %v5775, %v5775
  %v5798 = vcombine.high %v5782, %v5782
  %v5799 = vcombine.high %v5789, %v5789
  %v5800 = vcombine.high %v5796, %v5796
  %v5801 = vcombine.high %v5463, %v5463
  %v5803 = vunpack.c.l.s4 1966171168
  %v5804 = vunpack.c.0.s8 %v5803
  %v5805 = vlaneseq
  %v5806 = vshrl.u32 %v5805, 7
  %v5807 = vsub.s32 %v5804, %v5806
  %v5808 = vrot.slane %v5463, %v5807
  %v5810 = vunpack.c.l.s4 1966171168
  %v5811 = vunpack.c.0.s8 %v5810
  %v5812 = vlaneseq
  %v5813 = vshrl.u32 %v5812, 7
  %v5814 = vsub.s32 %v5811, %v5813
  %v5815 = vrot.slane %v5801, %v5814
  %v5816 = vcombine.high %v5808, %v5808
  %v5817 = vcombine.high %v5815, %v5815
  %v5819 = vunpack.c.l.s4 1966171168
  %v5820 = vunpack.c.0.s8 %v5819
  %v5821 = vlaneseq
  %v5822 = vshrl.u32 %v5821, 7
  %v5823 = vsub.s32 %v5820, %v5822
  %v5824 = vrot.slane %v5808, %v5823
  %v5826 = vunpack.c.l.s4 1966171168
  %v5827 = vunpack.c.0.s8 %v5826
  %v5828 = vlaneseq
  %v5829 = vshrl.u32 %v5828, 7
  %v5830 = vsub.s32 %v5827, %v5829
  %v5831 = vrot.slane %v5815, %v5830
  %v5833 = vunpack.c.l.s4 1966171168
  %v5834 = vunpack.c.0.s8 %v5833
  %v5835 = vlaneseq
  %v5836 = vshrl.u32 %v5835, 7
  %v5837 = vsub.s32 %v5834, %v5836
  %v5838 = vrot.slane %v5816, %v5837
  %v5840 = vunpack.c.l.s4 1966171168
  %v5841 = vunpack.c.0.s8 %v5840
  %v5842 = vlaneseq
  %v5843 = vshrl.u32 %v5842, 7
  %v5844 = vsub.s32 %v5841, %v5843
  %v5845 = vrot.slane %v5817, %v5844
  %v5846 = vcombine.high %v5824, %v5824
  %v5847 = vcombine.high %v5831, %v5831
  %v5848 = vcombine.high %v5838, %v5838
  %v5849 = vcombine.high %v5845, %v5845
  %v5850 = vcombine.high %v5466, %v5466
  %v5852 = vunpack.c.l.s4 1966171168
  %v5853 = vunpack.c.0.s8 %v5852
  %v5854 = vlaneseq
  %v5855 = vshrl.u32 %v5854, 7
  %v5856 = vsub.s32 %v5853, %v5855
  %v5857 = vrot.slane %v5466, %v5856
  %v5859 = vunpack.c.l.s4 1966171168
  %v5860 = vunpack.c.0.s8 %v5859
  %v5861 = vlaneseq
  %v5862 = vshrl.u32 %v5861, 7
  %v5863 = vsub.s32 %v5860, %v5862
  %v5864 = vrot.slane %v5850, %v5863
  %v5865 = vcombine.high %v5857, %v5857
  %v5866 = vcombine.high %v5864, %v5864
  %v5868 = vunpack.c.l.s4 1966171168
  %v5869 = vunpack.c.0.s8 %v5868
  %v5870 = vlaneseq
  %v5871 = vshrl.u32 %v5870, 7
  %v5872 = vsub.s32 %v5869, %v5871
  %v5873 = vrot.slane %v5857, %v5872
  %v5875 = vunpack.c.l.s4 1966171168
  %v5876 = vunpack.c.0.s8 %v5875
  %v5877 = vlaneseq
  %v5878 = vshrl.u32 %v5877, 7
  %v5879 = vsub.s32 %v5876, %v5878
  %v5880 = vrot.slane %v5864, %v5879
  %v5882 = vunpack.c.l.s4 1966171168
  %v5883 = vunpack.c.0.s8 %v5882
  %v5884 = vlaneseq
  %v5885 = vshrl.u32 %v5884, 7
  %v5886 = vsub.s32 %v5883, %v5885
  %v5887 = vrot.slane %v5865, %v5886
  %v5889 = vunpack.c.l.s4 1966171168
  %v5890 = vunpack.c.0.s8 %v5889
  %v5891 = vlaneseq
  %v5892 = vshrl.u32 %v5891, 7
  %v5893 = vsub.s32 %v5890, %v5892
  %v5894 = vrot.slane %v5866, %v5893
  %v5895 = vcombine.high %v5873, %v5873
  %v5896 = vcombine.high %v5880, %v5880
  %v5897 = vcombine.high %v5887, %v5887
  %v5898 = vcombine.high %v5894, %v5894
  %v5899 = vcombine.high %v5471, %v5471
  %v5901 = vunpack.c.l.s4 1966171168
  %v5902 = vunpack.c.0.s8 %v5901
  %v5903 = vlaneseq
  %v5904 = vshrl.u32 %v5903, 7
  %v5905 = vsub.s32 %v5902, %v5904
  %v5906 = vrot.slane %v5471, %v5905
  %v5908 = vunpack.c.l.s4 1966171168
  %v5909 = vunpack.c.0.s8 %v5908
  %v5910 = vlaneseq
  %v5911 = vshrl.u32 %v5910, 7
  %v5912 = vsub.s32 %v5909, %v5911
  %v5913 = vrot.slane %v5899, %v5912
  %v5914 = vcombine.high %v5906, %v5906
  %v5915 = vcombine.high %v5913, %v5913
  %v5917 = vunpack.c.l.s4 1966171168
  %v5918 = vunpack.c.0.s8 %v5917
  %v5919 = vlaneseq
  %v5920 = vshrl.u32 %v5919, 7
  %v5921 = vsub.s32 %v5918, %v5920
  %v5922 = vrot.slane %v5906, %v5921
  %v5924 = vunpack.c.l.s4 1966171168
  %v5925 = vunpack.c.0.s8 %v5924
  %v5926 = vlaneseq
  %v5927 = vshrl.u32 %v5926, 7
  %v5928 = vsub.s32 %v5925, %v5927
  %v5929 = vrot.slane %v5913, %v5928
  %v5931 = vunpack.c.l.s4 1966171168
  %v5932 = vunpack.c.0.s8 %v5931
  %v5933 = vlaneseq
  %v5934 = vshrl.u32 %v5933, 7
  %v5935 = vsub.s32 %v5932, %v5934
  %v5936 = vrot.slane %v5914, %v5935
  %v5938 = vunpack.c.l.s4 1966171168
  %v5939 = vunpack.c.0.s8 %v5938
  %v5940 = vlaneseq
  %v5941 = vshrl.u32 %v5940, 7
  %v5942 = vsub.s32 %v5939, %v5941
  %v5943 = vrot.slane %v5915, %v5942
  %v5944 = vcombine.high %v5922, %v5922
  %v5945 = vcombine.high %v5929, %v5929
  %v5946 = vcombine.high %v5936, %v5936
  %v5947 = vcombine.high %v5943, %v5943
  %v5948 = vcombine.high %v5474, %v5474
  %v5950 = vunpack.c.l.s4 1966171168
  %v5951 = vunpack.c.0.s8 %v5950
  %v5952 = vlaneseq
  %v5953 = vshrl.u32 %v5952, 7
  %v5954 = vsub.s32 %v5951, %v5953
  %v5955 = vrot.slane %v5474, %v5954
  %v5957 = vunpack.c.l.s4 1966171168
  %v5958 = vunpack.c.0.s8 %v5957
  %v5959 = vlaneseq
  %v5960 = vshrl.u32 %v5959, 7
  %v5961 = vsub.s32 %v5958, %v5960
  %v5962 = vrot.slane %v5948, %v5961
  %v5963 = vcombine.high %v5955, %v5955
  %v5964 = vcombine.high %v5962, %v5962
  %v5966 = vunpack.c.l.s4 1966171168
  %v5967 = vunpack.c.0.s8 %v5966
  %v5968 = vlaneseq
  %v5969 = vshrl.u32 %v5968, 7
  %v5970 = vsub.s32 %v5967, %v5969
  %v5971 = vrot.slane %v5955, %v5970
  %v5973 = vunpack.c.l.s4 1966171168
  %v5974 = vunpack.c.0.s8 %v5973
  %v5975 = vlaneseq
  %v5976 = vshrl.u32 %v5975, 7
  %v5977 = vsub.s32 %v5974, %v5976
  %v5978 = vrot.slane %v5962, %v5977
  %v5980 = vunpack.c.l.s4 1966171168
  %v5981 = vunpack.c.0.s8 %v5980
  %v5982 = vlaneseq
  %v5983 = vshrl.u32 %v5982, 7
  %v5984 = vsub.s32 %v5981, %v5983
  %v5985 = vrot.slane %v5963, %v5984
  %v5987 = vunpack.c.l.s4 1966171168
  %v5988 = vunpack.c.0.s8 %v5987
  %v5989 = vlaneseq
  %v5990 = vshrl.u32 %v5989, 7
  %v5991 = vsub.s32 %v5988, %v5990
  %v5992 = vrot.slane %v5964, %v5991
  %v5993 = vcombine.high %v5971, %v5971
  %v5994 = vcombine.high %v5978, %v5978
  %v5995 = vcombine.high %v5985, %v5985
  %v5996 = vcombine.high %v5992, %v5992
  %v5997 = vcombine.high %v5479, %v5479
  %v5999 = vunpack.c.l.s4 1966171168
  %v6000 = vunpack.c.0.s8 %v5999
  %v6001 = vlaneseq
  %v6002 = vshrl.u32 %v6001, 7
  %v6003 = vsub.s32 %v6000, %v6002
  %v6004 = vrot.slane %v5479, %v6003
  %v6006 = vunpack.c.l.s4 1966171168
  %v6007 = vunpack.c.0.s8 %v6006
  %v6008 = vlaneseq
  %v6009 = vshrl.u32 %v6008, 7
  %v6010 = vsub.s32 %v6007, %v6009
  %v6011 = vrot.slane %v5997, %v6010
  %v6012 = vcombine.high %v6004, %v6004
  %v6013 = vcombine.high %v6011, %v6011
  %v6015 = vunpack.c.l.s4 1966171168
  %v6016 = vunpack.c.0.s8 %v6015
  %v6017 = vlaneseq
  %v6018 = vshrl.u32 %v6017, 7
  %v6019 = vsub.s32 %v6016, %v6018
  %v6020 = vrot.slane %v6004, %v6019
  %v6022 = vunpack.c.l.s4 1966171168
  %v6023 = vunpack.c.0.s8 %v6022
  %v6024 = vlaneseq
  %v6025 = vshrl.u32 %v6024, 7
  %v6026 = vsub.s32 %v6023, %v6025
  %v6027 = vrot.slane %v6011, %v6026
  %v6029 = vunpack.c.l.s4 1966171168
  %v6030 = vunpack.c.0.s8 %v6029
  %v6031 = vlaneseq
  %v6032 = vshrl.u32 %v6031, 7
  %v6033 = vsub.s32 %v6030, %v6032
  %v6034 = vrot.slane %v6012, %v6033
  %v6036 = vunpack.c.l.s4 1966171168
  %v6037 = vunpack.c.0.s8 %v6036
  %v6038 = vlaneseq
  %v6039 = vshrl.u32 %v6038, 7
  %v6040 = vsub.s32 %v6037, %v6039
  %v6041 = vrot.slane %v6013, %v6040
  %v6042 = vcombine.high %v6020, %v6020
  %v6043 = vcombine.high %v6027, %v6027
  %v6044 = vcombine.high %v6034, %v6034
  %v6045 = vcombine.high %v6041, %v6041
  %v6046 = vcombine.high %v5482, %v5482
  %v6048 = vunpack.c.l.s4 1966171168
  %v6049 = vunpack.c.0.s8 %v6048
  %v6050 = vlaneseq
  %v6051 = vshrl.u32 %v6050, 7
  %v6052 = vsub.s32 %v6049, %v6051
  %v6053 = vrot.slane %v5482, %v6052
  %v6055 = vunpack.c.l.s4 1966171168
  %v6056 = vunpack.c.0.s8 %v6055
  %v6057 = vlaneseq
  %v6058 = vshrl.u32 %v6057, 7
  %v6059 = vsub.s32 %v6056, %v6058
  %v6060 = vrot.slane %v6046, %v6059
  %v6061 = vcombine.high %v6053, %v6053
  %v6062 = vcombine.high %v6060, %v6060
  %v6064 = vunpack.c.l.s4 1966171168
  %v6065 = vunpack.c.0.s8 %v6064
  %v6066 = vlaneseq
  %v6067 = vshrl.u32 %v6066, 7
  %v6068 = vsub.s32 %v6065, %v6067
  %v6069 = vrot.slane %v6053, %v6068
  %v6071 = vunpack.c.l.s4 1966171168
  %v6072 = vunpack.c.0.s8 %v6071
  %v6073 = vlaneseq
  %v6074 = vshrl.u32 %v6073, 7
  %v6075 = vsub.s32 %v6072, %v6074
  %v6076 = vrot.slane %v6060, %v6075
  %v6078 = vunpack.c.l.s4 1966171168
  %v6079 = vunpack.c.0.s8 %v6078
  %v6080 = vlaneseq
  %v6081 = vshrl.u32 %v6080, 7
  %v6082 = vsub.s32 %v6079, %v6081
  %v6083 = vrot.slane %v6061, %v6082
  %v6085 = vunpack.c.l.s4 1966171168
  %v6086 = vunpack.c.0.s8 %v6085
  %v6087 = vlaneseq
  %v6088 = vshrl.u32 %v6087, 7
  %v6089 = vsub.s32 %v6086, %v6088
  %v6090 = vrot.slane %v6062, %v6089
  %v6091 = vcombine.high %v6069, %v6069
  %v6092 = vcombine.high %v6076, %v6076
  %v6093 = vcombine.high %v6083, %v6083
  %v6094 = vcombine.high %v6090, %v6090
  %v6095 = vcombine.high %v5487, %v5487
  %v6097 = vunpack.c.l.s4 1966171168
  %v6098 = vunpack.c.0.s8 %v6097
  %v6099 = vlaneseq
  %v6100 = vshrl.u32 %v6099, 7
  %v6101 = vsub.s32 %v6098, %v6100
  %v6102 = vrot.slane %v5487, %v6101
  %v6104 = vunpack.c.l.s4 1966171168
  %v6105 = vunpack.c.0.s8 %v6104
  %v6106 = vlaneseq
  %v6107 = vshrl.u32 %v6106, 7
  %v6108 = vsub.s32 %v6105, %v6107
  %v6109 = vrot.slane %v6095, %v6108
  %v6110 = vcombine.high %v6102, %v6102
  %v6111 = vcombine.high %v6109, %v6109
  %v6113 = vunpack.c.l.s4 1966171168
  %v6114 = vunpack.c.0.s8 %v6113
  %v6115 = vlaneseq
  %v6116 = vshrl.u32 %v6115, 7
  %v6117 = vsub.s32 %v6114, %v6116
  %v6118 = vrot.slane %v6102, %v6117
  %v6120 = vunpack.c.l.s4 1966171168
  %v6121 = vunpack.c.0.s8 %v6120
  %v6122 = vlaneseq
  %v6123 = vshrl.u32 %v6122, 7
  %v6124 = vsub.s32 %v6121, %v6123
  %v6125 = vrot.slane %v6109, %v6124
  %v6127 = vunpack.c.l.s4 1966171168
  %v6128 = vunpack.c.0.s8 %v6127
  %v6129 = vlaneseq
  %v6130 = vshrl.u32 %v6129, 7
  %v6131 = vsub.s32 %v6128, %v6130
  %v6132 = vrot.slane %v6110, %v6131
  %v6134 = vunpack.c.l.s4 1966171168
  %v6135 = vunpack.c.0.s8 %v6134
  %v6136 = vlaneseq
  %v6137 = vshrl.u32 %v6136, 7
  %v6138 = vsub.s32 %v6135, %v6137
  %v6139 = vrot.slane %v6111, %v6138
  %v6140 = vcombine.high %v6118, %v6118
  %v6141 = vcombine.high %v6125, %v6125
  %v6142 = vcombine.high %v6132, %v6132
  %v6143 = vcombine.high %v6139, %v6139
  %v6144 = vcombine.high %v5490, %v5490
  %v6146 = vunpack.c.l.s4 1966171168
  %v6147 = vunpack.c.0.s8 %v6146
  %v6148 = vlaneseq
  %v6149 = vshrl.u32 %v6148, 7
  %v6150 = vsub.s32 %v6147, %v6149
  %v6151 = vrot.slane %v5490, %v6150
  %v6153 = vunpack.c.l.s4 1966171168
  %v6154 = vunpack.c.0.s8 %v6153
  %v6155 = vlaneseq
  %v6156 = vshrl.u32 %v6155, 7
  %v6157 = vsub.s32 %v6154, %v6156
  %v6158 = vrot.slane %v6144, %v6157
  %v6159 = vcombine.high %v6151, %v6151
  %v6160 = vcombine.high %v6158, %v6158
  %v6162 = vunpack.c.l.s4 1966171168
  %v6163 = vunpack.c.0.s8 %v6162
  %v6164 = vlaneseq
  %v6165 = vshrl.u32 %v6164, 7
  %v6166 = vsub.s32 %v6163, %v6165
  %v6167 = vrot.slane %v6151, %v6166
  %v6169 = vunpack.c.l.s4 1966171168
  %v6170 = vunpack.c.0.s8 %v6169
  %v6171 = vlaneseq
  %v6172 = vshrl.u32 %v6171, 7
  %v6173 = vsub.s32 %v6170, %v6172
  %v6174 = vrot.slane %v6158, %v6173
  %v6176 = vunpack.c.l.s4 1966171168
  %v6177 = vunpack.c.0.s8 %v6176
  %v6178 = vlaneseq
  %v6179 = vshrl.u32 %v6178, 7
  %v6180 = vsub.s32 %v6177, %v6179
  %v6181 = vrot.slane %v6159, %v6180
  %v6183 = vunpack.c.l.s4 1966171168
  %v6184 = vunpack.c.0.s8 %v6183
  %v6185 = vlaneseq
  %v6186 = vshrl.u32 %v6185, 7
  %v6187 = vsub.s32 %v6184, %v6186
  %v6188 = vrot.slane %v6160, %v6187
  %v6189 = vcombine.high %v6167, %v6167
  %v6190 = vcombine.high %v6174, %v6174
  %v6191 = vcombine.high %v6181, %v6181
  %v6192 = vcombine.high %v6188, %v6188
  %v6193 = vcombine.low %v5530, %v5544
  %v6194 = vcombine.low %v5552, %v5554
  %v6195 = vcombine.low %v5537, %v5551
  %v6197 = vunpack.c.l.s4 1966171168
  %v6198 = vunpack.c.0.s8 %v6197
  %v6199 = vlaneseq
  %v6200 = vshrl.u32 %v6199, 7
  %v6201 = vsub.s32 %v6198, %v6200
  %v6202 = vrot.slane %v6193, %v6201
  %v6204 = vunpack.c.l.s4 1966171168
  %v6205 = vunpack.c.0.s8 %v6204
  %v6206 = vlaneseq
  %v6207 = vshrl.u32 %v6206, 7
  %v6208 = vsub.s32 %v6205, %v6207
  %v6209 = vrot.slane %v6194, %v6208
  %v6211 = vunpack.c.l.s4 1966171168
  %v6212 = vunpack.c.0.s8 %v6211
  %v6213 = vlaneseq
  %v6214 = vshrl.u32 %v6213, 7
  %v6215 = vsub.s32 %v6212, %v6214
  %v6216 = vrot.slane %v6195, %v6215
  %v6218 = vunpack.c.l.s4 1966171168
  %v6219 = vunpack.c.0.s8 %v6218
  %v6220 = vlaneseq
  %v6221 = vshrl.u32 %v6220, 7
  %v6222 = vsub.s32 %v6219, %v6221
  %v6223 = vrot.slane %v5553, %v6222
  %v6224 = vcombine.low %v6202, %v6209
  %v6225 = vcombine.low %v6216, %v6223
  %v6227 = vunpack.c.l.s4 1966171168
  %v6228 = vunpack.c.0.s8 %v6227
  %v6229 = vlaneseq
  %v6230 = vshrl.u32 %v6229, 7
  %v6231 = vsub.s32 %v6228, %v6230
  %v6232 = vrot.slane %v6224, %v6231
  %v6234 = vunpack.c.l.s4 1966171168
  %v6235 = vunpack.c.0.s8 %v6234
  %v6236 = vlaneseq
  %v6237 = vshrl.u32 %v6236, 7
  %v6238 = vsub.s32 %v6235, %v6237
  %v6239 = vrot.slane %v6225, %v6238
  %v6240 = vcombine.low %v6232, %v6239
  %v6241 = vcombine.low %v5555, %v5579
  %v6242 = vcombine.low %v5593, %v5601
  %v6243 = vcombine.low %v5603, %v5586
  %v6245 = vunpack.c.l.s4 1966171168
  %v6246 = vunpack.c.0.s8 %v6245
  %v6247 = vlaneseq
  %v6248 = vshrl.u32 %v6247, 7
  %v6249 = vsub.s32 %v6246, %v6248
  %v6250 = vrot.slane %v6241, %v6249
  %v6252 = vunpack.c.l.s4 1966171168
  %v6253 = vunpack.c.0.s8 %v6252
  %v6254 = vlaneseq
  %v6255 = vshrl.u32 %v6254, 7
  %v6256 = vsub.s32 %v6253, %v6255
  %v6257 = vrot.slane %v6242, %v6256
  %v6259 = vunpack.c.l.s4 1966171168
  %v6260 = vunpack.c.0.s8 %v6259
  %v6261 = vlaneseq
  %v6262 = vshrl.u32 %v6261, 7
  %v6263 = vsub.s32 %v6260, %v6262
  %v6264 = vrot.slane %v6243, %v6263
  %v6266 = vunpack.c.l.s4 1966171168
  %v6267 = vunpack.c.0.s8 %v6266
  %v6268 = vlaneseq
  %v6269 = vshrl.u32 %v6268, 7
  %v6270 = vsub.s32 %v6267, %v6269
  %v6271 = vrot.slane %v5600, %v6270
  %v6272 = vcombine.low %v6250, %v6257
  %v6273 = vcombine.low %v6264, %v6271
  %v6275 = vunpack.c.l.s4 1966171168
  %v6276 = vunpack.c.0.s8 %v6275
  %v6277 = vlaneseq
  %v6278 = vshrl.u32 %v6277, 7
  %v6279 = vsub.s32 %v6276, %v6278
  %v6280 = vrot.slane %v6272, %v6279
  %v6282 = vunpack.c.l.s4 1966171168
  %v6283 = vunpack.c.0.s8 %v6282
  %v6284 = vlaneseq
  %v6285 = vshrl.u32 %v6284, 7
  %v6286 = vsub.s32 %v6283, %v6285
  %v6287 = vrot.slane %v6273, %v6286
  %v6288 = vcombine.low %v6280, %v6287
  %v6289 = vcombine.low %v5602, %v5604
  %v6290 = vcombine.low %v5628, %v5642
  %v6291 = vcombine.low %v5650, %v5652
  %v6293 = vunpack.c.l.s4 1966171168
  %v6294 = vunpack.c.0.s8 %v6293
  %v6295 = vlaneseq
  %v6296 = vshrl.u32 %v6295, 7
  %v6297 = vsub.s32 %v6294, %v6296
  %v6298 = vrot.slane %v6289, %v6297
  %v6300 = vunpack.c.l.s4 1966171168
  %v6301 = vunpack.c.0.s8 %v6300
  %v6302 = vlaneseq
  %v6303 = vshrl.u32 %v6302, 7
  %v6304 = vsub.s32 %v6301, %v6303
  %v6305 = vrot.slane %v6290, %v6304
  %v6307 = vunpack.c.l.s4 1966171168
  %v6308 = vunpack.c.0.s8 %v6307
  %v6309 = vlaneseq
  %v6310 = vshrl.u32 %v6309, 7
  %v6311 = vsub.s32 %v6308, %v6310
  %v6312 = vrot.slane %v6291, %v6311
  %v6314 = vunpack.c.l.s4 1966171168
  %v6315 = vunpack.c.0.s8 %v6314
  %v6316 = vlaneseq
  %v6317 = vshrl.u32 %v6316, 7
  %v6318 = vsub.s32 %v6315, %v6317
  %v6319 = vrot.slane %v5635, %v6318
  %v6320 = vcombine.low %v6298, %v6305
  %v6321 = vcombine.low %v6312, %v6319
  %v6323 = vunpack.c.l.s4 1966171168
  %v6324 = vunpack.c.0.s8 %v6323
  %v6325 = vlaneseq
  %v6326 = vshrl.u32 %v6325, 7
  %v6327 = vsub.s32 %v6324, %v6326
  %v6328 = vrot.slane %v6320, %v6327
  %v6330 = vunpack.c.l.s4 1966171168
  %v6331 = vunpack.c.0.s8 %v6330
  %v6332 = vlaneseq
  %v6333 = vshrl.u32 %v6332, 7
  %v6334 = vsub.s32 %v6331, %v6333
  %v6335 = vrot.slane %v6321, %v6334
  %v6336 = vcombine.low %v6328, %v6335
  %v6337 = vcombine.low %v5649, %v5651
  %v6338 = vcombine.low %v5653, %v5677
  %v6339 = vcombine.low %v5691, %v5699
  %v6341 = vunpack.c.l.s4 1966171168
  %v6342 = vunpack.c.0.s8 %v6341
  %v6343 = vlaneseq
  %v6344 = vshrl.u32 %v6343, 7
  %v6345 = vsub.s32 %v6342, %v6344
  %v6346 = vrot.slane %v6337, %v6345
  %v6348 = vunpack.c.l.s4 1966171168
  %v6349 = vunpack.c.0.s8 %v6348
  %v6350 = vlaneseq
  %v6351 = vshrl.u32 %v6350, 7
  %v6352 = vsub.s32 %v6349, %v6351
  %v6353 = vrot.slane %v6338, %v6352
  %v6355 = vunpack.c.l.s4 1966171168
  %v6356 = vunpack.c.0.s8 %v6355
  %v6357 = vlaneseq
  %v6358 = vshrl.u32 %v6357, 7
  %v6359 = vsub.s32 %v6356, %v6358
  %v6360 = vrot.slane %v6339, %v6359
  %v6362 = vunpack.c.l.s4 1966171168
  %v6363 = vunpack.c.0.s8 %v6362
  %v6364 = vlaneseq
  %v6365 = vshrl.u32 %v6364, 7
  %v6366 = vsub.s32 %v6363, %v6365
  %v6367 = vrot.slane %v5701, %v6366
  %v6368 = vcombine.low %v6346, %v6353
  %v6369 = vcombine.low %v6360, %v6367
  %v6371 = vunpack.c.l.s4 1966171168
  %v6372 = vunpack.c.0.s8 %v6371
  %v6373 = vlaneseq
  %v6374 = vshrl.u32 %v6373, 7
  %v6375 = vsub.s32 %v6372, %v6374
  %v6376 = vrot.slane %v6368, %v6375
  %v6378 = vunpack.c.l.s4 1966171168
  %v6379 = vunpack.c.0.s8 %v6378
  %v6380 = vlaneseq
  %v6381 = vshrl.u32 %v6380, 7
  %v6382 = vsub.s32 %v6379, %v6381
  %v6383 = vrot.slane %v6369, %v6382
  %v6384 = vcombine.low %v6376, %v6383
  %v6385 = vcombine.low %v5684, %v5698
  %v6386 = vcombine.low %v5700, %v5702
  %v6387 = vcombine.low %v5726, %v5740
  %v6389 = vunpack.c.l.s4 1966171168
  %v6390 = vunpack.c.0.s8 %v6389
  %v6391 = vlaneseq
  %v6392 = vshrl.u32 %v6391, 7
  %v6393 = vsub.s32 %v6390, %v6392
  %v6394 = vrot.slane %v6385, %v6393
  %v6396 = vunpack.c.l.s4 1966171168
  %v6397 = vunpack.c.0.s8 %v6396
  %v6398 = vlaneseq
  %v6399 = vshrl.u32 %v6398, 7
  %v6400 = vsub.s32 %v6397, %v6399
  %v6401 = vrot.slane %v6386, %v6400
  %v6403 = vunpack.c.l.s4 1966171168
  %v6404 = vunpack.c.0.s8 %v6403
  %v6405 = vlaneseq
  %v6406 = vshrl.u32 %v6405, 7
  %v6407 = vsub.s32 %v6404, %v6406
  %v6408 = vrot.slane %v6387, %v6407
  %v6410 = vunpack.c.l.s4 1966171168
  %v6411 = vunpack.c.0.s8 %v6410
  %v6412 = vlaneseq
  %v6413 = vshrl.u32 %v6412, 7
  %v6414 = vsub.s32 %v6411, %v6413
  %v6415 = vrot.slane %v5748, %v6414
  %v6416 = vcombine.low %v6394, %v6401
  %v6417 = vcombine.low %v6408, %v6415
  %v6419 = vunpack.c.l.s4 1966171168
  %v6420 = vunpack.c.0.s8 %v6419
  %v6421 = vlaneseq
  %v6422 = vshrl.u32 %v6421, 7
  %v6423 = vsub.s32 %v6420, %v6422
  %v6424 = vrot.slane %v6416, %v6423
  %v6426 = vunpack.c.l.s4 1966171168
  %v6427 = vunpack.c.0.s8 %v6426
  %v6428 = vlaneseq
  %v6429 = vshrl.u32 %v6428, 7
  %v6430 = vsub.s32 %v6427, %v6429
  %v6431 = vrot.slane %v6417, %v6430
  %v6432 = vcombine.low %v6424, %v6431
  %v6433 = vcombine.low %v5750, %v5733
  %v6434 = vcombine.low %v5747, %v5749
  %v6435 = vcombine.low %v5751, %v5775
  %v6437 = vunpack.c.l.s4 1966171168
  %v6438 = vunpack.c.0.s8 %v6437
  %v6439 = vlaneseq
  %v6440 = vshrl.u32 %v6439, 7
  %v6441 = vsub.s32 %v6438, %v6440
  %v6442 = vrot.slane %v6433, %v6441
  %v6444 = vunpack.c.l.s4 1966171168
  %v6445 = vunpack.c.0.s8 %v6444
  %v6446 = vlaneseq
  %v6447 = vshrl.u32 %v6446, 7
  %v6448 = vsub.s32 %v6445, %v6447
  %v6449 = vrot.slane %v6434, %v6448
  %v6451 = vunpack.c.l.s4 1966171168
  %v6452 = vunpack.c.0.s8 %v6451
  %v6453 = vlaneseq
  %v6454 = vshrl.u32 %v6453, 7
  %v6455 = vsub.s32 %v6452, %v6454
  %v6456 = vrot.slane %v6435, %v6455
  %v6458 = vunpack.c.l.s4 1966171168
  %v6459 = vunpack.c.0.s8 %v6458
  %v6460 = vlaneseq
  %v6461 = vshrl.u32 %v6460, 7
  %v6462 = vsub.s32 %v6459, %v6461
  %v6463 = vrot.slane %v5789, %v6462
  %v6464 = vcombine.low %v6442, %v6449
  %v6465 = vcombine.low %v6456, %v6463
  %v6467 = vunpack.c.l.s4 1966171168
  %v6468 = vunpack.c.0.s8 %v6467
  %v6469 = vlaneseq
  %v6470 = vshrl.u32 %v6469, 7
  %v6471 = vsub.s32 %v6468, %v6470
  %v6472 = vrot.slane %v6464, %v6471
  %v6474 = vunpack.c.l.s4 1966171168
  %v6475 = vunpack.c.0.s8 %v6474
  %v6476 = vlaneseq
  %v6477 = vshrl.u32 %v6476, 7
  %v6478 = vsub.s32 %v6475, %v6477
  %v6479 = vrot.slane %v6465, %v6478
  %v6480 = vcombine.low %v6472, %v6479
  %v6481 = vcombine.low %v5797, %v5799
  %v6482 = vcombine.low %v5782, %v5796
  %v6483 = vcombine.low %v5798, %v5800
  %v6485 = vunpack.c.l.s4 1966171168
  %v6486 = vunpack.c.0.s8 %v6485
  %v6487 = vlaneseq
  %v6488 = vshrl.u32 %v6487, 7
  %v6489 = vsub.s32 %v6486, %v6488
  %v6490 = vrot.slane %v6481, %v6489
  %v6492 = vunpack.c.l.s4 1966171168
  %v6493 = vunpack.c.0.s8 %v6492
  %v6494 = vlaneseq
  %v6495 = vshrl.u32 %v6494, 7
  %v6496 = vsub.s32 %v6493, %v6495
  %v6497 = vrot.slane %v6482, %v6496
  %v6499 = vunpack.c.l.s4 1966171168
  %v6500 = vunpack.c.0.s8 %v6499
  %v6501 = vlaneseq
  %v6502 = vshrl.u32 %v6501, 7
  %v6503 = vsub.s32 %v6500, %v6502
  %v6504 = vrot.slane %v6483, %v6503
  %v6506 = vunpack.c.l.s4 1966171168
  %v6507 = vunpack.c.0.s8 %v6506
  %v6508 = vlaneseq
  %v6509 = vshrl.u32 %v6508, 7
  %v6510 = vsub.s32 %v6507, %v6509
  %v6511 = vrot.slane %v5824, %v6510
  %v6512 = vcombine.low %v6490, %v6497
  %v6513 = vcombine.low %v6504, %v6511
  %v6515 = vunpack.c.l.s4 1966171168
  %v6516 = vunpack.c.0.s8 %v6515
  %v6517 = vlaneseq
  %v6518 = vshrl.u32 %v6517, 7
  %v6519 = vsub.s32 %v6516, %v6518
  %v6520 = vrot.slane %v6512, %v6519
  %v6522 = vunpack.c.l.s4 1966171168
  %v6523 = vunpack.c.0.s8 %v6522
  %v6524 = vlaneseq
  %v6525 = vshrl.u32 %v6524, 7
  %v6526 = vsub.s32 %v6523, %v6525
  %v6527 = vrot.slane %v6513, %v6526
  %v6528 = vcombine.low %v6520, %v6527
  %v6529 = vcombine.low %v5838, %v5846
  %v6530 = vcombine.low %v5848, %v5831
  %v6531 = vcombine.low %v5845, %v5847
  %v6533 = vunpack.c.l.s4 1966171168
  %v6534 = vunpack.c.0.s8 %v6533
  %v6535 = vlaneseq
  %v6536 = vshrl.u32 %v6535, 7
  %v6537 = vsub.s32 %v6534, %v6536
  %v6538 = vrot.slane %v6529, %v6537
  %v6540 = vunpack.c.l.s4 1966171168
  %v6541 = vunpack.c.0.s8 %v6540
  %v6542 = vlaneseq
  %v6543 = vshrl.u32 %v6542, 7
  %v6544 = vsub.s32 %v6541, %v6543
  %v6545 = vrot.slane %v6530, %v6544
  %v6547 = vunpack.c.l.s4 1966171168
  %v6548 = vunpack.c.0.s8 %v6547
  %v6549 = vlaneseq
  %v6550 = vshrl.u32 %v6549, 7
  %v6551 = vsub.s32 %v6548, %v6550
  %v6552 = vrot.slane %v6531, %v6551
  %v6554 = vunpack.c.l.s4 1966171168
  %v6555 = vunpack.c.0.s8 %v6554
  %v6556 = vlaneseq
  %v6557 = vshrl.u32 %v6556, 7
  %v6558 = vsub.s32 %v6555, %v6557
  %v6559 = vrot.slane %v5849, %v6558
  %v6560 = vcombine.low %v6538, %v6545
  %v6561 = vcombine.low %v6552, %v6559
  %v6563 = vunpack.c.l.s4 1966171168
  %v6564 = vunpack.c.0.s8 %v6563
  %v6565 = vlaneseq
  %v6566 = vshrl.u32 %v6565, 7
  %v6567 = vsub.s32 %v6564, %v6566
  %v6568 = vrot.slane %v6560, %v6567
  %v6570 = vunpack.c.l.s4 1966171168
  %v6571 = vunpack.c.0.s8 %v6570
  %v6572 = vlaneseq
  %v6573 = vshrl.u32 %v6572, 7
  %v6574 = vsub.s32 %v6571, %v6573
  %v6575 = vrot.slane %v6561, %v6574
  %v6576 = vcombine.low %v6568, %v6575
  %v6577 = vcombine.low %v5873, %v5887
  %v6578 = vcombine.low %v5895, %v5897
  %v6579 = vcombine.low %v5880, %v5894
  %v6581 = vunpack.c.l.s4 1966171168
  %v6582 = vunpack.c.0.s8 %v6581
  %v6583 = vlaneseq
  %v6584 = vshrl.u32 %v6583, 7
  %v6585 = vsub.s32 %v6582, %v6584
  %v6586 = vrot.slane %v6577, %v6585
  %v6588 = vunpack.c.l.s4 1966171168
  %v6589 = vunpack.c.0.s8 %v6588
  %v6590 = vlaneseq
  %v6591 = vshrl.u32 %v6590, 7
  %v6592 = vsub.s32 %v6589, %v6591
  %v6593 = vrot.slane %v6578, %v6592
  %v6595 = vunpack.c.l.s4 1966171168
  %v6596 = vunpack.c.0.s8 %v6595
  %v6597 = vlaneseq
  %v6598 = vshrl.u32 %v6597, 7
  %v6599 = vsub.s32 %v6596, %v6598
  %v6600 = vrot.slane %v6579, %v6599
  %v6602 = vunpack.c.l.s4 1966171168
  %v6603 = vunpack.c.0.s8 %v6602
  %v6604 = vlaneseq
  %v6605 = vshrl.u32 %v6604, 7
  %v6606 = vsub.s32 %v6603, %v6605
  %v6607 = vrot.slane %v5896, %v6606
  %v6608 = vcombine.low %v6586, %v6593
  %v6609 = vcombine.low %v6600, %v6607
  %v6611 = vunpack.c.l.s4 1966171168
  %v6612 = vunpack.c.0.s8 %v6611
  %v6613 = vlaneseq
  %v6614 = vshrl.u32 %v6613, 7
  %v6615 = vsub.s32 %v6612, %v6614
  %v6616 = vrot.slane %v6608, %v6615
  %v6618 = vunpack.c.l.s4 1966171168
  %v6619 = vunpack.c.0.s8 %v6618
  %v6620 = vlaneseq
  %v6621 = vshrl.u32 %v6620, 7
  %v6622 = vsub.s32 %v6619, %v6621
  %v6623 = vrot.slane %v6609, %v6622
  %v6624 = vcombine.low %v6616, %v6623
  %v6625 = vcombine.low %v5898, %v5922
  %v6626 = vcombine.low %v5936, %v5944
  %v6627 = vcombine.low %v5946, %v5929
  %v6629 = vunpack.c.l.s4 1966171168
  %v6630 = vunpack.c.0.s8 %v6629
  %v6631 = vlaneseq
  %v6632 = vshrl.u32 %v6631, 7
  %v6633 = vsub.s32 %v6630, %v6632
  %v6634 = vrot.slane %v6625, %v6633
  %v6636 = vunpack.c.l.s4 1966171168
  %v6637 = vunpack.c.0.s8 %v6636
  %v6638 = vlaneseq
  %v6639 = vshrl.u32 %v6638, 7
  %v6640 = vsub.s32 %v6637, %v6639
  %v6641 = vrot.slane %v6626, %v6640
  %v6643 = vunpack.c.l.s4 1966171168
  %v6644 = vunpack.c.0.s8 %v6643
  %v6645 = vlaneseq
  %v6646 = vshrl.u32 %v6645, 7
  %v6647 = vsub.s32 %v6644, %v6646
  %v6648 = vrot.slane %v6627, %v6647
  %v6650 = vunpack.c.l.s4 1966171168
  %v6651 = vunpack.c.0.s8 %v6650
  %v6652 = vlaneseq
  %v6653 = vshrl.u32 %v6652, 7
  %v6654 = vsub.s32 %v6651, %v6653
  %v6655 = vrot.slane %v5943, %v6654
  %v6656 = vcombine.low %v6634, %v6641
  %v6657 = vcombine.low %v6648, %v6655
  %v6659 = vunpack.c.l.s4 1966171168
  %v6660 = vunpack.c.0.s8 %v6659
  %v6661 = vlaneseq
  %v6662 = vshrl.u32 %v6661, 7
  %v6663 = vsub.s32 %v6660, %v6662
  %v6664 = vrot.slane %v6656, %v6663
  %v6666 = vunpack.c.l.s4 1966171168
  %v6667 = vunpack.c.0.s8 %v6666
  %v6668 = vlaneseq
  %v6669 = vshrl.u32 %v6668, 7
  %v6670 = vsub.s32 %v6667, %v6669
  %v6671 = vrot.slane %v6657, %v6670
  %v6672 = vcombine.low %v6664, %v6671
  %v6673 = vcombine.low %v5945, %v5947
  %v6674 = vcombine.low %v5971, %v5985
  %v6675 = vcombine.low %v5993, %v5995
  %v6677 = vunpack.c.l.s4 1966171168
  %v6678 = vunpack.c.0.s8 %v6677
  %v6679 = vlaneseq
  %v6680 = vshrl.u32 %v6679, 7
  %v6681 = vsub.s32 %v6678, %v6680
  %v6682 = vrot.slane %v6673, %v6681
  %v6684 = vunpack.c.l.s4 1966171168
  %v6685 = vunpack.c.0.s8 %v6684
  %v6686 = vlaneseq
  %v6687 = vshrl.u32 %v6686, 7
  %v6688 = vsub.s32 %v6685, %v6687
  %v6689 = vrot.slane %v6674, %v6688
  %v6691 = vunpack.c.l.s4 1966171168
  %v6692 = vunpack.c.0.s8 %v6691
  %v6693 = vlaneseq
  %v6694 = vshrl.u32 %v6693, 7
  %v6695 = vsub.s32 %v6692, %v6694
  %v6696 = vrot.slane %v6675, %v6695
  %v6698 = vunpack.c.l.s4 1966171168
  %v6699 = vunpack.c.0.s8 %v6698
  %v6700 = vlaneseq
  %v6701 = vshrl.u32 %v6700, 7
  %v6702 = vsub.s32 %v6699, %v6701
  %v6703 = vrot.slane %v5978, %v6702
  %v6704 = vcombine.low %v6682, %v6689
  %v6705 = vcombine.low %v6696, %v6703
  %v6707 = vunpack.c.l.s4 1966171168
  %v6708 = vunpack.c.0.s8 %v6707
  %v6709 = vlaneseq
  %v6710 = vshrl.u32 %v6709, 7
  %v6711 = vsub.s32 %v6708, %v6710
  %v6712 = vrot.slane %v6704, %v6711
  %v6714 = vunpack.c.l.s4 1966171168
  %v6715 = vunpack.c.0.s8 %v6714
  %v6716 = vlaneseq
  %v6717 = vshrl.u32 %v6716, 7
  %v6718 = vsub.s32 %v6715, %v6717
  %v6719 = vrot.slane %v6705, %v6718
  %v6720 = vcombine.low %v6712, %v6719
  %v6721 = vcombine.low %v5992, %v5994
  %v6722 = vcombine.low %v5996, %v6020
  %v6723 = vcombine.low %v6034, %v6042
  %v6725 = vunpack.c.l.s4 1966171168
  %v6726 = vunpack.c.0.s8 %v6725
  %v6727 = vlaneseq
  %v6728 = vshrl.u32 %v6727, 7
  %v6729 = vsub.s32 %v6726, %v6728
  %v6730 = vrot.slane %v6721, %v6729
  %v6732 = vunpack.c.l.s4 1966171168
  %v6733 = vunpack.c.0.s8 %v6732
  %v6734 = vlaneseq
  %v6735 = vshrl.u32 %v6734, 7
  %v6736 = vsub.s32 %v6733, %v6735
  %v6737 = vrot.slane %v6722, %v6736
  %v6739 = vunpack.c.l.s4 1966171168
  %v6740 = vunpack.c.0.s8 %v6739
  %v6741 = vlaneseq
  %v6742 = vshrl.u32 %v6741, 7
  %v6743 = vsub.s32 %v6740, %v6742
  %v6744 = vrot.slane %v6723, %v6743
  %v6746 = vunpack.c.l.s4 1966171168
  %v6747 = vunpack.c.0.s8 %v6746
  %v6748 = vlaneseq
  %v6749 = vshrl.u32 %v6748, 7
  %v6750 = vsub.s32 %v6747, %v6749
  %v6751 = vrot.slane %v6044, %v6750
  %v6752 = vcombine.low %v6730, %v6737
  %v6753 = vcombine.low %v6744, %v6751
  %v6755 = vunpack.c.l.s4 1966171168
  %v6756 = vunpack.c.0.s8 %v6755
  %v6757 = vlaneseq
  %v6758 = vshrl.u32 %v6757, 7
  %v6759 = vsub.s32 %v6756, %v6758
  %v6760 = vrot.slane %v6752, %v6759
  %v6762 = vunpack.c.l.s4 1966171168
  %v6763 = vunpack.c.0.s8 %v6762
  %v6764 = vlaneseq
  %v6765 = vshrl.u32 %v6764, 7
  %v6766 = vsub.s32 %v6763, %v6765
  %v6767 = vrot.slane %v6753, %v6766
  %v6768 = vcombine.low %v6760, %v6767
  %v6769 = vcombine.low %v6027, %v6041
  %v6770 = vcombine.low %v6043, %v6045
  %v6771 = vcombine.low %v6069, %v6083
  %v6773 = vunpack.c.l.s4 1966171168
  %v6774 = vunpack.c.0.s8 %v6773
  %v6775 = vlaneseq
  %v6776 = vshrl.u32 %v6775, 7
  %v6777 = vsub.s32 %v6774, %v6776
  %v6778 = vrot.slane %v6769, %v6777
  %v6780 = vunpack.c.l.s4 1966171168
  %v6781 = vunpack.c.0.s8 %v6780
  %v6782 = vlaneseq
  %v6783 = vshrl.u32 %v6782, 7
  %v6784 = vsub.s32 %v6781, %v6783
  %v6785 = vrot.slane %v6770, %v6784
  %v6787 = vunpack.c.l.s4 1966171168
  %v6788 = vunpack.c.0.s8 %v6787
  %v6789 = vlaneseq
  %v6790 = vshrl.u32 %v6789, 7
  %v6791 = vsub.s32 %v6788, %v6790
  %v6792 = vrot.slane %v6771, %v6791
  %v6794 = vunpack.c.l.s4 1966171168
  %v6795 = vunpack.c.0.s8 %v6794
  %v6796 = vlaneseq
  %v6797 = vshrl.u32 %v6796, 7
  %v6798 = vsub.s32 %v6795, %v6797
  %v6799 = vrot.slane %v6091, %v6798
  %v6800 = vcombine.low %v6778, %v6785
  %v6801 = vcombine.low %v6792, %v6799
  %v6803 = vunpack.c.l.s4 1966171168
  %v6804 = vunpack.c.0.s8 %v6803
  %v6805 = vlaneseq
  %v6806 = vshrl.u32 %v6805, 7
  %v6807 = vsub.s32 %v6804, %v6806
  %v6808 = vrot.slane %v6800, %v6807
  %v6810 = vunpack.c.l.s4 1966171168
  %v6811 = vunpack.c.0.s8 %v6810
  %v6812 = vlaneseq
  %v6813 = vshrl.u32 %v6812, 7
  %v6814 = vsub.s32 %v6811, %v6813
  %v6815 = vrot.slane %v6801, %v6814
  %v6816 = vcombine.low %v6808, %v6815
  %v6817 = vcombine.low %v6093, %v6076
  %v6818 = vcombine.low %v6090, %v6092
  %v6819 = vcombine.low %v6094, %v6118
  %v6821 = vunpack.c.l.s4 1966171168
  %v6822 = vunpack.c.0.s8 %v6821
  %v6823 = vlaneseq
  %v6824 = vshrl.u32 %v6823, 7
  %v6825 = vsub.s32 %v6822, %v6824
  %v6826 = vrot.slane %v6817, %v6825
  %v6828 = vunpack.c.l.s4 1966171168
  %v6829 = vunpack.c.0.s8 %v6828
  %v6830 = vlaneseq
  %v6831 = vshrl.u32 %v6830, 7
  %v6832 = vsub.s32 %v6829, %v6831
  %v6833 = vrot.slane %v6818, %v6832
  %v6835 = vunpack.c.l.s4 1966171168
  %v6836 = vunpack.c.0.s8 %v6835
  %v6837 = vlaneseq
  %v6838 = vshrl.u32 %v6837, 7
  %v6839 = vsub.s32 %v6836, %v6838
  %v6840 = vrot.slane %v6819, %v6839
  %v6842 = vunpack.c.l.s4 1966171168
  %v6843 = vunpack.c.0.s8 %v6842
  %v6844 = vlaneseq
  %v6845 = vshrl.u32 %v6844, 7
  %v6846 = vsub.s32 %v6843, %v6845
  %v6847 = vrot.slane %v6132, %v6846
  %v6848 = vcombine.low %v6826, %v6833
  %v6849 = vcombine.low %v6840, %v6847
  %v6851 = vunpack.c.l.s4 1966171168
  %v6852 = vunpack.c.0.s8 %v6851
  %v6853 = vlaneseq
  %v6854 = vshrl.u32 %v6853, 7
  %v6855 = vsub.s32 %v6852, %v6854
  %v6856 = vrot.slane %v6848, %v6855
  %v6858 = vunpack.c.l.s4 1966171168
  %v6859 = vunpack.c.0.s8 %v6858
  %v6860 = vlaneseq
  %v6861 = vshrl.u32 %v6860, 7
  %v6862 = vsub.s32 %v6859, %v6861
  %v6863 = vrot.slane %v6849, %v6862
  %v6864 = vcombine.low %v6856, %v6863
  %v6865 = vcombine.low %v6140, %v6142
  %v6866 = vcombine.low %v6125, %v6139
  %v6867 = vcombine.low %v6141, %v6143
  %v6869 = vunpack.c.l.s4 1966171168
  %v6870 = vunpack.c.0.s8 %v6869
  %v6871 = vlaneseq
  %v6872 = vshrl.u32 %v6871, 7
  %v6873 = vsub.s32 %v6870, %v6872
  %v6874 = vrot.slane %v6865, %v6873
  %v6876 = vunpack.c.l.s4 1966171168
  %v6877 = vunpack.c.0.s8 %v6876
  %v6878 = vlaneseq
  %v6879 = vshrl.u32 %v6878, 7
  %v6880 = vsub.s32 %v6877, %v6879
  %v6881 = vrot.slane %v6866, %v6880
  %v6883 = vunpack.c.l.s4 1966171168
  %v6884 = vunpack.c.0.s8 %v6883
  %v6885 = vlaneseq
  %v6886 = vshrl.u32 %v6885, 7
  %v6887 = vsub.s32 %v6884, %v6886
  %v6888 = vrot.slane %v6867, %v6887
  %v6890 = vunpack.c.l.s4 1966171168
  %v6891 = vunpack.c.0.s8 %v6890
  %v6892 = vlaneseq
  %v6893 = vshrl.u32 %v6892, 7
  %v6894 = vsub.s32 %v6891, %v6893
  %v6895 = vrot.slane %v6167, %v6894
  %v6896 = vcombine.low %v6874, %v6881
  %v6897 = vcombine.low %v6888, %v6895
  %v6899 = vunpack.c.l.s4 1966171168
  %v6900 = vunpack.c.0.s8 %v6899
  %v6901 = vlaneseq
  %v6902 = vshrl.u32 %v6901, 7
  %v6903 = vsub.s32 %v6900, %v6902
  %v6904 = vrot.slane %v6896, %v6903
  %v6906 = vunpack.c.l.s4 1966171168
  %v6907 = vunpack.c.0.s8 %v6906
  %v6908 = vlaneseq
  %v6909 = vshrl.u32 %v6908, 7
  %v6910 = vsub.s32 %v6907, %v6909
  %v6911 = vrot.slane %v6897, %v6910
  %v6912 = vcombine.low %v6904, %v6911
  %v6913 = vcombine.low %v6181, %v6189
  %v6914 = vcombine.low %v6191, %v6174
  %v6915 = vcombine.low %v6188, %v6190
  %v6917 = vunpack.c.l.s4 1966171168
  %v6918 = vunpack.c.0.s8 %v6917
  %v6919 = vlaneseq
  %v6920 = vshrl.u32 %v6919, 7
  %v6921 = vsub.s32 %v6918, %v6920
  %v6922 = vrot.slane %v6913, %v6921
  %v6924 = vunpack.c.l.s4 1966171168
  %v6925 = vunpack.c.0.s8 %v6924
  %v6926 = vlaneseq
  %v6927 = vshrl.u32 %v6926, 7
  %v6928 = vsub.s32 %v6925, %v6927
  %v6929 = vrot.slane %v6914, %v6928
  %v6931 = vunpack.c.l.s4 1966171168
  %v6932 = vunpack.c.0.s8 %v6931
  %v6933 = vlaneseq
  %v6934 = vshrl.u32 %v6933, 7
  %v6935 = vsub.s32 %v6932, %v6934
  %v6936 = vrot.slane %v6915, %v6935
  %v6938 = vunpack.c.l.s4 1966171168
  %v6939 = vunpack.c.0.s8 %v6938
  %v6940 = vlaneseq
  %v6941 = vshrl.u32 %v6940, 7
  %v6942 = vsub.s32 %v6939, %v6941
  %v6943 = vrot.slane %v6192, %v6942
  %v6944 = vcombine.low %v6922, %v6929
  %v6945 = vcombine.low %v6936, %v6943
  %v6947 = vunpack.c.l.s4 1966171168
  %v6948 = vunpack.c.0.s8 %v6947
  %v6949 = vlaneseq
  %v6950 = vshrl.u32 %v6949, 7
  %v6951 = vsub.s32 %v6948, %v6950
  %v6952 = vrot.slane %v6944, %v6951
  %v6954 = vunpack.c.l.s4 1966171168
  %v6955 = vunpack.c.0.s8 %v6954
  %v6956 = vlaneseq
  %v6957 = vshrl.u32 %v6956, 7
  %v6958 = vsub.s32 %v6955, %v6957
  %v6959 = vrot.slane %v6945, %v6958
  %v6960 = vcombine.low %v6952, %v6959
  %v6977 = vadd.f32 %v4835, %v6240
  %v6978 = vadd.f32 %v4836, %v6288
  %v6979 = vadd.f32 %v4837, %v6336
  %v6980 = vadd.f32 %v4838, %v6384
  %v6981 = vadd.f32 %v4839, %v6432
  %v6982 = vadd.f32 %v4840, %v6480
  %v6983 = vadd.f32 %v4841, %v6528
  %v6984 = vadd.f32 %v4842, %v6576
  %v6985 = vadd.f32 %v4843, %v6624
  %v6986 = vadd.f32 %v4844, %v6672
  %v6987 = vadd.f32 %v4845, %v6720
  %v6988 = vadd.f32 %v4846, %v6768
  %v6989 = vadd.f32 %v4847, %v6816
  %v6990 = vadd.f32 %v4848, %v6864
  %v6991 = vadd.f32 %v4849, %v6912
  %v6992 = vadd.f32 %v4850, %v6960
  %s6993 = scalar_lea.vmem %s1, 6
  %v6994 = vld [vmem:[%s6993] sm:$0x3]
  %v6995 = vcombine.high %v2628, %v2628
  %v6996 = vcombine.high %v2642, %v2642
  %v6997 = vcombine.high %v2656, %v2656
  %v6998 = vcombine.high %v2670, %v2670
  %v6999 = vcombine.high %v2684, %v2684
  %v7000 = vcombine.high %v2698, %v2698
  %v7001 = vcombine.high %v2712, %v2712
  %v7002 = vcombine.high %v2726, %v2726
  %v7003 = vcombine.high %v2740, %v2740
  %v7004 = vcombine.high %v2754, %v2754
  %v7005 = vcombine.high %v2768, %v2768
  %v7006 = vcombine.high %v2782, %v2782
  %v7007 = vcombine.high %v2796, %v2796
  %v7008 = vcombine.high %v2810, %v2810
  %v7009 = vcombine.high %v2824, %v2824
  %v7010 = vcombine.high %v2838, %v2838
  %v7011 = vunpack.i.h.s16 %v4860
  %v7012 = vunpack.i.l.s16 %v6995
  %v7013 = vunpack.i.h.s16 %v4868
  %v7014 = vunpack.i.l.s16 %v6996
  %v7015 = vunpack.i.h.s16 %v4876
  %v7016 = vunpack.i.l.s16 %v6997
  %v7017 = vunpack.i.h.s16 %v4884
  %v7018 = vunpack.i.l.s16 %v6998
  %v7019 = vunpack.i.h.s16 %v4892
  %v7020 = vunpack.i.l.s16 %v6999
  %v7021 = vunpack.i.h.s16 %v4900
  %v7022 = vunpack.i.l.s16 %v7000
  %v7023 = vunpack.i.h.s16 %v4908
  %v7024 = vunpack.i.l.s16 %v7001
  %v7025 = vunpack.i.h.s16 %v4916
  %v7026 = vunpack.i.l.s16 %v7002
  %v7027 = vunpack.i.h.s16 %v4924
  %v7028 = vunpack.i.l.s16 %v7003
  %v7029 = vunpack.i.h.s16 %v4932
  %v7030 = vunpack.i.l.s16 %v7004
  %v7031 = vunpack.i.h.s16 %v4940
  %v7032 = vunpack.i.l.s16 %v7005
  %v7033 = vunpack.i.h.s16 %v4948
  %v7034 = vunpack.i.l.s16 %v7006
  %v7035 = vunpack.i.h.s16 %v4956
  %v7036 = vunpack.i.l.s16 %v7007
  %v7037 = vunpack.i.h.s16 %v4964
  %v7038 = vunpack.i.l.s16 %v7008
  %v7039 = vunpack.i.h.s16 %v4972
  %v7040 = vunpack.i.l.s16 %v7009
  %v7041 = vunpack.i.h.s16 %v4980
  %v7042 = vunpack.i.l.s16 %v7010
  %v7043 = vpack.i.b16 %v7011, %v4982
  %v7044 = vpack.i.b16 %v484, %v7012
  %v7045 = vpack.i.b16 %v7014, %v7013
  %v7046 = vpack.i.b16 %v7015, %v4986
  %v7047 = vpack.i.b16 %v498, %v7016
  %v7048 = vpack.i.b16 %v7018, %v7017
  %v7049 = vpack.i.b16 %v7019, %v4990
  %v7050 = vpack.i.b16 %v512, %v7020
  %v7051 = vpack.i.b16 %v7022, %v7021
  %v7052 = vpack.i.b16 %v7023, %v4994
  %v7053 = vpack.i.b16 %v526, %v7024
  %v7054 = vpack.i.b16 %v7026, %v7025
  %v7055 = vpack.i.b16 %v7027, %v4998
  %v7056 = vpack.i.b16 %v540, %v7028
  %v7057 = vpack.i.b16 %v7030, %v7029
  %v7058 = vpack.i.b16 %v7031, %v5002
  %v7059 = vpack.i.b16 %v554, %v7032
  %v7060 = vpack.i.b16 %v7034, %v7033
  %v7061 = vpack.i.b16 %v7035, %v5006
  %v7062 = vpack.i.b16 %v568, %v7036
  %v7063 = vpack.i.b16 %v7038, %v7037
  %v7064 = vpack.i.b16 %v7039, %v5010
  %v7065 = vpack.i.b16 %v582, %v7040
  %v7066 = vpack.i.b16 %v7042, %v7041
  %v7067 = vcombine.low %v2871, %v5013
  %v7068 = vcombine.low %v7043, %v7044
  %v7069 = vcombine.low %v2873, %v5015
  %v7070 = vcombine.low %v7045, %v2874
  %v7072 = vunpack.c.l.s4 1966171168
  %v7073 = vunpack.c.0.s8 %v7072
  %v7074 = vlaneseq
  %v7075 = vshrl.u32 %v7074, 7
  %v7076 = vsub.s32 %v7073, %v7075
  %v7077 = vrot.slane %v7067, %v7076
  %v7079 = vunpack.c.l.s4 1966171168
  %v7080 = vunpack.c.0.s8 %v7079
  %v7081 = vlaneseq
  %v7082 = vshrl.u32 %v7081, 7
  %v7083 = vsub.s32 %v7080, %v7082
  %v7084 = vrot.slane %v7068, %v7083
  %v7086 = vunpack.c.l.s4 1966171168
  %v7087 = vunpack.c.0.s8 %v7086
  %v7088 = vlaneseq
  %v7089 = vshrl.u32 %v7088, 7
  %v7090 = vsub.s32 %v7087, %v7089
  %v7091 = vrot.slane %v7069, %v7090
  %v7093 = vunpack.c.l.s4 1966171168
  %v7094 = vunpack.c.0.s8 %v7093
  %v7095 = vlaneseq
  %v7096 = vshrl.u32 %v7095, 7
  %v7097 = vsub.s32 %v7094, %v7096
  %v7098 = vrot.slane %v7070, %v7097
  %v7099 = vcombine.low %v7077, %v7084
  %v7100 = vcombine.low %v7091, %v7098
  %v7102 = vunpack.c.l.s4 1966171168
  %v7103 = vunpack.c.0.s8 %v7102
  %v7104 = vlaneseq
  %v7105 = vshrl.u32 %v7104, 7
  %v7106 = vsub.s32 %v7103, %v7105
  %v7107 = vrot.slane %v7099, %v7106
  %v7109 = vunpack.c.l.s4 1966171168
  %v7110 = vunpack.c.0.s8 %v7109
  %v7111 = vlaneseq
  %v7112 = vshrl.u32 %v7111, 7
  %v7113 = vsub.s32 %v7110, %v7112
  %v7114 = vrot.slane %v7100, %v7113
  %v7115 = vcombine.low %v7107, %v7114
  %v7116 = vcombine.low %v5016, %v7046
  %v7117 = vcombine.low %v7047, %v2876
  %v7118 = vcombine.low %v5018, %v7048
  %v7119 = vcombine.low %v2877, %v5019
  %v7121 = vunpack.c.l.s4 1966171168
  %v7122 = vunpack.c.0.s8 %v7121
  %v7123 = vlaneseq
  %v7124 = vshrl.u32 %v7123, 7
  %v7125 = vsub.s32 %v7122, %v7124
  %v7126 = vrot.slane %v7116, %v7125
  %v7128 = vunpack.c.l.s4 1966171168
  %v7129 = vunpack.c.0.s8 %v7128
  %v7130 = vlaneseq
  %v7131 = vshrl.u32 %v7130, 7
  %v7132 = vsub.s32 %v7129, %v7131
  %v7133 = vrot.slane %v7117, %v7132
  %v7135 = vunpack.c.l.s4 1966171168
  %v7136 = vunpack.c.0.s8 %v7135
  %v7137 = vlaneseq
  %v7138 = vshrl.u32 %v7137, 7
  %v7139 = vsub.s32 %v7136, %v7138
  %v7140 = vrot.slane %v7118, %v7139
  %v7142 = vunpack.c.l.s4 1966171168
  %v7143 = vunpack.c.0.s8 %v7142
  %v7144 = vlaneseq
  %v7145 = vshrl.u32 %v7144, 7
  %v7146 = vsub.s32 %v7143, %v7145
  %v7147 = vrot.slane %v7119, %v7146
  %v7148 = vcombine.low %v7126, %v7133
  %v7149 = vcombine.low %v7140, %v7147
  %v7151 = vunpack.c.l.s4 1966171168
  %v7152 = vunpack.c.0.s8 %v7151
  %v7153 = vlaneseq
  %v7154 = vshrl.u32 %v7153, 7
  %v7155 = vsub.s32 %v7152, %v7154
  %v7156 = vrot.slane %v7148, %v7155
  %v7158 = vunpack.c.l.s4 1966171168
  %v7159 = vunpack.c.0.s8 %v7158
  %v7160 = vlaneseq
  %v7161 = vshrl.u32 %v7160, 7
  %v7162 = vsub.s32 %v7159, %v7161
  %v7163 = vrot.slane %v7149, %v7162
  %v7164 = vcombine.low %v7156, %v7163
  %v7165 = vcombine.low %v7049, %v7050
  %v7166 = vcombine.low %v2879, %v5021
  %v7167 = vcombine.low %v7051, %v2880
  %v7168 = vcombine.low %v5022, %v7052
  %v7170 = vunpack.c.l.s4 1966171168
  %v7171 = vunpack.c.0.s8 %v7170
  %v7172 = vlaneseq
  %v7173 = vshrl.u32 %v7172, 7
  %v7174 = vsub.s32 %v7171, %v7173
  %v7175 = vrot.slane %v7165, %v7174
  %v7177 = vunpack.c.l.s4 1966171168
  %v7178 = vunpack.c.0.s8 %v7177
  %v7179 = vlaneseq
  %v7180 = vshrl.u32 %v7179, 7
  %v7181 = vsub.s32 %v7178, %v7180
  %v7182 = vrot.slane %v7166, %v7181
  %v7184 = vunpack.c.l.s4 1966171168
  %v7185 = vunpack.c.0.s8 %v7184
  %v7186 = vlaneseq
  %v7187 = vshrl.u32 %v7186, 7
  %v7188 = vsub.s32 %v7185, %v7187
  %v7189 = vrot.slane %v7167, %v7188
  %v7191 = vunpack.c.l.s4 1966171168
  %v7192 = vunpack.c.0.s8 %v7191
  %v7193 = vlaneseq
  %v7194 = vshrl.u32 %v7193, 7
  %v7195 = vsub.s32 %v7192, %v7194
  %v7196 = vrot.slane %v7168, %v7195
  %v7197 = vcombine.low %v7175, %v7182
  %v7198 = vcombine.low %v7189, %v7196
  %v7200 = vunpack.c.l.s4 1966171168
  %v7201 = vunpack.c.0.s8 %v7200
  %v7202 = vlaneseq
  %v7203 = vshrl.u32 %v7202, 7
  %v7204 = vsub.s32 %v7201, %v7203
  %v7205 = vrot.slane %v7197, %v7204
  %v7207 = vunpack.c.l.s4 1966171168
  %v7208 = vunpack.c.0.s8 %v7207
  %v7209 = vlaneseq
  %v7210 = vshrl.u32 %v7209, 7
  %v7211 = vsub.s32 %v7208, %v7210
  %v7212 = vrot.slane %v7198, %v7211
  %v7213 = vcombine.low %v7205, %v7212
  %v7214 = vcombine.low %v7053, %v2882
  %v7215 = vcombine.low %v5024, %v7054
  %v7216 = vcombine.low %v2883, %v5025
  %v7217 = vcombine.low %v7055, %v7056
  %v7219 = vunpack.c.l.s4 1966171168
  %v7220 = vunpack.c.0.s8 %v7219
  %v7221 = vlaneseq
  %v7222 = vshrl.u32 %v7221, 7
  %v7223 = vsub.s32 %v7220, %v7222
  %v7224 = vrot.slane %v7214, %v7223
  %v7226 = vunpack.c.l.s4 1966171168
  %v7227 = vunpack.c.0.s8 %v7226
  %v7228 = vlaneseq
  %v7229 = vshrl.u32 %v7228, 7
  %v7230 = vsub.s32 %v7227, %v7229
  %v7231 = vrot.slane %v7215, %v7230
  %v7233 = vunpack.c.l.s4 1966171168
  %v7234 = vunpack.c.0.s8 %v7233
  %v7235 = vlaneseq
  %v7236 = vshrl.u32 %v7235, 7
  %v7237 = vsub.s32 %v7234, %v7236
  %v7238 = vrot.slane %v7216, %v7237
  %v7240 = vunpack.c.l.s4 1966171168
  %v7241 = vunpack.c.0.s8 %v7240
  %v7242 = vlaneseq
  %v7243 = vshrl.u32 %v7242, 7
  %v7244 = vsub.s32 %v7241, %v7243
  %v7245 = vrot.slane %v7217, %v7244
  %v7246 = vcombine.low %v7224, %v7231
  %v7247 = vcombine.low %v7238, %v7245
  %v7249 = vunpack.c.l.s4 1966171168
  %v7250 = vunpack.c.0.s8 %v7249
  %v7251 = vlaneseq
  %v7252 = vshrl.u32 %v7251, 7
  %v7253 = vsub.s32 %v7250, %v7252
  %v7254 = vrot.slane %v7246, %v7253
  %v7256 = vunpack.c.l.s4 1966171168
  %v7257 = vunpack.c.0.s8 %v7256
  %v7258 = vlaneseq
  %v7259 = vshrl.u32 %v7258, 7
  %v7260 = vsub.s32 %v7257, %v7259
  %v7261 = vrot.slane %v7247, %v7260
  %v7262 = vcombine.low %v7254, %v7261
  %v7263 = vcombine.low %v2885, %v5027
  %v7264 = vcombine.low %v7057, %v2886
  %v7265 = vcombine.low %v5028, %v7058
  %v7266 = vcombine.low %v7059, %v2888
  %v7268 = vunpack.c.l.s4 1966171168
  %v7269 = vunpack.c.0.s8 %v7268
  %v7270 = vlaneseq
  %v7271 = vshrl.u32 %v7270, 7
  %v7272 = vsub.s32 %v7269, %v7271
  %v7273 = vrot.slane %v7263, %v7272
  %v7275 = vunpack.c.l.s4 1966171168
  %v7276 = vunpack.c.0.s8 %v7275
  %v7277 = vlaneseq
  %v7278 = vshrl.u32 %v7277, 7
  %v7279 = vsub.s32 %v7276, %v7278
  %v7280 = vrot.slane %v7264, %v7279
  %v7282 = vunpack.c.l.s4 1966171168
  %v7283 = vunpack.c.0.s8 %v7282
  %v7284 = vlaneseq
  %v7285 = vshrl.u32 %v7284, 7
  %v7286 = vsub.s32 %v7283, %v7285
  %v7287 = vrot.slane %v7265, %v7286
  %v7289 = vunpack.c.l.s4 1966171168
  %v7290 = vunpack.c.0.s8 %v7289
  %v7291 = vlaneseq
  %v7292 = vshrl.u32 %v7291, 7
  %v7293 = vsub.s32 %v7290, %v7292
  %v7294 = vrot.slane %v7266, %v7293
  %v7295 = vcombine.low %v7273, %v7280
  %v7296 = vcombine.low %v7287, %v7294
  %v7298 = vunpack.c.l.s4 1966171168
  %v7299 = vunpack.c.0.s8 %v7298
  %v7300 = vlaneseq
  %v7301 = vshrl.u32 %v7300, 7
  %v7302 = vsub.s32 %v7299, %v7301
  %v7303 = vrot.slane %v7295, %v7302
  %v7305 = vunpack.c.l.s4 1966171168
  %v7306 = vunpack.c.0.s8 %v7305
  %v7307 = vlaneseq
  %v7308 = vshrl.u32 %v7307, 7
  %v7309 = vsub.s32 %v7306, %v7308
  %v7310 = vrot.slane %v7296, %v7309
  %v7311 = vcombine.low %v7303, %v7310
  %v7312 = vcombine.low %v5030, %v7060
  %v7313 = vcombine.low %v2889, %v5031
  %v7314 = vcombine.low %v7061, %v7062
  %v7315 = vcombine.low %v2891, %v5033
  %v7317 = vunpack.c.l.s4 1966171168
  %v7318 = vunpack.c.0.s8 %v7317
  %v7319 = vlaneseq
  %v7320 = vshrl.u32 %v7319, 7
  %v7321 = vsub.s32 %v7318, %v7320
  %v7322 = vrot.slane %v7312, %v7321
  %v7324 = vunpack.c.l.s4 1966171168
  %v7325 = vunpack.c.0.s8 %v7324
  %v7326 = vlaneseq
  %v7327 = vshrl.u32 %v7326, 7
  %v7328 = vsub.s32 %v7325, %v7327
  %v7329 = vrot.slane %v7313, %v7328
  %v7331 = vunpack.c.l.s4 1966171168
  %v7332 = vunpack.c.0.s8 %v7331
  %v7333 = vlaneseq
  %v7334 = vshrl.u32 %v7333, 7
  %v7335 = vsub.s32 %v7332, %v7334
  %v7336 = vrot.slane %v7314, %v7335
  %v7338 = vunpack.c.l.s4 1966171168
  %v7339 = vunpack.c.0.s8 %v7338
  %v7340 = vlaneseq
  %v7341 = vshrl.u32 %v7340, 7
  %v7342 = vsub.s32 %v7339, %v7341
  %v7343 = vrot.slane %v7315, %v7342
  %v7344 = vcombine.low %v7322, %v7329
  %v7345 = vcombine.low %v7336, %v7343
  %v7347 = vunpack.c.l.s4 1966171168
  %v7348 = vunpack.c.0.s8 %v7347
  %v7349 = vlaneseq
  %v7350 = vshrl.u32 %v7349, 7
  %v7351 = vsub.s32 %v7348, %v7350
  %v7352 = vrot.slane %v7344, %v7351
  %v7354 = vunpack.c.l.s4 1966171168
  %v7355 = vunpack.c.0.s8 %v7354
  %v7356 = vlaneseq
  %v7357 = vshrl.u32 %v7356, 7
  %v7358 = vsub.s32 %v7355, %v7357
  %v7359 = vrot.slane %v7345, %v7358
  %v7360 = vcombine.low %v7352, %v7359
  %v7361 = vcombine.low %v7063, %v2892
  %v7362 = vcombine.low %v5034, %v7064
  %v7363 = vcombine.low %v7065, %v2894
  %v7364 = vcombine.low %v5036, %v7066
  %v7366 = vunpack.c.l.s4 1966171168
  %v7367 = vunpack.c.0.s8 %v7366
  %v7368 = vlaneseq
  %v7369 = vshrl.u32 %v7368, 7
  %v7370 = vsub.s32 %v7367, %v7369
  %v7371 = vrot.slane %v7361, %v7370
  %v7373 = vunpack.c.l.s4 1966171168
  %v7374 = vunpack.c.0.s8 %v7373
  %v7375 = vlaneseq
  %v7376 = vshrl.u32 %v7375, 7
  %v7377 = vsub.s32 %v7374, %v7376
  %v7378 = vrot.slane %v7362, %v7377
  %v7380 = vunpack.c.l.s4 1966171168
  %v7381 = vunpack.c.0.s8 %v7380
  %v7382 = vlaneseq
  %v7383 = vshrl.u32 %v7382, 7
  %v7384 = vsub.s32 %v7381, %v7383
  %v7385 = vrot.slane %v7363, %v7384
  %v7387 = vunpack.c.l.s4 1966171168
  %v7388 = vunpack.c.0.s8 %v7387
  %v7389 = vlaneseq
  %v7390 = vshrl.u32 %v7389, 7
  %v7391 = vsub.s32 %v7388, %v7390
  %v7392 = vrot.slane %v7364, %v7391
  %v7393 = vcombine.low %v7371, %v7378
  %v7394 = vcombine.low %v7385, %v7392
  %v7396 = vunpack.c.l.s4 1966171168
  %v7397 = vunpack.c.0.s8 %v7396
  %v7398 = vlaneseq
  %v7399 = vshrl.u32 %v7398, 7
  %v7400 = vsub.s32 %v7397, %v7399
  %v7401 = vrot.slane %v7393, %v7400
  %v7403 = vunpack.c.l.s4 1966171168
  %v7404 = vunpack.c.0.s8 %v7403
  %v7405 = vlaneseq
  %v7406 = vshrl.u32 %v7405, 7
  %v7407 = vsub.s32 %v7404, %v7406
  %v7408 = vrot.slane %v7394, %v7407
  %v7409 = vcombine.low %v7401, %v7408
  %v7411 = vsel %vm982, %v7115, 0
  %v7414 = vsel %vm982, %v7164, 0
  %v7417 = vsel %vm982, %v7213, 0
  %v7420 = vsel %vm982, %v7262, 0
  %v7423 = vsel %vm982, %v7311, 0
  %v7426 = vsel %vm982, %v7360, 0
  %v7429 = vsel %vm982, %v7409, 0
  %v7432 = vsel %vm1004, %v6994, 0
  %7434 = vmatprep.subr.bf16.mxu0 0
  %7435 = vmatpush1.bf16.msra.mxu0 %v7432
  %7436 = vmatprep.subr.bf16.mxu0 0
  %7437 = vmatpush1.bf16.msra.mxu0 0
  %7438 = vmatprep.subr.bf16.mxu0 0
  %7439 = vmatpush1.bf16.msra.mxu0 0
  %7440 = vmatprep.subr.bf16.mxu0 0
  %7441 = vmatpush1.bf16.msra.mxu0 0
  %7442 = vmatprep.subr.bf16.mxu0 0
  %7443 = vmatpush1.bf16.msra.mxu0 0
  %7444 = vmatprep.subr.bf16.mxu0 0
  %7445 = vmatpush1.bf16.msra.mxu0 0
  %7446 = vmatprep.subr.bf16.mxu0 0
  %7447 = vmatpush1.bf16.msra.mxu0 0
  %7448 = vmatprep.subr.bf16.mxu0 0
  %7449 = vmatpush1.bf16.msra.mxu0 0
  %7450 = vmatprep.subr.bf16.mxu0 0
  %7451 = vmatpush1.bf16.msra.mxu0 0
  %7452 = vmatprep.subr.bf16.mxu0 0
  %7453 = vmatpush1.bf16.msra.mxu0 0
  %7454 = vmatprep.subr.bf16.mxu0 0
  %7455 = vmatpush1.bf16.msra.mxu0 0
  %7456 = vmatprep.subr.bf16.mxu0 0
  %7457 = vmatpush1.bf16.msra.mxu0 0
  %7458 = vmatprep.subr.bf16.mxu0 0
  %7459 = vmatpush1.bf16.msra.mxu0 0
  %7460 = vmatprep.subr.bf16.mxu0 0
  %7461 = vmatpush1.bf16.msra.mxu0 0
  %7462 = vmatprep.subr.bf16.mxu0 0
  %7463 = vmatpush1.bf16.msra.mxu0 0
  %7464 = vmatprep.subr.bf16.mxu0 0
  %7465 = vmatpush1.bf16.msra.mxu0 0
  %7466 = vmatprep.mubr.bf16.mxu0 0
  %7467 = vmatmul.mubr.bf16.gmra.mrb[0].mxu0 %v7411
  %v7468 = vpop.f32.mrb[0].mxu0
  %v7469 = vadd.f32 0.0, %v7468
  %v7470 = vpop.f32.mrb[0].mxu0
  %v7471 = vpop.f32.mrb[0].mxu0
  %v7472 = vadd.f32 0.0, %v7471
  %v7473 = vpop.f32.mrb[0].mxu0
  %7474 = vmatprep.mubr.bf16.mxu0 0
  %7475 = vmatmul.mubr.bf16.gmra.mrb[0].mxu0 %v7414
  %v7476 = vpop.f32.mrb[0].mxu0
  %v7477 = vadd.f32 0.0, %v7476
  %v7478 = vpop.f32.mrb[0].mxu0
  %v7479 = vpop.f32.mrb[0].mxu0
  %v7480 = vadd.f32 0.0, %v7479
  %v7481 = vpop.f32.mrb[0].mxu0
  %7482 = vmatprep.mubr.bf16.mxu0 0
  %7483 = vmatmul.mubr.bf16.gmra.mrb[0].mxu0 %v7417
  %v7484 = vpop.f32.mrb[0].mxu0
  %v7485 = vadd.f32 0.0, %v7484
  %v7486 = vpop.f32.mrb[0].mxu0
  %v7487 = vpop.f32.mrb[0].mxu0
  %v7488 = vadd.f32 0.0, %v7487
  %v7489 = vpop.f32.mrb[0].mxu0
  %7490 = vmatprep.mubr.bf16.mxu0 0
  %7491 = vmatmul.mubr.bf16.gmra.mrb[0].mxu0 %v7420
  %v7492 = vpop.f32.mrb[0].mxu0
  %v7493 = vadd.f32 0.0, %v7492
  %v7494 = vpop.f32.mrb[0].mxu0
  %v7495 = vpop.f32.mrb[0].mxu0
  %v7496 = vadd.f32 0.0, %v7495
  %v7497 = vpop.f32.mrb[0].mxu0
  %7498 = vmatprep.mubr.bf16.mxu0 0
  %7499 = vmatmul.mubr.bf16.gmra.mrb[0].mxu0 %v7423
  %v7500 = vpop.f32.mrb[0].mxu0
  %v7501 = vadd.f32 0.0, %v7500
  %v7502 = vpop.f32.mrb[0].mxu0
  %v7503 = vpop.f32.mrb[0].mxu0
  %v7504 = vadd.f32 0.0, %v7503
  %v7505 = vpop.f32.mrb[0].mxu0
  %7506 = vmatprep.mubr.bf16.mxu0 0
  %7507 = vmatmul.mubr.bf16.gmra.mrb[0].mxu0 %v7426
  %v7508 = vpop.f32.mrb[0].mxu0
  %v7509 = vadd.f32 0.0, %v7508
  %v7510 = vpop.f32.mrb[0].mxu0
  %v7511 = vpop.f32.mrb[0].mxu0
  %v7512 = vadd.f32 0.0, %v7511
  %v7513 = vpop.f32.mrb[0].mxu0
  %7514 = vmatprep.mubr.bf16.mxu0 0
  %7515 = vmatmul.mubr.bf16.gmra.mrb[0].mxu0 %v7429
  %v7516 = vpop.f32.mrb[0].mxu0
  %v7517 = vadd.f32 0.0, %v7516
  %v7518 = vpop.f32.mrb[0].mxu0
  %v7519 = vpop.f32.mrb[0].mxu0
  %v7520 = vadd.f32 0.0, %v7519
  %v7521 = vpop.f32.mrb[0].mxu0
  %7522 = vdwg.mxu0
  %v7537 = vcombine.high %v7469, %v7469
  %v7539 = vunpack.c.l.s4 1966171168
  %v7540 = vunpack.c.0.s8 %v7539
  %v7541 = vlaneseq
  %v7542 = vshrl.u32 %v7541, 7
  %v7543 = vsub.s32 %v7540, %v7542
  %v7544 = vrot.slane %v7469, %v7543
  %v7546 = vunpack.c.l.s4 1966171168
  %v7547 = vunpack.c.0.s8 %v7546
  %v7548 = vlaneseq
  %v7549 = vshrl.u32 %v7548, 7
  %v7550 = vsub.s32 %v7547, %v7549
  %v7551 = vrot.slane %v7537, %v7550
  %v7552 = vcombine.high %v7544, %v7544
  %v7553 = vcombine.high %v7551, %v7551
  %v7555 = vunpack.c.l.s4 1966171168
  %v7556 = vunpack.c.0.s8 %v7555
  %v7557 = vlaneseq
  %v7558 = vshrl.u32 %v7557, 7
  %v7559 = vsub.s32 %v7556, %v7558
  %v7560 = vrot.slane %v7544, %v7559
  %v7562 = vunpack.c.l.s4 1966171168
  %v7563 = vunpack.c.0.s8 %v7562
  %v7564 = vlaneseq
  %v7565 = vshrl.u32 %v7564, 7
  %v7566 = vsub.s32 %v7563, %v7565
  %v7567 = vrot.slane %v7551, %v7566
  %v7569 = vunpack.c.l.s4 1966171168
  %v7570 = vunpack.c.0.s8 %v7569
  %v7571 = vlaneseq
  %v7572 = vshrl.u32 %v7571, 7
  %v7573 = vsub.s32 %v7570, %v7572
  %v7574 = vrot.slane %v7552, %v7573
  %v7576 = vunpack.c.l.s4 1966171168
  %v7577 = vunpack.c.0.s8 %v7576
  %v7578 = vlaneseq
  %v7579 = vshrl.u32 %v7578, 7
  %v7580 = vsub.s32 %v7577, %v7579
  %v7581 = vrot.slane %v7553, %v7580
  %v7582 = vcombine.high %v7560, %v7560
  %v7583 = vcombine.high %v7567, %v7567
  %v7584 = vcombine.high %v7574, %v7574
  %v7585 = vcombine.high %v7581, %v7581
  %v7586 = vcombine.high %v7472, %v7472
  %v7588 = vunpack.c.l.s4 1966171168
  %v7589 = vunpack.c.0.s8 %v7588
  %v7590 = vlaneseq
  %v7591 = vshrl.u32 %v7590, 7
  %v7592 = vsub.s32 %v7589, %v7591
  %v7593 = vrot.slane %v7472, %v7592
  %v7595 = vunpack.c.l.s4 1966171168
  %v7596 = vunpack.c.0.s8 %v7595
  %v7597 = vlaneseq
  %v7598 = vshrl.u32 %v7597, 7
  %v7599 = vsub.s32 %v7596, %v7598
  %v7600 = vrot.slane %v7586, %v7599
  %v7601 = vcombine.high %v7593, %v7593
  %v7602 = vcombine.high %v7600, %v7600
  %v7604 = vunpack.c.l.s4 1966171168
  %v7605 = vunpack.c.0.s8 %v7604
  %v7606 = vlaneseq
  %v7607 = vshrl.u32 %v7606, 7
  %v7608 = vsub.s32 %v7605, %v7607
  %v7609 = vrot.slane %v7593, %v7608
  %v7611 = vunpack.c.l.s4 1966171168
  %v7612 = vunpack.c.0.s8 %v7611
  %v7613 = vlaneseq
  %v7614 = vshrl.u32 %v7613, 7
  %v7615 = vsub.s32 %v7612, %v7614
  %v7616 = vrot.slane %v7600, %v7615
  %v7618 = vunpack.c.l.s4 1966171168
  %v7619 = vunpack.c.0.s8 %v7618
  %v7620 = vlaneseq
  %v7621 = vshrl.u32 %v7620, 7
  %v7622 = vsub.s32 %v7619, %v7621
  %v7623 = vrot.slane %v7601, %v7622
  %v7625 = vunpack.c.l.s4 1966171168
  %v7626 = vunpack.c.0.s8 %v7625
  %v7627 = vlaneseq
  %v7628 = vshrl.u32 %v7627, 7
  %v7629 = vsub.s32 %v7626, %v7628
  %v7630 = vrot.slane %v7602, %v7629
  %v7631 = vcombine.high %v7609, %v7609
  %v7632 = vcombine.high %v7616, %v7616
  %v7633 = vcombine.high %v7623, %v7623
  %v7634 = vcombine.high %v7630, %v7630
  %v7635 = vcombine.high %v7477, %v7477
  %v7637 = vunpack.c.l.s4 1966171168
  %v7638 = vunpack.c.0.s8 %v7637
  %v7639 = vlaneseq
  %v7640 = vshrl.u32 %v7639, 7
  %v7641 = vsub.s32 %v7638, %v7640
  %v7642 = vrot.slane %v7477, %v7641
  %v7644 = vunpack.c.l.s4 1966171168
  %v7645 = vunpack.c.0.s8 %v7644
  %v7646 = vlaneseq
  %v7647 = vshrl.u32 %v7646, 7
  %v7648 = vsub.s32 %v7645, %v7647
  %v7649 = vrot.slane %v7635, %v7648
  %v7650 = vcombine.high %v7642, %v7642
  %v7651 = vcombine.high %v7649, %v7649
  %v7653 = vunpack.c.l.s4 1966171168
  %v7654 = vunpack.c.0.s8 %v7653
  %v7655 = vlaneseq
  %v7656 = vshrl.u32 %v7655, 7
  %v7657 = vsub.s32 %v7654, %v7656
  %v7658 = vrot.slane %v7642, %v7657
  %v7660 = vunpack.c.l.s4 1966171168
  %v7661 = vunpack.c.0.s8 %v7660
  %v7662 = vlaneseq
  %v7663 = vshrl.u32 %v7662, 7
  %v7664 = vsub.s32 %v7661, %v7663
  %v7665 = vrot.slane %v7649, %v7664
  %v7667 = vunpack.c.l.s4 1966171168
  %v7668 = vunpack.c.0.s8 %v7667
  %v7669 = vlaneseq
  %v7670 = vshrl.u32 %v7669, 7
  %v7671 = vsub.s32 %v7668, %v7670
  %v7672 = vrot.slane %v7650, %v7671
  %v7674 = vunpack.c.l.s4 1966171168
  %v7675 = vunpack.c.0.s8 %v7674
  %v7676 = vlaneseq
  %v7677 = vshrl.u32 %v7676, 7
  %v7678 = vsub.s32 %v7675, %v7677
  %v7679 = vrot.slane %v7651, %v7678
  %v7680 = vcombine.high %v7658, %v7658
  %v7681 = vcombine.high %v7665, %v7665
  %v7682 = vcombine.high %v7672, %v7672
  %v7683 = vcombine.high %v7679, %v7679
  %v7684 = vcombine.high %v7480, %v7480
  %v7686 = vunpack.c.l.s4 1966171168
  %v7687 = vunpack.c.0.s8 %v7686
  %v7688 = vlaneseq
  %v7689 = vshrl.u32 %v7688, 7
  %v7690 = vsub.s32 %v7687, %v7689
  %v7691 = vrot.slane %v7480, %v7690
  %v7693 = vunpack.c.l.s4 1966171168
  %v7694 = vunpack.c.0.s8 %v7693
  %v7695 = vlaneseq
  %v7696 = vshrl.u32 %v7695, 7
  %v7697 = vsub.s32 %v7694, %v7696
  %v7698 = vrot.slane %v7684, %v7697
  %v7699 = vcombine.high %v7691, %v7691
  %v7700 = vcombine.high %v7698, %v7698
  %v7702 = vunpack.c.l.s4 1966171168
  %v7703 = vunpack.c.0.s8 %v7702
  %v7704 = vlaneseq
  %v7705 = vshrl.u32 %v7704, 7
  %v7706 = vsub.s32 %v7703, %v7705
  %v7707 = vrot.slane %v7691, %v7706
  %v7709 = vunpack.c.l.s4 1966171168
  %v7710 = vunpack.c.0.s8 %v7709
  %v7711 = vlaneseq
  %v7712 = vshrl.u32 %v7711, 7
  %v7713 = vsub.s32 %v7710, %v7712
  %v7714 = vrot.slane %v7698, %v7713
  %v7716 = vunpack.c.l.s4 1966171168
  %v7717 = vunpack.c.0.s8 %v7716
  %v7718 = vlaneseq
  %v7719 = vshrl.u32 %v7718, 7
  %v7720 = vsub.s32 %v7717, %v7719
  %v7721 = vrot.slane %v7699, %v7720
  %v7723 = vunpack.c.l.s4 1966171168
  %v7724 = vunpack.c.0.s8 %v7723
  %v7725 = vlaneseq
  %v7726 = vshrl.u32 %v7725, 7
  %v7727 = vsub.s32 %v7724, %v7726
  %v7728 = vrot.slane %v7700, %v7727
  %v7729 = vcombine.high %v7707, %v7707
  %v7730 = vcombine.high %v7714, %v7714
  %v7731 = vcombine.high %v7721, %v7721
  %v7732 = vcombine.high %v7728, %v7728
  %v7733 = vcombine.high %v7485, %v7485
  %v7735 = vunpack.c.l.s4 1966171168
  %v7736 = vunpack.c.0.s8 %v7735
  %v7737 = vlaneseq
  %v7738 = vshrl.u32 %v7737, 7
  %v7739 = vsub.s32 %v7736, %v7738
  %v7740 = vrot.slane %v7485, %v7739
  %v7742 = vunpack.c.l.s4 1966171168
  %v7743 = vunpack.c.0.s8 %v7742
  %v7744 = vlaneseq
  %v7745 = vshrl.u32 %v7744, 7
  %v7746 = vsub.s32 %v7743, %v7745
  %v7747 = vrot.slane %v7733, %v7746
  %v7748 = vcombine.high %v7740, %v7740
  %v7749 = vcombine.high %v7747, %v7747
  %v7751 = vunpack.c.l.s4 1966171168
  %v7752 = vunpack.c.0.s8 %v7751
  %v7753 = vlaneseq
  %v7754 = vshrl.u32 %v7753, 7
  %v7755 = vsub.s32 %v7752, %v7754
  %v7756 = vrot.slane %v7740, %v7755
  %v7758 = vunpack.c.l.s4 1966171168
  %v7759 = vunpack.c.0.s8 %v7758
  %v7760 = vlaneseq
  %v7761 = vshrl.u32 %v7760, 7
  %v7762 = vsub.s32 %v7759, %v7761
  %v7763 = vrot.slane %v7747, %v7762
  %v7765 = vunpack.c.l.s4 1966171168
  %v7766 = vunpack.c.0.s8 %v7765
  %v7767 = vlaneseq
  %v7768 = vshrl.u32 %v7767, 7
  %v7769 = vsub.s32 %v7766, %v7768
  %v7770 = vrot.slane %v7748, %v7769
  %v7772 = vunpack.c.l.s4 1966171168
  %v7773 = vunpack.c.0.s8 %v7772
  %v7774 = vlaneseq
  %v7775 = vshrl.u32 %v7774, 7
  %v7776 = vsub.s32 %v7773, %v7775
  %v7777 = vrot.slane %v7749, %v7776
  %v7778 = vcombine.high %v7756, %v7756
  %v7779 = vcombine.high %v7763, %v7763
  %v7780 = vcombine.high %v7770, %v7770
  %v7781 = vcombine.high %v7777, %v7777
  %v7782 = vcombine.high %v7488, %v7488
  %v7784 = vunpack.c.l.s4 1966171168
  %v7785 = vunpack.c.0.s8 %v7784
  %v7786 = vlaneseq
  %v7787 = vshrl.u32 %v7786, 7
  %v7788 = vsub.s32 %v7785, %v7787
  %v7789 = vrot.slane %v7488, %v7788
  %v7791 = vunpack.c.l.s4 1966171168
  %v7792 = vunpack.c.0.s8 %v7791
  %v7793 = vlaneseq
  %v7794 = vshrl.u32 %v7793, 7
  %v7795 = vsub.s32 %v7792, %v7794
  %v7796 = vrot.slane %v7782, %v7795
  %v7797 = vcombine.high %v7789, %v7789
  %v7798 = vcombine.high %v7796, %v7796
  %v7800 = vunpack.c.l.s4 1966171168
  %v7801 = vunpack.c.0.s8 %v7800
  %v7802 = vlaneseq
  %v7803 = vshrl.u32 %v7802, 7
  %v7804 = vsub.s32 %v7801, %v7803
  %v7805 = vrot.slane %v7789, %v7804
  %v7807 = vunpack.c.l.s4 1966171168
  %v7808 = vunpack.c.0.s8 %v7807
  %v7809 = vlaneseq
  %v7810 = vshrl.u32 %v7809, 7
  %v7811 = vsub.s32 %v7808, %v7810
  %v7812 = vrot.slane %v7796, %v7811
  %v7814 = vunpack.c.l.s4 1966171168
  %v7815 = vunpack.c.0.s8 %v7814
  %v7816 = vlaneseq
  %v7817 = vshrl.u32 %v7816, 7
  %v7818 = vsub.s32 %v7815, %v7817
  %v7819 = vrot.slane %v7797, %v7818
  %v7821 = vunpack.c.l.s4 1966171168
  %v7822 = vunpack.c.0.s8 %v7821
  %v7823 = vlaneseq
  %v7824 = vshrl.u32 %v7823, 7
  %v7825 = vsub.s32 %v7822, %v7824
  %v7826 = vrot.slane %v7798, %v7825
  %v7827 = vcombine.high %v7805, %v7805
  %v7828 = vcombine.high %v7812, %v7812
  %v7829 = vcombine.high %v7819, %v7819
  %v7830 = vcombine.high %v7826, %v7826
  %v7831 = vcombine.high %v7493, %v7493
  %v7833 = vunpack.c.l.s4 1966171168
  %v7834 = vunpack.c.0.s8 %v7833
  %v7835 = vlaneseq
  %v7836 = vshrl.u32 %v7835, 7
  %v7837 = vsub.s32 %v7834, %v7836
  %v7838 = vrot.slane %v7493, %v7837
  %v7840 = vunpack.c.l.s4 1966171168
  %v7841 = vunpack.c.0.s8 %v7840
  %v7842 = vlaneseq
  %v7843 = vshrl.u32 %v7842, 7
  %v7844 = vsub.s32 %v7841, %v7843
  %v7845 = vrot.slane %v7831, %v7844
  %v7846 = vcombine.high %v7838, %v7838
  %v7847 = vcombine.high %v7845, %v7845
  %v7849 = vunpack.c.l.s4 1966171168
  %v7850 = vunpack.c.0.s8 %v7849
  %v7851 = vlaneseq
  %v7852 = vshrl.u32 %v7851, 7
  %v7853 = vsub.s32 %v7850, %v7852
  %v7854 = vrot.slane %v7838, %v7853
  %v7856 = vunpack.c.l.s4 1966171168
  %v7857 = vunpack.c.0.s8 %v7856
  %v7858 = vlaneseq
  %v7859 = vshrl.u32 %v7858, 7
  %v7860 = vsub.s32 %v7857, %v7859
  %v7861 = vrot.slane %v7845, %v7860
  %v7863 = vunpack.c.l.s4 1966171168
  %v7864 = vunpack.c.0.s8 %v7863
  %v7865 = vlaneseq
  %v7866 = vshrl.u32 %v7865, 7
  %v7867 = vsub.s32 %v7864, %v7866
  %v7868 = vrot.slane %v7846, %v7867
  %v7870 = vunpack.c.l.s4 1966171168
  %v7871 = vunpack.c.0.s8 %v7870
  %v7872 = vlaneseq
  %v7873 = vshrl.u32 %v7872, 7
  %v7874 = vsub.s32 %v7871, %v7873
  %v7875 = vrot.slane %v7847, %v7874
  %v7876 = vcombine.high %v7854, %v7854
  %v7877 = vcombine.high %v7861, %v7861
  %v7878 = vcombine.high %v7868, %v7868
  %v7879 = vcombine.high %v7875, %v7875
  %v7880 = vcombine.high %v7496, %v7496
  %v7882 = vunpack.c.l.s4 1966171168
  %v7883 = vunpack.c.0.s8 %v7882
  %v7884 = vlaneseq
  %v7885 = vshrl.u32 %v7884, 7
  %v7886 = vsub.s32 %v7883, %v7885
  %v7887 = vrot.slane %v7496, %v7886
  %v7889 = vunpack.c.l.s4 1966171168
  %v7890 = vunpack.c.0.s8 %v7889
  %v7891 = vlaneseq
  %v7892 = vshrl.u32 %v7891, 7
  %v7893 = vsub.s32 %v7890, %v7892
  %v7894 = vrot.slane %v7880, %v7893
  %v7895 = vcombine.high %v7887, %v7887
  %v7896 = vcombine.high %v7894, %v7894
  %v7898 = vunpack.c.l.s4 1966171168
  %v7899 = vunpack.c.0.s8 %v7898
  %v7900 = vlaneseq
  %v7901 = vshrl.u32 %v7900, 7
  %v7902 = vsub.s32 %v7899, %v7901
  %v7903 = vrot.slane %v7887, %v7902
  %v7905 = vunpack.c.l.s4 1966171168
  %v7906 = vunpack.c.0.s8 %v7905
  %v7907 = vlaneseq
  %v7908 = vshrl.u32 %v7907, 7
  %v7909 = vsub.s32 %v7906, %v7908
  %v7910 = vrot.slane %v7894, %v7909
  %v7912 = vunpack.c.l.s4 1966171168
  %v7913 = vunpack.c.0.s8 %v7912
  %v7914 = vlaneseq
  %v7915 = vshrl.u32 %v7914, 7
  %v7916 = vsub.s32 %v7913, %v7915
  %v7917 = vrot.slane %v7895, %v7916
  %v7919 = vunpack.c.l.s4 1966171168
  %v7920 = vunpack.c.0.s8 %v7919
  %v7921 = vlaneseq
  %v7922 = vshrl.u32 %v7921, 7
  %v7923 = vsub.s32 %v7920, %v7922
  %v7924 = vrot.slane %v7896, %v7923
  %v7925 = vcombine.high %v7903, %v7903
  %v7926 = vcombine.high %v7910, %v7910
  %v7927 = vcombine.high %v7917, %v7917
  %v7928 = vcombine.high %v7924, %v7924
  %v7929 = vcombine.high %v7501, %v7501
  %v7931 = vunpack.c.l.s4 1966171168
  %v7932 = vunpack.c.0.s8 %v7931
  %v7933 = vlaneseq
  %v7934 = vshrl.u32 %v7933, 7
  %v7935 = vsub.s32 %v7932, %v7934
  %v7936 = vrot.slane %v7501, %v7935
  %v7938 = vunpack.c.l.s4 1966171168
  %v7939 = vunpack.c.0.s8 %v7938
  %v7940 = vlaneseq
  %v7941 = vshrl.u32 %v7940, 7
  %v7942 = vsub.s32 %v7939, %v7941
  %v7943 = vrot.slane %v7929, %v7942
  %v7944 = vcombine.high %v7936, %v7936
  %v7945 = vcombine.high %v7943, %v7943
  %v7947 = vunpack.c.l.s4 1966171168
  %v7948 = vunpack.c.0.s8 %v7947
  %v7949 = vlaneseq
  %v7950 = vshrl.u32 %v7949, 7
  %v7951 = vsub.s32 %v7948, %v7950
  %v7952 = vrot.slane %v7936, %v7951
  %v7954 = vunpack.c.l.s4 1966171168
  %v7955 = vunpack.c.0.s8 %v7954
  %v7956 = vlaneseq
  %v7957 = vshrl.u32 %v7956, 7
  %v7958 = vsub.s32 %v7955, %v7957
  %v7959 = vrot.slane %v7943, %v7958
  %v7961 = vunpack.c.l.s4 1966171168
  %v7962 = vunpack.c.0.s8 %v7961
  %v7963 = vlaneseq
  %v7964 = vshrl.u32 %v7963, 7
  %v7965 = vsub.s32 %v7962, %v7964
  %v7966 = vrot.slane %v7944, %v7965
  %v7968 = vunpack.c.l.s4 1966171168
  %v7969 = vunpack.c.0.s8 %v7968
  %v7970 = vlaneseq
  %v7971 = vshrl.u32 %v7970, 7
  %v7972 = vsub.s32 %v7969, %v7971
  %v7973 = vrot.slane %v7945, %v7972
  %v7974 = vcombine.high %v7952, %v7952
  %v7975 = vcombine.high %v7959, %v7959
  %v7976 = vcombine.high %v7966, %v7966
  %v7977 = vcombine.high %v7973, %v7973
  %v7978 = vcombine.high %v7504, %v7504
  %v7980 = vunpack.c.l.s4 1966171168
  %v7981 = vunpack.c.0.s8 %v7980
  %v7982 = vlaneseq
  %v7983 = vshrl.u32 %v7982, 7
  %v7984 = vsub.s32 %v7981, %v7983
  %v7985 = vrot.slane %v7504, %v7984
  %v7987 = vunpack.c.l.s4 1966171168
  %v7988 = vunpack.c.0.s8 %v7987
  %v7989 = vlaneseq
  %v7990 = vshrl.u32 %v7989, 7
  %v7991 = vsub.s32 %v7988, %v7990
  %v7992 = vrot.slane %v7978, %v7991
  %v7993 = vcombine.high %v7985, %v7985
  %v7994 = vcombine.high %v7992, %v7992
  %v7996 = vunpack.c.l.s4 1966171168
  %v7997 = vunpack.c.0.s8 %v7996
  %v7998 = vlaneseq
  %v7999 = vshrl.u32 %v7998, 7
  %v8000 = vsub.s32 %v7997, %v7999
  %v8001 = vrot.slane %v7985, %v8000
  %v8003 = vunpack.c.l.s4 1966171168
  %v8004 = vunpack.c.0.s8 %v8003
  %v8005 = vlaneseq
  %v8006 = vshrl.u32 %v8005, 7
  %v8007 = vsub.s32 %v8004, %v8006
  %v8008 = vrot.slane %v7992, %v8007
  %v8010 = vunpack.c.l.s4 1966171168
  %v8011 = vunpack.c.0.s8 %v8010
  %v8012 = vlaneseq
  %v8013 = vshrl.u32 %v8012, 7
  %v8014 = vsub.s32 %v8011, %v8013
  %v8015 = vrot.slane %v7993, %v8014
  %v8017 = vunpack.c.l.s4 1966171168
  %v8018 = vunpack.c.0.s8 %v8017
  %v8019 = vlaneseq
  %v8020 = vshrl.u32 %v8019, 7
  %v8021 = vsub.s32 %v8018, %v8020
  %v8022 = vrot.slane %v7994, %v8021
  %v8023 = vcombine.high %v8001, %v8001
  %v8024 = vcombine.high %v8008, %v8008
  %v8025 = vcombine.high %v8015, %v8015
  %v8026 = vcombine.high %v8022, %v8022
  %v8027 = vcombine.high %v7509, %v7509
  %v8029 = vunpack.c.l.s4 1966171168
  %v8030 = vunpack.c.0.s8 %v8029
  %v8031 = vlaneseq
  %v8032 = vshrl.u32 %v8031, 7
  %v8033 = vsub.s32 %v8030, %v8032
  %v8034 = vrot.slane %v7509, %v8033
  %v8036 = vunpack.c.l.s4 1966171168
  %v8037 = vunpack.c.0.s8 %v8036
  %v8038 = vlaneseq
  %v8039 = vshrl.u32 %v8038, 7
  %v8040 = vsub.s32 %v8037, %v8039
  %v8041 = vrot.slane %v8027, %v8040
  %v8042 = vcombine.high %v8034, %v8034
  %v8043 = vcombine.high %v8041, %v8041
  %v8045 = vunpack.c.l.s4 1966171168
  %v8046 = vunpack.c.0.s8 %v8045
  %v8047 = vlaneseq
  %v8048 = vshrl.u32 %v8047, 7
  %v8049 = vsub.s32 %v8046, %v8048
  %v8050 = vrot.slane %v8034, %v8049
  %v8052 = vunpack.c.l.s4 1966171168
  %v8053 = vunpack.c.0.s8 %v8052
  %v8054 = vlaneseq
  %v8055 = vshrl.u32 %v8054, 7
  %v8056 = vsub.s32 %v8053, %v8055
  %v8057 = vrot.slane %v8041, %v8056
  %v8059 = vunpack.c.l.s4 1966171168
  %v8060 = vunpack.c.0.s8 %v8059
  %v8061 = vlaneseq
  %v8062 = vshrl.u32 %v8061, 7
  %v8063 = vsub.s32 %v8060, %v8062
  %v8064 = vrot.slane %v8042, %v8063
  %v8066 = vunpack.c.l.s4 1966171168
  %v8067 = vunpack.c.0.s8 %v8066
  %v8068 = vlaneseq
  %v8069 = vshrl.u32 %v8068, 7
  %v8070 = vsub.s32 %v8067, %v8069
  %v8071 = vrot.slane %v8043, %v8070
  %v8072 = vcombine.high %v8050, %v8050
  %v8073 = vcombine.high %v8057, %v8057
  %v8074 = vcombine.high %v8064, %v8064
  %v8075 = vcombine.high %v8071, %v8071
  %v8076 = vcombine.high %v7512, %v7512
  %v8078 = vunpack.c.l.s4 1966171168
  %v8079 = vunpack.c.0.s8 %v8078
  %v8080 = vlaneseq
  %v8081 = vshrl.u32 %v8080, 7
  %v8082 = vsub.s32 %v8079, %v8081
  %v8083 = vrot.slane %v7512, %v8082
  %v8085 = vunpack.c.l.s4 1966171168
  %v8086 = vunpack.c.0.s8 %v8085
  %v8087 = vlaneseq
  %v8088 = vshrl.u32 %v8087, 7
  %v8089 = vsub.s32 %v8086, %v8088
  %v8090 = vrot.slane %v8076, %v8089
  %v8091 = vcombine.high %v8083, %v8083
  %v8092 = vcombine.high %v8090, %v8090
  %v8094 = vunpack.c.l.s4 1966171168
  %v8095 = vunpack.c.0.s8 %v8094
  %v8096 = vlaneseq
  %v8097 = vshrl.u32 %v8096, 7
  %v8098 = vsub.s32 %v8095, %v8097
  %v8099 = vrot.slane %v8083, %v8098
  %v8101 = vunpack.c.l.s4 1966171168
  %v8102 = vunpack.c.0.s8 %v8101
  %v8103 = vlaneseq
  %v8104 = vshrl.u32 %v8103, 7
  %v8105 = vsub.s32 %v8102, %v8104
  %v8106 = vrot.slane %v8090, %v8105
  %v8108 = vunpack.c.l.s4 1966171168
  %v8109 = vunpack.c.0.s8 %v8108
  %v8110 = vlaneseq
  %v8111 = vshrl.u32 %v8110, 7
  %v8112 = vsub.s32 %v8109, %v8111
  %v8113 = vrot.slane %v8091, %v8112
  %v8115 = vunpack.c.l.s4 1966171168
  %v8116 = vunpack.c.0.s8 %v8115
  %v8117 = vlaneseq
  %v8118 = vshrl.u32 %v8117, 7
  %v8119 = vsub.s32 %v8116, %v8118
  %v8120 = vrot.slane %v8092, %v8119
  %v8121 = vcombine.high %v8099, %v8099
  %v8122 = vcombine.high %v8106, %v8106
  %v8123 = vcombine.high %v8113, %v8113
  %v8124 = vcombine.high %v8120, %v8120
  %v8125 = vcombine.high %v7517, %v7517
  %v8127 = vunpack.c.l.s4 1966171168
  %v8128 = vunpack.c.0.s8 %v8127
  %v8129 = vlaneseq
  %v8130 = vshrl.u32 %v8129, 7
  %v8131 = vsub.s32 %v8128, %v8130
  %v8132 = vrot.slane %v7517, %v8131
  %v8134 = vunpack.c.l.s4 1966171168
  %v8135 = vunpack.c.0.s8 %v8134
  %v8136 = vlaneseq
  %v8137 = vshrl.u32 %v8136, 7
  %v8138 = vsub.s32 %v8135, %v8137
  %v8139 = vrot.slane %v8125, %v8138
  %v8140 = vcombine.high %v8132, %v8132
  %v8141 = vcombine.high %v8139, %v8139
  %v8143 = vunpack.c.l.s4 1966171168
  %v8144 = vunpack.c.0.s8 %v8143
  %v8145 = vlaneseq
  %v8146 = vshrl.u32 %v8145, 7
  %v8147 = vsub.s32 %v8144, %v8146
  %v8148 = vrot.slane %v8132, %v8147
  %v8150 = vunpack.c.l.s4 1966171168
  %v8151 = vunpack.c.0.s8 %v8150
  %v8152 = vlaneseq
  %v8153 = vshrl.u32 %v8152, 7
  %v8154 = vsub.s32 %v8151, %v8153
  %v8155 = vrot.slane %v8139, %v8154
  %v8157 = vunpack.c.l.s4 1966171168
  %v8158 = vunpack.c.0.s8 %v8157
  %v8159 = vlaneseq
  %v8160 = vshrl.u32 %v8159, 7
  %v8161 = vsub.s32 %v8158, %v8160
  %v8162 = vrot.slane %v8140, %v8161
  %v8164 = vunpack.c.l.s4 1966171168
  %v8165 = vunpack.c.0.s8 %v8164
  %v8166 = vlaneseq
  %v8167 = vshrl.u32 %v8166, 7
  %v8168 = vsub.s32 %v8165, %v8167
  %v8169 = vrot.slane %v8141, %v8168
  %v8170 = vcombine.high %v8148, %v8148
  %v8171 = vcombine.high %v8155, %v8155
  %v8172 = vcombine.high %v8162, %v8162
  %v8173 = vcombine.high %v8169, %v8169
  %v8174 = vcombine.high %v7520, %v7520
  %v8176 = vunpack.c.l.s4 1966171168
  %v8177 = vunpack.c.0.s8 %v8176
  %v8178 = vlaneseq
  %v8179 = vshrl.u32 %v8178, 7
  %v8180 = vsub.s32 %v8177, %v8179
  %v8181 = vrot.slane %v7520, %v8180
  %v8183 = vunpack.c.l.s4 1966171168
  %v8184 = vunpack.c.0.s8 %v8183
  %v8185 = vlaneseq
  %v8186 = vshrl.u32 %v8185, 7
  %v8187 = vsub.s32 %v8184, %v8186
  %v8188 = vrot.slane %v8174, %v8187
  %v8189 = vcombine.high %v8181, %v8181
  %v8190 = vcombine.high %v8188, %v8188
  %v8192 = vunpack.c.l.s4 1966171168
  %v8193 = vunpack.c.0.s8 %v8192
  %v8194 = vlaneseq
  %v8195 = vshrl.u32 %v8194, 7
  %v8196 = vsub.s32 %v8193, %v8195
  %v8197 = vrot.slane %v8181, %v8196
  %v8199 = vunpack.c.l.s4 1966171168
  %v8200 = vunpack.c.0.s8 %v8199
  %v8201 = vlaneseq
  %v8202 = vshrl.u32 %v8201, 7
  %v8203 = vsub.s32 %v8200, %v8202
  %v8204 = vrot.slane %v8188, %v8203
  %v8206 = vunpack.c.l.s4 1966171168
  %v8207 = vunpack.c.0.s8 %v8206
  %v8208 = vlaneseq
  %v8209 = vshrl.u32 %v8208, 7
  %v8210 = vsub.s32 %v8207, %v8209
  %v8211 = vrot.slane %v8189, %v8210
  %v8213 = vunpack.c.l.s4 1966171168
  %v8214 = vunpack.c.0.s8 %v8213
  %v8215 = vlaneseq
  %v8216 = vshrl.u32 %v8215, 7
  %v8217 = vsub.s32 %v8214, %v8216
  %v8218 = vrot.slane %v8190, %v8217
  %v8219 = vcombine.high %v8197, %v8197
  %v8220 = vcombine.high %v8204, %v8204
  %v8221 = vcombine.high %v8211, %v8211
  %v8222 = vcombine.high %v8218, %v8218
  %v8223 = vcombine.low %v7560, %v7574
  %v8224 = vcombine.low %v7582, %v7584
  %v8225 = vcombine.low %v7567, %v7581
  %v8227 = vunpack.c.l.s4 1966171168
  %v8228 = vunpack.c.0.s8 %v8227
  %v8229 = vlaneseq
  %v8230 = vshrl.u32 %v8229, 7
  %v8231 = vsub.s32 %v8228, %v8230
  %v8232 = vrot.slane %v8223, %v8231
  %v8234 = vunpack.c.l.s4 1966171168
  %v8235 = vunpack.c.0.s8 %v8234
  %v8236 = vlaneseq
  %v8237 = vshrl.u32 %v8236, 7
  %v8238 = vsub.s32 %v8235, %v8237
  %v8239 = vrot.slane %v8224, %v8238
  %v8241 = vunpack.c.l.s4 1966171168
  %v8242 = vunpack.c.0.s8 %v8241
  %v8243 = vlaneseq
  %v8244 = vshrl.u32 %v8243, 7
  %v8245 = vsub.s32 %v8242, %v8244
  %v8246 = vrot.slane %v8225, %v8245
  %v8248 = vunpack.c.l.s4 1966171168
  %v8249 = vunpack.c.0.s8 %v8248
  %v8250 = vlaneseq
  %v8251 = vshrl.u32 %v8250, 7
  %v8252 = vsub.s32 %v8249, %v8251
  %v8253 = vrot.slane %v7583, %v8252
  %v8254 = vcombine.low %v8232, %v8239
  %v8255 = vcombine.low %v8246, %v8253
  %v8257 = vunpack.c.l.s4 1966171168
  %v8258 = vunpack.c.0.s8 %v8257
  %v8259 = vlaneseq
  %v8260 = vshrl.u32 %v8259, 7
  %v8261 = vsub.s32 %v8258, %v8260
  %v8262 = vrot.slane %v8254, %v8261
  %v8264 = vunpack.c.l.s4 1966171168
  %v8265 = vunpack.c.0.s8 %v8264
  %v8266 = vlaneseq
  %v8267 = vshrl.u32 %v8266, 7
  %v8268 = vsub.s32 %v8265, %v8267
  %v8269 = vrot.slane %v8255, %v8268
  %v8270 = vcombine.low %v8262, %v8269
  %v8271 = vcombine.low %v7585, %v7609
  %v8272 = vcombine.low %v7623, %v7631
  %v8273 = vcombine.low %v7633, %v7616
  %v8275 = vunpack.c.l.s4 1966171168
  %v8276 = vunpack.c.0.s8 %v8275
  %v8277 = vlaneseq
  %v8278 = vshrl.u32 %v8277, 7
  %v8279 = vsub.s32 %v8276, %v8278
  %v8280 = vrot.slane %v8271, %v8279
  %v8282 = vunpack.c.l.s4 1966171168
  %v8283 = vunpack.c.0.s8 %v8282
  %v8284 = vlaneseq
  %v8285 = vshrl.u32 %v8284, 7
  %v8286 = vsub.s32 %v8283, %v8285
  %v8287 = vrot.slane %v8272, %v8286
  %v8289 = vunpack.c.l.s4 1966171168
  %v8290 = vunpack.c.0.s8 %v8289
  %v8291 = vlaneseq
  %v8292 = vshrl.u32 %v8291, 7
  %v8293 = vsub.s32 %v8290, %v8292
  %v8294 = vrot.slane %v8273, %v8293
  %v8296 = vunpack.c.l.s4 1966171168
  %v8297 = vunpack.c.0.s8 %v8296
  %v8298 = vlaneseq
  %v8299 = vshrl.u32 %v8298, 7
  %v8300 = vsub.s32 %v8297, %v8299
  %v8301 = vrot.slane %v7630, %v8300
  %v8302 = vcombine.low %v8280, %v8287
  %v8303 = vcombine.low %v8294, %v8301
  %v8305 = vunpack.c.l.s4 1966171168
  %v8306 = vunpack.c.0.s8 %v8305
  %v8307 = vlaneseq
  %v8308 = vshrl.u32 %v8307, 7
  %v8309 = vsub.s32 %v8306, %v8308
  %v8310 = vrot.slane %v8302, %v8309
  %v8312 = vunpack.c.l.s4 1966171168
  %v8313 = vunpack.c.0.s8 %v8312
  %v8314 = vlaneseq
  %v8315 = vshrl.u32 %v8314, 7
  %v8316 = vsub.s32 %v8313, %v8315
  %v8317 = vrot.slane %v8303, %v8316
  %v8318 = vcombine.low %v8310, %v8317
  %v8319 = vcombine.low %v7632, %v7634
  %v8320 = vcombine.low %v7658, %v7672
  %v8321 = vcombine.low %v7680, %v7682
  %v8323 = vunpack.c.l.s4 1966171168
  %v8324 = vunpack.c.0.s8 %v8323
  %v8325 = vlaneseq
  %v8326 = vshrl.u32 %v8325, 7
  %v8327 = vsub.s32 %v8324, %v8326
  %v8328 = vrot.slane %v8319, %v8327
  %v8330 = vunpack.c.l.s4 1966171168
  %v8331 = vunpack.c.0.s8 %v8330
  %v8332 = vlaneseq
  %v8333 = vshrl.u32 %v8332, 7
  %v8334 = vsub.s32 %v8331, %v8333
  %v8335 = vrot.slane %v8320, %v8334
  %v8337 = vunpack.c.l.s4 1966171168
  %v8338 = vunpack.c.0.s8 %v8337
  %v8339 = vlaneseq
  %v8340 = vshrl.u32 %v8339, 7
  %v8341 = vsub.s32 %v8338, %v8340
  %v8342 = vrot.slane %v8321, %v8341
  %v8344 = vunpack.c.l.s4 1966171168
  %v8345 = vunpack.c.0.s8 %v8344
  %v8346 = vlaneseq
  %v8347 = vshrl.u32 %v8346, 7
  %v8348 = vsub.s32 %v8345, %v8347
  %v8349 = vrot.slane %v7665, %v8348
  %v8350 = vcombine.low %v8328, %v8335
  %v8351 = vcombine.low %v8342, %v8349
  %v8353 = vunpack.c.l.s4 1966171168
  %v8354 = vunpack.c.0.s8 %v8353
  %v8355 = vlaneseq
  %v8356 = vshrl.u32 %v8355, 7
  %v8357 = vsub.s32 %v8354, %v8356
  %v8358 = vrot.slane %v8350, %v8357
  %v8360 = vunpack.c.l.s4 1966171168
  %v8361 = vunpack.c.0.s8 %v8360
  %v8362 = vlaneseq
  %v8363 = vshrl.u32 %v8362, 7
  %v8364 = vsub.s32 %v8361, %v8363
  %v8365 = vrot.slane %v8351, %v8364
  %v8366 = vcombine.low %v8358, %v8365
  %v8367 = vcombine.low %v7679, %v7681
  %v8368 = vcombine.low %v7683, %v7707
  %v8369 = vcombine.low %v7721, %v7729
  %v8371 = vunpack.c.l.s4 1966171168
  %v8372 = vunpack.c.0.s8 %v8371
  %v8373 = vlaneseq
  %v8374 = vshrl.u32 %v8373, 7
  %v8375 = vsub.s32 %v8372, %v8374
  %v8376 = vrot.slane %v8367, %v8375
  %v8378 = vunpack.c.l.s4 1966171168
  %v8379 = vunpack.c.0.s8 %v8378
  %v8380 = vlaneseq
  %v8381 = vshrl.u32 %v8380, 7
  %v8382 = vsub.s32 %v8379, %v8381
  %v8383 = vrot.slane %v8368, %v8382
  %v8385 = vunpack.c.l.s4 1966171168
  %v8386 = vunpack.c.0.s8 %v8385
  %v8387 = vlaneseq
  %v8388 = vshrl.u32 %v8387, 7
  %v8389 = vsub.s32 %v8386, %v8388
  %v8390 = vrot.slane %v8369, %v8389
  %v8392 = vunpack.c.l.s4 1966171168
  %v8393 = vunpack.c.0.s8 %v8392
  %v8394 = vlaneseq
  %v8395 = vshrl.u32 %v8394, 7
  %v8396 = vsub.s32 %v8393, %v8395
  %v8397 = vrot.slane %v7731, %v8396
  %v8398 = vcombine.low %v8376, %v8383
  %v8399 = vcombine.low %v8390, %v8397
  %v8401 = vunpack.c.l.s4 1966171168
  %v8402 = vunpack.c.0.s8 %v8401
  %v8403 = vlaneseq
  %v8404 = vshrl.u32 %v8403, 7
  %v8405 = vsub.s32 %v8402, %v8404
  %v8406 = vrot.slane %v8398, %v8405
  %v8408 = vunpack.c.l.s4 1966171168
  %v8409 = vunpack.c.0.s8 %v8408
  %v8410 = vlaneseq
  %v8411 = vshrl.u32 %v8410, 7
  %v8412 = vsub.s32 %v8409, %v8411
  %v8413 = vrot.slane %v8399, %v8412
  %v8414 = vcombine.low %v8406, %v8413
  %v8415 = vcombine.low %v7714, %v7728
  %v8416 = vcombine.low %v7730, %v7732
  %v8417 = vcombine.low %v7756, %v7770
  %v8419 = vunpack.c.l.s4 1966171168
  %v8420 = vunpack.c.0.s8 %v8419
  %v8421 = vlaneseq
  %v8422 = vshrl.u32 %v8421, 7
  %v8423 = vsub.s32 %v8420, %v8422
  %v8424 = vrot.slane %v8415, %v8423
  %v8426 = vunpack.c.l.s4 1966171168
  %v8427 = vunpack.c.0.s8 %v8426
  %v8428 = vlaneseq
  %v8429 = vshrl.u32 %v8428, 7
  %v8430 = vsub.s32 %v8427, %v8429
  %v8431 = vrot.slane %v8416, %v8430
  %v8433 = vunpack.c.l.s4 1966171168
  %v8434 = vunpack.c.0.s8 %v8433
  %v8435 = vlaneseq
  %v8436 = vshrl.u32 %v8435, 7
  %v8437 = vsub.s32 %v8434, %v8436
  %v8438 = vrot.slane %v8417, %v8437
  %v8440 = vunpack.c.l.s4 1966171168
  %v8441 = vunpack.c.0.s8 %v8440
  %v8442 = vlaneseq
  %v8443 = vshrl.u32 %v8442, 7
  %v8444 = vsub.s32 %v8441, %v8443
  %v8445 = vrot.slane %v7778, %v8444
  %v8446 = vcombine.low %v8424, %v8431
  %v8447 = vcombine.low %v8438, %v8445
  %v8449 = vunpack.c.l.s4 1966171168
  %v8450 = vunpack.c.0.s8 %v8449
  %v8451 = vlaneseq
  %v8452 = vshrl.u32 %v8451, 7
  %v8453 = vsub.s32 %v8450, %v8452
  %v8454 = vrot.slane %v8446, %v8453
  %v8456 = vunpack.c.l.s4 1966171168
  %v8457 = vunpack.c.0.s8 %v8456
  %v8458 = vlaneseq
  %v8459 = vshrl.u32 %v8458, 7
  %v8460 = vsub.s32 %v8457, %v8459
  %v8461 = vrot.slane %v8447, %v8460
  %v8462 = vcombine.low %v8454, %v8461
  %v8463 = vcombine.low %v7780, %v7763
  %v8464 = vcombine.low %v7777, %v7779
  %v8465 = vcombine.low %v7781, %v7805
  %v8467 = vunpack.c.l.s4 1966171168
  %v8468 = vunpack.c.0.s8 %v8467
  %v8469 = vlaneseq
  %v8470 = vshrl.u32 %v8469, 7
  %v8471 = vsub.s32 %v8468, %v8470
  %v8472 = vrot.slane %v8463, %v8471
  %v8474 = vunpack.c.l.s4 1966171168
  %v8475 = vunpack.c.0.s8 %v8474
  %v8476 = vlaneseq
  %v8477 = vshrl.u32 %v8476, 7
  %v8478 = vsub.s32 %v8475, %v8477
  %v8479 = vrot.slane %v8464, %v8478
  %v8481 = vunpack.c.l.s4 1966171168
  %v8482 = vunpack.c.0.s8 %v8481
  %v8483 = vlaneseq
  %v8484 = vshrl.u32 %v8483, 7
  %v8485 = vsub.s32 %v8482, %v8484
  %v8486 = vrot.slane %v8465, %v8485
  %v8488 = vunpack.c.l.s4 1966171168
  %v8489 = vunpack.c.0.s8 %v8488
  %v8490 = vlaneseq
  %v8491 = vshrl.u32 %v8490, 7
  %v8492 = vsub.s32 %v8489, %v8491
  %v8493 = vrot.slane %v7819, %v8492
  %v8494 = vcombine.low %v8472, %v8479
  %v8495 = vcombine.low %v8486, %v8493
  %v8497 = vunpack.c.l.s4 1966171168
  %v8498 = vunpack.c.0.s8 %v8497
  %v8499 = vlaneseq
  %v8500 = vshrl.u32 %v8499, 7
  %v8501 = vsub.s32 %v8498, %v8500
  %v8502 = vrot.slane %v8494, %v8501
  %v8504 = vunpack.c.l.s4 1966171168
  %v8505 = vunpack.c.0.s8 %v8504
  %v8506 = vlaneseq
  %v8507 = vshrl.u32 %v8506, 7
  %v8508 = vsub.s32 %v8505, %v8507
  %v8509 = vrot.slane %v8495, %v8508
  %v8510 = vcombine.low %v8502, %v8509
  %v8511 = vcombine.low %v7827, %v7829
  %v8512 = vcombine.low %v7812, %v7826
  %v8513 = vcombine.low %v7828, %v7830
  %v8515 = vunpack.c.l.s4 1966171168
  %v8516 = vunpack.c.0.s8 %v8515
  %v8517 = vlaneseq
  %v8518 = vshrl.u32 %v8517, 7
  %v8519 = vsub.s32 %v8516, %v8518
  %v8520 = vrot.slane %v8511, %v8519
  %v8522 = vunpack.c.l.s4 1966171168
  %v8523 = vunpack.c.0.s8 %v8522
  %v8524 = vlaneseq
  %v8525 = vshrl.u32 %v8524, 7
  %v8526 = vsub.s32 %v8523, %v8525
  %v8527 = vrot.slane %v8512, %v8526
  %v8529 = vunpack.c.l.s4 1966171168
  %v8530 = vunpack.c.0.s8 %v8529
  %v8531 = vlaneseq
  %v8532 = vshrl.u32 %v8531, 7
  %v8533 = vsub.s32 %v8530, %v8532
  %v8534 = vrot.slane %v8513, %v8533
  %v8536 = vunpack.c.l.s4 1966171168
  %v8537 = vunpack.c.0.s8 %v8536
  %v8538 = vlaneseq
  %v8539 = vshrl.u32 %v8538, 7
  %v8540 = vsub.s32 %v8537, %v8539
  %v8541 = vrot.slane %v7854, %v8540
  %v8542 = vcombine.low %v8520, %v8527
  %v8543 = vcombine.low %v8534, %v8541
  %v8545 = vunpack.c.l.s4 1966171168
  %v8546 = vunpack.c.0.s8 %v8545
  %v8547 = vlaneseq
  %v8548 = vshrl.u32 %v8547, 7
  %v8549 = vsub.s32 %v8546, %v8548
  %v8550 = vrot.slane %v8542, %v8549
  %v8552 = vunpack.c.l.s4 1966171168
  %v8553 = vunpack.c.0.s8 %v8552
  %v8554 = vlaneseq
  %v8555 = vshrl.u32 %v8554, 7
  %v8556 = vsub.s32 %v8553, %v8555
  %v8557 = vrot.slane %v8543, %v8556
  %v8558 = vcombine.low %v8550, %v8557
  %v8559 = vcombine.low %v7868, %v7876
  %v8560 = vcombine.low %v7878, %v7861
  %v8561 = vcombine.low %v7875, %v7877
  %v8563 = vunpack.c.l.s4 1966171168
  %v8564 = vunpack.c.0.s8 %v8563
  %v8565 = vlaneseq
  %v8566 = vshrl.u32 %v8565, 7
  %v8567 = vsub.s32 %v8564, %v8566
  %v8568 = vrot.slane %v8559, %v8567
  %v8570 = vunpack.c.l.s4 1966171168
  %v8571 = vunpack.c.0.s8 %v8570
  %v8572 = vlaneseq
  %v8573 = vshrl.u32 %v8572, 7
  %v8574 = vsub.s32 %v8571, %v8573
  %v8575 = vrot.slane %v8560, %v8574
  %v8577 = vunpack.c.l.s4 1966171168
  %v8578 = vunpack.c.0.s8 %v8577
  %v8579 = vlaneseq
  %v8580 = vshrl.u32 %v8579, 7
  %v8581 = vsub.s32 %v8578, %v8580
  %v8582 = vrot.slane %v8561, %v8581
  %v8584 = vunpack.c.l.s4 1966171168
  %v8585 = vunpack.c.0.s8 %v8584
  %v8586 = vlaneseq
  %v8587 = vshrl.u32 %v8586, 7
  %v8588 = vsub.s32 %v8585, %v8587
  %v8589 = vrot.slane %v7879, %v8588
  %v8590 = vcombine.low %v8568, %v8575
  %v8591 = vcombine.low %v8582, %v8589
  %v8593 = vunpack.c.l.s4 1966171168
  %v8594 = vunpack.c.0.s8 %v8593
  %v8595 = vlaneseq
  %v8596 = vshrl.u32 %v8595, 7
  %v8597 = vsub.s32 %v8594, %v8596
  %v8598 = vrot.slane %v8590, %v8597
  %v8600 = vunpack.c.l.s4 1966171168
  %v8601 = vunpack.c.0.s8 %v8600
  %v8602 = vlaneseq
  %v8603 = vshrl.u32 %v8602, 7
  %v8604 = vsub.s32 %v8601, %v8603
  %v8605 = vrot.slane %v8591, %v8604
  %v8606 = vcombine.low %v8598, %v8605
  %v8607 = vcombine.low %v7903, %v7917
  %v8608 = vcombine.low %v7925, %v7927
  %v8609 = vcombine.low %v7910, %v7924
  %v8611 = vunpack.c.l.s4 1966171168
  %v8612 = vunpack.c.0.s8 %v8611
  %v8613 = vlaneseq
  %v8614 = vshrl.u32 %v8613, 7
  %v8615 = vsub.s32 %v8612, %v8614
  %v8616 = vrot.slane %v8607, %v8615
  %v8618 = vunpack.c.l.s4 1966171168
  %v8619 = vunpack.c.0.s8 %v8618
  %v8620 = vlaneseq
  %v8621 = vshrl.u32 %v8620, 7
  %v8622 = vsub.s32 %v8619, %v8621
  %v8623 = vrot.slane %v8608, %v8622
  %v8625 = vunpack.c.l.s4 1966171168
  %v8626 = vunpack.c.0.s8 %v8625
  %v8627 = vlaneseq
  %v8628 = vshrl.u32 %v8627, 7
  %v8629 = vsub.s32 %v8626, %v8628
  %v8630 = vrot.slane %v8609, %v8629
  %v8632 = vunpack.c.l.s4 1966171168
  %v8633 = vunpack.c.0.s8 %v8632
  %v8634 = vlaneseq
  %v8635 = vshrl.u32 %v8634, 7
  %v8636 = vsub.s32 %v8633, %v8635
  %v8637 = vrot.slane %v7926, %v8636
  %v8638 = vcombine.low %v8616, %v8623
  %v8639 = vcombine.low %v8630, %v8637
  %v8641 = vunpack.c.l.s4 1966171168
  %v8642 = vunpack.c.0.s8 %v8641
  %v8643 = vlaneseq
  %v8644 = vshrl.u32 %v8643, 7
  %v8645 = vsub.s32 %v8642, %v8644
  %v8646 = vrot.slane %v8638, %v8645
  %v8648 = vunpack.c.l.s4 1966171168
  %v8649 = vunpack.c.0.s8 %v8648
  %v8650 = vlaneseq
  %v8651 = vshrl.u32 %v8650, 7
  %v8652 = vsub.s32 %v8649, %v8651
  %v8653 = vrot.slane %v8639, %v8652
  %v8654 = vcombine.low %v8646, %v8653
  %v8655 = vcombine.low %v7928, %v7952
  %v8656 = vcombine.low %v7966, %v7974
  %v8657 = vcombine.low %v7976, %v7959
  %v8659 = vunpack.c.l.s4 1966171168
  %v8660 = vunpack.c.0.s8 %v8659
  %v8661 = vlaneseq
  %v8662 = vshrl.u32 %v8661, 7
  %v8663 = vsub.s32 %v8660, %v8662
  %v8664 = vrot.slane %v8655, %v8663
  %v8666 = vunpack.c.l.s4 1966171168
  %v8667 = vunpack.c.0.s8 %v8666
  %v8668 = vlaneseq
  %v8669 = vshrl.u32 %v8668, 7
  %v8670 = vsub.s32 %v8667, %v8669
  %v8671 = vrot.slane %v8656, %v8670
  %v8673 = vunpack.c.l.s4 1966171168
  %v8674 = vunpack.c.0.s8 %v8673
  %v8675 = vlaneseq
  %v8676 = vshrl.u32 %v8675, 7
  %v8677 = vsub.s32 %v8674, %v8676
  %v8678 = vrot.slane %v8657, %v8677
  %v8680 = vunpack.c.l.s4 1966171168
  %v8681 = vunpack.c.0.s8 %v8680
  %v8682 = vlaneseq
  %v8683 = vshrl.u32 %v8682, 7
  %v8684 = vsub.s32 %v8681, %v8683
  %v8685 = vrot.slane %v7973, %v8684
  %v8686 = vcombine.low %v8664, %v8671
  %v8687 = vcombine.low %v8678, %v8685
  %v8689 = vunpack.c.l.s4 1966171168
  %v8690 = vunpack.c.0.s8 %v8689
  %v8691 = vlaneseq
  %v8692 = vshrl.u32 %v8691, 7
  %v8693 = vsub.s32 %v8690, %v8692
  %v8694 = vrot.slane %v8686, %v8693
  %v8696 = vunpack.c.l.s4 1966171168
  %v8697 = vunpack.c.0.s8 %v8696
  %v8698 = vlaneseq
  %v8699 = vshrl.u32 %v8698, 7
  %v8700 = vsub.s32 %v8697, %v8699
  %v8701 = vrot.slane %v8687, %v8700
  %v8702 = vcombine.low %v8694, %v8701
  %v8703 = vcombine.low %v7975, %v7977
  %v8704 = vcombine.low %v8001, %v8015
  %v8705 = vcombine.low %v8023, %v8025
  %v8707 = vunpack.c.l.s4 1966171168
  %v8708 = vunpack.c.0.s8 %v8707
  %v8709 = vlaneseq
  %v8710 = vshrl.u32 %v8709, 7
  %v8711 = vsub.s32 %v8708, %v8710
  %v8712 = vrot.slane %v8703, %v8711
  %v8714 = vunpack.c.l.s4 1966171168
  %v8715 = vunpack.c.0.s8 %v8714
  %v8716 = vlaneseq
  %v8717 = vshrl.u32 %v8716, 7
  %v8718 = vsub.s32 %v8715, %v8717
  %v8719 = vrot.slane %v8704, %v8718
  %v8721 = vunpack.c.l.s4 1966171168
  %v8722 = vunpack.c.0.s8 %v8721
  %v8723 = vlaneseq
  %v8724 = vshrl.u32 %v8723, 7
  %v8725 = vsub.s32 %v8722, %v8724
  %v8726 = vrot.slane %v8705, %v8725
  %v8728 = vunpack.c.l.s4 1966171168
  %v8729 = vunpack.c.0.s8 %v8728
  %v8730 = vlaneseq
  %v8731 = vshrl.u32 %v8730, 7
  %v8732 = vsub.s32 %v8729, %v8731
  %v8733 = vrot.slane %v8008, %v8732
  %v8734 = vcombine.low %v8712, %v8719
  %v8735 = vcombine.low %v8726, %v8733
  %v8737 = vunpack.c.l.s4 1966171168
  %v8738 = vunpack.c.0.s8 %v8737
  %v8739 = vlaneseq
  %v8740 = vshrl.u32 %v8739, 7
  %v8741 = vsub.s32 %v8738, %v8740
  %v8742 = vrot.slane %v8734, %v8741
  %v8744 = vunpack.c.l.s4 1966171168
  %v8745 = vunpack.c.0.s8 %v8744
  %v8746 = vlaneseq
  %v8747 = vshrl.u32 %v8746, 7
  %v8748 = vsub.s32 %v8745, %v8747
  %v8749 = vrot.slane %v8735, %v8748
  %v8750 = vcombine.low %v8742, %v8749
  %v8751 = vcombine.low %v8022, %v8024
  %v8752 = vcombine.low %v8026, %v8050
  %v8753 = vcombine.low %v8064, %v8072
  %v8755 = vunpack.c.l.s4 1966171168
  %v8756 = vunpack.c.0.s8 %v8755
  %v8757 = vlaneseq
  %v8758 = vshrl.u32 %v8757, 7
  %v8759 = vsub.s32 %v8756, %v8758
  %v8760 = vrot.slane %v8751, %v8759
  %v8762 = vunpack.c.l.s4 1966171168
  %v8763 = vunpack.c.0.s8 %v8762
  %v8764 = vlaneseq
  %v8765 = vshrl.u32 %v8764, 7
  %v8766 = vsub.s32 %v8763, %v8765
  %v8767 = vrot.slane %v8752, %v8766
  %v8769 = vunpack.c.l.s4 1966171168
  %v8770 = vunpack.c.0.s8 %v8769
  %v8771 = vlaneseq
  %v8772 = vshrl.u32 %v8771, 7
  %v8773 = vsub.s32 %v8770, %v8772
  %v8774 = vrot.slane %v8753, %v8773
  %v8776 = vunpack.c.l.s4 1966171168
  %v8777 = vunpack.c.0.s8 %v8776
  %v8778 = vlaneseq
  %v8779 = vshrl.u32 %v8778, 7
  %v8780 = vsub.s32 %v8777, %v8779
  %v8781 = vrot.slane %v8074, %v8780
  %v8782 = vcombine.low %v8760, %v8767
  %v8783 = vcombine.low %v8774, %v8781
  %v8785 = vunpack.c.l.s4 1966171168
  %v8786 = vunpack.c.0.s8 %v8785
  %v8787 = vlaneseq
  %v8788 = vshrl.u32 %v8787, 7
  %v8789 = vsub.s32 %v8786, %v8788
  %v8790 = vrot.slane %v8782, %v8789
  %v8792 = vunpack.c.l.s4 1966171168
  %v8793 = vunpack.c.0.s8 %v8792
  %v8794 = vlaneseq
  %v8795 = vshrl.u32 %v8794, 7
  %v8796 = vsub.s32 %v8793, %v8795
  %v8797 = vrot.slane %v8783, %v8796
  %v8798 = vcombine.low %v8790, %v8797
  %v8799 = vcombine.low %v8057, %v8071
  %v8800 = vcombine.low %v8073, %v8075
  %v8801 = vcombine.low %v8099, %v8113
  %v8803 = vunpack.c.l.s4 1966171168
  %v8804 = vunpack.c.0.s8 %v8803
  %v8805 = vlaneseq
  %v8806 = vshrl.u32 %v8805, 7
  %v8807 = vsub.s32 %v8804, %v8806
  %v8808 = vrot.slane %v8799, %v8807
  %v8810 = vunpack.c.l.s4 1966171168
  %v8811 = vunpack.c.0.s8 %v8810
  %v8812 = vlaneseq
  %v8813 = vshrl.u32 %v8812, 7
  %v8814 = vsub.s32 %v8811, %v8813
  %v8815 = vrot.slane %v8800, %v8814
  %v8817 = vunpack.c.l.s4 1966171168
  %v8818 = vunpack.c.0.s8 %v8817
  %v8819 = vlaneseq
  %v8820 = vshrl.u32 %v8819, 7
  %v8821 = vsub.s32 %v8818, %v8820
  %v8822 = vrot.slane %v8801, %v8821
  %v8824 = vunpack.c.l.s4 1966171168
  %v8825 = vunpack.c.0.s8 %v8824
  %v8826 = vlaneseq
  %v8827 = vshrl.u32 %v8826, 7
  %v8828 = vsub.s32 %v8825, %v8827
  %v8829 = vrot.slane %v8121, %v8828
  %v8830 = vcombine.low %v8808, %v8815
  %v8831 = vcombine.low %v8822, %v8829
  %v8833 = vunpack.c.l.s4 1966171168
  %v8834 = vunpack.c.0.s8 %v8833
  %v8835 = vlaneseq
  %v8836 = vshrl.u32 %v8835, 7
  %v8837 = vsub.s32 %v8834, %v8836
  %v8838 = vrot.slane %v8830, %v8837
  %v8840 = vunpack.c.l.s4 1966171168
  %v8841 = vunpack.c.0.s8 %v8840
  %v8842 = vlaneseq
  %v8843 = vshrl.u32 %v8842, 7
  %v8844 = vsub.s32 %v8841, %v8843
  %v8845 = vrot.slane %v8831, %v8844
  %v8846 = vcombine.low %v8838, %v8845
  %v8847 = vcombine.low %v8123, %v8106
  %v8848 = vcombine.low %v8120, %v8122
  %v8849 = vcombine.low %v8124, %v8148
  %v8851 = vunpack.c.l.s4 1966171168
  %v8852 = vunpack.c.0.s8 %v8851
  %v8853 = vlaneseq
  %v8854 = vshrl.u32 %v8853, 7
  %v8855 = vsub.s32 %v8852, %v8854
  %v8856 = vrot.slane %v8847, %v8855
  %v8858 = vunpack.c.l.s4 1966171168
  %v8859 = vunpack.c.0.s8 %v8858
  %v8860 = vlaneseq
  %v8861 = vshrl.u32 %v8860, 7
  %v8862 = vsub.s32 %v8859, %v8861
  %v8863 = vrot.slane %v8848, %v8862
  %v8865 = vunpack.c.l.s4 1966171168
  %v8866 = vunpack.c.0.s8 %v8865
  %v8867 = vlaneseq
  %v8868 = vshrl.u32 %v8867, 7
  %v8869 = vsub.s32 %v8866, %v8868
  %v8870 = vrot.slane %v8849, %v8869
  %v8872 = vunpack.c.l.s4 1966171168
  %v8873 = vunpack.c.0.s8 %v8872
  %v8874 = vlaneseq
  %v8875 = vshrl.u32 %v8874, 7
  %v8876 = vsub.s32 %v8873, %v8875
  %v8877 = vrot.slane %v8162, %v8876
  %v8878 = vcombine.low %v8856, %v8863
  %v8879 = vcombine.low %v8870, %v8877
  %v8881 = vunpack.c.l.s4 1966171168
  %v8882 = vunpack.c.0.s8 %v8881
  %v8883 = vlaneseq
  %v8884 = vshrl.u32 %v8883, 7
  %v8885 = vsub.s32 %v8882, %v8884
  %v8886 = vrot.slane %v8878, %v8885
  %v8888 = vunpack.c.l.s4 1966171168
  %v8889 = vunpack.c.0.s8 %v8888
  %v8890 = vlaneseq
  %v8891 = vshrl.u32 %v8890, 7
  %v8892 = vsub.s32 %v8889, %v8891
  %v8893 = vrot.slane %v8879, %v8892
  %v8894 = vcombine.low %v8886, %v8893
  %v8895 = vcombine.low %v8170, %v8172
  %v8896 = vcombine.low %v8155, %v8169
  %v8897 = vcombine.low %v8171, %v8173
  %v8899 = vunpack.c.l.s4 1966171168
  %v8900 = vunpack.c.0.s8 %v8899
  %v8901 = vlaneseq
  %v8902 = vshrl.u32 %v8901, 7
  %v8903 = vsub.s32 %v8900, %v8902
  %v8904 = vrot.slane %v8895, %v8903
  %v8906 = vunpack.c.l.s4 1966171168
  %v8907 = vunpack.c.0.s8 %v8906
  %v8908 = vlaneseq
  %v8909 = vshrl.u32 %v8908, 7
  %v8910 = vsub.s32 %v8907, %v8909
  %v8911 = vrot.slane %v8896, %v8910
  %v8913 = vunpack.c.l.s4 1966171168
  %v8914 = vunpack.c.0.s8 %v8913
  %v8915 = vlaneseq
  %v8916 = vshrl.u32 %v8915, 7
  %v8917 = vsub.s32 %v8914, %v8916
  %v8918 = vrot.slane %v8897, %v8917
  %v8920 = vunpack.c.l.s4 1966171168
  %v8921 = vunpack.c.0.s8 %v8920
  %v8922 = vlaneseq
  %v8923 = vshrl.u32 %v8922, 7
  %v8924 = vsub.s32 %v8921, %v8923
  %v8925 = vrot.slane %v8197, %v8924
  %v8926 = vcombine.low %v8904, %v8911
  %v8927 = vcombine.low %v8918, %v8925
  %v8929 = vunpack.c.l.s4 1966171168
  %v8930 = vunpack.c.0.s8 %v8929
  %v8931 = vlaneseq
  %v8932 = vshrl.u32 %v8931, 7
  %v8933 = vsub.s32 %v8930, %v8932
  %v8934 = vrot.slane %v8926, %v8933
  %v8936 = vunpack.c.l.s4 1966171168
  %v8937 = vunpack.c.0.s8 %v8936
  %v8938 = vlaneseq
  %v8939 = vshrl.u32 %v8938, 7
  %v8940 = vsub.s32 %v8937, %v8939
  %v8941 = vrot.slane %v8927, %v8940
  %v8942 = vcombine.low %v8934, %v8941
  %v8943 = vcombine.low %v8211, %v8219
  %v8944 = vcombine.low %v8221, %v8204
  %v8945 = vcombine.low %v8218, %v8220
  %v8947 = vunpack.c.l.s4 1966171168
  %v8948 = vunpack.c.0.s8 %v8947
  %v8949 = vlaneseq
  %v8950 = vshrl.u32 %v8949, 7
  %v8951 = vsub.s32 %v8948, %v8950
  %v8952 = vrot.slane %v8943, %v8951
  %v8954 = vunpack.c.l.s4 1966171168
  %v8955 = vunpack.c.0.s8 %v8954
  %v8956 = vlaneseq
  %v8957 = vshrl.u32 %v8956, 7
  %v8958 = vsub.s32 %v8955, %v8957
  %v8959 = vrot.slane %v8944, %v8958
  %v8961 = vunpack.c.l.s4 1966171168
  %v8962 = vunpack.c.0.s8 %v8961
  %v8963 = vlaneseq
  %v8964 = vshrl.u32 %v8963, 7
  %v8965 = vsub.s32 %v8962, %v8964
  %v8966 = vrot.slane %v8945, %v8965
  %v8968 = vunpack.c.l.s4 1966171168
  %v8969 = vunpack.c.0.s8 %v8968
  %v8970 = vlaneseq
  %v8971 = vshrl.u32 %v8970, 7
  %v8972 = vsub.s32 %v8969, %v8971
  %v8973 = vrot.slane %v8222, %v8972
  %v8974 = vcombine.low %v8952, %v8959
  %v8975 = vcombine.low %v8966, %v8973
  %v8977 = vunpack.c.l.s4 1966171168
  %v8978 = vunpack.c.0.s8 %v8977
  %v8979 = vlaneseq
  %v8980 = vshrl.u32 %v8979, 7
  %v8981 = vsub.s32 %v8978, %v8980
  %v8982 = vrot.slane %v8974, %v8981
  %v8984 = vunpack.c.l.s4 1966171168
  %v8985 = vunpack.c.0.s8 %v8984
  %v8986 = vlaneseq
  %v8987 = vshrl.u32 %v8986, 7
  %v8988 = vsub.s32 %v8985, %v8987
  %v8989 = vrot.slane %v8975, %v8988
  %v8990 = vcombine.low %v8982, %v8989
  %v9007 = vadd.f32 %v6977, %v8270
  %v9008 = vadd.f32 %v6978, %v8318
  %v9009 = vadd.f32 %v6979, %v8366
  %v9010 = vadd.f32 %v6980, %v8414
  %v9011 = vadd.f32 %v6981, %v8462
  %v9012 = vadd.f32 %v6982, %v8510
  %v9013 = vadd.f32 %v6983, %v8558
  %v9014 = vadd.f32 %v6984, %v8606
  %v9015 = vadd.f32 %v6985, %v8654
  %v9016 = vadd.f32 %v6986, %v8702
  %v9017 = vadd.f32 %v6987, %v8750
  %v9018 = vadd.f32 %v6988, %v8798
  %v9019 = vadd.f32 %v6989, %v8846
  %v9020 = vadd.f32 %v6990, %v8894
  %v9021 = vadd.f32 %v6991, %v8942
  %v9022 = vadd.f32 %v6992, %v8990
  %s9023 = scalar_lea.vmem %s1, 8
  %v9024 = vld [vmem:[%s9023] sm:$0x3]
  %v9025 = vcombine.high %v4860, %v4860
  %v9026 = vcombine.high %v4868, %v4868
  %v9027 = vcombine.high %v4876, %v4876
  %v9028 = vcombine.high %v4884, %v4884
  %v9029 = vcombine.high %v4892, %v4892
  %v9030 = vcombine.high %v4900, %v4900
  %v9031 = vcombine.high %v4908, %v4908
  %v9032 = vcombine.high %v4916, %v4916
  %v9033 = vcombine.high %v4924, %v4924
  %v9034 = vcombine.high %v4932, %v4932
  %v9035 = vcombine.high %v4940, %v4940
  %v9036 = vcombine.high %v4948, %v4948
  %v9037 = vcombine.high %v4956, %v4956
  %v9038 = vcombine.high %v4964, %v4964
  %v9039 = vcombine.high %v4972, %v4972
  %v9040 = vcombine.high %v4980, %v4980
  %v9041 = vunpack.i.h.s16 %v6995
  %v9042 = vunpack.i.l.s16 %v9025
  %v9043 = vunpack.i.h.s16 %v6996
  %v9044 = vunpack.i.l.s16 %v9026
  %v9045 = vunpack.i.h.s16 %v6997
  %v9046 = vunpack.i.l.s16 %v9027
  %v9047 = vunpack.i.h.s16 %v6998
  %v9048 = vunpack.i.l.s16 %v9028
  %v9049 = vunpack.i.h.s16 %v6999
  %v9050 = vunpack.i.l.s16 %v9029
  %v9051 = vunpack.i.h.s16 %v7000
  %v9052 = vunpack.i.l.s16 %v9030
  %v9053 = vunpack.i.h.s16 %v7001
  %v9054 = vunpack.i.l.s16 %v9031
  %v9055 = vunpack.i.h.s16 %v7002
  %v9056 = vunpack.i.l.s16 %v9032
  %v9057 = vunpack.i.h.s16 %v7003
  %v9058 = vunpack.i.l.s16 %v9033
  %v9059 = vunpack.i.h.s16 %v7004
  %v9060 = vunpack.i.l.s16 %v9034
  %v9061 = vunpack.i.h.s16 %v7005
  %v9062 = vunpack.i.l.s16 %v9035
  %v9063 = vunpack.i.h.s16 %v7006
  %v9064 = vunpack.i.l.s16 %v9036
  %v9065 = vunpack.i.h.s16 %v7007
  %v9066 = vunpack.i.l.s16 %v9037
  %v9067 = vunpack.i.h.s16 %v7008
  %v9068 = vunpack.i.l.s16 %v9038
  %v9069 = vunpack.i.h.s16 %v7009
  %v9070 = vunpack.i.l.s16 %v9039
  %v9071 = vunpack.i.h.s16 %v7010
  %v9072 = vunpack.i.l.s16 %v9040
  %v9073 = vpack.i.b16 %v9041, %v7012
  %v9074 = vpack.i.b16 %v2842, %v9042
  %v9075 = vpack.i.b16 %v9044, %v9043
  %v9076 = vpack.i.b16 %v9045, %v7016
  %v9077 = vpack.i.b16 %v2846, %v9046
  %v9078 = vpack.i.b16 %v9048, %v9047
  %v9079 = vpack.i.b16 %v9049, %v7020
  %v9080 = vpack.i.b16 %v2850, %v9050
  %v9081 = vpack.i.b16 %v9052, %v9051
  %v9082 = vpack.i.b16 %v9053, %v7024
  %v9083 = vpack.i.b16 %v2854, %v9054
  %v9084 = vpack.i.b16 %v9056, %v9055
  %v9085 = vpack.i.b16 %v9057, %v7028
  %v9086 = vpack.i.b16 %v2858, %v9058
  %v9087 = vpack.i.b16 %v9060, %v9059
  %v9088 = vpack.i.b16 %v9061, %v7032
  %v9089 = vpack.i.b16 %v2862, %v9062
  %v9090 = vpack.i.b16 %v9064, %v9063
  %v9091 = vpack.i.b16 %v9065, %v7036
  %v9092 = vpack.i.b16 %v2866, %v9066
  %v9093 = vpack.i.b16 %v9068, %v9067
  %v9094 = vpack.i.b16 %v9069, %v7040
  %v9095 = vpack.i.b16 %v2870, %v9070
  %v9096 = vpack.i.b16 %v9072, %v9071
  %v9097 = vcombine.low %v5013, %v7043
  %v9098 = vcombine.low %v9073, %v9074
  %v9099 = vcombine.low %v5015, %v7045
  %v9100 = vcombine.low %v9075, %v5016
  %v9102 = vunpack.c.l.s4 1966171168
  %v9103 = vunpack.c.0.s8 %v9102
  %v9104 = vlaneseq
  %v9105 = vshrl.u32 %v9104, 7
  %v9106 = vsub.s32 %v9103, %v9105
  %v9107 = vrot.slane %v9097, %v9106
  %v9109 = vunpack.c.l.s4 1966171168
  %v9110 = vunpack.c.0.s8 %v9109
  %v9111 = vlaneseq
  %v9112 = vshrl.u32 %v9111, 7
  %v9113 = vsub.s32 %v9110, %v9112
  %v9114 = vrot.slane %v9098, %v9113
  %v9116 = vunpack.c.l.s4 1966171168
  %v9117 = vunpack.c.0.s8 %v9116
  %v9118 = vlaneseq
  %v9119 = vshrl.u32 %v9118, 7
  %v9120 = vsub.s32 %v9117, %v9119
  %v9121 = vrot.slane %v9099, %v9120
  %v9123 = vunpack.c.l.s4 1966171168
  %v9124 = vunpack.c.0.s8 %v9123
  %v9125 = vlaneseq
  %v9126 = vshrl.u32 %v9125, 7
  %v9127 = vsub.s32 %v9124, %v9126
  %v9128 = vrot.slane %v9100, %v9127
  %v9129 = vcombine.low %v9107, %v9114
  %v9130 = vcombine.low %v9121, %v9128
  %v9132 = vunpack.c.l.s4 1966171168
  %v9133 = vunpack.c.0.s8 %v9132
  %v9134 = vlaneseq
  %v9135 = vshrl.u32 %v9134, 7
  %v9136 = vsub.s32 %v9133, %v9135
  %v9137 = vrot.slane %v9129, %v9136
  %v9139 = vunpack.c.l.s4 1966171168
  %v9140 = vunpack.c.0.s8 %v9139
  %v9141 = vlaneseq
  %v9142 = vshrl.u32 %v9141, 7
  %v9143 = vsub.s32 %v9140, %v9142
  %v9144 = vrot.slane %v9130, %v9143
  %v9145 = vcombine.low %v9137, %v9144
  %v9146 = vcombine.low %v7046, %v9076
  %v9147 = vcombine.low %v9077, %v5018
  %v9148 = vcombine.low %v7048, %v9078
  %v9149 = vcombine.low %v5019, %v7049
  %v9151 = vunpack.c.l.s4 1966171168
  %v9152 = vunpack.c.0.s8 %v9151
  %v9153 = vlaneseq
  %v9154 = vshrl.u32 %v9153, 7
  %v9155 = vsub.s32 %v9152, %v9154
  %v9156 = vrot.slane %v9146, %v9155
  %v9158 = vunpack.c.l.s4 1966171168
  %v9159 = vunpack.c.0.s8 %v9158
  %v9160 = vlaneseq
  %v9161 = vshrl.u32 %v9160, 7
  %v9162 = vsub.s32 %v9159, %v9161
  %v9163 = vrot.slane %v9147, %v9162
  %v9165 = vunpack.c.l.s4 1966171168
  %v9166 = vunpack.c.0.s8 %v9165
  %v9167 = vlaneseq
  %v9168 = vshrl.u32 %v9167, 7
  %v9169 = vsub.s32 %v9166, %v9168
  %v9170 = vrot.slane %v9148, %v9169
  %v9172 = vunpack.c.l.s4 1966171168
  %v9173 = vunpack.c.0.s8 %v9172
  %v9174 = vlaneseq
  %v9175 = vshrl.u32 %v9174, 7
  %v9176 = vsub.s32 %v9173, %v9175
  %v9177 = vrot.slane %v9149, %v9176
  %v9178 = vcombine.low %v9156, %v9163
  %v9179 = vcombine.low %v9170, %v9177
  %v9181 = vunpack.c.l.s4 1966171168
  %v9182 = vunpack.c.0.s8 %v9181
  %v9183 = vlaneseq
  %v9184 = vshrl.u32 %v9183, 7
  %v9185 = vsub.s32 %v9182, %v9184
  %v9186 = vrot.slane %v9178, %v9185
  %v9188 = vunpack.c.l.s4 1966171168
  %v9189 = vunpack.c.0.s8 %v9188
  %v9190 = vlaneseq
  %v9191 = vshrl.u32 %v9190, 7
  %v9192 = vsub.s32 %v9189, %v9191
  %v9193 = vrot.slane %v9179, %v9192
  %v9194 = vcombine.low %v9186, %v9193
  %v9195 = vcombine.low %v9079, %v9080
  %v9196 = vcombine.low %v5021, %v7051
  %v9197 = vcombine.low %v9081, %v5022
  %v9198 = vcombine.low %v7052, %v9082
  %v9200 = vunpack.c.l.s4 1966171168
  %v9201 = vunpack.c.0.s8 %v9200
  %v9202 = vlaneseq
  %v9203 = vshrl.u32 %v9202, 7
  %v9204 = vsub.s32 %v9201, %v9203
  %v9205 = vrot.slane %v9195, %v9204
  %v9207 = vunpack.c.l.s4 1966171168
  %v9208 = vunpack.c.0.s8 %v9207
  %v9209 = vlaneseq
  %v9210 = vshrl.u32 %v9209, 7
  %v9211 = vsub.s32 %v9208, %v9210
  %v9212 = vrot.slane %v9196, %v9211
  %v9214 = vunpack.c.l.s4 1966171168
  %v9215 = vunpack.c.0.s8 %v9214
  %v9216 = vlaneseq
  %v9217 = vshrl.u32 %v9216, 7
  %v9218 = vsub.s32 %v9215, %v9217
  %v9219 = vrot.slane %v9197, %v9218
  %v9221 = vunpack.c.l.s4 1966171168
  %v9222 = vunpack.c.0.s8 %v9221
  %v9223 = vlaneseq
  %v9224 = vshrl.u32 %v9223, 7
  %v9225 = vsub.s32 %v9222, %v9224
  %v9226 = vrot.slane %v9198, %v9225
  %v9227 = vcombine.low %v9205, %v9212
  %v9228 = vcombine.low %v9219, %v9226
  %v9230 = vunpack.c.l.s4 1966171168
  %v9231 = vunpack.c.0.s8 %v9230
  %v9232 = vlaneseq
  %v9233 = vshrl.u32 %v9232, 7
  %v9234 = vsub.s32 %v9231, %v9233
  %v9235 = vrot.slane %v9227, %v9234
  %v9237 = vunpack.c.l.s4 1966171168
  %v9238 = vunpack.c.0.s8 %v9237
  %v9239 = vlaneseq
  %v9240 = vshrl.u32 %v9239, 7
  %v9241 = vsub.s32 %v9238, %v9240
  %v9242 = vrot.slane %v9228, %v9241
  %v9243 = vcombine.low %v9235, %v9242
  %v9244 = vcombine.low %v9083, %v5024
  %v9245 = vcombine.low %v7054, %v9084
  %v9246 = vcombine.low %v5025, %v7055
  %v9247 = vcombine.low %v9085, %v9086
  %v9249 = vunpack.c.l.s4 1966171168
  %v9250 = vunpack.c.0.s8 %v9249
  %v9251 = vlaneseq
  %v9252 = vshrl.u32 %v9251, 7
  %v9253 = vsub.s32 %v9250, %v9252
  %v9254 = vrot.slane %v9244, %v9253
  %v9256 = vunpack.c.l.s4 1966171168
  %v9257 = vunpack.c.0.s8 %v9256
  %v9258 = vlaneseq
  %v9259 = vshrl.u32 %v9258, 7
  %v9260 = vsub.s32 %v9257, %v9259
  %v9261 = vrot.slane %v9245, %v9260
  %v9263 = vunpack.c.l.s4 1966171168
  %v9264 = vunpack.c.0.s8 %v9263
  %v9265 = vlaneseq
  %v9266 = vshrl.u32 %v9265, 7
  %v9267 = vsub.s32 %v9264, %v9266
  %v9268 = vrot.slane %v9246, %v9267
  %v9270 = vunpack.c.l.s4 1966171168
  %v9271 = vunpack.c.0.s8 %v9270
  %v9272 = vlaneseq
  %v9273 = vshrl.u32 %v9272, 7
  %v9274 = vsub.s32 %v9271, %v9273
  %v9275 = vrot.slane %v9247, %v9274
  %v9276 = vcombine.low %v9254, %v9261
  %v9277 = vcombine.low %v9268, %v9275
  %v9279 = vunpack.c.l.s4 1966171168
  %v9280 = vunpack.c.0.s8 %v9279
  %v9281 = vlaneseq
  %v9282 = vshrl.u32 %v9281, 7
  %v9283 = vsub.s32 %v9280, %v9282
  %v9284 = vrot.slane %v9276, %v9283
  %v9286 = vunpack.c.l.s4 1966171168
  %v9287 = vunpack.c.0.s8 %v9286
  %v9288 = vlaneseq
  %v9289 = vshrl.u32 %v9288, 7
  %v9290 = vsub.s32 %v9287, %v9289
  %v9291 = vrot.slane %v9277, %v9290
  %v9292 = vcombine.low %v9284, %v9291
  %v9293 = vcombine.low %v5027, %v7057
  %v9294 = vcombine.low %v9087, %v5028
  %v9295 = vcombine.low %v7058, %v9088
  %v9296 = vcombine.low %v9089, %v5030
  %v9298 = vunpack.c.l.s4 1966171168
  %v9299 = vunpack.c.0.s8 %v9298
  %v9300 = vlaneseq
  %v9301 = vshrl.u32 %v9300, 7
  %v9302 = vsub.s32 %v9299, %v9301
  %v9303 = vrot.slane %v9293, %v9302
  %v9305 = vunpack.c.l.s4 1966171168
  %v9306 = vunpack.c.0.s8 %v9305
  %v9307 = vlaneseq
  %v9308 = vshrl.u32 %v9307, 7
  %v9309 = vsub.s32 %v9306, %v9308
  %v9310 = vrot.slane %v9294, %v9309
  %v9312 = vunpack.c.l.s4 1966171168
  %v9313 = vunpack.c.0.s8 %v9312
  %v9314 = vlaneseq
  %v9315 = vshrl.u32 %v9314, 7
  %v9316 = vsub.s32 %v9313, %v9315
  %v9317 = vrot.slane %v9295, %v9316
  %v9319 = vunpack.c.l.s4 1966171168
  %v9320 = vunpack.c.0.s8 %v9319
  %v9321 = vlaneseq
  %v9322 = vshrl.u32 %v9321, 7
  %v9323 = vsub.s32 %v9320, %v9322
  %v9324 = vrot.slane %v9296, %v9323
  %v9325 = vcombine.low %v9303, %v9310
  %v9326 = vcombine.low %v9317, %v9324
  %v9328 = vunpack.c.l.s4 1966171168
  %v9329 = vunpack.c.0.s8 %v9328
  %v9330 = vlaneseq
  %v9331 = vshrl.u32 %v9330, 7
  %v9332 = vsub.s32 %v9329, %v9331
  %v9333 = vrot.slane %v9325, %v9332
  %v9335 = vunpack.c.l.s4 1966171168
  %v9336 = vunpack.c.0.s8 %v9335
  %v9337 = vlaneseq
  %v9338 = vshrl.u32 %v9337, 7
  %v9339 = vsub.s32 %v9336, %v9338
  %v9340 = vrot.slane %v9326, %v9339
  %v9341 = vcombine.low %v9333, %v9340
  %v9342 = vcombine.low %v7060, %v9090
  %v9343 = vcombine.low %v5031, %v7061
  %v9344 = vcombine.low %v9091, %v9092
  %v9345 = vcombine.low %v5033, %v7063
  %v9347 = vunpack.c.l.s4 1966171168
  %v9348 = vunpack.c.0.s8 %v9347
  %v9349 = vlaneseq
  %v9350 = vshrl.u32 %v9349, 7
  %v9351 = vsub.s32 %v9348, %v9350
  %v9352 = vrot.slane %v9342, %v9351
  %v9354 = vunpack.c.l.s4 1966171168
  %v9355 = vunpack.c.0.s8 %v9354
  %v9356 = vlaneseq
  %v9357 = vshrl.u32 %v9356, 7
  %v9358 = vsub.s32 %v9355, %v9357
  %v9359 = vrot.slane %v9343, %v9358
  %v9361 = vunpack.c.l.s4 1966171168
  %v9362 = vunpack.c.0.s8 %v9361
  %v9363 = vlaneseq
  %v9364 = vshrl.u32 %v9363, 7
  %v9365 = vsub.s32 %v9362, %v9364
  %v9366 = vrot.slane %v9344, %v9365
  %v9368 = vunpack.c.l.s4 1966171168
  %v9369 = vunpack.c.0.s8 %v9368
  %v9370 = vlaneseq
  %v9371 = vshrl.u32 %v9370, 7
  %v9372 = vsub.s32 %v9369, %v9371
  %v9373 = vrot.slane %v9345, %v9372
  %v9374 = vcombine.low %v9352, %v9359
  %v9375 = vcombine.low %v9366, %v9373
  %v9377 = vunpack.c.l.s4 1966171168
  %v9378 = vunpack.c.0.s8 %v9377
  %v9379 = vlaneseq
  %v9380 = vshrl.u32 %v9379, 7
  %v9381 = vsub.s32 %v9378, %v9380
  %v9382 = vrot.slane %v9374, %v9381
  %v9384 = vunpack.c.l.s4 1966171168
  %v9385 = vunpack.c.0.s8 %v9384
  %v9386 = vlaneseq
  %v9387 = vshrl.u32 %v9386, 7
  %v9388 = vsub.s32 %v9385, %v9387
  %v9389 = vrot.slane %v9375, %v9388
  %v9390 = vcombine.low %v9382, %v9389
  %v9391 = vcombine.low %v9093, %v5034
  %v9392 = vcombine.low %v7064, %v9094
  %v9393 = vcombine.low %v9095, %v5036
  %v9394 = vcombine.low %v7066, %v9096
  %v9396 = vunpack.c.l.s4 1966171168
  %v9397 = vunpack.c.0.s8 %v9396
  %v9398 = vlaneseq
  %v9399 = vshrl.u32 %v9398, 7
  %v9400 = vsub.s32 %v9397, %v9399
  %v9401 = vrot.slane %v9391, %v9400
  %v9403 = vunpack.c.l.s4 1966171168
  %v9404 = vunpack.c.0.s8 %v9403
  %v9405 = vlaneseq
  %v9406 = vshrl.u32 %v9405, 7
  %v9407 = vsub.s32 %v9404, %v9406
  %v9408 = vrot.slane %v9392, %v9407
  %v9410 = vunpack.c.l.s4 1966171168
  %v9411 = vunpack.c.0.s8 %v9410
  %v9412 = vlaneseq
  %v9413 = vshrl.u32 %v9412, 7
  %v9414 = vsub.s32 %v9411, %v9413
  %v9415 = vrot.slane %v9393, %v9414
  %v9417 = vunpack.c.l.s4 1966171168
  %v9418 = vunpack.c.0.s8 %v9417
  %v9419 = vlaneseq
  %v9420 = vshrl.u32 %v9419, 7
  %v9421 = vsub.s32 %v9418, %v9420
  %v9422 = vrot.slane %v9394, %v9421
  %v9423 = vcombine.low %v9401, %v9408
  %v9424 = vcombine.low %v9415, %v9422
  %v9426 = vunpack.c.l.s4 1966171168
  %v9427 = vunpack.c.0.s8 %v9426
  %v9428 = vlaneseq
  %v9429 = vshrl.u32 %v9428, 7
  %v9430 = vsub.s32 %v9427, %v9429
  %v9431 = vrot.slane %v9423, %v9430
  %v9433 = vunpack.c.l.s4 1966171168
  %v9434 = vunpack.c.0.s8 %v9433
  %v9435 = vlaneseq
  %v9436 = vshrl.u32 %v9435, 7
  %v9437 = vsub.s32 %v9434, %v9436
  %v9438 = vrot.slane %v9424, %v9437
  %v9439 = vcombine.low %v9431, %v9438
  %v9441 = vsel %vm982, %v9145, 0
  %v9444 = vsel %vm982, %v9194, 0
  %v9447 = vsel %vm982, %v9243, 0
  %v9450 = vsel %vm982, %v9292, 0
  %v9453 = vsel %vm982, %v9341, 0
  %v9456 = vsel %vm982, %v9390, 0
  %v9459 = vsel %vm982, %v9439, 0
  %v9462 = vsel %vm1004, %v9024, 0
  %9464 = vmatprep.subr.bf16.mxu0 0
  %9465 = vmatpush1.bf16.msra.mxu0 %v9462
  %9466 = vmatprep.subr.bf16.mxu0 0
  %9467 = vmatpush1.bf16.msra.mxu0 0
  %9468 = vmatprep.subr.bf16.mxu0 0
  %9469 = vmatpush1.bf16.msra.mxu0 0
  %9470 = vmatprep.subr.bf16.mxu0 0
  %9471 = vmatpush1.bf16.msra.mxu0 0
  %9472 = vmatprep.subr.bf16.mxu0 0
  %9473 = vmatpush1.bf16.msra.mxu0 0
  %9474 = vmatprep.subr.bf16.mxu0 0
  %9475 = vmatpush1.bf16.msra.mxu0 0
  %9476 = vmatprep.subr.bf16.mxu0 0
  %9477 = vmatpush1.bf16.msra.mxu0 0
  %9478 = vmatprep.subr.bf16.mxu0 0
  %9479 = vmatpush1.bf16.msra.mxu0 0
  %9480 = vmatprep.subr.bf16.mxu0 0
  %9481 = vmatpush1.bf16.msra.mxu0 0
  %9482 = vmatprep.subr.bf16.mxu0 0
  %9483 = vmatpush1.bf16.msra.mxu0 0
  %9484 = vmatprep.subr.bf16.mxu0 0
  %9485 = vmatpush1.bf16.msra.mxu0 0
  %9486 = vmatprep.subr.bf16.mxu0 0
  %9487 = vmatpush1.bf16.msra.mxu0 0
  %9488 = vmatprep.subr.bf16.mxu0 0
  %9489 = vmatpush1.bf16.msra.mxu0 0
  %9490 = vmatprep.subr.bf16.mxu0 0
  %9491 = vmatpush1.bf16.msra.mxu0 0
  %9492 = vmatprep.subr.bf16.mxu0 0
  %9493 = vmatpush1.bf16.msra.mxu0 0
  %9494 = vmatprep.subr.bf16.mxu0 0
  %9495 = vmatpush1.bf16.msra.mxu0 0
  %9496 = vmatprep.mubr.bf16.mxu0 0
  %9497 = vmatmul.mubr.bf16.gmra.mrb[0].mxu0 %v9441
  %v9498 = vpop.f32.mrb[0].mxu0
  %v9499 = vadd.f32 0.0, %v9498
  %v9500 = vpop.f32.mrb[0].mxu0
  %v9501 = vpop.f32.mrb[0].mxu0
  %v9502 = vadd.f32 0.0, %v9501
  %v9503 = vpop.f32.mrb[0].mxu0
  %9504 = vmatprep.mubr.bf16.mxu0 0
  %9505 = vmatmul.mubr.bf16.gmra.mrb[0].mxu0 %v9444
  %v9506 = vpop.f32.mrb[0].mxu0
  %v9507 = vadd.f32 0.0, %v9506
  %v9508 = vpop.f32.mrb[0].mxu0
  %v9509 = vpop.f32.mrb[0].mxu0
  %v9510 = vadd.f32 0.0, %v9509
  %v9511 = vpop.f32.mrb[0].mxu0
  %9512 = vmatprep.mubr.bf16.mxu0 0
  %9513 = vmatmul.mubr.bf16.gmra.mrb[0].mxu0 %v9447
  %v9514 = vpop.f32.mrb[0].mxu0
  %v9515 = vadd.f32 0.0, %v9514
  %v9516 = vpop.f32.mrb[0].mxu0
  %v9517 = vpop.f32.mrb[0].mxu0
  %v9518 = vadd.f32 0.0, %v9517
  %v9519 = vpop.f32.mrb[0].mxu0
  %9520 = vmatprep.mubr.bf16.mxu0 0
  %9521 = vmatmul.mubr.bf16.gmra.mrb[0].mxu0 %v9450
  %v9522 = vpop.f32.mrb[0].mxu0
  %v9523 = vadd.f32 0.0, %v9522
  %v9524 = vpop.f32.mrb[0].mxu0
  %v9525 = vpop.f32.mrb[0].mxu0
  %v9526 = vadd.f32 0.0, %v9525
  %v9527 = vpop.f32.mrb[0].mxu0
  %9528 = vmatprep.mubr.bf16.mxu0 0
  %9529 = vmatmul.mubr.bf16.gmra.mrb[0].mxu0 %v9453
  %v9530 = vpop.f32.mrb[0].mxu0
  %v9531 = vadd.f32 0.0, %v9530
  %v9532 = vpop.f32.mrb[0].mxu0
  %v9533 = vpop.f32.mrb[0].mxu0
  %v9534 = vadd.f32 0.0, %v9533
  %v9535 = vpop.f32.mrb[0].mxu0
  %9536 = vmatprep.mubr.bf16.mxu0 0
  %9537 = vmatmul.mubr.bf16.gmra.mrb[0].mxu0 %v9456
  %v9538 = vpop.f32.mrb[0].mxu0
  %v9539 = vadd.f32 0.0, %v9538
  %v9540 = vpop.f32.mrb[0].mxu0
  %v9541 = vpop.f32.mrb[0].mxu0
  %v9542 = vadd.f32 0.0, %v9541
  %v9543 = vpop.f32.mrb[0].mxu0
  %9544 = vmatprep.mubr.bf16.mxu0 0
  %9545 = vmatmul.mubr.bf16.gmra.mrb[0].mxu0 %v9459
  %v9546 = vpop.f32.mrb[0].mxu0
  %v9547 = vadd.f32 0.0, %v9546
  %v9548 = vpop.f32.mrb[0].mxu0
  %v9549 = vpop.f32.mrb[0].mxu0
  %v9550 = vadd.f32 0.0, %v9549
  %v9551 = vpop.f32.mrb[0].mxu0
  %9552 = vdwg.mxu0
  %v9567 = vcombine.high %v9499, %v9499
  %v9569 = vunpack.c.l.s4 1966171168
  %v9570 = vunpack.c.0.s8 %v9569
  %v9571 = vlaneseq
  %v9572 = vshrl.u32 %v9571, 7
  %v9573 = vsub.s32 %v9570, %v9572
  %v9574 = vrot.slane %v9499, %v9573
  %v9576 = vunpack.c.l.s4 1966171168
  %v9577 = vunpack.c.0.s8 %v9576
  %v9578 = vlaneseq
  %v9579 = vshrl.u32 %v9578, 7
  %v9580 = vsub.s32 %v9577, %v9579
  %v9581 = vrot.slane %v9567, %v9580
  %v9582 = vcombine.high %v9574, %v9574
  %v9583 = vcombine.high %v9581, %v9581
  %v9585 = vunpack.c.l.s4 1966171168
  %v9586 = vunpack.c.0.s8 %v9585
  %v9587 = vlaneseq
  %v9588 = vshrl.u32 %v9587, 7
  %v9589 = vsub.s32 %v9586, %v9588
  %v9590 = vrot.slane %v9574, %v9589
  %v9592 = vunpack.c.l.s4 1966171168
  %v9593 = vunpack.c.0.s8 %v9592
  %v9594 = vlaneseq
  %v9595 = vshrl.u32 %v9594, 7
  %v9596 = vsub.s32 %v9593, %v9595
  %v9597 = vrot.slane %v9581, %v9596
  %v9599 = vunpack.c.l.s4 1966171168
  %v9600 = vunpack.c.0.s8 %v9599
  %v9601 = vlaneseq
  %v9602 = vshrl.u32 %v9601, 7
  %v9603 = vsub.s32 %v9600, %v9602
  %v9604 = vrot.slane %v9582, %v9603
  %v9606 = vunpack.c.l.s4 1966171168
  %v9607 = vunpack.c.0.s8 %v9606
  %v9608 = vlaneseq
  %v9609 = vshrl.u32 %v9608, 7
  %v9610 = vsub.s32 %v9607, %v9609
  %v9611 = vrot.slane %v9583, %v9610
  %v9612 = vcombine.high %v9590, %v9590
  %v9613 = vcombine.high %v9597, %v9597
  %v9614 = vcombine.high %v9604, %v9604
  %v9615 = vcombine.high %v9611, %v9611
  %v9616 = vcombine.high %v9502, %v9502
  %v9618 = vunpack.c.l.s4 1966171168
  %v9619 = vunpack.c.0.s8 %v9618
  %v9620 = vlaneseq
  %v9621 = vshrl.u32 %v9620, 7
  %v9622 = vsub.s32 %v9619, %v9621
  %v9623 = vrot.slane %v9502, %v9622
  %v9625 = vunpack.c.l.s4 1966171168
  %v9626 = vunpack.c.0.s8 %v9625
  %v9627 = vlaneseq
  %v9628 = vshrl.u32 %v9627, 7
  %v9629 = vsub.s32 %v9626, %v9628
  %v9630 = vrot.slane %v9616, %v9629
  %v9631 = vcombine.high %v9623, %v9623
  %v9632 = vcombine.high %v9630, %v9630
  %v9634 = vunpack.c.l.s4 1966171168
  %v9635 = vunpack.c.0.s8 %v9634
  %v9636 = vlaneseq
  %v9637 = vshrl.u32 %v9636, 7
  %v9638 = vsub.s32 %v9635, %v9637
  %v9639 = vrot.slane %v9623, %v9638
  %v9641 = vunpack.c.l.s4 1966171168
  %v9642 = vunpack.c.0.s8 %v9641
  %v9643 = vlaneseq
  %v9644 = vshrl.u32 %v9643, 7
  %v9645 = vsub.s32 %v9642, %v9644
  %v9646 = vrot.slane %v9630, %v9645
  %v9648 = vunpack.c.l.s4 1966171168
  %v9649 = vunpack.c.0.s8 %v9648
  %v9650 = vlaneseq
  %v9651 = vshrl.u32 %v9650, 7
  %v9652 = vsub.s32 %v9649, %v9651
  %v9653 = vrot.slane %v9631, %v9652
  %v9655 = vunpack.c.l.s4 1966171168
  %v9656 = vunpack.c.0.s8 %v9655
  %v9657 = vlaneseq
  %v9658 = vshrl.u32 %v9657, 7
  %v9659 = vsub.s32 %v9656, %v9658
  %v9660 = vrot.slane %v9632, %v9659
  %v9661 = vcombine.high %v9639, %v9639
  %v9662 = vcombine.high %v9646, %v9646
  %v9663 = vcombine.high %v9653, %v9653
  %v9664 = vcombine.high %v9660, %v9660
  %v9665 = vcombine.high %v9507, %v9507
  %v9667 = vunpack.c.l.s4 1966171168
  %v9668 = vunpack.c.0.s8 %v9667
  %v9669 = vlaneseq
  %v9670 = vshrl.u32 %v9669, 7
  %v9671 = vsub.s32 %v9668, %v9670
  %v9672 = vrot.slane %v9507, %v9671
  %v9674 = vunpack.c.l.s4 1966171168
  %v9675 = vunpack.c.0.s8 %v9674
  %v9676 = vlaneseq
  %v9677 = vshrl.u32 %v9676, 7
  %v9678 = vsub.s32 %v9675, %v9677
  %v9679 = vrot.slane %v9665, %v9678
  %v9680 = vcombine.high %v9672, %v9672
  %v9681 = vcombine.high %v9679, %v9679
  %v9683 = vunpack.c.l.s4 1966171168
  %v9684 = vunpack.c.0.s8 %v9683
  %v9685 = vlaneseq
  %v9686 = vshrl.u32 %v9685, 7
  %v9687 = vsub.s32 %v9684, %v9686
  %v9688 = vrot.slane %v9672, %v9687
  %v9690 = vunpack.c.l.s4 1966171168
  %v9691 = vunpack.c.0.s8 %v9690
  %v9692 = vlaneseq
  %v9693 = vshrl.u32 %v9692, 7
  %v9694 = vsub.s32 %v9691, %v9693
  %v9695 = vrot.slane %v9679, %v9694
  %v9697 = vunpack.c.l.s4 1966171168
  %v9698 = vunpack.c.0.s8 %v9697
  %v9699 = vlaneseq
  %v9700 = vshrl.u32 %v9699, 7
  %v9701 = vsub.s32 %v9698, %v9700
  %v9702 = vrot.slane %v9680, %v9701
  %v9704 = vunpack.c.l.s4 1966171168
  %v9705 = vunpack.c.0.s8 %v9704
  %v9706 = vlaneseq
  %v9707 = vshrl.u32 %v9706, 7
  %v9708 = vsub.s32 %v9705, %v9707
  %v9709 = vrot.slane %v9681, %v9708
  %v9710 = vcombine.high %v9688, %v9688
  %v9711 = vcombine.high %v9695, %v9695
  %v9712 = vcombine.high %v9702, %v9702
  %v9713 = vcombine.high %v9709, %v9709
  %v9714 = vcombine.high %v9510, %v9510
  %v9716 = vunpack.c.l.s4 1966171168
  %v9717 = vunpack.c.0.s8 %v9716
  %v9718 = vlaneseq
  %v9719 = vshrl.u32 %v9718, 7
  %v9720 = vsub.s32 %v9717, %v9719
  %v9721 = vrot.slane %v9510, %v9720
  %v9723 = vunpack.c.l.s4 1966171168
  %v9724 = vunpack.c.0.s8 %v9723
  %v9725 = vlaneseq
  %v9726 = vshrl.u32 %v9725, 7
  %v9727 = vsub.s32 %v9724, %v9726
  %v9728 = vrot.slane %v9714, %v9727
  %v9729 = vcombine.high %v9721, %v9721
  %v9730 = vcombine.high %v9728, %v9728
  %v9732 = vunpack.c.l.s4 1966171168
  %v9733 = vunpack.c.0.s8 %v9732
  %v9734 = vlaneseq
  %v9735 = vshrl.u32 %v9734, 7
  %v9736 = vsub.s32 %v9733, %v9735
  %v9737 = vrot.slane %v9721, %v9736
  %v9739 = vunpack.c.l.s4 1966171168
  %v9740 = vunpack.c.0.s8 %v9739
  %v9741 = vlaneseq
  %v9742 = vshrl.u32 %v9741, 7
  %v9743 = vsub.s32 %v9740, %v9742
  %v9744 = vrot.slane %v9728, %v9743
  %v9746 = vunpack.c.l.s4 1966171168
  %v9747 = vunpack.c.0.s8 %v9746
  %v9748 = vlaneseq
  %v9749 = vshrl.u32 %v9748, 7
  %v9750 = vsub.s32 %v9747, %v9749
  %v9751 = vrot.slane %v9729, %v9750
  %v9753 = vunpack.c.l.s4 1966171168
  %v9754 = vunpack.c.0.s8 %v9753
  %v9755 = vlaneseq
  %v9756 = vshrl.u32 %v9755, 7
  %v9757 = vsub.s32 %v9754, %v9756
  %v9758 = vrot.slane %v9730, %v9757
  %v9759 = vcombine.high %v9737, %v9737
  %v9760 = vcombine.high %v9744, %v9744
  %v9761 = vcombine.high %v9751, %v9751
  %v9762 = vcombine.high %v9758, %v9758
  %v9763 = vcombine.high %v9515, %v9515
  %v9765 = vunpack.c.l.s4 1966171168
  %v9766 = vunpack.c.0.s8 %v9765
  %v9767 = vlaneseq
  %v9768 = vshrl.u32 %v9767, 7
  %v9769 = vsub.s32 %v9766, %v9768
  %v9770 = vrot.slane %v9515, %v9769
  %v9772 = vunpack.c.l.s4 1966171168
  %v9773 = vunpack.c.0.s8 %v9772
  %v9774 = vlaneseq
  %v9775 = vshrl.u32 %v9774, 7
  %v9776 = vsub.s32 %v9773, %v9775
  %v9777 = vrot.slane %v9763, %v9776
  %v9778 = vcombine.high %v9770, %v9770
  %v9779 = vcombine.high %v9777, %v9777
  %v9781 = vunpack.c.l.s4 1966171168
  %v9782 = vunpack.c.0.s8 %v9781
  %v9783 = vlaneseq
  %v9784 = vshrl.u32 %v9783, 7
  %v9785 = vsub.s32 %v9782, %v9784
  %v9786 = vrot.slane %v9770, %v9785
  %v9788 = vunpack.c.l.s4 1966171168
  %v9789 = vunpack.c.0.s8 %v9788
  %v9790 = vlaneseq
  %v9791 = vshrl.u32 %v9790, 7
  %v9792 = vsub.s32 %v9789, %v9791
  %v9793 = vrot.slane %v9777, %v9792
  %v9795 = vunpack.c.l.s4 1966171168
  %v9796 = vunpack.c.0.s8 %v9795
  %v9797 = vlaneseq
  %v9798 = vshrl.u32 %v9797, 7
  %v9799 = vsub.s32 %v9796, %v9798
  %v9800 = vrot.slane %v9778, %v9799
  %v9802 = vunpack.c.l.s4 1966171168
  %v9803 = vunpack.c.0.s8 %v9802
  %v9804 = vlaneseq
  %v9805 = vshrl.u32 %v9804, 7
  %v9806 = vsub.s32 %v9803, %v9805
  %v9807 = vrot.slane %v9779, %v9806
  %v9808 = vcombine.high %v9786, %v9786
  %v9809 = vcombine.high %v9793, %v9793
  %v9810 = vcombine.high %v9800, %v9800
  %v9811 = vcombine.high %v9807, %v9807
  %v9812 = vcombine.high %v9518, %v9518
  %v9814 = vunpack.c.l.s4 1966171168
  %v9815 = vunpack.c.0.s8 %v9814
  %v9816 = vlaneseq
  %v9817 = vshrl.u32 %v9816, 7
  %v9818 = vsub.s32 %v9815, %v9817
  %v9819 = vrot.slane %v9518, %v9818
  %v9821 = vunpack.c.l.s4 1966171168
  %v9822 = vunpack.c.0.s8 %v9821
  %v9823 = vlaneseq
  %v9824 = vshrl.u32 %v9823, 7
  %v9825 = vsub.s32 %v9822, %v9824
  %v9826 = vrot.slane %v9812, %v9825
  %v9827 = vcombine.high %v9819, %v9819
  %v9828 = vcombine.high %v9826, %v9826
  %v9830 = vunpack.c.l.s4 1966171168
  %v9831 = vunpack.c.0.s8 %v9830
  %v9832 = vlaneseq
  %v9833 = vshrl.u32 %v9832, 7
  %v9834 = vsub.s32 %v9831, %v9833
  %v9835 = vrot.slane %v9819, %v9834
  %v9837 = vunpack.c.l.s4 1966171168
  %v9838 = vunpack.c.0.s8 %v9837
  %v9839 = vlaneseq
  %v9840 = vshrl.u32 %v9839, 7
  %v9841 = vsub.s32 %v9838, %v9840
  %v9842 = vrot.slane %v9826, %v9841
  %v9844 = vunpack.c.l.s4 1966171168
  %v9845 = vunpack.c.0.s8 %v9844
  %v9846 = vlaneseq
  %v9847 = vshrl.u32 %v9846, 7
  %v9848 = vsub.s32 %v9845, %v9847
  %v9849 = vrot.slane %v9827, %v9848
  %v9851 = vunpack.c.l.s4 1966171168
  %v9852 = vunpack.c.0.s8 %v9851
  %v9853 = vlaneseq
  %v9854 = vshrl.u32 %v9853, 7
  %v9855 = vsub.s32 %v9852, %v9854
  %v9856 = vrot.slane %v9828, %v9855
  %v9857 = vcombine.high %v9835, %v9835
  %v9858 = vcombine.high %v9842, %v9842
  %v9859 = vcombine.high %v9849, %v9849
  %v9860 = vcombine.high %v9856, %v9856
  %v9861 = vcombine.high %v9523, %v9523
  %v9863 = vunpack.c.l.s4 1966171168
  %v9864 = vunpack.c.0.s8 %v9863
  %v9865 = vlaneseq
  %v9866 = vshrl.u32 %v9865, 7
  %v9867 = vsub.s32 %v9864, %v9866
  %v9868 = vrot.slane %v9523, %v9867
  %v9870 = vunpack.c.l.s4 1966171168
  %v9871 = vunpack.c.0.s8 %v9870
  %v9872 = vlaneseq
  %v9873 = vshrl.u32 %v9872, 7
  %v9874 = vsub.s32 %v9871, %v9873
  %v9875 = vrot.slane %v9861, %v9874
  %v9876 = vcombine.high %v9868, %v9868
  %v9877 = vcombine.high %v9875, %v9875
  %v9879 = vunpack.c.l.s4 1966171168
  %v9880 = vunpack.c.0.s8 %v9879
  %v9881 = vlaneseq
  %v9882 = vshrl.u32 %v9881, 7
  %v9883 = vsub.s32 %v9880, %v9882
  %v9884 = vrot.slane %v9868, %v9883
  %v9886 = vunpack.c.l.s4 1966171168
  %v9887 = vunpack.c.0.s8 %v9886
  %v9888 = vlaneseq
  %v9889 = vshrl.u32 %v9888, 7
  %v9890 = vsub.s32 %v9887, %v9889
  %v9891 = vrot.slane %v9875, %v9890
  %v9893 = vunpack.c.l.s4 1966171168
  %v9894 = vunpack.c.0.s8 %v9893
  %v9895 = vlaneseq
  %v9896 = vshrl.u32 %v9895, 7
  %v9897 = vsub.s32 %v9894, %v9896
  %v9898 = vrot.slane %v9876, %v9897
  %v9900 = vunpack.c.l.s4 1966171168
  %v9901 = vunpack.c.0.s8 %v9900
  %v9902 = vlaneseq
  %v9903 = vshrl.u32 %v9902, 7
  %v9904 = vsub.s32 %v9901, %v9903
  %v9905 = vrot.slane %v9877, %v9904
  %v9906 = vcombine.high %v9884, %v9884
  %v9907 = vcombine.high %v9891, %v9891
  %v9908 = vcombine.high %v9898, %v9898
  %v9909 = vcombine.high %v9905, %v9905
  %v9910 = vcombine.high %v9526, %v9526
  %v9912 = vunpack.c.l.s4 1966171168
  %v9913 = vunpack.c.0.s8 %v9912
  %v9914 = vlaneseq
  %v9915 = vshrl.u32 %v9914, 7
  %v9916 = vsub.s32 %v9913, %v9915
  %v9917 = vrot.slane %v9526, %v9916
  %v9919 = vunpack.c.l.s4 1966171168
  %v9920 = vunpack.c.0.s8 %v9919
  %v9921 = vlaneseq
  %v9922 = vshrl.u32 %v9921, 7
  %v9923 = vsub.s32 %v9920, %v9922
  %v9924 = vrot.slane %v9910, %v9923
  %v9925 = vcombine.high %v9917, %v9917
  %v9926 = vcombine.high %v9924, %v9924
  %v9928 = vunpack.c.l.s4 1966171168
  %v9929 = vunpack.c.0.s8 %v9928
  %v9930 = vlaneseq
  %v9931 = vshrl.u32 %v9930, 7
  %v9932 = vsub.s32 %v9929, %v9931
  %v9933 = vrot.slane %v9917, %v9932
  %v9935 = vunpack.c.l.s4 1966171168
  %v9936 = vunpack.c.0.s8 %v9935
  %v9937 = vlaneseq
  %v9938 = vshrl.u32 %v9937, 7
  %v9939 = vsub.s32 %v9936, %v9938
  %v9940 = vrot.slane %v9924, %v9939
  %v9942 = vunpack.c.l.s4 1966171168
  %v9943 = vunpack.c.0.s8 %v9942
  %v9944 = vlaneseq
  %v9945 = vshrl.u32 %v9944, 7
  %v9946 = vsub.s32 %v9943, %v9945
  %v9947 = vrot.slane %v9925, %v9946
  %v9949 = vunpack.c.l.s4 1966171168
  %v9950 = vunpack.c.0.s8 %v9949
  %v9951 = vlaneseq
  %v9952 = vshrl.u32 %v9951, 7
  %v9953 = vsub.s32 %v9950, %v9952
  %v9954 = vrot.slane %v9926, %v9953
  %v9955 = vcombine.high %v9933, %v9933
  %v9956 = vcombine.high %v9940, %v9940
  %v9957 = vcombine.high %v9947, %v9947
  %v9958 = vcombine.high %v9954, %v9954
  %v9959 = vcombine.high %v9531, %v9531
  %v9961 = vunpack.c.l.s4 1966171168
  %v9962 = vunpack.c.0.s8 %v9961
  %v9963 = vlaneseq
  %v9964 = vshrl.u32 %v9963, 7
  %v9965 = vsub.s32 %v9962, %v9964
  %v9966 = vrot.slane %v9531, %v9965
  %v9968 = vunpack.c.l.s4 1966171168
  %v9969 = vunpack.c.0.s8 %v9968
  %v9970 = vlaneseq
  %v9971 = vshrl.u32 %v9970, 7
  %v9972 = vsub.s32 %v9969, %v9971
  %v9973 = vrot.slane %v9959, %v9972
  %v9974 = vcombine.high %v9966, %v9966
  %v9975 = vcombine.high %v9973, %v9973
  %v9977 = vunpack.c.l.s4 1966171168
  %v9978 = vunpack.c.0.s8 %v9977
  %v9979 = vlaneseq
  %v9980 = vshrl.u32 %v9979, 7
  %v9981 = vsub.s32 %v9978, %v9980
  %v9982 = vrot.slane %v9966, %v9981
  %v9984 = vunpack.c.l.s4 1966171168
  %v9985 = vunpack.c.0.s8 %v9984
  %v9986 = vlaneseq
  %v9987 = vshrl.u32 %v9986, 7
  %v9988 = vsub.s32 %v9985, %v9987
  %v9989 = vrot.slane %v9973, %v9988
  %v9991 = vunpack.c.l.s4 1966171168
  %v9992 = vunpack.c.0.s8 %v9991
  %v9993 = vlaneseq
  %v9994 = vshrl.u32 %v9993, 7
  %v9995 = vsub.s32 %v9992, %v9994
  %v9996 = vrot.slane %v9974, %v9995
  %v9998 = vunpack.c.l.s4 1966171168
  %v9999 = vunpack.c.0.s8 %v9998
  %v10000 = vlaneseq
  %v10001 = vshrl.u32 %v10000, 7
  %v10002 = vsub.s32 %v9999, %v10001
  %v10003 = vrot.slane %v9975, %v10002
  %v10004 = vcombine.high %v9982, %v9982
  %v10005 = vcombine.high %v9989, %v9989
  %v10006 = vcombine.high %v9996, %v9996
  %v10007 = vcombine.high %v10003, %v10003
  %v10008 = vcombine.high %v9534, %v9534
  %v10010 = vunpack.c.l.s4 1966171168
  %v10011 = vunpack.c.0.s8 %v10010
  %v10012 = vlaneseq
  %v10013 = vshrl.u32 %v10012, 7
  %v10014 = vsub.s32 %v10011, %v10013
  %v10015 = vrot.slane %v9534, %v10014
  %v10017 = vunpack.c.l.s4 1966171168
  %v10018 = vunpack.c.0.s8 %v10017
  %v10019 = vlaneseq
  %v10020 = vshrl.u32 %v10019, 7
  %v10021 = vsub.s32 %v10018, %v10020
  %v10022 = vrot.slane %v10008, %v10021
  %v10023 = vcombine.high %v10015, %v10015
  %v10024 = vcombine.high %v10022, %v10022
  %v10026 = vunpack.c.l.s4 1966171168
  %v10027 = vunpack.c.0.s8 %v10026
  %v10028 = vlaneseq
  %v10029 = vshrl.u32 %v10028, 7
  %v10030 = vsub.s32 %v10027, %v10029
  %v10031 = vrot.slane %v10015, %v10030
  %v10033 = vunpack.c.l.s4 1966171168
  %v10034 = vunpack.c.0.s8 %v10033
  %v10035 = vlaneseq
  %v10036 = vshrl.u32 %v10035, 7
  %v10037 = vsub.s32 %v10034, %v10036
  %v10038 = vrot.slane %v10022, %v10037
  %v10040 = vunpack.c.l.s4 1966171168
  %v10041 = vunpack.c.0.s8 %v10040
  %v10042 = vlaneseq
  %v10043 = vshrl.u32 %v10042, 7
  %v10044 = vsub.s32 %v10041, %v10043
  %v10045 = vrot.slane %v10023, %v10044
  %v10047 = vunpack.c.l.s4 1966171168
  %v10048 = vunpack.c.0.s8 %v10047
  %v10049 = vlaneseq
  %v10050 = vshrl.u32 %v10049, 7
  %v10051 = vsub.s32 %v10048, %v10050
  %v10052 = vrot.slane %v10024, %v10051
  %v10053 = vcombine.high %v10031, %v10031
  %v10054 = vcombine.high %v10038, %v10038
  %v10055 = vcombine.high %v10045, %v10045
  %v10056 = vcombine.high %v10052, %v10052
  %v10057 = vcombine.high %v9539, %v9539
  %v10059 = vunpack.c.l.s4 1966171168
  %v10060 = vunpack.c.0.s8 %v10059
  %v10061 = vlaneseq
  %v10062 = vshrl.u32 %v10061, 7
  %v10063 = vsub.s32 %v10060, %v10062
  %v10064 = vrot.slane %v9539, %v10063
  %v10066 = vunpack.c.l.s4 1966171168
  %v10067 = vunpack.c.0.s8 %v10066
  %v10068 = vlaneseq
  %v10069 = vshrl.u32 %v10068, 7
  %v10070 = vsub.s32 %v10067, %v10069
  %v10071 = vrot.slane %v10057, %v10070
  %v10072 = vcombine.high %v10064, %v10064
  %v10073 = vcombine.high %v10071, %v10071
  %v10075 = vunpack.c.l.s4 1966171168
  %v10076 = vunpack.c.0.s8 %v10075
  %v10077 = vlaneseq
  %v10078 = vshrl.u32 %v10077, 7
  %v10079 = vsub.s32 %v10076, %v10078
  %v10080 = vrot.slane %v10064, %v10079
  %v10082 = vunpack.c.l.s4 1966171168
  %v10083 = vunpack.c.0.s8 %v10082
  %v10084 = vlaneseq
  %v10085 = vshrl.u32 %v10084, 7
  %v10086 = vsub.s32 %v10083, %v10085
  %v10087 = vrot.slane %v10071, %v10086
  %v10089 = vunpack.c.l.s4 1966171168
  %v10090 = vunpack.c.0.s8 %v10089
  %v10091 = vlaneseq
  %v10092 = vshrl.u32 %v10091, 7
  %v10093 = vsub.s32 %v10090, %v10092
  %v10094 = vrot.slane %v10072, %v10093
  %v10096 = vunpack.c.l.s4 1966171168
  %v10097 = vunpack.c.0.s8 %v10096
  %v10098 = vlaneseq
  %v10099 = vshrl.u32 %v10098, 7
  %v10100 = vsub.s32 %v10097, %v10099
  %v10101 = vrot.slane %v10073, %v10100
  %v10102 = vcombine.high %v10080, %v10080
  %v10103 = vcombine.high %v10087, %v10087
  %v10104 = vcombine.high %v10094, %v10094
  %v10105 = vcombine.high %v10101, %v10101
  %v10106 = vcombine.high %v9542, %v9542
  %v10108 = vunpack.c.l.s4 1966171168
  %v10109 = vunpack.c.0.s8 %v10108
  %v10110 = vlaneseq
  %v10111 = vshrl.u32 %v10110, 7
  %v10112 = vsub.s32 %v10109, %v10111
  %v10113 = vrot.slane %v9542, %v10112
  %v10115 = vunpack.c.l.s4 1966171168
  %v10116 = vunpack.c.0.s8 %v10115
  %v10117 = vlaneseq
  %v10118 = vshrl.u32 %v10117, 7
  %v10119 = vsub.s32 %v10116, %v10118
  %v10120 = vrot.slane %v10106, %v10119
  %v10121 = vcombine.high %v10113, %v10113
  %v10122 = vcombine.high %v10120, %v10120
  %v10124 = vunpack.c.l.s4 1966171168
  %v10125 = vunpack.c.0.s8 %v10124
  %v10126 = vlaneseq
  %v10127 = vshrl.u32 %v10126, 7
  %v10128 = vsub.s32 %v10125, %v10127
  %v10129 = vrot.slane %v10113, %v10128
  %v10131 = vunpack.c.l.s4 1966171168
  %v10132 = vunpack.c.0.s8 %v10131
  %v10133 = vlaneseq
  %v10134 = vshrl.u32 %v10133, 7
  %v10135 = vsub.s32 %v10132, %v10134
  %v10136 = vrot.slane %v10120, %v10135
  %v10138 = vunpack.c.l.s4 1966171168
  %v10139 = vunpack.c.0.s8 %v10138
  %v10140 = vlaneseq
  %v10141 = vshrl.u32 %v10140, 7
  %v10142 = vsub.s32 %v10139, %v10141
  %v10143 = vrot.slane %v10121, %v10142
  %v10145 = vunpack.c.l.s4 1966171168
  %v10146 = vunpack.c.0.s8 %v10145
  %v10147 = vlaneseq
  %v10148 = vshrl.u32 %v10147, 7
  %v10149 = vsub.s32 %v10146, %v10148
  %v10150 = vrot.slane %v10122, %v10149
  %v10151 = vcombine.high %v10129, %v10129
  %v10152 = vcombine.high %v10136, %v10136
  %v10153 = vcombine.high %v10143, %v10143
  %v10154 = vcombine.high %v10150, %v10150
  %v10155 = vcombine.high %v9547, %v9547
  %v10157 = vunpack.c.l.s4 1966171168
  %v10158 = vunpack.c.0.s8 %v10157
  %v10159 = vlaneseq
  %v10160 = vshrl.u32 %v10159, 7
  %v10161 = vsub.s32 %v10158, %v10160
  %v10162 = vrot.slane %v9547, %v10161
  %v10164 = vunpack.c.l.s4 1966171168
  %v10165 = vunpack.c.0.s8 %v10164
  %v10166 = vlaneseq
  %v10167 = vshrl.u32 %v10166, 7
  %v10168 = vsub.s32 %v10165, %v10167
  %v10169 = vrot.slane %v10155, %v10168
  %v10170 = vcombine.high %v10162, %v10162
  %v10171 = vcombine.high %v10169, %v10169
  %v10173 = vunpack.c.l.s4 1966171168
  %v10174 = vunpack.c.0.s8 %v10173
  %v10175 = vlaneseq
  %v10176 = vshrl.u32 %v10175, 7
  %v10177 = vsub.s32 %v10174, %v10176
  %v10178 = vrot.slane %v10162, %v10177
  %v10180 = vunpack.c.l.s4 1966171168
  %v10181 = vunpack.c.0.s8 %v10180
  %v10182 = vlaneseq
  %v10183 = vshrl.u32 %v10182, 7
  %v10184 = vsub.s32 %v10181, %v10183
  %v10185 = vrot.slane %v10169, %v10184
  %v10187 = vunpack.c.l.s4 1966171168
  %v10188 = vunpack.c.0.s8 %v10187
  %v10189 = vlaneseq
  %v10190 = vshrl.u32 %v10189, 7
  %v10191 = vsub.s32 %v10188, %v10190
  %v10192 = vrot.slane %v10170, %v10191
  %v10194 = vunpack.c.l.s4 1966171168
  %v10195 = vunpack.c.0.s8 %v10194
  %v10196 = vlaneseq
  %v10197 = vshrl.u32 %v10196, 7
  %v10198 = vsub.s32 %v10195, %v10197
  %v10199 = vrot.slane %v10171, %v10198
  %v10200 = vcombine.high %v10178, %v10178
  %v10201 = vcombine.high %v10185, %v10185
  %v10202 = vcombine.high %v10192, %v10192
  %v10203 = vcombine.high %v10199, %v10199
  %v10204 = vcombine.high %v9550, %v9550
  %v10206 = vunpack.c.l.s4 1966171168
  %v10207 = vunpack.c.0.s8 %v10206
  %v10208 = vlaneseq
  %v10209 = vshrl.u32 %v10208, 7
  %v10210 = vsub.s32 %v10207, %v10209
  %v10211 = vrot.slane %v9550, %v10210
  %v10213 = vunpack.c.l.s4 1966171168
  %v10214 = vunpack.c.0.s8 %v10213
  %v10215 = vlaneseq
  %v10216 = vshrl.u32 %v10215, 7
  %v10217 = vsub.s32 %v10214, %v10216
  %v10218 = vrot.slane %v10204, %v10217
  %v10219 = vcombine.high %v10211, %v10211
  %v10220 = vcombine.high %v10218, %v10218
  %v10222 = vunpack.c.l.s4 1966171168
  %v10223 = vunpack.c.0.s8 %v10222
  %v10224 = vlaneseq
  %v10225 = vshrl.u32 %v10224, 7
  %v10226 = vsub.s32 %v10223, %v10225
  %v10227 = vrot.slane %v10211, %v10226
  %v10229 = vunpack.c.l.s4 1966171168
  %v10230 = vunpack.c.0.s8 %v10229
  %v10231 = vlaneseq
  %v10232 = vshrl.u32 %v10231, 7
  %v10233 = vsub.s32 %v10230, %v10232
  %v10234 = vrot.slane %v10218, %v10233
  %v10236 = vunpack.c.l.s4 1966171168
  %v10237 = vunpack.c.0.s8 %v10236
  %v10238 = vlaneseq
  %v10239 = vshrl.u32 %v10238, 7
  %v10240 = vsub.s32 %v10237, %v10239
  %v10241 = vrot.slane %v10219, %v10240
  %v10243 = vunpack.c.l.s4 1966171168
  %v10244 = vunpack.c.0.s8 %v10243
  %v10245 = vlaneseq
  %v10246 = vshrl.u32 %v10245, 7
  %v10247 = vsub.s32 %v10244, %v10246
  %v10248 = vrot.slane %v10220, %v10247
  %v10249 = vcombine.high %v10227, %v10227
  %v10250 = vcombine.high %v10234, %v10234
  %v10251 = vcombine.high %v10241, %v10241
  %v10252 = vcombine.high %v10248, %v10248
  %v10253 = vcombine.low %v9590, %v9604
  %v10254 = vcombine.low %v9612, %v9614
  %v10255 = vcombine.low %v9597, %v9611
  %v10257 = vunpack.c.l.s4 1966171168
  %v10258 = vunpack.c.0.s8 %v10257
  %v10259 = vlaneseq
  %v10260 = vshrl.u32 %v10259, 7
  %v10261 = vsub.s32 %v10258, %v10260
  %v10262 = vrot.slane %v10253, %v10261
  %v10264 = vunpack.c.l.s4 1966171168
  %v10265 = vunpack.c.0.s8 %v10264
  %v10266 = vlaneseq
  %v10267 = vshrl.u32 %v10266, 7
  %v10268 = vsub.s32 %v10265, %v10267
  %v10269 = vrot.slane %v10254, %v10268
  %v10271 = vunpack.c.l.s4 1966171168
  %v10272 = vunpack.c.0.s8 %v10271
  %v10273 = vlaneseq
  %v10274 = vshrl.u32 %v10273, 7
  %v10275 = vsub.s32 %v10272, %v10274
  %v10276 = vrot.slane %v10255, %v10275
  %v10278 = vunpack.c.l.s4 1966171168
  %v10279 = vunpack.c.0.s8 %v10278
  %v10280 = vlaneseq
  %v10281 = vshrl.u32 %v10280, 7
  %v10282 = vsub.s32 %v10279, %v10281
  %v10283 = vrot.slane %v9613, %v10282
  %v10284 = vcombine.low %v10262, %v10269
  %v10285 = vcombine.low %v10276, %v10283
  %v10287 = vunpack.c.l.s4 1966171168
  %v10288 = vunpack.c.0.s8 %v10287
  %v10289 = vlaneseq
  %v10290 = vshrl.u32 %v10289, 7
  %v10291 = vsub.s32 %v10288, %v10290
  %v10292 = vrot.slane %v10284, %v10291
  %v10294 = vunpack.c.l.s4 1966171168
  %v10295 = vunpack.c.0.s8 %v10294
  %v10296 = vlaneseq
  %v10297 = vshrl.u32 %v10296, 7
  %v10298 = vsub.s32 %v10295, %v10297
  %v10299 = vrot.slane %v10285, %v10298
  %v10300 = vcombine.low %v10292, %v10299
  %v10301 = vcombine.low %v9615, %v9639
  %v10302 = vcombine.low %v9653, %v9661
  %v10303 = vcombine.low %v9663, %v9646
  %v10305 = vunpack.c.l.s4 1966171168
  %v10306 = vunpack.c.0.s8 %v10305
  %v10307 = vlaneseq
  %v10308 = vshrl.u32 %v10307, 7
  %v10309 = vsub.s32 %v10306, %v10308
  %v10310 = vrot.slane %v10301, %v10309
  %v10312 = vunpack.c.l.s4 1966171168
  %v10313 = vunpack.c.0.s8 %v10312
  %v10314 = vlaneseq
  %v10315 = vshrl.u32 %v10314, 7
  %v10316 = vsub.s32 %v10313, %v10315
  %v10317 = vrot.slane %v10302, %v10316
  %v10319 = vunpack.c.l.s4 1966171168
  %v10320 = vunpack.c.0.s8 %v10319
  %v10321 = vlaneseq
  %v10322 = vshrl.u32 %v10321, 7
  %v10323 = vsub.s32 %v10320, %v10322
  %v10324 = vrot.slane %v10303, %v10323
  %v10326 = vunpack.c.l.s4 1966171168
  %v10327 = vunpack.c.0.s8 %v10326
  %v10328 = vlaneseq
  %v10329 = vshrl.u32 %v10328, 7
  %v10330 = vsub.s32 %v10327, %v10329
  %v10331 = vrot.slane %v9660, %v10330
  %v10332 = vcombine.low %v10310, %v10317
  %v10333 = vcombine.low %v10324, %v10331
  %v10335 = vunpack.c.l.s4 1966171168
  %v10336 = vunpack.c.0.s8 %v10335
  %v10337 = vlaneseq
  %v10338 = vshrl.u32 %v10337, 7
  %v10339 = vsub.s32 %v10336, %v10338
  %v10340 = vrot.slane %v10332, %v10339
  %v10342 = vunpack.c.l.s4 1966171168
  %v10343 = vunpack.c.0.s8 %v10342
  %v10344 = vlaneseq
  %v10345 = vshrl.u32 %v10344, 7
  %v10346 = vsub.s32 %v10343, %v10345
  %v10347 = vrot.slane %v10333, %v10346
  %v10348 = vcombine.low %v10340, %v10347
  %v10349 = vcombine.low %v9662, %v9664
  %v10350 = vcombine.low %v9688, %v9702
  %v10351 = vcombine.low %v9710, %v9712
  %v10353 = vunpack.c.l.s4 1966171168
  %v10354 = vunpack.c.0.s8 %v10353
  %v10355 = vlaneseq
  %v10356 = vshrl.u32 %v10355, 7
  %v10357 = vsub.s32 %v10354, %v10356
  %v10358 = vrot.slane %v10349, %v10357
  %v10360 = vunpack.c.l.s4 1966171168
  %v10361 = vunpack.c.0.s8 %v10360
  %v10362 = vlaneseq
  %v10363 = vshrl.u32 %v10362, 7
  %v10364 = vsub.s32 %v10361, %v10363
  %v10365 = vrot.slane %v10350, %v10364
  %v10367 = vunpack.c.l.s4 1966171168
  %v10368 = vunpack.c.0.s8 %v10367
  %v10369 = vlaneseq
  %v10370 = vshrl.u32 %v10369, 7
  %v10371 = vsub.s32 %v10368, %v10370
  %v10372 = vrot.slane %v10351, %v10371
  %v10374 = vunpack.c.l.s4 1966171168
  %v10375 = vunpack.c.0.s8 %v10374
  %v10376 = vlaneseq
  %v10377 = vshrl.u32 %v10376, 7
  %v10378 = vsub.s32 %v10375, %v10377
  %v10379 = vrot.slane %v9695, %v10378
  %v10380 = vcombine.low %v10358, %v10365
  %v10381 = vcombine.low %v10372, %v10379
  %v10383 = vunpack.c.l.s4 1966171168
  %v10384 = vunpack.c.0.s8 %v10383
  %v10385 = vlaneseq
  %v10386 = vshrl.u32 %v10385, 7
  %v10387 = vsub.s32 %v10384, %v10386
  %v10388 = vrot.slane %v10380, %v10387
  %v10390 = vunpack.c.l.s4 1966171168
  %v10391 = vunpack.c.0.s8 %v10390
  %v10392 = vlaneseq
  %v10393 = vshrl.u32 %v10392, 7
  %v10394 = vsub.s32 %v10391, %v10393
  %v10395 = vrot.slane %v10381, %v10394
  %v10396 = vcombine.low %v10388, %v10395
  %v10397 = vcombine.low %v9709, %v9711
  %v10398 = vcombine.low %v9713, %v9737
  %v10399 = vcombine.low %v9751, %v9759
  %v10401 = vunpack.c.l.s4 1966171168
  %v10402 = vunpack.c.0.s8 %v10401
  %v10403 = vlaneseq
  %v10404 = vshrl.u32 %v10403, 7
  %v10405 = vsub.s32 %v10402, %v10404
  %v10406 = vrot.slane %v10397, %v10405
  %v10408 = vunpack.c.l.s4 1966171168
  %v10409 = vunpack.c.0.s8 %v10408
  %v10410 = vlaneseq
  %v10411 = vshrl.u32 %v10410, 7
  %v10412 = vsub.s32 %v10409, %v10411
  %v10413 = vrot.slane %v10398, %v10412
  %v10415 = vunpack.c.l.s4 1966171168
  %v10416 = vunpack.c.0.s8 %v10415
  %v10417 = vlaneseq
  %v10418 = vshrl.u32 %v10417, 7
  %v10419 = vsub.s32 %v10416, %v10418
  %v10420 = vrot.slane %v10399, %v10419
  %v10422 = vunpack.c.l.s4 1966171168
  %v10423 = vunpack.c.0.s8 %v10422
  %v10424 = vlaneseq
  %v10425 = vshrl.u32 %v10424, 7
  %v10426 = vsub.s32 %v10423, %v10425
  %v10427 = vrot.slane %v9761, %v10426
  %v10428 = vcombine.low %v10406, %v10413
  %v10429 = vcombine.low %v10420, %v10427
  %v10431 = vunpack.c.l.s4 1966171168
  %v10432 = vunpack.c.0.s8 %v10431
  %v10433 = vlaneseq
  %v10434 = vshrl.u32 %v10433, 7
  %v10435 = vsub.s32 %v10432, %v10434
  %v10436 = vrot.slane %v10428, %v10435
  %v10438 = vunpack.c.l.s4 1966171168
  %v10439 = vunpack.c.0.s8 %v10438
  %v10440 = vlaneseq
  %v10441 = vshrl.u32 %v10440, 7
  %v10442 = vsub.s32 %v10439, %v10441
  %v10443 = vrot.slane %v10429, %v10442
  %v10444 = vcombine.low %v10436, %v10443
  %v10445 = vcombine.low %v9744, %v9758
  %v10446 = vcombine.low %v9760, %v9762
  %v10447 = vcombine.low %v9786, %v9800
  %v10449 = vunpack.c.l.s4 1966171168
  %v10450 = vunpack.c.0.s8 %v10449
  %v10451 = vlaneseq
  %v10452 = vshrl.u32 %v10451, 7
  %v10453 = vsub.s32 %v10450, %v10452
  %v10454 = vrot.slane %v10445, %v10453
  %v10456 = vunpack.c.l.s4 1966171168
  %v10457 = vunpack.c.0.s8 %v10456
  %v10458 = vlaneseq
  %v10459 = vshrl.u32 %v10458, 7
  %v10460 = vsub.s32 %v10457, %v10459
  %v10461 = vrot.slane %v10446, %v10460
  %v10463 = vunpack.c.l.s4 1966171168
  %v10464 = vunpack.c.0.s8 %v10463
  %v10465 = vlaneseq
  %v10466 = vshrl.u32 %v10465, 7
  %v10467 = vsub.s32 %v10464, %v10466
  %v10468 = vrot.slane %v10447, %v10467
  %v10470 = vunpack.c.l.s4 1966171168
  %v10471 = vunpack.c.0.s8 %v10470
  %v10472 = vlaneseq
  %v10473 = vshrl.u32 %v10472, 7
  %v10474 = vsub.s32 %v10471, %v10473
  %v10475 = vrot.slane %v9808, %v10474
  %v10476 = vcombine.low %v10454, %v10461
  %v10477 = vcombine.low %v10468, %v10475
  %v10479 = vunpack.c.l.s4 1966171168
  %v10480 = vunpack.c.0.s8 %v10479
  %v10481 = vlaneseq
  %v10482 = vshrl.u32 %v10481, 7
  %v10483 = vsub.s32 %v10480, %v10482
  %v10484 = vrot.slane %v10476, %v10483
  %v10486 = vunpack.c.l.s4 1966171168
  %v10487 = vunpack.c.0.s8 %v10486
  %v10488 = vlaneseq
  %v10489 = vshrl.u32 %v10488, 7
  %v10490 = vsub.s32 %v10487, %v10489
  %v10491 = vrot.slane %v10477, %v10490
  %v10492 = vcombine.low %v10484, %v10491
  %v10493 = vcombine.low %v9810, %v9793
  %v10494 = vcombine.low %v9807, %v9809
  %v10495 = vcombine.low %v9811, %v9835
  %v10497 = vunpack.c.l.s4 1966171168
  %v10498 = vunpack.c.0.s8 %v10497
  %v10499 = vlaneseq
  %v10500 = vshrl.u32 %v10499, 7
  %v10501 = vsub.s32 %v10498, %v10500
  %v10502 = vrot.slane %v10493, %v10501
  %v10504 = vunpack.c.l.s4 1966171168
  %v10505 = vunpack.c.0.s8 %v10504
  %v10506 = vlaneseq
  %v10507 = vshrl.u32 %v10506, 7
  %v10508 = vsub.s32 %v10505, %v10507
  %v10509 = vrot.slane %v10494, %v10508
  %v10511 = vunpack.c.l.s4 1966171168
  %v10512 = vunpack.c.0.s8 %v10511
  %v10513 = vlaneseq
  %v10514 = vshrl.u32 %v10513, 7
  %v10515 = vsub.s32 %v10512, %v10514
  %v10516 = vrot.slane %v10495, %v10515
  %v10518 = vunpack.c.l.s4 1966171168
  %v10519 = vunpack.c.0.s8 %v10518
  %v10520 = vlaneseq
  %v10521 = vshrl.u32 %v10520, 7
  %v10522 = vsub.s32 %v10519, %v10521
  %v10523 = vrot.slane %v9849, %v10522
  %v10524 = vcombine.low %v10502, %v10509
  %v10525 = vcombine.low %v10516, %v10523
  %v10527 = vunpack.c.l.s4 1966171168
  %v10528 = vunpack.c.0.s8 %v10527
  %v10529 = vlaneseq
  %v10530 = vshrl.u32 %v10529, 7
  %v10531 = vsub.s32 %v10528, %v10530
  %v10532 = vrot.slane %v10524, %v10531
  %v10534 = vunpack.c.l.s4 1966171168
  %v10535 = vunpack.c.0.s8 %v10534
  %v10536 = vlaneseq
  %v10537 = vshrl.u32 %v10536, 7
  %v10538 = vsub.s32 %v10535, %v10537
  %v10539 = vrot.slane %v10525, %v10538
  %v10540 = vcombine.low %v10532, %v10539
  %v10541 = vcombine.low %v9857, %v9859
  %v10542 = vcombine.low %v9842, %v9856
  %v10543 = vcombine.low %v9858, %v9860
  %v10545 = vunpack.c.l.s4 1966171168
  %v10546 = vunpack.c.0.s8 %v10545
  %v10547 = vlaneseq
  %v10548 = vshrl.u32 %v10547, 7
  %v10549 = vsub.s32 %v10546, %v10548
  %v10550 = vrot.slane %v10541, %v10549
  %v10552 = vunpack.c.l.s4 1966171168
  %v10553 = vunpack.c.0.s8 %v10552
  %v10554 = vlaneseq
  %v10555 = vshrl.u32 %v10554, 7
  %v10556 = vsub.s32 %v10553, %v10555
  %v10557 = vrot.slane %v10542, %v10556
  %v10559 = vunpack.c.l.s4 1966171168
  %v10560 = vunpack.c.0.s8 %v10559
  %v10561 = vlaneseq
  %v10562 = vshrl.u32 %v10561, 7
  %v10563 = vsub.s32 %v10560, %v10562
  %v10564 = vrot.slane %v10543, %v10563
  %v10566 = vunpack.c.l.s4 1966171168
  %v10567 = vunpack.c.0.s8 %v10566
  %v10568 = vlaneseq
  %v10569 = vshrl.u32 %v10568, 7
  %v10570 = vsub.s32 %v10567, %v10569
  %v10571 = vrot.slane %v9884, %v10570
  %v10572 = vcombine.low %v10550, %v10557
  %v10573 = vcombine.low %v10564, %v10571
  %v10575 = vunpack.c.l.s4 1966171168
  %v10576 = vunpack.c.0.s8 %v10575
  %v10577 = vlaneseq
  %v10578 = vshrl.u32 %v10577, 7
  %v10579 = vsub.s32 %v10576, %v10578
  %v10580 = vrot.slane %v10572, %v10579
  %v10582 = vunpack.c.l.s4 1966171168
  %v10583 = vunpack.c.0.s8 %v10582
  %v10584 = vlaneseq
  %v10585 = vshrl.u32 %v10584, 7
  %v10586 = vsub.s32 %v10583, %v10585
  %v10587 = vrot.slane %v10573, %v10586
  %v10588 = vcombine.low %v10580, %v10587
  %v10589 = vcombine.low %v9898, %v9906
  %v10590 = vcombine.low %v9908, %v9891
  %v10591 = vcombine.low %v9905, %v9907
  %v10593 = vunpack.c.l.s4 1966171168
  %v10594 = vunpack.c.0.s8 %v10593
  %v10595 = vlaneseq
  %v10596 = vshrl.u32 %v10595, 7
  %v10597 = vsub.s32 %v10594, %v10596
  %v10598 = vrot.slane %v10589, %v10597
  %v10600 = vunpack.c.l.s4 1966171168
  %v10601 = vunpack.c.0.s8 %v10600
  %v10602 = vlaneseq
  %v10603 = vshrl.u32 %v10602, 7
  %v10604 = vsub.s32 %v10601, %v10603
  %v10605 = vrot.slane %v10590, %v10604
  %v10607 = vunpack.c.l.s4 1966171168
  %v10608 = vunpack.c.0.s8 %v10607
  %v10609 = vlaneseq
  %v10610 = vshrl.u32 %v10609, 7
  %v10611 = vsub.s32 %v10608, %v10610
  %v10612 = vrot.slane %v10591, %v10611
  %v10614 = vunpack.c.l.s4 1966171168
  %v10615 = vunpack.c.0.s8 %v10614
  %v10616 = vlaneseq
  %v10617 = vshrl.u32 %v10616, 7
  %v10618 = vsub.s32 %v10615, %v10617
  %v10619 = vrot.slane %v9909, %v10618
  %v10620 = vcombine.low %v10598, %v10605
  %v10621 = vcombine.low %v10612, %v10619
  %v10623 = vunpack.c.l.s4 1966171168
  %v10624 = vunpack.c.0.s8 %v10623
  %v10625 = vlaneseq
  %v10626 = vshrl.u32 %v10625, 7
  %v10627 = vsub.s32 %v10624, %v10626
  %v10628 = vrot.slane %v10620, %v10627
  %v10630 = vunpack.c.l.s4 1966171168
  %v10631 = vunpack.c.0.s8 %v10630
  %v10632 = vlaneseq
  %v10633 = vshrl.u32 %v10632, 7
  %v10634 = vsub.s32 %v10631, %v10633
  %v10635 = vrot.slane %v10621, %v10634
  %v10636 = vcombine.low %v10628, %v10635
  %v10637 = vcombine.low %v9933, %v9947
  %v10638 = vcombine.low %v9955, %v9957
  %v10639 = vcombine.low %v9940, %v9954
  %v10641 = vunpack.c.l.s4 1966171168
  %v10642 = vunpack.c.0.s8 %v10641
  %v10643 = vlaneseq
  %v10644 = vshrl.u32 %v10643, 7
  %v10645 = vsub.s32 %v10642, %v10644
  %v10646 = vrot.slane %v10637, %v10645
  %v10648 = vunpack.c.l.s4 1966171168
  %v10649 = vunpack.c.0.s8 %v10648
  %v10650 = vlaneseq
  %v10651 = vshrl.u32 %v10650, 7
  %v10652 = vsub.s32 %v10649, %v10651
  %v10653 = vrot.slane %v10638, %v10652
  %v10655 = vunpack.c.l.s4 1966171168
  %v10656 = vunpack.c.0.s8 %v10655
  %v10657 = vlaneseq
  %v10658 = vshrl.u32 %v10657, 7
  %v10659 = vsub.s32 %v10656, %v10658
  %v10660 = vrot.slane %v10639, %v10659
  %v10662 = vunpack.c.l.s4 1966171168
  %v10663 = vunpack.c.0.s8 %v10662
  %v10664 = vlaneseq
  %v10665 = vshrl.u32 %v10664, 7
  %v10666 = vsub.s32 %v10663, %v10665
  %v10667 = vrot.slane %v9956, %v10666
  %v10668 = vcombine.low %v10646, %v10653
  %v10669 = vcombine.low %v10660, %v10667
  %v10671 = vunpack.c.l.s4 1966171168
  %v10672 = vunpack.c.0.s8 %v10671
  %v10673 = vlaneseq
  %v10674 = vshrl.u32 %v10673, 7
  %v10675 = vsub.s32 %v10672, %v10674
  %v10676 = vrot.slane %v10668, %v10675
  %v10678 = vunpack.c.l.s4 1966171168
  %v10679 = vunpack.c.0.s8 %v10678
  %v10680 = vlaneseq
  %v10681 = vshrl.u32 %v10680, 7
  %v10682 = vsub.s32 %v10679, %v10681
  %v10683 = vrot.slane %v10669, %v10682
  %v10684 = vcombine.low %v10676, %v10683
  %v10685 = vcombine.low %v9958, %v9982
  %v10686 = vcombine.low %v9996, %v10004
  %v10687 = vcombine.low %v10006, %v9989
  %v10689 = vunpack.c.l.s4 1966171168
  %v10690 = vunpack.c.0.s8 %v10689
  %v10691 = vlaneseq
  %v10692 = vshrl.u32 %v10691, 7
  %v10693 = vsub.s32 %v10690, %v10692
  %v10694 = vrot.slane %v10685, %v10693
  %v10696 = vunpack.c.l.s4 1966171168
  %v10697 = vunpack.c.0.s8 %v10696
  %v10698 = vlaneseq
  %v10699 = vshrl.u32 %v10698, 7
  %v10700 = vsub.s32 %v10697, %v10699
  %v10701 = vrot.slane %v10686, %v10700
  %v10703 = vunpack.c.l.s4 1966171168
  %v10704 = vunpack.c.0.s8 %v10703
  %v10705 = vlaneseq
  %v10706 = vshrl.u32 %v10705, 7
  %v10707 = vsub.s32 %v10704, %v10706
  %v10708 = vrot.slane %v10687, %v10707
  %v10710 = vunpack.c.l.s4 1966171168
  %v10711 = vunpack.c.0.s8 %v10710
  %v10712 = vlaneseq
  %v10713 = vshrl.u32 %v10712, 7
  %v10714 = vsub.s32 %v10711, %v10713
  %v10715 = vrot.slane %v10003, %v10714
  %v10716 = vcombine.low %v10694, %v10701
  %v10717 = vcombine.low %v10708, %v10715
  %v10719 = vunpack.c.l.s4 1966171168
  %v10720 = vunpack.c.0.s8 %v10719
  %v10721 = vlaneseq
  %v10722 = vshrl.u32 %v10721, 7
  %v10723 = vsub.s32 %v10720, %v10722
  %v10724 = vrot.slane %v10716, %v10723
  %v10726 = vunpack.c.l.s4 1966171168
  %v10727 = vunpack.c.0.s8 %v10726
  %v10728 = vlaneseq
  %v10729 = vshrl.u32 %v10728, 7
  %v10730 = vsub.s32 %v10727, %v10729
  %v10731 = vrot.slane %v10717, %v10730
  %v10732 = vcombine.low %v10724, %v10731
  %v10733 = vcombine.low %v10005, %v10007
  %v10734 = vcombine.low %v10031, %v10045
  %v10735 = vcombine.low %v10053, %v10055
  %v10737 = vunpack.c.l.s4 1966171168
  %v10738 = vunpack.c.0.s8 %v10737
  %v10739 = vlaneseq
  %v10740 = vshrl.u32 %v10739, 7
  %v10741 = vsub.s32 %v10738, %v10740
  %v10742 = vrot.slane %v10733, %v10741
  %v10744 = vunpack.c.l.s4 1966171168
  %v10745 = vunpack.c.0.s8 %v10744
  %v10746 = vlaneseq
  %v10747 = vshrl.u32 %v10746, 7
  %v10748 = vsub.s32 %v10745, %v10747
  %v10749 = vrot.slane %v10734, %v10748
  %v10751 = vunpack.c.l.s4 1966171168
  %v10752 = vunpack.c.0.s8 %v10751
  %v10753 = vlaneseq
  %v10754 = vshrl.u32 %v10753, 7
  %v10755 = vsub.s32 %v10752, %v10754
  %v10756 = vrot.slane %v10735, %v10755
  %v10758 = vunpack.c.l.s4 1966171168
  %v10759 = vunpack.c.0.s8 %v10758
  %v10760 = vlaneseq
  %v10761 = vshrl.u32 %v10760, 7
  %v10762 = vsub.s32 %v10759, %v10761
  %v10763 = vrot.slane %v10038, %v10762
  %v10764 = vcombine.low %v10742, %v10749
  %v10765 = vcombine.low %v10756, %v10763
  %v10767 = vunpack.c.l.s4 1966171168
  %v10768 = vunpack.c.0.s8 %v10767
  %v10769 = vlaneseq
  %v10770 = vshrl.u32 %v10769, 7
  %v10771 = vsub.s32 %v10768, %v10770
  %v10772 = vrot.slane %v10764, %v10771
  %v10774 = vunpack.c.l.s4 1966171168
  %v10775 = vunpack.c.0.s8 %v10774
  %v10776 = vlaneseq
  %v10777 = vshrl.u32 %v10776, 7
  %v10778 = vsub.s32 %v10775, %v10777
  %v10779 = vrot.slane %v10765, %v10778
  %v10780 = vcombine.low %v10772, %v10779
  %v10781 = vcombine.low %v10052, %v10054
  %v10782 = vcombine.low %v10056, %v10080
  %v10783 = vcombine.low %v10094, %v10102
  %v10785 = vunpack.c.l.s4 1966171168
  %v10786 = vunpack.c.0.s8 %v10785
  %v10787 = vlaneseq
  %v10788 = vshrl.u32 %v10787, 7
  %v10789 = vsub.s32 %v10786, %v10788
  %v10790 = vrot.slane %v10781, %v10789
  %v10792 = vunpack.c.l.s4 1966171168
  %v10793 = vunpack.c.0.s8 %v10792
  %v10794 = vlaneseq
  %v10795 = vshrl.u32 %v10794, 7
  %v10796 = vsub.s32 %v10793, %v10795
  %v10797 = vrot.slane %v10782, %v10796
  %v10799 = vunpack.c.l.s4 1966171168
  %v10800 = vunpack.c.0.s8 %v10799
  %v10801 = vlaneseq
  %v10802 = vshrl.u32 %v10801, 7
  %v10803 = vsub.s32 %v10800, %v10802
  %v10804 = vrot.slane %v10783, %v10803
  %v10806 = vunpack.c.l.s4 1966171168
  %v10807 = vunpack.c.0.s8 %v10806
  %v10808 = vlaneseq
  %v10809 = vshrl.u32 %v10808, 7
  %v10810 = vsub.s32 %v10807, %v10809
  %v10811 = vrot.slane %v10104, %v10810
  %v10812 = vcombine.low %v10790, %v10797
  %v10813 = vcombine.low %v10804, %v10811
  %v10815 = vunpack.c.l.s4 1966171168
  %v10816 = vunpack.c.0.s8 %v10815
  %v10817 = vlaneseq
  %v10818 = vshrl.u32 %v10817, 7
  %v10819 = vsub.s32 %v10816, %v10818
  %v10820 = vrot.slane %v10812, %v10819
  %v10822 = vunpack.c.l.s4 1966171168
  %v10823 = vunpack.c.0.s8 %v10822
  %v10824 = vlaneseq
  %v10825 = vshrl.u32 %v10824, 7
  %v10826 = vsub.s32 %v10823, %v10825
  %v10827 = vrot.slane %v10813, %v10826
  %v10828 = vcombine.low %v10820, %v10827
  %v10829 = vcombine.low %v10087, %v10101
  %v10830 = vcombine.low %v10103, %v10105
  %v10831 = vcombine.low %v10129, %v10143
  %v10833 = vunpack.c.l.s4 1966171168
  %v10834 = vunpack.c.0.s8 %v10833
  %v10835 = vlaneseq
  %v10836 = vshrl.u32 %v10835, 7
  %v10837 = vsub.s32 %v10834, %v10836
  %v10838 = vrot.slane %v10829, %v10837
  %v10840 = vunpack.c.l.s4 1966171168
  %v10841 = vunpack.c.0.s8 %v10840
  %v10842 = vlaneseq
  %v10843 = vshrl.u32 %v10842, 7
  %v10844 = vsub.s32 %v10841, %v10843
  %v10845 = vrot.slane %v10830, %v10844
  %v10847 = vunpack.c.l.s4 1966171168
  %v10848 = vunpack.c.0.s8 %v10847
  %v10849 = vlaneseq
  %v10850 = vshrl.u32 %v10849, 7
  %v10851 = vsub.s32 %v10848, %v10850
  %v10852 = vrot.slane %v10831, %v10851
  %v10854 = vunpack.c.l.s4 1966171168
  %v10855 = vunpack.c.0.s8 %v10854
  %v10856 = vlaneseq
  %v10857 = vshrl.u32 %v10856, 7
  %v10858 = vsub.s32 %v10855, %v10857
  %v10859 = vrot.slane %v10151, %v10858
  %v10860 = vcombine.low %v10838, %v10845
  %v10861 = vcombine.low %v10852, %v10859
  %v10863 = vunpack.c.l.s4 1966171168
  %v10864 = vunpack.c.0.s8 %v10863
  %v10865 = vlaneseq
  %v10866 = vshrl.u32 %v10865, 7
  %v10867 = vsub.s32 %v10864, %v10866
  %v10868 = vrot.slane %v10860, %v10867
  %v10870 = vunpack.c.l.s4 1966171168
  %v10871 = vunpack.c.0.s8 %v10870
  %v10872 = vlaneseq
  %v10873 = vshrl.u32 %v10872, 7
  %v10874 = vsub.s32 %v10871, %v10873
  %v10875 = vrot.slane %v10861, %v10874
  %v10876 = vcombine.low %v10868, %v10875
  %v10877 = vcombine.low %v10153, %v10136
  %v10878 = vcombine.low %v10150, %v10152
  %v10879 = vcombine.low %v10154, %v10178
  %v10881 = vunpack.c.l.s4 1966171168
  %v10882 = vunpack.c.0.s8 %v10881
  %v10883 = vlaneseq
  %v10884 = vshrl.u32 %v10883, 7
  %v10885 = vsub.s32 %v10882, %v10884
  %v10886 = vrot.slane %v10877, %v10885
  %v10888 = vunpack.c.l.s4 1966171168
  %v10889 = vunpack.c.0.s8 %v10888
  %v10890 = vlaneseq
  %v10891 = vshrl.u32 %v10890, 7
  %v10892 = vsub.s32 %v10889, %v10891
  %v10893 = vrot.slane %v10878, %v10892
  %v10895 = vunpack.c.l.s4 1966171168
  %v10896 = vunpack.c.0.s8 %v10895
  %v10897 = vlaneseq
  %v10898 = vshrl.u32 %v10897, 7
  %v10899 = vsub.s32 %v10896, %v10898
  %v10900 = vrot.slane %v10879, %v10899
  %v10902 = vunpack.c.l.s4 1966171168
  %v10903 = vunpack.c.0.s8 %v10902
  %v10904 = vlaneseq
  %v10905 = vshrl.u32 %v10904, 7
  %v10906 = vsub.s32 %v10903, %v10905
  %v10907 = vrot.slane %v10192, %v10906
  %v10908 = vcombine.low %v10886, %v10893
  %v10909 = vcombine.low %v10900, %v10907
  %v10911 = vunpack.c.l.s4 1966171168
  %v10912 = vunpack.c.0.s8 %v10911
  %v10913 = vlaneseq
  %v10914 = vshrl.u32 %v10913, 7
  %v10915 = vsub.s32 %v10912, %v10914
  %v10916 = vrot.slane %v10908, %v10915
  %v10918 = vunpack.c.l.s4 1966171168
  %v10919 = vunpack.c.0.s8 %v10918
  %v10920 = vlaneseq
  %v10921 = vshrl.u32 %v10920, 7
  %v10922 = vsub.s32 %v10919, %v10921
  %v10923 = vrot.slane %v10909, %v10922
  %v10924 = vcombine.low %v10916, %v10923
  %v10925 = vcombine.low %v10200, %v10202
  %v10926 = vcombine.low %v10185, %v10199
  %v10927 = vcombine.low %v10201, %v10203
  %v10929 = vunpack.c.l.s4 1966171168
  %v10930 = vunpack.c.0.s8 %v10929
  %v10931 = vlaneseq
  %v10932 = vshrl.u32 %v10931, 7
  %v10933 = vsub.s32 %v10930, %v10932
  %v10934 = vrot.slane %v10925, %v10933
  %v10936 = vunpack.c.l.s4 1966171168
  %v10937 = vunpack.c.0.s8 %v10936
  %v10938 = vlaneseq
  %v10939 = vshrl.u32 %v10938, 7
  %v10940 = vsub.s32 %v10937, %v10939
  %v10941 = vrot.slane %v10926, %v10940
  %v10943 = vunpack.c.l.s4 1966171168
  %v10944 = vunpack.c.0.s8 %v10943
  %v10945 = vlaneseq
  %v10946 = vshrl.u32 %v10945, 7
  %v10947 = vsub.s32 %v10944, %v10946
  %v10948 = vrot.slane %v10927, %v10947
  %v10950 = vunpack.c.l.s4 1966171168
  %v10951 = vunpack.c.0.s8 %v10950
  %v10952 = vlaneseq
  %v10953 = vshrl.u32 %v10952, 7
  %v10954 = vsub.s32 %v10951, %v10953
  %v10955 = vrot.slane %v10227, %v10954
  %v10956 = vcombine.low %v10934, %v10941
  %v10957 = vcombine.low %v10948, %v10955
  %v10959 = vunpack.c.l.s4 1966171168
  %v10960 = vunpack.c.0.s8 %v10959
  %v10961 = vlaneseq
  %v10962 = vshrl.u32 %v10961, 7
  %v10963 = vsub.s32 %v10960, %v10962
  %v10964 = vrot.slane %v10956, %v10963
  %v10966 = vunpack.c.l.s4 1966171168
  %v10967 = vunpack.c.0.s8 %v10966
  %v10968 = vlaneseq
  %v10969 = vshrl.u32 %v10968, 7
  %v10970 = vsub.s32 %v10967, %v10969
  %v10971 = vrot.slane %v10957, %v10970
  %v10972 = vcombine.low %v10964, %v10971
  %v10973 = vcombine.low %v10241, %v10249
  %v10974 = vcombine.low %v10251, %v10234
  %v10975 = vcombine.low %v10248, %v10250
  %v10977 = vunpack.c.l.s4 1966171168
  %v10978 = vunpack.c.0.s8 %v10977
  %v10979 = vlaneseq
  %v10980 = vshrl.u32 %v10979, 7
  %v10981 = vsub.s32 %v10978, %v10980
  %v10982 = vrot.slane %v10973, %v10981
  %v10984 = vunpack.c.l.s4 1966171168
  %v10985 = vunpack.c.0.s8 %v10984
  %v10986 = vlaneseq
  %v10987 = vshrl.u32 %v10986, 7
  %v10988 = vsub.s32 %v10985, %v10987
  %v10989 = vrot.slane %v10974, %v10988
  %v10991 = vunpack.c.l.s4 1966171168
  %v10992 = vunpack.c.0.s8 %v10991
  %v10993 = vlaneseq
  %v10994 = vshrl.u32 %v10993, 7
  %v10995 = vsub.s32 %v10992, %v10994
  %v10996 = vrot.slane %v10975, %v10995
  %v10998 = vunpack.c.l.s4 1966171168
  %v10999 = vunpack.c.0.s8 %v10998
  %v11000 = vlaneseq
  %v11001 = vshrl.u32 %v11000, 7
  %v11002 = vsub.s32 %v10999, %v11001
  %v11003 = vrot.slane %v10252, %v11002
  %v11004 = vcombine.low %v10982, %v10989
  %v11005 = vcombine.low %v10996, %v11003
  %v11007 = vunpack.c.l.s4 1966171168
  %v11008 = vunpack.c.0.s8 %v11007
  %v11009 = vlaneseq
  %v11010 = vshrl.u32 %v11009, 7
  %v11011 = vsub.s32 %v11008, %v11010
  %v11012 = vrot.slane %v11004, %v11011
  %v11014 = vunpack.c.l.s4 1966171168
  %v11015 = vunpack.c.0.s8 %v11014
  %v11016 = vlaneseq
  %v11017 = vshrl.u32 %v11016, 7
  %v11018 = vsub.s32 %v11015, %v11017
  %v11019 = vrot.slane %v11005, %v11018
  %v11020 = vcombine.low %v11012, %v11019
  %v11037 = vadd.f32 %v9007, %v10300
  %v11038 = vadd.f32 %v9008, %v10348
  %v11039 = vadd.f32 %v9009, %v10396
  %v11040 = vadd.f32 %v9010, %v10444
  %v11041 = vadd.f32 %v9011, %v10492
  %v11042 = vadd.f32 %v9012, %v10540
  %v11043 = vadd.f32 %v9013, %v10588
  %v11044 = vadd.f32 %v9014, %v10636
  %v11045 = vadd.f32 %v9015, %v10684
  %v11046 = vadd.f32 %v9016, %v10732
  %v11047 = vadd.f32 %v9017, %v10780
  %v11048 = vadd.f32 %v9018, %v10828
  %v11049 = vadd.f32 %v9019, %v10876
  %v11050 = vadd.f32 %v9020, %v10924
  %v11051 = vadd.f32 %v9021, %v10972
  %v11052 = vadd.f32 %v9022, %v11020
  %s11053 = scalar_lea.vmem %s1, 10
  %v11054 = vld [vmem:[%s11053] sm:$0x3]
  %v11072 = vunpack.c.l.s4 1966171168
  %v11073 = vunpack.c.0.s8 %v11072
  %v11074 = vlaneseq
  %v11075 = vshrl.u32 %v11074, 7
  %v11076 = vsub.s32 %v11073, %v11075
  %v11077 = vrot.slane %v17, %v11076
  %v11079 = vunpack.c.l.s4 1966171168
  %v11080 = vunpack.c.0.s8 %v11079
  %v11081 = vlaneseq
  %v11082 = vshrl.u32 %v11081, 7
  %v11083 = vsub.s32 %v11080, %v11082
  %v11084 = vrot.slane %v11077, %v11083
  %v11086 = vunpack.c.l.s4 1966171168
  %v11087 = vunpack.c.0.s8 %v11086
  %v11088 = vlaneseq
  %v11089 = vshrl.u32 %v11088, 7
  %v11090 = vsub.s32 %v11087, %v11089
  %v11091 = vrot.slane %v20, %v11090
  %v11093 = vunpack.c.l.s4 1966171168
  %v11094 = vunpack.c.0.s8 %v11093
  %v11095 = vlaneseq
  %v11096 = vshrl.u32 %v11095, 7
  %v11097 = vsub.s32 %v11094, %v11096
  %v11098 = vrot.slane %v11091, %v11097
  %v11100 = vunpack.c.l.s4 1966171168
  %v11101 = vunpack.c.0.s8 %v11100
  %v11102 = vlaneseq
  %v11103 = vshrl.u32 %v11102, 7
  %v11104 = vsub.s32 %v11101, %v11103
  %v11105 = vrot.slane %v23, %v11104
  %v11107 = vunpack.c.l.s4 1966171168
  %v11108 = vunpack.c.0.s8 %v11107
  %v11109 = vlaneseq
  %v11110 = vshrl.u32 %v11109, 7
  %v11111 = vsub.s32 %v11108, %v11110
  %v11112 = vrot.slane %v11105, %v11111
  %v11114 = vunpack.c.l.s4 1966171168
  %v11115 = vunpack.c.0.s8 %v11114
  %v11116 = vlaneseq
  %v11117 = vshrl.u32 %v11116, 7
  %v11118 = vsub.s32 %v11115, %v11117
  %v11119 = vrot.slane %v26, %v11118
  %v11121 = vunpack.c.l.s4 1966171168
  %v11122 = vunpack.c.0.s8 %v11121
  %v11123 = vlaneseq
  %v11124 = vshrl.u32 %v11123, 7
  %v11125 = vsub.s32 %v11122, %v11124
  %v11126 = vrot.slane %v11119, %v11125
  %v11128 = vunpack.c.l.s4 1966171168
  %v11129 = vunpack.c.0.s8 %v11128
  %v11130 = vlaneseq
  %v11131 = vshrl.u32 %v11130, 7
  %v11132 = vsub.s32 %v11129, %v11131
  %v11133 = vrot.slane %v29, %v11132
  %v11135 = vunpack.c.l.s4 1966171168
  %v11136 = vunpack.c.0.s8 %v11135
  %v11137 = vlaneseq
  %v11138 = vshrl.u32 %v11137, 7
  %v11139 = vsub.s32 %v11136, %v11138
  %v11140 = vrot.slane %v11133, %v11139
  %v11142 = vunpack.c.l.s4 1966171168
  %v11143 = vunpack.c.0.s8 %v11142
  %v11144 = vlaneseq
  %v11145 = vshrl.u32 %v11144, 7
  %v11146 = vsub.s32 %v11143, %v11145
  %v11147 = vrot.slane %v32, %v11146
  %v11149 = vunpack.c.l.s4 1966171168
  %v11150 = vunpack.c.0.s8 %v11149
  %v11151 = vlaneseq
  %v11152 = vshrl.u32 %v11151, 7
  %v11153 = vsub.s32 %v11150, %v11152
  %v11154 = vrot.slane %v11147, %v11153
  %v11156 = vunpack.c.l.s4 1966171168
  %v11157 = vunpack.c.0.s8 %v11156
  %v11158 = vlaneseq
  %v11159 = vshrl.u32 %v11158, 7
  %v11160 = vsub.s32 %v11157, %v11159
  %v11161 = vrot.slane %v35, %v11160
  %v11163 = vunpack.c.l.s4 1966171168
  %v11164 = vunpack.c.0.s8 %v11163
  %v11165 = vlaneseq
  %v11166 = vshrl.u32 %v11165, 7
  %v11167 = vsub.s32 %v11164, %v11166
  %v11168 = vrot.slane %v11161, %v11167
  %v11170 = vunpack.c.l.s4 1966171168
  %v11171 = vunpack.c.0.s8 %v11170
  %v11172 = vlaneseq
  %v11173 = vshrl.u32 %v11172, 7
  %v11174 = vsub.s32 %v11171, %v11173
  %v11175 = vrot.slane %v38, %v11174
  %v11177 = vunpack.c.l.s4 1966171168
  %v11178 = vunpack.c.0.s8 %v11177
  %v11179 = vlaneseq
  %v11180 = vshrl.u32 %v11179, 7
  %v11181 = vsub.s32 %v11178, %v11180
  %v11182 = vrot.slane %v11175, %v11181
  %v11184 = vunpack.c.l.s4 1966171168
  %v11185 = vunpack.c.0.s8 %v11184
  %v11186 = vlaneseq
  %v11187 = vshrl.u32 %v11186, 7
  %v11188 = vsub.s32 %v11185, %v11187
  %v11189 = vrot.slane %v41, %v11188
  %v11191 = vunpack.c.l.s4 1966171168
  %v11192 = vunpack.c.0.s8 %v11191
  %v11193 = vlaneseq
  %v11194 = vshrl.u32 %v11193, 7
  %v11195 = vsub.s32 %v11192, %v11194
  %v11196 = vrot.slane %v11189, %v11195
  %v11198 = vunpack.c.l.s4 1966171168
  %v11199 = vunpack.c.0.s8 %v11198
  %v11200 = vlaneseq
  %v11201 = vshrl.u32 %v11200, 7
  %v11202 = vsub.s32 %v11199, %v11201
  %v11203 = vrot.slane %v44, %v11202
  %v11205 = vunpack.c.l.s4 1966171168
  %v11206 = vunpack.c.0.s8 %v11205
  %v11207 = vlaneseq
  %v11208 = vshrl.u32 %v11207, 7
  %v11209 = vsub.s32 %v11206, %v11208
  %v11210 = vrot.slane %v11203, %v11209
  %v11212 = vunpack.c.l.s4 1966171168
  %v11213 = vunpack.c.0.s8 %v11212
  %v11214 = vlaneseq
  %v11215 = vshrl.u32 %v11214, 7
  %v11216 = vsub.s32 %v11213, %v11215
  %v11217 = vrot.slane %v47, %v11216
  %v11219 = vunpack.c.l.s4 1966171168
  %v11220 = vunpack.c.0.s8 %v11219
  %v11221 = vlaneseq
  %v11222 = vshrl.u32 %v11221, 7
  %v11223 = vsub.s32 %v11220, %v11222
  %v11224 = vrot.slane %v11217, %v11223
  %v11226 = vunpack.c.l.s4 1966171168
  %v11227 = vunpack.c.0.s8 %v11226
  %v11228 = vlaneseq
  %v11229 = vshrl.u32 %v11228, 7
  %v11230 = vsub.s32 %v11227, %v11229
  %v11231 = vrot.slane %v50, %v11230
  %v11233 = vunpack.c.l.s4 1966171168
  %v11234 = vunpack.c.0.s8 %v11233
  %v11235 = vlaneseq
  %v11236 = vshrl.u32 %v11235, 7
  %v11237 = vsub.s32 %v11234, %v11236
  %v11238 = vrot.slane %v11231, %v11237
  %v11240 = vunpack.c.l.s4 1966171168
  %v11241 = vunpack.c.0.s8 %v11240
  %v11242 = vlaneseq
  %v11243 = vshrl.u32 %v11242, 7
  %v11244 = vsub.s32 %v11241, %v11243
  %v11245 = vrot.slane %v53, %v11244
  %v11247 = vunpack.c.l.s4 1966171168
  %v11248 = vunpack.c.0.s8 %v11247
  %v11249 = vlaneseq
  %v11250 = vshrl.u32 %v11249, 7
  %v11251 = vsub.s32 %v11248, %v11250
  %v11252 = vrot.slane %v11245, %v11251
  %v11254 = vunpack.c.l.s4 1966171168
  %v11255 = vunpack.c.0.s8 %v11254
  %v11256 = vlaneseq
  %v11257 = vshrl.u32 %v11256, 7
  %v11258 = vsub.s32 %v11255, %v11257
  %v11259 = vrot.slane %v56, %v11258
  %v11261 = vunpack.c.l.s4 1966171168
  %v11262 = vunpack.c.0.s8 %v11261
  %v11263 = vlaneseq
  %v11264 = vshrl.u32 %v11263, 7
  %v11265 = vsub.s32 %v11262, %v11264
  %v11266 = vrot.slane %v11259, %v11265
  %v11268 = vunpack.c.l.s4 1966171168
  %v11269 = vunpack.c.0.s8 %v11268
  %v11270 = vlaneseq
  %v11271 = vshrl.u32 %v11270, 7
  %v11272 = vsub.s32 %v11269, %v11271
  %v11273 = vrot.slane %v59, %v11272
  %v11275 = vunpack.c.l.s4 1966171168
  %v11276 = vunpack.c.0.s8 %v11275
  %v11277 = vlaneseq
  %v11278 = vshrl.u32 %v11277, 7
  %v11279 = vsub.s32 %v11276, %v11278
  %v11280 = vrot.slane %v11273, %v11279
  %v11282 = vunpack.c.l.s4 1966171168
  %v11283 = vunpack.c.0.s8 %v11282
  %v11284 = vlaneseq
  %v11285 = vshrl.u32 %v11284, 7
  %v11286 = vsub.s32 %v11283, %v11285
  %v11287 = vrot.slane %v62, %v11286
  %v11289 = vunpack.c.l.s4 1966171168
  %v11290 = vunpack.c.0.s8 %v11289
  %v11291 = vlaneseq
  %v11292 = vshrl.u32 %v11291, 7
  %v11293 = vsub.s32 %v11290, %v11292
  %v11294 = vrot.slane %v11287, %v11293
  %v11295 = vunpack.i.h.s16 %v9025
  %v11296 = vunpack.i.l.s16 %v11084
  %v11297 = vunpack.i.h.s16 %v9026
  %v11298 = vunpack.i.l.s16 %v11098
  %v11299 = vunpack.i.h.s16 %v9027
  %v11300 = vunpack.i.l.s16 %v11112
  %v11301 = vunpack.i.h.s16 %v9028
  %v11302 = vunpack.i.l.s16 %v11126
  %v11303 = vunpack.i.h.s16 %v9029
  %v11304 = vunpack.i.l.s16 %v11140
  %v11305 = vunpack.i.h.s16 %v9030
  %v11306 = vunpack.i.l.s16 %v11154
  %v11307 = vunpack.i.h.s16 %v9031
  %v11308 = vunpack.i.l.s16 %v11168
  %v11309 = vunpack.i.h.s16 %v9032
  %v11310 = vunpack.i.l.s16 %v11182
  %v11311 = vunpack.i.h.s16 %v9033
  %v11312 = vunpack.i.l.s16 %v11196
  %v11313 = vunpack.i.h.s16 %v9034
  %v11314 = vunpack.i.l.s16 %v11210
  %v11315 = vunpack.i.h.s16 %v9035
  %v11316 = vunpack.i.l.s16 %v11224
  %v11317 = vunpack.i.h.s16 %v9036
  %v11318 = vunpack.i.l.s16 %v11238
  %v11319 = vunpack.i.h.s16 %v9037
  %v11320 = vunpack.i.l.s16 %v11252
  %v11321 = vunpack.i.h.s16 %v9038
  %v11322 = vunpack.i.l.s16 %v11266
  %v11323 = vunpack.i.h.s16 %v9039
  %v11324 = vunpack.i.l.s16 %v11280
  %v11325 = vunpack.i.h.s16 %v9040
  %v11326 = vunpack.i.l.s16 %v11294
  %v11327 = vpack.i.b16 %v11295, %v9042
  %v11328 = vpack.i.b16 %v4984, %v11296
  %v11329 = vpack.i.b16 %v11298, %v11297
  %v11330 = vpack.i.b16 %v11299, %v9046
  %v11331 = vpack.i.b16 %v4988, %v11300
  %v11332 = vpack.i.b16 %v11302, %v11301
  %v11333 = vpack.i.b16 %v11303, %v9050
  %v11334 = vpack.i.b16 %v4992, %v11304
  %v11335 = vpack.i.b16 %v11306, %v11305
  %v11336 = vpack.i.b16 %v11307, %v9054
  %v11337 = vpack.i.b16 %v4996, %v11308
  %v11338 = vpack.i.b16 %v11310, %v11309
  %v11339 = vpack.i.b16 %v11311, %v9058
  %v11340 = vpack.i.b16 %v5000, %v11312
  %v11341 = vpack.i.b16 %v11314, %v11313
  %v11342 = vpack.i.b16 %v11315, %v9062
  %v11343 = vpack.i.b16 %v5004, %v11316
  %v11344 = vpack.i.b16 %v11318, %v11317
  %v11345 = vpack.i.b16 %v11319, %v9066
  %v11346 = vpack.i.b16 %v5008, %v11320
  %v11347 = vpack.i.b16 %v11322, %v11321
  %v11348 = vpack.i.b16 %v11323, %v9070
  %v11349 = vpack.i.b16 %v5012, %v11324
  %v11350 = vpack.i.b16 %v11326, %v11325
  %v11351 = vcombine.low %v7043, %v9073
  %v11352 = vcombine.low %v11327, %v11328
  %v11353 = vcombine.low %v7045, %v9075
  %v11354 = vcombine.low %v11329, %v7046
  %v11356 = vunpack.c.l.s4 1966171168
  %v11357 = vunpack.c.0.s8 %v11356
  %v11358 = vlaneseq
  %v11359 = vshrl.u32 %v11358, 7
  %v11360 = vsub.s32 %v11357, %v11359
  %v11361 = vrot.slane %v11351, %v11360
  %v11363 = vunpack.c.l.s4 1966171168
  %v11364 = vunpack.c.0.s8 %v11363
  %v11365 = vlaneseq
  %v11366 = vshrl.u32 %v11365, 7
  %v11367 = vsub.s32 %v11364, %v11366
  %v11368 = vrot.slane %v11352, %v11367
  %v11370 = vunpack.c.l.s4 1966171168
  %v11371 = vunpack.c.0.s8 %v11370
  %v11372 = vlaneseq
  %v11373 = vshrl.u32 %v11372, 7
  %v11374 = vsub.s32 %v11371, %v11373
  %v11375 = vrot.slane %v11353, %v11374
  %v11377 = vunpack.c.l.s4 1966171168
  %v11378 = vunpack.c.0.s8 %v11377
  %v11379 = vlaneseq
  %v11380 = vshrl.u32 %v11379, 7
  %v11381 = vsub.s32 %v11378, %v11380
  %v11382 = vrot.slane %v11354, %v11381
  %v11383 = vcombine.low %v11361, %v11368
  %v11384 = vcombine.low %v11375, %v11382
  %v11386 = vunpack.c.l.s4 1966171168
  %v11387 = vunpack.c.0.s8 %v11386
  %v11388 = vlaneseq
  %v11389 = vshrl.u32 %v11388, 7
  %v11390 = vsub.s32 %v11387, %v11389
  %v11391 = vrot.slane %v11383, %v11390
  %v11393 = vunpack.c.l.s4 1966171168
  %v11394 = vunpack.c.0.s8 %v11393
  %v11395 = vlaneseq
  %v11396 = vshrl.u32 %v11395, 7
  %v11397 = vsub.s32 %v11394, %v11396
  %v11398 = vrot.slane %v11384, %v11397
  %v11399 = vcombine.low %v11391, %v11398
  %v11400 = vcombine.low %v9076, %v11330
  %v11401 = vcombine.low %v11331, %v7048
  %v11402 = vcombine.low %v9078, %v11332
  %v11403 = vcombine.low %v7049, %v9079
  %v11405 = vunpack.c.l.s4 1966171168
  %v11406 = vunpack.c.0.s8 %v11405
  %v11407 = vlaneseq
  %v11408 = vshrl.u32 %v11407, 7
  %v11409 = vsub.s32 %v11406, %v11408
  %v11410 = vrot.slane %v11400, %v11409
  %v11412 = vunpack.c.l.s4 1966171168
  %v11413 = vunpack.c.0.s8 %v11412
  %v11414 = vlaneseq
  %v11415 = vshrl.u32 %v11414, 7
  %v11416 = vsub.s32 %v11413, %v11415
  %v11417 = vrot.slane %v11401, %v11416
  %v11419 = vunpack.c.l.s4 1966171168
  %v11420 = vunpack.c.0.s8 %v11419
  %v11421 = vlaneseq
  %v11422 = vshrl.u32 %v11421, 7
  %v11423 = vsub.s32 %v11420, %v11422
  %v11424 = vrot.slane %v11402, %v11423
  %v11426 = vunpack.c.l.s4 1966171168
  %v11427 = vunpack.c.0.s8 %v11426
  %v11428 = vlaneseq
  %v11429 = vshrl.u32 %v11428, 7
  %v11430 = vsub.s32 %v11427, %v11429
  %v11431 = vrot.slane %v11403, %v11430
  %v11432 = vcombine.low %v11410, %v11417
  %v11433 = vcombine.low %v11424, %v11431
  %v11435 = vunpack.c.l.s4 1966171168
  %v11436 = vunpack.c.0.s8 %v11435
  %v11437 = vlaneseq
  %v11438 = vshrl.u32 %v11437, 7
  %v11439 = vsub.s32 %v11436, %v11438
  %v11440 = vrot.slane %v11432, %v11439
  %v11442 = vunpack.c.l.s4 1966171168
  %v11443 = vunpack.c.0.s8 %v11442
  %v11444 = vlaneseq
  %v11445 = vshrl.u32 %v11444, 7
  %v11446 = vsub.s32 %v11443, %v11445
  %v11447 = vrot.slane %v11433, %v11446
  %v11448 = vcombine.low %v11440, %v11447
  %v11449 = vcombine.low %v11333, %v11334
  %v11450 = vcombine.low %v7051, %v9081
  %v11451 = vcombine.low %v11335, %v7052
  %v11452 = vcombine.low %v9082, %v11336
  %v11454 = vunpack.c.l.s4 1966171168
  %v11455 = vunpack.c.0.s8 %v11454
  %v11456 = vlaneseq
  %v11457 = vshrl.u32 %v11456, 7
  %v11458 = vsub.s32 %v11455, %v11457
  %v11459 = vrot.slane %v11449, %v11458
  %v11461 = vunpack.c.l.s4 1966171168
  %v11462 = vunpack.c.0.s8 %v11461
  %v11463 = vlaneseq
  %v11464 = vshrl.u32 %v11463, 7
  %v11465 = vsub.s32 %v11462, %v11464
  %v11466 = vrot.slane %v11450, %v11465
  %v11468 = vunpack.c.l.s4 1966171168
  %v11469 = vunpack.c.0.s8 %v11468
  %v11470 = vlaneseq
  %v11471 = vshrl.u32 %v11470, 7
  %v11472 = vsub.s32 %v11469, %v11471
  %v11473 = vrot.slane %v11451, %v11472
  %v11475 = vunpack.c.l.s4 1966171168
  %v11476 = vunpack.c.0.s8 %v11475
  %v11477 = vlaneseq
  %v11478 = vshrl.u32 %v11477, 7
  %v11479 = vsub.s32 %v11476, %v11478
  %v11480 = vrot.slane %v11452, %v11479
  %v11481 = vcombine.low %v11459, %v11466
  %v11482 = vcombine.low %v11473, %v11480
  %v11484 = vunpack.c.l.s4 1966171168
  %v11485 = vunpack.c.0.s8 %v11484
  %v11486 = vlaneseq
  %v11487 = vshrl.u32 %v11486, 7
  %v11488 = vsub.s32 %v11485, %v11487
  %v11489 = vrot.slane %v11481, %v11488
  %v11491 = vunpack.c.l.s4 1966171168
  %v11492 = vunpack.c.0.s8 %v11491
  %v11493 = vlaneseq
  %v11494 = vshrl.u32 %v11493, 7
  %v11495 = vsub.s32 %v11492, %v11494
  %v11496 = vrot.slane %v11482, %v11495
  %v11497 = vcombine.low %v11489, %v11496
  %v11498 = vcombine.low %v11337, %v7054
  %v11499 = vcombine.low %v9084, %v11338
  %v11500 = vcombine.low %v7055, %v9085
  %v11501 = vcombine.low %v11339, %v11340
  %v11503 = vunpack.c.l.s4 1966171168
  %v11504 = vunpack.c.0.s8 %v11503
  %v11505 = vlaneseq
  %v11506 = vshrl.u32 %v11505, 7
  %v11507 = vsub.s32 %v11504, %v11506
  %v11508 = vrot.slane %v11498, %v11507
  %v11510 = vunpack.c.l.s4 1966171168
  %v11511 = vunpack.c.0.s8 %v11510
  %v11512 = vlaneseq
  %v11513 = vshrl.u32 %v11512, 7
  %v11514 = vsub.s32 %v11511, %v11513
  %v11515 = vrot.slane %v11499, %v11514
  %v11517 = vunpack.c.l.s4 1966171168
  %v11518 = vunpack.c.0.s8 %v11517
  %v11519 = vlaneseq
  %v11520 = vshrl.u32 %v11519, 7
  %v11521 = vsub.s32 %v11518, %v11520
  %v11522 = vrot.slane %v11500, %v11521
  %v11524 = vunpack.c.l.s4 1966171168
  %v11525 = vunpack.c.0.s8 %v11524
  %v11526 = vlaneseq
  %v11527 = vshrl.u32 %v11526, 7
  %v11528 = vsub.s32 %v11525, %v11527
  %v11529 = vrot.slane %v11501, %v11528
  %v11530 = vcombine.low %v11508, %v11515
  %v11531 = vcombine.low %v11522, %v11529
  %v11533 = vunpack.c.l.s4 1966171168
  %v11534 = vunpack.c.0.s8 %v11533
  %v11535 = vlaneseq
  %v11536 = vshrl.u32 %v11535, 7
  %v11537 = vsub.s32 %v11534, %v11536
  %v11538 = vrot.slane %v11530, %v11537
  %v11540 = vunpack.c.l.s4 1966171168
  %v11541 = vunpack.c.0.s8 %v11540
  %v11542 = vlaneseq
  %v11543 = vshrl.u32 %v11542, 7
  %v11544 = vsub.s32 %v11541, %v11543
  %v11545 = vrot.slane %v11531, %v11544
  %v11546 = vcombine.low %v11538, %v11545
  %v11547 = vcombine.low %v7057, %v9087
  %v11548 = vcombine.low %v11341, %v7058
  %v11549 = vcombine.low %v9088, %v11342
  %v11550 = vcombine.low %v11343, %v7060
  %v11552 = vunpack.c.l.s4 1966171168
  %v11553 = vunpack.c.0.s8 %v11552
  %v11554 = vlaneseq
  %v11555 = vshrl.u32 %v11554, 7
  %v11556 = vsub.s32 %v11553, %v11555
  %v11557 = vrot.slane %v11547, %v11556
  %v11559 = vunpack.c.l.s4 1966171168
  %v11560 = vunpack.c.0.s8 %v11559
  %v11561 = vlaneseq
  %v11562 = vshrl.u32 %v11561, 7
  %v11563 = vsub.s32 %v11560, %v11562
  %v11564 = vrot.slane %v11548, %v11563
  %v11566 = vunpack.c.l.s4 1966171168
  %v11567 = vunpack.c.0.s8 %v11566
  %v11568 = vlaneseq
  %v11569 = vshrl.u32 %v11568, 7
  %v11570 = vsub.s32 %v11567, %v11569
  %v11571 = vrot.slane %v11549, %v11570
  %v11573 = vunpack.c.l.s4 1966171168
  %v11574 = vunpack.c.0.s8 %v11573
  %v11575 = vlaneseq
  %v11576 = vshrl.u32 %v11575, 7
  %v11577 = vsub.s32 %v11574, %v11576
  %v11578 = vrot.slane %v11550, %v11577
  %v11579 = vcombine.low %v11557, %v11564
  %v11580 = vcombine.low %v11571, %v11578
  %v11582 = vunpack.c.l.s4 1966171168
  %v11583 = vunpack.c.0.s8 %v11582
  %v11584 = vlaneseq
  %v11585 = vshrl.u32 %v11584, 7
  %v11586 = vsub.s32 %v11583, %v11585
  %v11587 = vrot.slane %v11579, %v11586
  %v11589 = vunpack.c.l.s4 1966171168
  %v11590 = vunpack.c.0.s8 %v11589
  %v11591 = vlaneseq
  %v11592 = vshrl.u32 %v11591, 7
  %v11593 = vsub.s32 %v11590, %v11592
  %v11594 = vrot.slane %v11580, %v11593
  %v11595 = vcombine.low %v11587, %v11594
  %v11596 = vcombine.low %v9090, %v11344
  %v11597 = vcombine.low %v7061, %v9091
  %v11598 = vcombine.low %v11345, %v11346
  %v11599 = vcombine.low %v7063, %v9093
  %v11601 = vunpack.c.l.s4 1966171168
  %v11602 = vunpack.c.0.s8 %v11601
  %v11603 = vlaneseq
  %v11604 = vshrl.u32 %v11603, 7
  %v11605 = vsub.s32 %v11602, %v11604
  %v11606 = vrot.slane %v11596, %v11605
  %v11608 = vunpack.c.l.s4 1966171168
  %v11609 = vunpack.c.0.s8 %v11608
  %v11610 = vlaneseq
  %v11611 = vshrl.u32 %v11610, 7
  %v11612 = vsub.s32 %v11609, %v11611
  %v11613 = vrot.slane %v11597, %v11612
  %v11615 = vunpack.c.l.s4 1966171168
  %v11616 = vunpack.c.0.s8 %v11615
  %v11617 = vlaneseq
  %v11618 = vshrl.u32 %v11617, 7
  %v11619 = vsub.s32 %v11616, %v11618
  %v11620 = vrot.slane %v11598, %v11619
  %v11622 = vunpack.c.l.s4 1966171168
  %v11623 = vunpack.c.0.s8 %v11622
  %v11624 = vlaneseq
  %v11625 = vshrl.u32 %v11624, 7
  %v11626 = vsub.s32 %v11623, %v11625
  %v11627 = vrot.slane %v11599, %v11626
  %v11628 = vcombine.low %v11606, %v11613
  %v11629 = vcombine.low %v11620, %v11627
  %v11631 = vunpack.c.l.s4 1966171168
  %v11632 = vunpack.c.0.s8 %v11631
  %v11633 = vlaneseq
  %v11634 = vshrl.u32 %v11633, 7
  %v11635 = vsub.s32 %v11632, %v11634
  %v11636 = vrot.slane %v11628, %v11635
  %v11638 = vunpack.c.l.s4 1966171168
  %v11639 = vunpack.c.0.s8 %v11638
  %v11640 = vlaneseq
  %v11641 = vshrl.u32 %v11640, 7
  %v11642 = vsub.s32 %v11639, %v11641
  %v11643 = vrot.slane %v11629, %v11642
  %v11644 = vcombine.low %v11636, %v11643
  %v11645 = vcombine.low %v11347, %v7064
  %v11646 = vcombine.low %v9094, %v11348
  %v11647 = vcombine.low %v11349, %v7066
  %v11648 = vcombine.low %v9096, %v11350
  %v11650 = vunpack.c.l.s4 1966171168
  %v11651 = vunpack.c.0.s8 %v11650
  %v11652 = vlaneseq
  %v11653 = vshrl.u32 %v11652, 7
  %v11654 = vsub.s32 %v11651, %v11653
  %v11655 = vrot.slane %v11645, %v11654
  %v11657 = vunpack.c.l.s4 1966171168
  %v11658 = vunpack.c.0.s8 %v11657
  %v11659 = vlaneseq
  %v11660 = vshrl.u32 %v11659, 7
  %v11661 = vsub.s32 %v11658, %v11660
  %v11662 = vrot.slane %v11646, %v11661
  %v11664 = vunpack.c.l.s4 1966171168
  %v11665 = vunpack.c.0.s8 %v11664
  %v11666 = vlaneseq
  %v11667 = vshrl.u32 %v11666, 7
  %v11668 = vsub.s32 %v11665, %v11667
  %v11669 = vrot.slane %v11647, %v11668
  %v11671 = vunpack.c.l.s4 1966171168
  %v11672 = vunpack.c.0.s8 %v11671
  %v11673 = vlaneseq
  %v11674 = vshrl.u32 %v11673, 7
  %v11675 = vsub.s32 %v11672, %v11674
  %v11676 = vrot.slane %v11648, %v11675
  %v11677 = vcombine.low %v11655, %v11662
  %v11678 = vcombine.low %v11669, %v11676
  %v11680 = vunpack.c.l.s4 1966171168
  %v11681 = vunpack.c.0.s8 %v11680
  %v11682 = vlaneseq
  %v11683 = vshrl.u32 %v11682, 7
  %v11684 = vsub.s32 %v11681, %v11683
  %v11685 = vrot.slane %v11677, %v11684
  %v11687 = vunpack.c.l.s4 1966171168
  %v11688 = vunpack.c.0.s8 %v11687
  %v11689 = vlaneseq
  %v11690 = vshrl.u32 %v11689, 7
  %v11691 = vsub.s32 %v11688, %v11690
  %v11692 = vrot.slane %v11678, %v11691
  %v11693 = vcombine.low %v11685, %v11692
  %v11695 = vsel %vm982, %v11399, 0
  %v11698 = vsel %vm982, %v11448, 0
  %v11701 = vsel %vm982, %v11497, 0
  %v11704 = vsel %vm982, %v11546, 0
  %v11707 = vsel %vm982, %v11595, 0
  %v11710 = vsel %vm982, %v11644, 0
  %v11713 = vsel %vm982, %v11693, 0
  %v11716 = vsel %vm1004, %v11054, 0
  %11718 = vmatprep.subr.bf16.mxu0 0
  %11719 = vmatpush1.bf16.msra.mxu0 %v11716
  %11720 = vmatprep.subr.bf16.mxu0 0
  %11721 = vmatpush1.bf16.msra.mxu0 0
  %11722 = vmatprep.subr.bf16.mxu0 0
  %11723 = vmatpush1.bf16.msra.mxu0 0
  %11724 = vmatprep.subr.bf16.mxu0 0
  %11725 = vmatpush1.bf16.msra.mxu0 0
  %11726 = vmatprep.subr.bf16.mxu0 0
  %11727 = vmatpush1.bf16.msra.mxu0 0
  %11728 = vmatprep.subr.bf16.mxu0 0
  %11729 = vmatpush1.bf16.msra.mxu0 0
  %11730 = vmatprep.subr.bf16.mxu0 0
  %11731 = vmatpush1.bf16.msra.mxu0 0
  %11732 = vmatprep.subr.bf16.mxu0 0
  %11733 = vmatpush1.bf16.msra.mxu0 0
  %11734 = vmatprep.subr.bf16.mxu0 0
  %11735 = vmatpush1.bf16.msra.mxu0 0
  %11736 = vmatprep.subr.bf16.mxu0 0
  %11737 = vmatpush1.bf16.msra.mxu0 0
  %11738 = vmatprep.subr.bf16.mxu0 0
  %11739 = vmatpush1.bf16.msra.mxu0 0
  %11740 = vmatprep.subr.bf16.mxu0 0
  %11741 = vmatpush1.bf16.msra.mxu0 0
  %11742 = vmatprep.subr.bf16.mxu0 0
  %11743 = vmatpush1.bf16.msra.mxu0 0
  %11744 = vmatprep.subr.bf16.mxu0 0
  %11745 = vmatpush1.bf16.msra.mxu0 0
  %11746 = vmatprep.subr.bf16.mxu0 0
  %11747 = vmatpush1.bf16.msra.mxu0 0
  %11748 = vmatprep.subr.bf16.mxu0 0
  %11749 = vmatpush1.bf16.msra.mxu0 0
  %11750 = vmatprep.mubr.bf16.mxu0 0
  %11751 = vmatmul.mubr.bf16.gmra.mrb[0].mxu0 %v11695
  %v11752 = vpop.f32.mrb[0].mxu0
  %v11753 = vadd.f32 0.0, %v11752
  %v11754 = vpop.f32.mrb[0].mxu0
  %v11755 = vpop.f32.mrb[0].mxu0
  %v11756 = vadd.f32 0.0, %v11755
  %v11757 = vpop.f32.mrb[0].mxu0
  %11758 = vmatprep.mubr.bf16.mxu0 0
  %11759 = vmatmul.mubr.bf16.gmra.mrb[0].mxu0 %v11698
  %v11760 = vpop.f32.mrb[0].mxu0
  %v11761 = vadd.f32 0.0, %v11760
  %v11762 = vpop.f32.mrb[0].mxu0
  %v11763 = vpop.f32.mrb[0].mxu0
  %v11764 = vadd.f32 0.0, %v11763
  %v11765 = vpop.f32.mrb[0].mxu0
  %11766 = vmatprep.mubr.bf16.mxu0 0
  %11767 = vmatmul.mubr.bf16.gmra.mrb[0].mxu0 %v11701
  %v11768 = vpop.f32.mrb[0].mxu0
  %v11769 = vadd.f32 0.0, %v11768
  %v11770 = vpop.f32.mrb[0].mxu0
  %v11771 = vpop.f32.mrb[0].mxu0
  %v11772 = vadd.f32 0.0, %v11771
  %v11773 = vpop.f32.mrb[0].mxu0
  %11774 = vmatprep.mubr.bf16.mxu0 0
  %11775 = vmatmul.mubr.bf16.gmra.mrb[0].mxu0 %v11704
  %v11776 = vpop.f32.mrb[0].mxu0
  %v11777 = vadd.f32 0.0, %v11776
  %v11778 = vpop.f32.mrb[0].mxu0
  %v11779 = vpop.f32.mrb[0].mxu0
  %v11780 = vadd.f32 0.0, %v11779
  %v11781 = vpop.f32.mrb[0].mxu0
  %11782 = vmatprep.mubr.bf16.mxu0 0
  %11783 = vmatmul.mubr.bf16.gmra.mrb[0].mxu0 %v11707
  %v11784 = vpop.f32.mrb[0].mxu0
  %v11785 = vadd.f32 0.0, %v11784
  %v11786 = vpop.f32.mrb[0].mxu0
  %v11787 = vpop.f32.mrb[0].mxu0
  %v11788 = vadd.f32 0.0, %v11787
  %v11789 = vpop.f32.mrb[0].mxu0
  %11790 = vmatprep.mubr.bf16.mxu0 0
  %11791 = vmatmul.mubr.bf16.gmra.mrb[0].mxu0 %v11710
  %v11792 = vpop.f32.mrb[0].mxu0
  %v11793 = vadd.f32 0.0, %v11792
  %v11794 = vpop.f32.mrb[0].mxu0
  %v11795 = vpop.f32.mrb[0].mxu0
  %v11796 = vadd.f32 0.0, %v11795
  %v11797 = vpop.f32.mrb[0].mxu0
  %11798 = vmatprep.mubr.bf16.mxu0 0
  %11799 = vmatmul.mubr.bf16.gmra.mrb[0].mxu0 %v11713
  %v11800 = vpop.f32.mrb[0].mxu0
  %v11801 = vadd.f32 0.0, %v11800
  %v11802 = vpop.f32.mrb[0].mxu0
  %v11803 = vpop.f32.mrb[0].mxu0
  %v11804 = vadd.f32 0.0, %v11803
  %v11805 = vpop.f32.mrb[0].mxu0
  %11806 = vdwg.mxu0
  %v11821 = vcombine.high %v11753, %v11753
  %v11823 = vunpack.c.l.s4 1966171168
  %v11824 = vunpack.c.0.s8 %v11823
  %v11825 = vlaneseq
  %v11826 = vshrl.u32 %v11825, 7
  %v11827 = vsub.s32 %v11824, %v11826
  %v11828 = vrot.slane %v11753, %v11827
  %v11830 = vunpack.c.l.s4 1966171168
  %v11831 = vunpack.c.0.s8 %v11830
  %v11832 = vlaneseq
  %v11833 = vshrl.u32 %v11832, 7
  %v11834 = vsub.s32 %v11831, %v11833
  %v11835 = vrot.slane %v11821, %v11834
  %v11836 = vcombine.high %v11828, %v11828
  %v11837 = vcombine.high %v11835, %v11835
  %v11839 = vunpack.c.l.s4 1966171168
  %v11840 = vunpack.c.0.s8 %v11839
  %v11841 = vlaneseq
  %v11842 = vshrl.u32 %v11841, 7
  %v11843 = vsub.s32 %v11840, %v11842
  %v11844 = vrot.slane %v11828, %v11843
  %v11846 = vunpack.c.l.s4 1966171168
  %v11847 = vunpack.c.0.s8 %v11846
  %v11848 = vlaneseq
  %v11849 = vshrl.u32 %v11848, 7
  %v11850 = vsub.s32 %v11847, %v11849
  %v11851 = vrot.slane %v11835, %v11850
  %v11853 = vunpack.c.l.s4 1966171168
  %v11854 = vunpack.c.0.s8 %v11853
  %v11855 = vlaneseq
  %v11856 = vshrl.u32 %v11855, 7
  %v11857 = vsub.s32 %v11854, %v11856
  %v11858 = vrot.slane %v11836, %v11857
  %v11860 = vunpack.c.l.s4 1966171168
  %v11861 = vunpack.c.0.s8 %v11860
  %v11862 = vlaneseq
  %v11863 = vshrl.u32 %v11862, 7
  %v11864 = vsub.s32 %v11861, %v11863
  %v11865 = vrot.slane %v11837, %v11864
  %v11866 = vcombine.high %v11844, %v11844
  %v11867 = vcombine.high %v11851, %v11851
  %v11868 = vcombine.high %v11858, %v11858
  %v11869 = vcombine.high %v11865, %v11865
  %v11870 = vcombine.high %v11756, %v11756
  %v11872 = vunpack.c.l.s4 1966171168
  %v11873 = vunpack.c.0.s8 %v11872
  %v11874 = vlaneseq
  %v11875 = vshrl.u32 %v11874, 7
  %v11876 = vsub.s32 %v11873, %v11875
  %v11877 = vrot.slane %v11756, %v11876
  %v11879 = vunpack.c.l.s4 1966171168
  %v11880 = vunpack.c.0.s8 %v11879
  %v11881 = vlaneseq
  %v11882 = vshrl.u32 %v11881, 7
  %v11883 = vsub.s32 %v11880, %v11882
  %v11884 = vrot.slane %v11870, %v11883
  %v11885 = vcombine.high %v11877, %v11877
  %v11886 = vcombine.high %v11884, %v11884
  %v11888 = vunpack.c.l.s4 1966171168
  %v11889 = vunpack.c.0.s8 %v11888
  %v11890 = vlaneseq
  %v11891 = vshrl.u32 %v11890, 7
  %v11892 = vsub.s32 %v11889, %v11891
  %v11893 = vrot.slane %v11877, %v11892
  %v11895 = vunpack.c.l.s4 1966171168
  %v11896 = vunpack.c.0.s8 %v11895
  %v11897 = vlaneseq
  %v11898 = vshrl.u32 %v11897, 7
  %v11899 = vsub.s32 %v11896, %v11898
  %v11900 = vrot.slane %v11884, %v11899
  %v11902 = vunpack.c.l.s4 1966171168
  %v11903 = vunpack.c.0.s8 %v11902
  %v11904 = vlaneseq
  %v11905 = vshrl.u32 %v11904, 7
  %v11906 = vsub.s32 %v11903, %v11905
  %v11907 = vrot.slane %v11885, %v11906
  %v11909 = vunpack.c.l.s4 1966171168
  %v11910 = vunpack.c.0.s8 %v11909
  %v11911 = vlaneseq
  %v11912 = vshrl.u32 %v11911, 7
  %v11913 = vsub.s32 %v11910, %v11912
  %v11914 = vrot.slane %v11886, %v11913
  %v11915 = vcombine.high %v11893, %v11893
  %v11916 = vcombine.high %v11900, %v11900
  %v11917 = vcombine.high %v11907, %v11907
  %v11918 = vcombine.high %v11914, %v11914
  %v11919 = vcombine.high %v11761, %v11761
  %v11921 = vunpack.c.l.s4 1966171168
  %v11922 = vunpack.c.0.s8 %v11921
  %v11923 = vlaneseq
  %v11924 = vshrl.u32 %v11923, 7
  %v11925 = vsub.s32 %v11922, %v11924
  %v11926 = vrot.slane %v11761, %v11925
  %v11928 = vunpack.c.l.s4 1966171168
  %v11929 = vunpack.c.0.s8 %v11928
  %v11930 = vlaneseq
  %v11931 = vshrl.u32 %v11930, 7
  %v11932 = vsub.s32 %v11929, %v11931
  %v11933 = vrot.slane %v11919, %v11932
  %v11934 = vcombine.high %v11926, %v11926
  %v11935 = vcombine.high %v11933, %v11933
  %v11937 = vunpack.c.l.s4 1966171168
  %v11938 = vunpack.c.0.s8 %v11937
  %v11939 = vlaneseq
  %v11940 = vshrl.u32 %v11939, 7
  %v11941 = vsub.s32 %v11938, %v11940
  %v11942 = vrot.slane %v11926, %v11941
  %v11944 = vunpack.c.l.s4 1966171168
  %v11945 = vunpack.c.0.s8 %v11944
  %v11946 = vlaneseq
  %v11947 = vshrl.u32 %v11946, 7
  %v11948 = vsub.s32 %v11945, %v11947
  %v11949 = vrot.slane %v11933, %v11948
  %v11951 = vunpack.c.l.s4 1966171168
  %v11952 = vunpack.c.0.s8 %v11951
  %v11953 = vlaneseq
  %v11954 = vshrl.u32 %v11953, 7
  %v11955 = vsub.s32 %v11952, %v11954
  %v11956 = vrot.slane %v11934, %v11955
  %v11958 = vunpack.c.l.s4 1966171168
  %v11959 = vunpack.c.0.s8 %v11958
  %v11960 = vlaneseq
  %v11961 = vshrl.u32 %v11960, 7
  %v11962 = vsub.s32 %v11959, %v11961
  %v11963 = vrot.slane %v11935, %v11962
  %v11964 = vcombine.high %v11942, %v11942
  %v11965 = vcombine.high %v11949, %v11949
  %v11966 = vcombine.high %v11956, %v11956
  %v11967 = vcombine.high %v11963, %v11963
  %v11968 = vcombine.high %v11764, %v11764
  %v11970 = vunpack.c.l.s4 1966171168
  %v11971 = vunpack.c.0.s8 %v11970
  %v11972 = vlaneseq
  %v11973 = vshrl.u32 %v11972, 7
  %v11974 = vsub.s32 %v11971, %v11973
  %v11975 = vrot.slane %v11764, %v11974
  %v11977 = vunpack.c.l.s4 1966171168
  %v11978 = vunpack.c.0.s8 %v11977
  %v11979 = vlaneseq
  %v11980 = vshrl.u32 %v11979, 7
  %v11981 = vsub.s32 %v11978, %v11980
  %v11982 = vrot.slane %v11968, %v11981
  %v11983 = vcombine.high %v11975, %v11975
  %v11984 = vcombine.high %v11982, %v11982
  %v11986 = vunpack.c.l.s4 1966171168
  %v11987 = vunpack.c.0.s8 %v11986
  %v11988 = vlaneseq
  %v11989 = vshrl.u32 %v11988, 7
  %v11990 = vsub.s32 %v11987, %v11989
  %v11991 = vrot.slane %v11975, %v11990
  %v11993 = vunpack.c.l.s4 1966171168
  %v11994 = vunpack.c.0.s8 %v11993
  %v11995 = vlaneseq
  %v11996 = vshrl.u32 %v11995, 7
  %v11997 = vsub.s32 %v11994, %v11996
  %v11998 = vrot.slane %v11982, %v11997
  %v12000 = vunpack.c.l.s4 1966171168
  %v12001 = vunpack.c.0.s8 %v12000
  %v12002 = vlaneseq
  %v12003 = vshrl.u32 %v12002, 7
  %v12004 = vsub.s32 %v12001, %v12003
  %v12005 = vrot.slane %v11983, %v12004
  %v12007 = vunpack.c.l.s4 1966171168
  %v12008 = vunpack.c.0.s8 %v12007
  %v12009 = vlaneseq
  %v12010 = vshrl.u32 %v12009, 7
  %v12011 = vsub.s32 %v12008, %v12010
  %v12012 = vrot.slane %v11984, %v12011
  %v12013 = vcombine.high %v11991, %v11991
  %v12014 = vcombine.high %v11998, %v11998
  %v12015 = vcombine.high %v12005, %v12005
  %v12016 = vcombine.high %v12012, %v12012
  %v12017 = vcombine.high %v11769, %v11769
  %v12019 = vunpack.c.l.s4 1966171168
  %v12020 = vunpack.c.0.s8 %v12019
  %v12021 = vlaneseq
  %v12022 = vshrl.u32 %v12021, 7
  %v12023 = vsub.s32 %v12020, %v12022
  %v12024 = vrot.slane %v11769, %v12023
  %v12026 = vunpack.c.l.s4 1966171168
  %v12027 = vunpack.c.0.s8 %v12026
  %v12028 = vlaneseq
  %v12029 = vshrl.u32 %v12028, 7
  %v12030 = vsub.s32 %v12027, %v12029
  %v12031 = vrot.slane %v12017, %v12030
  %v12032 = vcombine.high %v12024, %v12024
  %v12033 = vcombine.high %v12031, %v12031
  %v12035 = vunpack.c.l.s4 1966171168
  %v12036 = vunpack.c.0.s8 %v12035
  %v12037 = vlaneseq
  %v12038 = vshrl.u32 %v12037, 7
  %v12039 = vsub.s32 %v12036, %v12038
  %v12040 = vrot.slane %v12024, %v12039
  %v12042 = vunpack.c.l.s4 1966171168
  %v12043 = vunpack.c.0.s8 %v12042
  %v12044 = vlaneseq
  %v12045 = vshrl.u32 %v12044, 7
  %v12046 = vsub.s32 %v12043, %v12045
  %v12047 = vrot.slane %v12031, %v12046
  %v12049 = vunpack.c.l.s4 1966171168
  %v12050 = vunpack.c.0.s8 %v12049
  %v12051 = vlaneseq
  %v12052 = vshrl.u32 %v12051, 7
  %v12053 = vsub.s32 %v12050, %v12052
  %v12054 = vrot.slane %v12032, %v12053
  %v12056 = vunpack.c.l.s4 1966171168
  %v12057 = vunpack.c.0.s8 %v12056
  %v12058 = vlaneseq
  %v12059 = vshrl.u32 %v12058, 7
  %v12060 = vsub.s32 %v12057, %v12059
  %v12061 = vrot.slane %v12033, %v12060
  %v12062 = vcombine.high %v12040, %v12040
  %v12063 = vcombine.high %v12047, %v12047
  %v12064 = vcombine.high %v12054, %v12054
  %v12065 = vcombine.high %v12061, %v12061
  %v12066 = vcombine.high %v11772, %v11772
  %v12068 = vunpack.c.l.s4 1966171168
  %v12069 = vunpack.c.0.s8 %v12068
  %v12070 = vlaneseq
  %v12071 = vshrl.u32 %v12070, 7
  %v12072 = vsub.s32 %v12069, %v12071
  %v12073 = vrot.slane %v11772, %v12072
  %v12075 = vunpack.c.l.s4 1966171168
  %v12076 = vunpack.c.0.s8 %v12075
  %v12077 = vlaneseq
  %v12078 = vshrl.u32 %v12077, 7
  %v12079 = vsub.s32 %v12076, %v12078
  %v12080 = vrot.slane %v12066, %v12079
  %v12081 = vcombine.high %v12073, %v12073
  %v12082 = vcombine.high %v12080, %v12080
  %v12084 = vunpack.c.l.s4 1966171168
  %v12085 = vunpack.c.0.s8 %v12084
  %v12086 = vlaneseq
  %v12087 = vshrl.u32 %v12086, 7
  %v12088 = vsub.s32 %v12085, %v12087
  %v12089 = vrot.slane %v12073, %v12088
  %v12091 = vunpack.c.l.s4 1966171168
  %v12092 = vunpack.c.0.s8 %v12091
  %v12093 = vlaneseq
  %v12094 = vshrl.u32 %v12093, 7
  %v12095 = vsub.s32 %v12092, %v12094
  %v12096 = vrot.slane %v12080, %v12095
  %v12098 = vunpack.c.l.s4 1966171168
  %v12099 = vunpack.c.0.s8 %v12098
  %v12100 = vlaneseq
  %v12101 = vshrl.u32 %v12100, 7
  %v12102 = vsub.s32 %v12099, %v12101
  %v12103 = vrot.slane %v12081, %v12102
  %v12105 = vunpack.c.l.s4 1966171168
  %v12106 = vunpack.c.0.s8 %v12105
  %v12107 = vlaneseq
  %v12108 = vshrl.u32 %v12107, 7
  %v12109 = vsub.s32 %v12106, %v12108
  %v12110 = vrot.slane %v12082, %v12109
  %v12111 = vcombine.high %v12089, %v12089
  %v12112 = vcombine.high %v12096, %v12096
  %v12113 = vcombine.high %v12103, %v12103
  %v12114 = vcombine.high %v12110, %v12110
  %v12115 = vcombine.high %v11777, %v11777
  %v12117 = vunpack.c.l.s4 1966171168
  %v12118 = vunpack.c.0.s8 %v12117
  %v12119 = vlaneseq
  %v12120 = vshrl.u32 %v12119, 7
  %v12121 = vsub.s32 %v12118, %v12120
  %v12122 = vrot.slane %v11777, %v12121
  %v12124 = vunpack.c.l.s4 1966171168
  %v12125 = vunpack.c.0.s8 %v12124
  %v12126 = vlaneseq
  %v12127 = vshrl.u32 %v12126, 7
  %v12128 = vsub.s32 %v12125, %v12127
  %v12129 = vrot.slane %v12115, %v12128
  %v12130 = vcombine.high %v12122, %v12122
  %v12131 = vcombine.high %v12129, %v12129
  %v12133 = vunpack.c.l.s4 1966171168
  %v12134 = vunpack.c.0.s8 %v12133
  %v12135 = vlaneseq
  %v12136 = vshrl.u32 %v12135, 7
  %v12137 = vsub.s32 %v12134, %v12136
  %v12138 = vrot.slane %v12122, %v12137
  %v12140 = vunpack.c.l.s4 1966171168
  %v12141 = vunpack.c.0.s8 %v12140
  %v12142 = vlaneseq
  %v12143 = vshrl.u32 %v12142, 7
  %v12144 = vsub.s32 %v12141, %v12143
  %v12145 = vrot.slane %v12129, %v12144
  %v12147 = vunpack.c.l.s4 1966171168
  %v12148 = vunpack.c.0.s8 %v12147
  %v12149 = vlaneseq
  %v12150 = vshrl.u32 %v12149, 7
  %v12151 = vsub.s32 %v12148, %v12150
  %v12152 = vrot.slane %v12130, %v12151
  %v12154 = vunpack.c.l.s4 1966171168
  %v12155 = vunpack.c.0.s8 %v12154
  %v12156 = vlaneseq
  %v12157 = vshrl.u32 %v12156, 7
  %v12158 = vsub.s32 %v12155, %v12157
  %v12159 = vrot.slane %v12131, %v12158
  %v12160 = vcombine.high %v12138, %v12138
  %v12161 = vcombine.high %v12145, %v12145
  %v12162 = vcombine.high %v12152, %v12152
  %v12163 = vcombine.high %v12159, %v12159
  %v12164 = vcombine.high %v11780, %v11780
  %v12166 = vunpack.c.l.s4 1966171168
  %v12167 = vunpack.c.0.s8 %v12166
  %v12168 = vlaneseq
  %v12169 = vshrl.u32 %v12168, 7
  %v12170 = vsub.s32 %v12167, %v12169
  %v12171 = vrot.slane %v11780, %v12170
  %v12173 = vunpack.c.l.s4 1966171168
  %v12174 = vunpack.c.0.s8 %v12173
  %v12175 = vlaneseq
  %v12176 = vshrl.u32 %v12175, 7
  %v12177 = vsub.s32 %v12174, %v12176
  %v12178 = vrot.slane %v12164, %v12177
  %v12179 = vcombine.high %v12171, %v12171
  %v12180 = vcombine.high %v12178, %v12178
  %v12182 = vunpack.c.l.s4 1966171168
  %v12183 = vunpack.c.0.s8 %v12182
  %v12184 = vlaneseq
  %v12185 = vshrl.u32 %v12184, 7
  %v12186 = vsub.s32 %v12183, %v12185
  %v12187 = vrot.slane %v12171, %v12186
  %v12189 = vunpack.c.l.s4 1966171168
  %v12190 = vunpack.c.0.s8 %v12189
  %v12191 = vlaneseq
  %v12192 = vshrl.u32 %v12191, 7
  %v12193 = vsub.s32 %v12190, %v12192
  %v12194 = vrot.slane %v12178, %v12193
  %v12196 = vunpack.c.l.s4 1966171168
  %v12197 = vunpack.c.0.s8 %v12196
  %v12198 = vlaneseq
  %v12199 = vshrl.u32 %v12198, 7
  %v12200 = vsub.s32 %v12197, %v12199
  %v12201 = vrot.slane %v12179, %v12200
  %v12203 = vunpack.c.l.s4 1966171168
  %v12204 = vunpack.c.0.s8 %v12203
  %v12205 = vlaneseq
  %v12206 = vshrl.u32 %v12205, 7
  %v12207 = vsub.s32 %v12204, %v12206
  %v12208 = vrot.slane %v12180, %v12207
  %v12209 = vcombine.high %v12187, %v12187
  %v12210 = vcombine.high %v12194, %v12194
  %v12211 = vcombine.high %v12201, %v12201
  %v12212 = vcombine.high %v12208, %v12208
  %v12213 = vcombine.high %v11785, %v11785
  %v12215 = vunpack.c.l.s4 1966171168
  %v12216 = vunpack.c.0.s8 %v12215
  %v12217 = vlaneseq
  %v12218 = vshrl.u32 %v12217, 7
  %v12219 = vsub.s32 %v12216, %v12218
  %v12220 = vrot.slane %v11785, %v12219
  %v12222 = vunpack.c.l.s4 1966171168
  %v12223 = vunpack.c.0.s8 %v12222
  %v12224 = vlaneseq
  %v12225 = vshrl.u32 %v12224, 7
  %v12226 = vsub.s32 %v12223, %v12225
  %v12227 = vrot.slane %v12213, %v12226
  %v12228 = vcombine.high %v12220, %v12220
  %v12229 = vcombine.high %v12227, %v12227
  %v12231 = vunpack.c.l.s4 1966171168
  %v12232 = vunpack.c.0.s8 %v12231
  %v12233 = vlaneseq
  %v12234 = vshrl.u32 %v12233, 7
  %v12235 = vsub.s32 %v12232, %v12234
  %v12236 = vrot.slane %v12220, %v12235
  %v12238 = vunpack.c.l.s4 1966171168
  %v12239 = vunpack.c.0.s8 %v12238
  %v12240 = vlaneseq
  %v12241 = vshrl.u32 %v12240, 7
  %v12242 = vsub.s32 %v12239, %v12241
  %v12243 = vrot.slane %v12227, %v12242
  %v12245 = vunpack.c.l.s4 1966171168
  %v12246 = vunpack.c.0.s8 %v12245
  %v12247 = vlaneseq
  %v12248 = vshrl.u32 %v12247, 7
  %v12249 = vsub.s32 %v12246, %v12248
  %v12250 = vrot.slane %v12228, %v12249
  %v12252 = vunpack.c.l.s4 1966171168
  %v12253 = vunpack.c.0.s8 %v12252
  %v12254 = vlaneseq
  %v12255 = vshrl.u32 %v12254, 7
  %v12256 = vsub.s32 %v12253, %v12255
  %v12257 = vrot.slane %v12229, %v12256
  %v12258 = vcombine.high %v12236, %v12236
  %v12259 = vcombine.high %v12243, %v12243
  %v12260 = vcombine.high %v12250, %v12250
  %v12261 = vcombine.high %v12257, %v12257
  %v12262 = vcombine.high %v11788, %v11788
  %v12264 = vunpack.c.l.s4 1966171168
  %v12265 = vunpack.c.0.s8 %v12264
  %v12266 = vlaneseq
  %v12267 = vshrl.u32 %v12266, 7
  %v12268 = vsub.s32 %v12265, %v12267
  %v12269 = vrot.slane %v11788, %v12268
  %v12271 = vunpack.c.l.s4 1966171168
  %v12272 = vunpack.c.0.s8 %v12271
  %v12273 = vlaneseq
  %v12274 = vshrl.u32 %v12273, 7
  %v12275 = vsub.s32 %v12272, %v12274
  %v12276 = vrot.slane %v12262, %v12275
  %v12277 = vcombine.high %v12269, %v12269
  %v12278 = vcombine.high %v12276, %v12276
  %v12280 = vunpack.c.l.s4 1966171168
  %v12281 = vunpack.c.0.s8 %v12280
  %v12282 = vlaneseq
  %v12283 = vshrl.u32 %v12282, 7
  %v12284 = vsub.s32 %v12281, %v12283
  %v12285 = vrot.slane %v12269, %v12284
  %v12287 = vunpack.c.l.s4 1966171168
  %v12288 = vunpack.c.0.s8 %v12287
  %v12289 = vlaneseq
  %v12290 = vshrl.u32 %v12289, 7
  %v12291 = vsub.s32 %v12288, %v12290
  %v12292 = vrot.slane %v12276, %v12291
  %v12294 = vunpack.c.l.s4 1966171168
  %v12295 = vunpack.c.0.s8 %v12294
  %v12296 = vlaneseq
  %v12297 = vshrl.u32 %v12296, 7
  %v12298 = vsub.s32 %v12295, %v12297
  %v12299 = vrot.slane %v12277, %v12298
  %v12301 = vunpack.c.l.s4 1966171168
  %v12302 = vunpack.c.0.s8 %v12301
  %v12303 = vlaneseq
  %v12304 = vshrl.u32 %v12303, 7
  %v12305 = vsub.s32 %v12302, %v12304
  %v12306 = vrot.slane %v12278, %v12305
  %v12307 = vcombine.high %v12285, %v12285
  %v12308 = vcombine.high %v12292, %v12292
  %v12309 = vcombine.high %v12299, %v12299
  %v12310 = vcombine.high %v12306, %v12306
  %v12311 = vcombine.high %v11793, %v11793
  %v12313 = vunpack.c.l.s4 1966171168
  %v12314 = vunpack.c.0.s8 %v12313
  %v12315 = vlaneseq
  %v12316 = vshrl.u32 %v12315, 7
  %v12317 = vsub.s32 %v12314, %v12316
  %v12318 = vrot.slane %v11793, %v12317
  %v12320 = vunpack.c.l.s4 1966171168
  %v12321 = vunpack.c.0.s8 %v12320
  %v12322 = vlaneseq
  %v12323 = vshrl.u32 %v12322, 7
  %v12324 = vsub.s32 %v12321, %v12323
  %v12325 = vrot.slane %v12311, %v12324
  %v12326 = vcombine.high %v12318, %v12318
  %v12327 = vcombine.high %v12325, %v12325
  %v12329 = vunpack.c.l.s4 1966171168
  %v12330 = vunpack.c.0.s8 %v12329
  %v12331 = vlaneseq
  %v12332 = vshrl.u32 %v12331, 7
  %v12333 = vsub.s32 %v12330, %v12332
  %v12334 = vrot.slane %v12318, %v12333
  %v12336 = vunpack.c.l.s4 1966171168
  %v12337 = vunpack.c.0.s8 %v12336
  %v12338 = vlaneseq
  %v12339 = vshrl.u32 %v12338, 7
  %v12340 = vsub.s32 %v12337, %v12339
  %v12341 = vrot.slane %v12325, %v12340
  %v12343 = vunpack.c.l.s4 1966171168
  %v12344 = vunpack.c.0.s8 %v12343
  %v12345 = vlaneseq
  %v12346 = vshrl.u32 %v12345, 7
  %v12347 = vsub.s32 %v12344, %v12346
  %v12348 = vrot.slane %v12326, %v12347
  %v12350 = vunpack.c.l.s4 1966171168
  %v12351 = vunpack.c.0.s8 %v12350
  %v12352 = vlaneseq
  %v12353 = vshrl.u32 %v12352, 7
  %v12354 = vsub.s32 %v12351, %v12353
  %v12355 = vrot.slane %v12327, %v12354
  %v12356 = vcombine.high %v12334, %v12334
  %v12357 = vcombine.high %v12341, %v12341
  %v12358 = vcombine.high %v12348, %v12348
  %v12359 = vcombine.high %v12355, %v12355
  %v12360 = vcombine.high %v11796, %v11796
  %v12362 = vunpack.c.l.s4 1966171168
  %v12363 = vunpack.c.0.s8 %v12362
  %v12364 = vlaneseq
  %v12365 = vshrl.u32 %v12364, 7
  %v12366 = vsub.s32 %v12363, %v12365
  %v12367 = vrot.slane %v11796, %v12366
  %v12369 = vunpack.c.l.s4 1966171168
  %v12370 = vunpack.c.0.s8 %v12369
  %v12371 = vlaneseq
  %v12372 = vshrl.u32 %v12371, 7
  %v12373 = vsub.s32 %v12370, %v12372
  %v12374 = vrot.slane %v12360, %v12373
  %v12375 = vcombine.high %v12367, %v12367
  %v12376 = vcombine.high %v12374, %v12374
  %v12378 = vunpack.c.l.s4 1966171168
  %v12379 = vunpack.c.0.s8 %v12378
  %v12380 = vlaneseq
  %v12381 = vshrl.u32 %v12380, 7
  %v12382 = vsub.s32 %v12379, %v12381
  %v12383 = vrot.slane %v12367, %v12382
  %v12385 = vunpack.c.l.s4 1966171168
  %v12386 = vunpack.c.0.s8 %v12385
  %v12387 = vlaneseq
  %v12388 = vshrl.u32 %v12387, 7
  %v12389 = vsub.s32 %v12386, %v12388
  %v12390 = vrot.slane %v12374, %v12389
  %v12392 = vunpack.c.l.s4 1966171168
  %v12393 = vunpack.c.0.s8 %v12392
  %v12394 = vlaneseq
  %v12395 = vshrl.u32 %v12394, 7
  %v12396 = vsub.s32 %v12393, %v12395
  %v12397 = vrot.slane %v12375, %v12396
  %v12399 = vunpack.c.l.s4 1966171168
  %v12400 = vunpack.c.0.s8 %v12399
  %v12401 = vlaneseq
  %v12402 = vshrl.u32 %v12401, 7
  %v12403 = vsub.s32 %v12400, %v12402
  %v12404 = vrot.slane %v12376, %v12403
  %v12405 = vcombine.high %v12383, %v12383
  %v12406 = vcombine.high %v12390, %v12390
  %v12407 = vcombine.high %v12397, %v12397
  %v12408 = vcombine.high %v12404, %v12404
  %v12409 = vcombine.high %v11801, %v11801
  %v12411 = vunpack.c.l.s4 1966171168
  %v12412 = vunpack.c.0.s8 %v12411
  %v12413 = vlaneseq
  %v12414 = vshrl.u32 %v12413, 7
  %v12415 = vsub.s32 %v12412, %v12414
  %v12416 = vrot.slane %v11801, %v12415
  %v12418 = vunpack.c.l.s4 1966171168
  %v12419 = vunpack.c.0.s8 %v12418
  %v12420 = vlaneseq
  %v12421 = vshrl.u32 %v12420, 7
  %v12422 = vsub.s32 %v12419, %v12421
  %v12423 = vrot.slane %v12409, %v12422
  %v12424 = vcombine.high %v12416, %v12416
  %v12425 = vcombine.high %v12423, %v12423
  %v12427 = vunpack.c.l.s4 1966171168
  %v12428 = vunpack.c.0.s8 %v12427
  %v12429 = vlaneseq
  %v12430 = vshrl.u32 %v12429, 7
  %v12431 = vsub.s32 %v12428, %v12430
  %v12432 = vrot.slane %v12416, %v12431
  %v12434 = vunpack.c.l.s4 1966171168
  %v12435 = vunpack.c.0.s8 %v12434
  %v12436 = vlaneseq
  %v12437 = vshrl.u32 %v12436, 7
  %v12438 = vsub.s32 %v12435, %v12437
  %v12439 = vrot.slane %v12423, %v12438
  %v12441 = vunpack.c.l.s4 1966171168
  %v12442 = vunpack.c.0.s8 %v12441
  %v12443 = vlaneseq
  %v12444 = vshrl.u32 %v12443, 7
  %v12445 = vsub.s32 %v12442, %v12444
  %v12446 = vrot.slane %v12424, %v12445
  %v12448 = vunpack.c.l.s4 1966171168
  %v12449 = vunpack.c.0.s8 %v12448
  %v12450 = vlaneseq
  %v12451 = vshrl.u32 %v12450, 7
  %v12452 = vsub.s32 %v12449, %v12451
  %v12453 = vrot.slane %v12425, %v12452
  %v12454 = vcombine.high %v12432, %v12432
  %v12455 = vcombine.high %v12439, %v12439
  %v12456 = vcombine.high %v12446, %v12446
  %v12457 = vcombine.high %v12453, %v12453
  %v12458 = vcombine.high %v11804, %v11804
  %v12460 = vunpack.c.l.s4 1966171168
  %v12461 = vunpack.c.0.s8 %v12460
  %v12462 = vlaneseq
  %v12463 = vshrl.u32 %v12462, 7
  %v12464 = vsub.s32 %v12461, %v12463
  %v12465 = vrot.slane %v11804, %v12464
  %v12467 = vunpack.c.l.s4 1966171168
  %v12468 = vunpack.c.0.s8 %v12467
  %v12469 = vlaneseq
  %v12470 = vshrl.u32 %v12469, 7
  %v12471 = vsub.s32 %v12468, %v12470
  %v12472 = vrot.slane %v12458, %v12471
  %v12473 = vcombine.high %v12465, %v12465
  %v12474 = vcombine.high %v12472, %v12472
  %v12476 = vunpack.c.l.s4 1966171168
  %v12477 = vunpack.c.0.s8 %v12476
  %v12478 = vlaneseq
  %v12479 = vshrl.u32 %v12478, 7
  %v12480 = vsub.s32 %v12477, %v12479
  %v12481 = vrot.slane %v12465, %v12480
  %v12483 = vunpack.c.l.s4 1966171168
  %v12484 = vunpack.c.0.s8 %v12483
  %v12485 = vlaneseq
  %v12486 = vshrl.u32 %v12485, 7
  %v12487 = vsub.s32 %v12484, %v12486
  %v12488 = vrot.slane %v12472, %v12487
  %v12490 = vunpack.c.l.s4 1966171168
  %v12491 = vunpack.c.0.s8 %v12490
  %v12492 = vlaneseq
  %v12493 = vshrl.u32 %v12492, 7
  %v12494 = vsub.s32 %v12491, %v12493
  %v12495 = vrot.slane %v12473, %v12494
  %v12497 = vunpack.c.l.s4 1966171168
  %v12498 = vunpack.c.0.s8 %v12497
  %v12499 = vlaneseq
  %v12500 = vshrl.u32 %v12499, 7
  %v12501 = vsub.s32 %v12498, %v12500
  %v12502 = vrot.slane %v12474, %v12501
  %v12503 = vcombine.high %v12481, %v12481
  %v12504 = vcombine.high %v12488, %v12488
  %v12505 = vcombine.high %v12495, %v12495
  %v12506 = vcombine.high %v12502, %v12502
  %v12507 = vcombine.low %v11844, %v11858
  %v12508 = vcombine.low %v11866, %v11868
  %v12509 = vcombine.low %v11851, %v11865
  %v12511 = vunpack.c.l.s4 1966171168
  %v12512 = vunpack.c.0.s8 %v12511
  %v12513 = vlaneseq
  %v12514 = vshrl.u32 %v12513, 7
  %v12515 = vsub.s32 %v12512, %v12514
  %v12516 = vrot.slane %v12507, %v12515
  %v12518 = vunpack.c.l.s4 1966171168
  %v12519 = vunpack.c.0.s8 %v12518
  %v12520 = vlaneseq
  %v12521 = vshrl.u32 %v12520, 7
  %v12522 = vsub.s32 %v12519, %v12521
  %v12523 = vrot.slane %v12508, %v12522
  %v12525 = vunpack.c.l.s4 1966171168
  %v12526 = vunpack.c.0.s8 %v12525
  %v12527 = vlaneseq
  %v12528 = vshrl.u32 %v12527, 7
  %v12529 = vsub.s32 %v12526, %v12528
  %v12530 = vrot.slane %v12509, %v12529
  %v12532 = vunpack.c.l.s4 1966171168
  %v12533 = vunpack.c.0.s8 %v12532
  %v12534 = vlaneseq
  %v12535 = vshrl.u32 %v12534, 7
  %v12536 = vsub.s32 %v12533, %v12535
  %v12537 = vrot.slane %v11867, %v12536
  %v12538 = vcombine.low %v12516, %v12523
  %v12539 = vcombine.low %v12530, %v12537
  %v12541 = vunpack.c.l.s4 1966171168
  %v12542 = vunpack.c.0.s8 %v12541
  %v12543 = vlaneseq
  %v12544 = vshrl.u32 %v12543, 7
  %v12545 = vsub.s32 %v12542, %v12544
  %v12546 = vrot.slane %v12538, %v12545
  %v12548 = vunpack.c.l.s4 1966171168
  %v12549 = vunpack.c.0.s8 %v12548
  %v12550 = vlaneseq
  %v12551 = vshrl.u32 %v12550, 7
  %v12552 = vsub.s32 %v12549, %v12551
  %v12553 = vrot.slane %v12539, %v12552
  %v12554 = vcombine.low %v12546, %v12553
  %v12555 = vcombine.low %v11869, %v11893
  %v12556 = vcombine.low %v11907, %v11915
  %v12557 = vcombine.low %v11917, %v11900
  %v12559 = vunpack.c.l.s4 1966171168
  %v12560 = vunpack.c.0.s8 %v12559
  %v12561 = vlaneseq
  %v12562 = vshrl.u32 %v12561, 7
  %v12563 = vsub.s32 %v12560, %v12562
  %v12564 = vrot.slane %v12555, %v12563
  %v12566 = vunpack.c.l.s4 1966171168
  %v12567 = vunpack.c.0.s8 %v12566
  %v12568 = vlaneseq
  %v12569 = vshrl.u32 %v12568, 7
  %v12570 = vsub.s32 %v12567, %v12569
  %v12571 = vrot.slane %v12556, %v12570
  %v12573 = vunpack.c.l.s4 1966171168
  %v12574 = vunpack.c.0.s8 %v12573
  %v12575 = vlaneseq
  %v12576 = vshrl.u32 %v12575, 7
  %v12577 = vsub.s32 %v12574, %v12576
  %v12578 = vrot.slane %v12557, %v12577
  %v12580 = vunpack.c.l.s4 1966171168
  %v12581 = vunpack.c.0.s8 %v12580
  %v12582 = vlaneseq
  %v12583 = vshrl.u32 %v12582, 7
  %v12584 = vsub.s32 %v12581, %v12583
  %v12585 = vrot.slane %v11914, %v12584
  %v12586 = vcombine.low %v12564, %v12571
  %v12587 = vcombine.low %v12578, %v12585
  %v12589 = vunpack.c.l.s4 1966171168
  %v12590 = vunpack.c.0.s8 %v12589
  %v12591 = vlaneseq
  %v12592 = vshrl.u32 %v12591, 7
  %v12593 = vsub.s32 %v12590, %v12592
  %v12594 = vrot.slane %v12586, %v12593
  %v12596 = vunpack.c.l.s4 1966171168
  %v12597 = vunpack.c.0.s8 %v12596
  %v12598 = vlaneseq
  %v12599 = vshrl.u32 %v12598, 7
  %v12600 = vsub.s32 %v12597, %v12599
  %v12601 = vrot.slane %v12587, %v12600
  %v12602 = vcombine.low %v12594, %v12601
  %v12603 = vcombine.low %v11916, %v11918
  %v12604 = vcombine.low %v11942, %v11956
  %v12605 = vcombine.low %v11964, %v11966
  %v12607 = vunpack.c.l.s4 1966171168
  %v12608 = vunpack.c.0.s8 %v12607
  %v12609 = vlaneseq
  %v12610 = vshrl.u32 %v12609, 7
  %v12611 = vsub.s32 %v12608, %v12610
  %v12612 = vrot.slane %v12603, %v12611
  %v12614 = vunpack.c.l.s4 1966171168
  %v12615 = vunpack.c.0.s8 %v12614
  %v12616 = vlaneseq
  %v12617 = vshrl.u32 %v12616, 7
  %v12618 = vsub.s32 %v12615, %v12617
  %v12619 = vrot.slane %v12604, %v12618
  %v12621 = vunpack.c.l.s4 1966171168
  %v12622 = vunpack.c.0.s8 %v12621
  %v12623 = vlaneseq
  %v12624 = vshrl.u32 %v12623, 7
  %v12625 = vsub.s32 %v12622, %v12624
  %v12626 = vrot.slane %v12605, %v12625
  %v12628 = vunpack.c.l.s4 1966171168
  %v12629 = vunpack.c.0.s8 %v12628
  %v12630 = vlaneseq
  %v12631 = vshrl.u32 %v12630, 7
  %v12632 = vsub.s32 %v12629, %v12631
  %v12633 = vrot.slane %v11949, %v12632
  %v12634 = vcombine.low %v12612, %v12619
  %v12635 = vcombine.low %v12626, %v12633
  %v12637 = vunpack.c.l.s4 1966171168
  %v12638 = vunpack.c.0.s8 %v12637
  %v12639 = vlaneseq
  %v12640 = vshrl.u32 %v12639, 7
  %v12641 = vsub.s32 %v12638, %v12640
  %v12642 = vrot.slane %v12634, %v12641
  %v12644 = vunpack.c.l.s4 1966171168
  %v12645 = vunpack.c.0.s8 %v12644
  %v12646 = vlaneseq
  %v12647 = vshrl.u32 %v12646, 7
  %v12648 = vsub.s32 %v12645, %v12647
  %v12649 = vrot.slane %v12635, %v12648
  %v12650 = vcombine.low %v12642, %v12649
  %v12651 = vcombine.low %v11963, %v11965
  %v12652 = vcombine.low %v11967, %v11991
  %v12653 = vcombine.low %v12005, %v12013
  %v12655 = vunpack.c.l.s4 1966171168
  %v12656 = vunpack.c.0.s8 %v12655
  %v12657 = vlaneseq
  %v12658 = vshrl.u32 %v12657, 7
  %v12659 = vsub.s32 %v12656, %v12658
  %v12660 = vrot.slane %v12651, %v12659
  %v12662 = vunpack.c.l.s4 1966171168
  %v12663 = vunpack.c.0.s8 %v12662
  %v12664 = vlaneseq
  %v12665 = vshrl.u32 %v12664, 7
  %v12666 = vsub.s32 %v12663, %v12665
  %v12667 = vrot.slane %v12652, %v12666
  %v12669 = vunpack.c.l.s4 1966171168
  %v12670 = vunpack.c.0.s8 %v12669
  %v12671 = vlaneseq
  %v12672 = vshrl.u32 %v12671, 7
  %v12673 = vsub.s32 %v12670, %v12672
  %v12674 = vrot.slane %v12653, %v12673
  %v12676 = vunpack.c.l.s4 1966171168
  %v12677 = vunpack.c.0.s8 %v12676
  %v12678 = vlaneseq
  %v12679 = vshrl.u32 %v12678, 7
  %v12680 = vsub.s32 %v12677, %v12679
  %v12681 = vrot.slane %v12015, %v12680
  %v12682 = vcombine.low %v12660, %v12667
  %v12683 = vcombine.low %v12674, %v12681
  %v12685 = vunpack.c.l.s4 1966171168
  %v12686 = vunpack.c.0.s8 %v12685
  %v12687 = vlaneseq
  %v12688 = vshrl.u32 %v12687, 7
  %v12689 = vsub.s32 %v12686, %v12688
  %v12690 = vrot.slane %v12682, %v12689
  %v12692 = vunpack.c.l.s4 1966171168
  %v12693 = vunpack.c.0.s8 %v12692
  %v12694 = vlaneseq
  %v12695 = vshrl.u32 %v12694, 7
  %v12696 = vsub.s32 %v12693, %v12695
  %v12697 = vrot.slane %v12683, %v12696
  %v12698 = vcombine.low %v12690, %v12697
  %v12699 = vcombine.low %v11998, %v12012
  %v12700 = vcombine.low %v12014, %v12016
  %v12701 = vcombine.low %v12040, %v12054
  %v12703 = vunpack.c.l.s4 1966171168
  %v12704 = vunpack.c.0.s8 %v12703
  %v12705 = vlaneseq
  %v12706 = vshrl.u32 %v12705, 7
  %v12707 = vsub.s32 %v12704, %v12706
  %v12708 = vrot.slane %v12699, %v12707
  %v12710 = vunpack.c.l.s4 1966171168
  %v12711 = vunpack.c.0.s8 %v12710
  %v12712 = vlaneseq
  %v12713 = vshrl.u32 %v12712, 7
  %v12714 = vsub.s32 %v12711, %v12713
  %v12715 = vrot.slane %v12700, %v12714
  %v12717 = vunpack.c.l.s4 1966171168
  %v12718 = vunpack.c.0.s8 %v12717
  %v12719 = vlaneseq
  %v12720 = vshrl.u32 %v12719, 7
  %v12721 = vsub.s32 %v12718, %v12720
  %v12722 = vrot.slane %v12701, %v12721
  %v12724 = vunpack.c.l.s4 1966171168
  %v12725 = vunpack.c.0.s8 %v12724
  %v12726 = vlaneseq
  %v12727 = vshrl.u32 %v12726, 7
  %v12728 = vsub.s32 %v12725, %v12727
  %v12729 = vrot.slane %v12062, %v12728
  %v12730 = vcombine.low %v12708, %v12715
  %v12731 = vcombine.low %v12722, %v12729
  %v12733 = vunpack.c.l.s4 1966171168
  %v12734 = vunpack.c.0.s8 %v12733
  %v12735 = vlaneseq
  %v12736 = vshrl.u32 %v12735, 7
  %v12737 = vsub.s32 %v12734, %v12736
  %v12738 = vrot.slane %v12730, %v12737
  %v12740 = vunpack.c.l.s4 1966171168
  %v12741 = vunpack.c.0.s8 %v12740
  %v12742 = vlaneseq
  %v12743 = vshrl.u32 %v12742, 7
  %v12744 = vsub.s32 %v12741, %v12743
  %v12745 = vrot.slane %v12731, %v12744
  %v12746 = vcombine.low %v12738, %v12745
  %v12747 = vcombine.low %v12064, %v12047
  %v12748 = vcombine.low %v12061, %v12063
  %v12749 = vcombine.low %v12065, %v12089
  %v12751 = vunpack.c.l.s4 1966171168
  %v12752 = vunpack.c.0.s8 %v12751
  %v12753 = vlaneseq
  %v12754 = vshrl.u32 %v12753, 7
  %v12755 = vsub.s32 %v12752, %v12754
  %v12756 = vrot.slane %v12747, %v12755
  %v12758 = vunpack.c.l.s4 1966171168
  %v12759 = vunpack.c.0.s8 %v12758
  %v12760 = vlaneseq
  %v12761 = vshrl.u32 %v12760, 7
  %v12762 = vsub.s32 %v12759, %v12761
  %v12763 = vrot.slane %v12748, %v12762
  %v12765 = vunpack.c.l.s4 1966171168
  %v12766 = vunpack.c.0.s8 %v12765
  %v12767 = vlaneseq
  %v12768 = vshrl.u32 %v12767, 7
  %v12769 = vsub.s32 %v12766, %v12768
  %v12770 = vrot.slane %v12749, %v12769
  %v12772 = vunpack.c.l.s4 1966171168
  %v12773 = vunpack.c.0.s8 %v12772
  %v12774 = vlaneseq
  %v12775 = vshrl.u32 %v12774, 7
  %v12776 = vsub.s32 %v12773, %v12775
  %v12777 = vrot.slane %v12103, %v12776
  %v12778 = vcombine.low %v12756, %v12763
  %v12779 = vcombine.low %v12770, %v12777
  %v12781 = vunpack.c.l.s4 1966171168
  %v12782 = vunpack.c.0.s8 %v12781
  %v12783 = vlaneseq
  %v12784 = vshrl.u32 %v12783, 7
  %v12785 = vsub.s32 %v12782, %v12784
  %v12786 = vrot.slane %v12778, %v12785
  %v12788 = vunpack.c.l.s4 1966171168
  %v12789 = vunpack.c.0.s8 %v12788
  %v12790 = vlaneseq
  %v12791 = vshrl.u32 %v12790, 7
  %v12792 = vsub.s32 %v12789, %v12791
  %v12793 = vrot.slane %v12779, %v12792
  %v12794 = vcombine.low %v12786, %v12793
  %v12795 = vcombine.low %v12111, %v12113
  %v12796 = vcombine.low %v12096, %v12110
  %v12797 = vcombine.low %v12112, %v12114
  %v12799 = vunpack.c.l.s4 1966171168
  %v12800 = vunpack.c.0.s8 %v12799
  %v12801 = vlaneseq
  %v12802 = vshrl.u32 %v12801, 7
  %v12803 = vsub.s32 %v12800, %v12802
  %v12804 = vrot.slane %v12795, %v12803
  %v12806 = vunpack.c.l.s4 1966171168
  %v12807 = vunpack.c.0.s8 %v12806
  %v12808 = vlaneseq
  %v12809 = vshrl.u32 %v12808, 7
  %v12810 = vsub.s32 %v12807, %v12809
  %v12811 = vrot.slane %v12796, %v12810
  %v12813 = vunpack.c.l.s4 1966171168
  %v12814 = vunpack.c.0.s8 %v12813
  %v12815 = vlaneseq
  %v12816 = vshrl.u32 %v12815, 7
  %v12817 = vsub.s32 %v12814, %v12816
  %v12818 = vrot.slane %v12797, %v12817
  %v12820 = vunpack.c.l.s4 1966171168
  %v12821 = vunpack.c.0.s8 %v12820
  %v12822 = vlaneseq
  %v12823 = vshrl.u32 %v12822, 7
  %v12824 = vsub.s32 %v12821, %v12823
  %v12825 = vrot.slane %v12138, %v12824
  %v12826 = vcombine.low %v12804, %v12811
  %v12827 = vcombine.low %v12818, %v12825
  %v12829 = vunpack.c.l.s4 1966171168
  %v12830 = vunpack.c.0.s8 %v12829
  %v12831 = vlaneseq
  %v12832 = vshrl.u32 %v12831, 7
  %v12833 = vsub.s32 %v12830, %v12832
  %v12834 = vrot.slane %v12826, %v12833
  %v12836 = vunpack.c.l.s4 1966171168
  %v12837 = vunpack.c.0.s8 %v12836
  %v12838 = vlaneseq
  %v12839 = vshrl.u32 %v12838, 7
  %v12840 = vsub.s32 %v12837, %v12839
  %v12841 = vrot.slane %v12827, %v12840
  %v12842 = vcombine.low %v12834, %v12841
  %v12843 = vcombine.low %v12152, %v12160
  %v12844 = vcombine.low %v12162, %v12145
  %v12845 = vcombine.low %v12159, %v12161
  %v12847 = vunpack.c.l.s4 1966171168
  %v12848 = vunpack.c.0.s8 %v12847
  %v12849 = vlaneseq
  %v12850 = vshrl.u32 %v12849, 7
  %v12851 = vsub.s32 %v12848, %v12850
  %v12852 = vrot.slane %v12843, %v12851
  %v12854 = vunpack.c.l.s4 1966171168
  %v12855 = vunpack.c.0.s8 %v12854
  %v12856 = vlaneseq
  %v12857 = vshrl.u32 %v12856, 7
  %v12858 = vsub.s32 %v12855, %v12857
  %v12859 = vrot.slane %v12844, %v12858
  %v12861 = vunpack.c.l.s4 1966171168
  %v12862 = vunpack.c.0.s8 %v12861
  %v12863 = vlaneseq
  %v12864 = vshrl.u32 %v12863, 7
  %v12865 = vsub.s32 %v12862, %v12864
  %v12866 = vrot.slane %v12845, %v12865
  %v12868 = vunpack.c.l.s4 1966171168
  %v12869 = vunpack.c.0.s8 %v12868
  %v12870 = vlaneseq
  %v12871 = vshrl.u32 %v12870, 7
  %v12872 = vsub.s32 %v12869, %v12871
  %v12873 = vrot.slane %v12163, %v12872
  %v12874 = vcombine.low %v12852, %v12859
  %v12875 = vcombine.low %v12866, %v12873
  %v12877 = vunpack.c.l.s4 1966171168
  %v12878 = vunpack.c.0.s8 %v12877
  %v12879 = vlaneseq
  %v12880 = vshrl.u32 %v12879, 7
  %v12881 = vsub.s32 %v12878, %v12880
  %v12882 = vrot.slane %v12874, %v12881
  %v12884 = vunpack.c.l.s4 1966171168
  %v12885 = vunpack.c.0.s8 %v12884
  %v12886 = vlaneseq
  %v12887 = vshrl.u32 %v12886, 7
  %v12888 = vsub.s32 %v12885, %v12887
  %v12889 = vrot.slane %v12875, %v12888
  %v12890 = vcombine.low %v12882, %v12889
  %v12891 = vcombine.low %v12187, %v12201
  %v12892 = vcombine.low %v12209, %v12211
  %v12893 = vcombine.low %v12194, %v12208
  %v12895 = vunpack.c.l.s4 1966171168
  %v12896 = vunpack.c.0.s8 %v12895
  %v12897 = vlaneseq
  %v12898 = vshrl.u32 %v12897, 7
  %v12899 = vsub.s32 %v12896, %v12898
  %v12900 = vrot.slane %v12891, %v12899
  %v12902 = vunpack.c.l.s4 1966171168
  %v12903 = vunpack.c.0.s8 %v12902
  %v12904 = vlaneseq
  %v12905 = vshrl.u32 %v12904, 7
  %v12906 = vsub.s32 %v12903, %v12905
  %v12907 = vrot.slane %v12892, %v12906
  %v12909 = vunpack.c.l.s4 1966171168
  %v12910 = vunpack.c.0.s8 %v12909
  %v12911 = vlaneseq
  %v12912 = vshrl.u32 %v12911, 7
  %v12913 = vsub.s32 %v12910, %v12912
  %v12914 = vrot.slane %v12893, %v12913
  %v12916 = vunpack.c.l.s4 1966171168
  %v12917 = vunpack.c.0.s8 %v12916
  %v12918 = vlaneseq
  %v12919 = vshrl.u32 %v12918, 7
  %v12920 = vsub.s32 %v12917, %v12919
  %v12921 = vrot.slane %v12210, %v12920
  %v12922 = vcombine.low %v12900, %v12907
  %v12923 = vcombine.low %v12914, %v12921
  %v12925 = vunpack.c.l.s4 1966171168
  %v12926 = vunpack.c.0.s8 %v12925
  %v12927 = vlaneseq
  %v12928 = vshrl.u32 %v12927, 7
  %v12929 = vsub.s32 %v12926, %v12928
  %v12930 = vrot.slane %v12922, %v12929
  %v12932 = vunpack.c.l.s4 1966171168
  %v12933 = vunpack.c.0.s8 %v12932
  %v12934 = vlaneseq
  %v12935 = vshrl.u32 %v12934, 7
  %v12936 = vsub.s32 %v12933, %v12935
  %v12937 = vrot.slane %v12923, %v12936
  %v12938 = vcombine.low %v12930, %v12937
  %v12939 = vcombine.low %v12212, %v12236
  %v12940 = vcombine.low %v12250, %v12258
  %v12941 = vcombine.low %v12260, %v12243
  %v12943 = vunpack.c.l.s4 1966171168
  %v12944 = vunpack.c.0.s8 %v12943
  %v12945 = vlaneseq
  %v12946 = vshrl.u32 %v12945, 7
  %v12947 = vsub.s32 %v12944, %v12946
  %v12948 = vrot.slane %v12939, %v12947
  %v12950 = vunpack.c.l.s4 1966171168
  %v12951 = vunpack.c.0.s8 %v12950
  %v12952 = vlaneseq
  %v12953 = vshrl.u32 %v12952, 7
  %v12954 = vsub.s32 %v12951, %v12953
  %v12955 = vrot.slane %v12940, %v12954
  %v12957 = vunpack.c.l.s4 1966171168
  %v12958 = vunpack.c.0.s8 %v12957
  %v12959 = vlaneseq
  %v12960 = vshrl.u32 %v12959, 7
  %v12961 = vsub.s32 %v12958, %v12960
  %v12962 = vrot.slane %v12941, %v12961
  %v12964 = vunpack.c.l.s4 1966171168
  %v12965 = vunpack.c.0.s8 %v12964
  %v12966 = vlaneseq
  %v12967 = vshrl.u32 %v12966, 7
  %v12968 = vsub.s32 %v12965, %v12967
  %v12969 = vrot.slane %v12257, %v12968
  %v12970 = vcombine.low %v12948, %v12955
  %v12971 = vcombine.low %v12962, %v12969
  %v12973 = vunpack.c.l.s4 1966171168
  %v12974 = vunpack.c.0.s8 %v12973
  %v12975 = vlaneseq
  %v12976 = vshrl.u32 %v12975, 7
  %v12977 = vsub.s32 %v12974, %v12976
  %v12978 = vrot.slane %v12970, %v12977
  %v12980 = vunpack.c.l.s4 1966171168
  %v12981 = vunpack.c.0.s8 %v12980
  %v12982 = vlaneseq
  %v12983 = vshrl.u32 %v12982, 7
  %v12984 = vsub.s32 %v12981, %v12983
  %v12985 = vrot.slane %v12971, %v12984
  %v12986 = vcombine.low %v12978, %v12985
  %v12987 = vcombine.low %v12259, %v12261
  %v12988 = vcombine.low %v12285, %v12299
  %v12989 = vcombine.low %v12307, %v12309
  %v12991 = vunpack.c.l.s4 1966171168
  %v12992 = vunpack.c.0.s8 %v12991
  %v12993 = vlaneseq
  %v12994 = vshrl.u32 %v12993, 7
  %v12995 = vsub.s32 %v12992, %v12994
  %v12996 = vrot.slane %v12987, %v12995
  %v12998 = vunpack.c.l.s4 1966171168
  %v12999 = vunpack.c.0.s8 %v12998
  %v13000 = vlaneseq
  %v13001 = vshrl.u32 %v13000, 7
  %v13002 = vsub.s32 %v12999, %v13001
  %v13003 = vrot.slane %v12988, %v13002
  %v13005 = vunpack.c.l.s4 1966171168
  %v13006 = vunpack.c.0.s8 %v13005
  %v13007 = vlaneseq
  %v13008 = vshrl.u32 %v13007, 7
  %v13009 = vsub.s32 %v13006, %v13008
  %v13010 = vrot.slane %v12989, %v13009
  %v13012 = vunpack.c.l.s4 1966171168
  %v13013 = vunpack.c.0.s8 %v13012
  %v13014 = vlaneseq
  %v13015 = vshrl.u32 %v13014, 7
  %v13016 = vsub.s32 %v13013, %v13015
  %v13017 = vrot.slane %v12292, %v13016
  %v13018 = vcombine.low %v12996, %v13003
  %v13019 = vcombine.low %v13010, %v13017
  %v13021 = vunpack.c.l.s4 1966171168
  %v13022 = vunpack.c.0.s8 %v13021
  %v13023 = vlaneseq
  %v13024 = vshrl.u32 %v13023, 7
  %v13025 = vsub.s32 %v13022, %v13024
  %v13026 = vrot.slane %v13018, %v13025
  %v13028 = vunpack.c.l.s4 1966171168
  %v13029 = vunpack.c.0.s8 %v13028
  %v13030 = vlaneseq
  %v13031 = vshrl.u32 %v13030, 7
  %v13032 = vsub.s32 %v13029, %v13031
  %v13033 = vrot.slane %v13019, %v13032
  %v13034 = vcombine.low %v13026, %v13033
  %v13035 = vcombine.low %v12306, %v12308
  %v13036 = vcombine.low %v12310, %v12334
  %v13037 = vcombine.low %v12348, %v12356
  %v13039 = vunpack.c.l.s4 1966171168
  %v13040 = vunpack.c.0.s8 %v13039
  %v13041 = vlaneseq
  %v13042 = vshrl.u32 %v13041, 7
  %v13043 = vsub.s32 %v13040, %v13042
  %v13044 = vrot.slane %v13035, %v13043
  %v13046 = vunpack.c.l.s4 1966171168
  %v13047 = vunpack.c.0.s8 %v13046
  %v13048 = vlaneseq
  %v13049 = vshrl.u32 %v13048, 7
  %v13050 = vsub.s32 %v13047, %v13049
  %v13051 = vrot.slane %v13036, %v13050
  %v13053 = vunpack.c.l.s4 1966171168
  %v13054 = vunpack.c.0.s8 %v13053
  %v13055 = vlaneseq
  %v13056 = vshrl.u32 %v13055, 7
  %v13057 = vsub.s32 %v13054, %v13056
  %v13058 = vrot.slane %v13037, %v13057
  %v13060 = vunpack.c.l.s4 1966171168
  %v13061 = vunpack.c.0.s8 %v13060
  %v13062 = vlaneseq
  %v13063 = vshrl.u32 %v13062, 7
  %v13064 = vsub.s32 %v13061, %v13063
  %v13065 = vrot.slane %v12358, %v13064
  %v13066 = vcombine.low %v13044, %v13051
  %v13067 = vcombine.low %v13058, %v13065
  %v13069 = vunpack.c.l.s4 1966171168
  %v13070 = vunpack.c.0.s8 %v13069
  %v13071 = vlaneseq
  %v13072 = vshrl.u32 %v13071, 7
  %v13073 = vsub.s32 %v13070, %v13072
  %v13074 = vrot.slane %v13066, %v13073
  %v13076 = vunpack.c.l.s4 1966171168
  %v13077 = vunpack.c.0.s8 %v13076
  %v13078 = vlaneseq
  %v13079 = vshrl.u32 %v13078, 7
  %v13080 = vsub.s32 %v13077, %v13079
  %v13081 = vrot.slane %v13067, %v13080
  %v13082 = vcombine.low %v13074, %v13081
  %v13083 = vcombine.low %v12341, %v12355
  %v13084 = vcombine.low %v12357, %v12359
  %v13085 = vcombine.low %v12383, %v12397
  %v13087 = vunpack.c.l.s4 1966171168
  %v13088 = vunpack.c.0.s8 %v13087
  %v13089 = vlaneseq
  %v13090 = vshrl.u32 %v13089, 7
  %v13091 = vsub.s32 %v13088, %v13090
  %v13092 = vrot.slane %v13083, %v13091
  %v13094 = vunpack.c.l.s4 1966171168
  %v13095 = vunpack.c.0.s8 %v13094
  %v13096 = vlaneseq
  %v13097 = vshrl.u32 %v13096, 7
  %v13098 = vsub.s32 %v13095, %v13097
  %v13099 = vrot.slane %v13084, %v13098
  %v13101 = vunpack.c.l.s4 1966171168
  %v13102 = vunpack.c.0.s8 %v13101
  %v13103 = vlaneseq
  %v13104 = vshrl.u32 %v13103, 7
  %v13105 = vsub.s32 %v13102, %v13104
  %v13106 = vrot.slane %v13085, %v13105
  %v13108 = vunpack.c.l.s4 1966171168
  %v13109 = vunpack.c.0.s8 %v13108
  %v13110 = vlaneseq
  %v13111 = vshrl.u32 %v13110, 7
  %v13112 = vsub.s32 %v13109, %v13111
  %v13113 = vrot.slane %v12405, %v13112
  %v13114 = vcombine.low %v13092, %v13099
  %v13115 = vcombine.low %v13106, %v13113
  %v13117 = vunpack.c.l.s4 1966171168
  %v13118 = vunpack.c.0.s8 %v13117
  %v13119 = vlaneseq
  %v13120 = vshrl.u32 %v13119, 7
  %v13121 = vsub.s32 %v13118, %v13120
  %v13122 = vrot.slane %v13114, %v13121
  %v13124 = vunpack.c.l.s4 1966171168
  %v13125 = vunpack.c.0.s8 %v13124
  %v13126 = vlaneseq
  %v13127 = vshrl.u32 %v13126, 7
  %v13128 = vsub.s32 %v13125, %v13127
  %v13129 = vrot.slane %v13115, %v13128
  %v13130 = vcombine.low %v13122, %v13129
  %v13131 = vcombine.low %v12407, %v12390
  %v13132 = vcombine.low %v12404, %v12406
  %v13133 = vcombine.low %v12408, %v12432
  %v13135 = vunpack.c.l.s4 1966171168
  %v13136 = vunpack.c.0.s8 %v13135
  %v13137 = vlaneseq
  %v13138 = vshrl.u32 %v13137, 7
  %v13139 = vsub.s32 %v13136, %v13138
  %v13140 = vrot.slane %v13131, %v13139
  %v13142 = vunpack.c.l.s4 1966171168
  %v13143 = vunpack.c.0.s8 %v13142
  %v13144 = vlaneseq
  %v13145 = vshrl.u32 %v13144, 7
  %v13146 = vsub.s32 %v13143, %v13145
  %v13147 = vrot.slane %v13132, %v13146
  %v13149 = vunpack.c.l.s4 1966171168
  %v13150 = vunpack.c.0.s8 %v13149
  %v13151 = vlaneseq
  %v13152 = vshrl.u32 %v13151, 7
  %v13153 = vsub.s32 %v13150, %v13152
  %v13154 = vrot.slane %v13133, %v13153
  %v13156 = vunpack.c.l.s4 1966171168
  %v13157 = vunpack.c.0.s8 %v13156
  %v13158 = vlaneseq
  %v13159 = vshrl.u32 %v13158, 7
  %v13160 = vsub.s32 %v13157, %v13159
  %v13161 = vrot.slane %v12446, %v13160
  %v13162 = vcombine.low %v13140, %v13147
  %v13163 = vcombine.low %v13154, %v13161
  %v13165 = vunpack.c.l.s4 1966171168
  %v13166 = vunpack.c.0.s8 %v13165
  %v13167 = vlaneseq
  %v13168 = vshrl.u32 %v13167, 7
  %v13169 = vsub.s32 %v13166, %v13168
  %v13170 = vrot.slane %v13162, %v13169
  %v13172 = vunpack.c.l.s4 1966171168
  %v13173 = vunpack.c.0.s8 %v13172
  %v13174 = vlaneseq
  %v13175 = vshrl.u32 %v13174, 7
  %v13176 = vsub.s32 %v13173, %v13175
  %v13177 = vrot.slane %v13163, %v13176
  %v13178 = vcombine.low %v13170, %v13177
  %v13179 = vcombine.low %v12454, %v12456
  %v13180 = vcombine.low %v12439, %v12453
  %v13181 = vcombine.low %v12455, %v12457
  %v13183 = vunpack.c.l.s4 1966171168
  %v13184 = vunpack.c.0.s8 %v13183
  %v13185 = vlaneseq
  %v13186 = vshrl.u32 %v13185, 7
  %v13187 = vsub.s32 %v13184, %v13186
  %v13188 = vrot.slane %v13179, %v13187
  %v13190 = vunpack.c.l.s4 1966171168
  %v13191 = vunpack.c.0.s8 %v13190
  %v13192 = vlaneseq
  %v13193 = vshrl.u32 %v13192, 7
  %v13194 = vsub.s32 %v13191, %v13193
  %v13195 = vrot.slane %v13180, %v13194
  %v13197 = vunpack.c.l.s4 1966171168
  %v13198 = vunpack.c.0.s8 %v13197
  %v13199 = vlaneseq
  %v13200 = vshrl.u32 %v13199, 7
  %v13201 = vsub.s32 %v13198, %v13200
  %v13202 = vrot.slane %v13181, %v13201
  %v13204 = vunpack.c.l.s4 1966171168
  %v13205 = vunpack.c.0.s8 %v13204
  %v13206 = vlaneseq
  %v13207 = vshrl.u32 %v13206, 7
  %v13208 = vsub.s32 %v13205, %v13207
  %v13209 = vrot.slane %v12481, %v13208
  %v13210 = vcombine.low %v13188, %v13195
  %v13211 = vcombine.low %v13202, %v13209
  %v13213 = vunpack.c.l.s4 1966171168
  %v13214 = vunpack.c.0.s8 %v13213
  %v13215 = vlaneseq
  %v13216 = vshrl.u32 %v13215, 7
  %v13217 = vsub.s32 %v13214, %v13216
  %v13218 = vrot.slane %v13210, %v13217
  %v13220 = vunpack.c.l.s4 1966171168
  %v13221 = vunpack.c.0.s8 %v13220
  %v13222 = vlaneseq
  %v13223 = vshrl.u32 %v13222, 7
  %v13224 = vsub.s32 %v13221, %v13223
  %v13225 = vrot.slane %v13211, %v13224
  %v13226 = vcombine.low %v13218, %v13225
  %v13227 = vcombine.low %v12495, %v12503
  %v13228 = vcombine.low %v12505, %v12488
  %v13229 = vcombine.low %v12502, %v12504
  %v13231 = vunpack.c.l.s4 1966171168
  %v13232 = vunpack.c.0.s8 %v13231
  %v13233 = vlaneseq
  %v13234 = vshrl.u32 %v13233, 7
  %v13235 = vsub.s32 %v13232, %v13234
  %v13236 = vrot.slane %v13227, %v13235
  %v13238 = vunpack.c.l.s4 1966171168
  %v13239 = vunpack.c.0.s8 %v13238
  %v13240 = vlaneseq
  %v13241 = vshrl.u32 %v13240, 7
  %v13242 = vsub.s32 %v13239, %v13241
  %v13243 = vrot.slane %v13228, %v13242
  %v13245 = vunpack.c.l.s4 1966171168
  %v13246 = vunpack.c.0.s8 %v13245
  %v13247 = vlaneseq
  %v13248 = vshrl.u32 %v13247, 7
  %v13249 = vsub.s32 %v13246, %v13248
  %v13250 = vrot.slane %v13229, %v13249
  %v13252 = vunpack.c.l.s4 1966171168
  %v13253 = vunpack.c.0.s8 %v13252
  %v13254 = vlaneseq
  %v13255 = vshrl.u32 %v13254, 7
  %v13256 = vsub.s32 %v13253, %v13255
  %v13257 = vrot.slane %v12506, %v13256
  %v13258 = vcombine.low %v13236, %v13243
  %v13259 = vcombine.low %v13250, %v13257
  %v13261 = vunpack.c.l.s4 1966171168
  %v13262 = vunpack.c.0.s8 %v13261
  %v13263 = vlaneseq
  %v13264 = vshrl.u32 %v13263, 7
  %v13265 = vsub.s32 %v13262, %v13264
  %v13266 = vrot.slane %v13258, %v13265
  %v13268 = vunpack.c.l.s4 1966171168
  %v13269 = vunpack.c.0.s8 %v13268
  %v13270 = vlaneseq
  %v13271 = vshrl.u32 %v13270, 7
  %v13272 = vsub.s32 %v13269, %v13271
  %v13273 = vrot.slane %v13259, %v13272
  %v13274 = vcombine.low %v13266, %v13273
  %v13291 = vadd.f32 %v11037, %v12554
  %v13292 = vadd.f32 %v11038, %v12602
  %v13293 = vadd.f32 %v11039, %v12650
  %v13294 = vadd.f32 %v11040, %v12698
  %v13295 = vadd.f32 %v11041, %v12746
  %v13296 = vadd.f32 %v11042, %v12794
  %v13297 = vadd.f32 %v11043, %v12842
  %v13298 = vadd.f32 %v11044, %v12890
  %v13299 = vadd.f32 %v11045, %v12938
  %v13300 = vadd.f32 %v11046, %v12986
  %v13301 = vadd.f32 %v11047, %v13034
  %v13302 = vadd.f32 %v11048, %v13082
  %v13303 = vadd.f32 %v11049, %v13130
  %v13304 = vadd.f32 %v11050, %v13178
  %v13305 = vadd.f32 %v11051, %v13226
  %v13306 = vadd.f32 %v11052, %v13274
  %s13307 = scalar_lea.vmem %s1, 12
  %v13308 = vld [vmem:[%s13307] sm:$0x3]
  %v13309 = vcombine.high %v11077, %v11077
  %v13311 = vunpack.c.l.s4 1966171168
  %v13312 = vunpack.c.0.s8 %v13311
  %v13313 = vlaneseq
  %v13314 = vshrl.u32 %v13313, 7
  %v13315 = vsub.s32 %v13312, %v13314
  %v13316 = vrot.slane %v13309, %v13315
  %v13317 = vcombine.high %v11091, %v11091
  %v13319 = vunpack.c.l.s4 1966171168
  %v13320 = vunpack.c.0.s8 %v13319
  %v13321 = vlaneseq
  %v13322 = vshrl.u32 %v13321, 7
  %v13323 = vsub.s32 %v13320, %v13322
  %v13324 = vrot.slane %v13317, %v13323
  %v13325 = vcombine.high %v11105, %v11105
  %v13327 = vunpack.c.l.s4 1966171168
  %v13328 = vunpack.c.0.s8 %v13327
  %v13329 = vlaneseq
  %v13330 = vshrl.u32 %v13329, 7
  %v13331 = vsub.s32 %v13328, %v13330
  %v13332 = vrot.slane %v13325, %v13331
  %v13333 = vcombine.high %v11119, %v11119
  %v13335 = vunpack.c.l.s4 1966171168
  %v13336 = vunpack.c.0.s8 %v13335
  %v13337 = vlaneseq
  %v13338 = vshrl.u32 %v13337, 7
  %v13339 = vsub.s32 %v13336, %v13338
  %v13340 = vrot.slane %v13333, %v13339
  %v13341 = vcombine.high %v11133, %v11133
  %v13343 = vunpack.c.l.s4 1966171168
  %v13344 = vunpack.c.0.s8 %v13343
  %v13345 = vlaneseq
  %v13346 = vshrl.u32 %v13345, 7
  %v13347 = vsub.s32 %v13344, %v13346
  %v13348 = vrot.slane %v13341, %v13347
  %v13349 = vcombine.high %v11147, %v11147
  %v13351 = vunpack.c.l.s4 1966171168
  %v13352 = vunpack.c.0.s8 %v13351
  %v13353 = vlaneseq
  %v13354 = vshrl.u32 %v13353, 7
  %v13355 = vsub.s32 %v13352, %v13354
  %v13356 = vrot.slane %v13349, %v13355
  %v13357 = vcombine.high %v11161, %v11161
  %v13359 = vunpack.c.l.s4 1966171168
  %v13360 = vunpack.c.0.s8 %v13359
  %v13361 = vlaneseq
  %v13362 = vshrl.u32 %v13361, 7
  %v13363 = vsub.s32 %v13360, %v13362
  %v13364 = vrot.slane %v13357, %v13363
  %v13365 = vcombine.high %v11175, %v11175
  %v13367 = vunpack.c.l.s4 1966171168
  %v13368 = vunpack.c.0.s8 %v13367
  %v13369 = vlaneseq
  %v13370 = vshrl.u32 %v13369, 7
  %v13371 = vsub.s32 %v13368, %v13370
  %v13372 = vrot.slane %v13365, %v13371
  %v13373 = vcombine.high %v11189, %v11189
  %v13375 = vunpack.c.l.s4 1966171168
  %v13376 = vunpack.c.0.s8 %v13375
  %v13377 = vlaneseq
  %v13378 = vshrl.u32 %v13377, 7
  %v13379 = vsub.s32 %v13376, %v13378
  %v13380 = vrot.slane %v13373, %v13379
  %v13381 = vcombine.high %v11203, %v11203
  %v13383 = vunpack.c.l.s4 1966171168
  %v13384 = vunpack.c.0.s8 %v13383
  %v13385 = vlaneseq
  %v13386 = vshrl.u32 %v13385, 7
  %v13387 = vsub.s32 %v13384, %v13386
  %v13388 = vrot.slane %v13381, %v13387
  %v13389 = vcombine.high %v11217, %v11217
  %v13391 = vunpack.c.l.s4 1966171168
  %v13392 = vunpack.c.0.s8 %v13391
  %v13393 = vlaneseq
  %v13394 = vshrl.u32 %v13393, 7
  %v13395 = vsub.s32 %v13392, %v13394
  %v13396 = vrot.slane %v13389, %v13395
  %v13397 = vcombine.high %v11231, %v11231
  %v13399 = vunpack.c.l.s4 1966171168
  %v13400 = vunpack.c.0.s8 %v13399
  %v13401 = vlaneseq
  %v13402 = vshrl.u32 %v13401, 7
  %v13403 = vsub.s32 %v13400, %v13402
  %v13404 = vrot.slane %v13397, %v13403
  %v13405 = vcombine.high %v11245, %v11245
  %v13407 = vunpack.c.l.s4 1966171168
  %v13408 = vunpack.c.0.s8 %v13407
  %v13409 = vlaneseq
  %v13410 = vshrl.u32 %v13409, 7
  %v13411 = vsub.s32 %v13408, %v13410
  %v13412 = vrot.slane %v13405, %v13411
  %v13413 = vcombine.high %v11259, %v11259
  %v13415 = vunpack.c.l.s4 1966171168
  %v13416 = vunpack.c.0.s8 %v13415
  %v13417 = vlaneseq
  %v13418 = vshrl.u32 %v13417, 7
  %v13419 = vsub.s32 %v13416, %v13418
  %v13420 = vrot.slane %v13413, %v13419
  %v13421 = vcombine.high %v11273, %v11273
  %v13423 = vunpack.c.l.s4 1966171168
  %v13424 = vunpack.c.0.s8 %v13423
  %v13425 = vlaneseq
  %v13426 = vshrl.u32 %v13425, 7
  %v13427 = vsub.s32 %v13424, %v13426
  %v13428 = vrot.slane %v13421, %v13427
  %v13429 = vcombine.high %v11287, %v11287
  %v13431 = vunpack.c.l.s4 1966171168
  %v13432 = vunpack.c.0.s8 %v13431
  %v13433 = vlaneseq
  %v13434 = vshrl.u32 %v13433, 7
  %v13435 = vsub.s32 %v13432, %v13434
  %v13436 = vrot.slane %v13429, %v13435
  %v13437 = vunpack.i.h.s16 %v11084
  %v13438 = vunpack.i.l.s16 %v13316
  %v13439 = vunpack.i.h.s16 %v11098
  %v13440 = vunpack.i.l.s16 %v13324
  %v13441 = vunpack.i.h.s16 %v11112
  %v13442 = vunpack.i.l.s16 %v13332
  %v13443 = vunpack.i.h.s16 %v11126
  %v13444 = vunpack.i.l.s16 %v13340
  %v13445 = vunpack.i.h.s16 %v11140
  %v13446 = vunpack.i.l.s16 %v13348
  %v13447 = vunpack.i.h.s16 %v11154
  %v13448 = vunpack.i.l.s16 %v13356
  %v13449 = vunpack.i.h.s16 %v11168
  %v13450 = vunpack.i.l.s16 %v13364
  %v13451 = vunpack.i.h.s16 %v11182
  %v13452 = vunpack.i.l.s16 %v13372
  %v13453 = vunpack.i.h.s16 %v11196
  %v13454 = vunpack.i.l.s16 %v13380
  %v13455 = vunpack.i.h.s16 %v11210
  %v13456 = vunpack.i.l.s16 %v13388
  %v13457 = vunpack.i.h.s16 %v11224
  %v13458 = vunpack.i.l.s16 %v13396
  %v13459 = vunpack.i.h.s16 %v11238
  %v13460 = vunpack.i.l.s16 %v13404
  %v13461 = vunpack.i.h.s16 %v11252
  %v13462 = vunpack.i.l.s16 %v13412
  %v13463 = vunpack.i.h.s16 %v11266
  %v13464 = vunpack.i.l.s16 %v13420
  %v13465 = vunpack.i.h.s16 %v11280
  %v13466 = vunpack.i.l.s16 %v13428
  %v13467 = vunpack.i.h.s16 %v11294
  %v13468 = vunpack.i.l.s16 %v13436
  %v13469 = vpack.i.b16 %v13437, %v11296
  %v13470 = vpack.i.b16 %v7014, %v13438
  %v13471 = vpack.i.b16 %v13440, %v13439
  %v13472 = vpack.i.b16 %v13441, %v11300
  %v13473 = vpack.i.b16 %v7018, %v13442
  %v13474 = vpack.i.b16 %v13444, %v13443
  %v13475 = vpack.i.b16 %v13445, %v11304
  %v13476 = vpack.i.b16 %v7022, %v13446
  %v13477 = vpack.i.b16 %v13448, %v13447
  %v13478 = vpack.i.b16 %v13449, %v11308
  %v13479 = vpack.i.b16 %v7026, %v13450
  %v13480 = vpack.i.b16 %v13452, %v13451
  %v13481 = vpack.i.b16 %v13453, %v11312
  %v13482 = vpack.i.b16 %v7030, %v13454
  %v13483 = vpack.i.b16 %v13456, %v13455
  %v13484 = vpack.i.b16 %v13457, %v11316
  %v13485 = vpack.i.b16 %v7034, %v13458
  %v13486 = vpack.i.b16 %v13460, %v13459
  %v13487 = vpack.i.b16 %v13461, %v11320
  %v13488 = vpack.i.b16 %v7038, %v13462
  %v13489 = vpack.i.b16 %v13464, %v13463
  %v13490 = vpack.i.b16 %v13465, %v11324
  %v13491 = vpack.i.b16 %v7042, %v13466
  %v13492 = vpack.i.b16 %v13468, %v13467
  %v13493 = vcombine.low %v9073, %v11327
  %v13494 = vcombine.low %v13469, %v13470
  %v13495 = vcombine.low %v9075, %v11329
  %v13496 = vcombine.low %v13471, %v9076
  %v13498 = vunpack.c.l.s4 1966171168
  %v13499 = vunpack.c.0.s8 %v13498
  %v13500 = vlaneseq
  %v13501 = vshrl.u32 %v13500, 7
  %v13502 = vsub.s32 %v13499, %v13501
  %v13503 = vrot.slane %v13493, %v13502
  %v13505 = vunpack.c.l.s4 1966171168
  %v13506 = vunpack.c.0.s8 %v13505
  %v13507 = vlaneseq
  %v13508 = vshrl.u32 %v13507, 7
  %v13509 = vsub.s32 %v13506, %v13508
  %v13510 = vrot.slane %v13494, %v13509
  %v13512 = vunpack.c.l.s4 1966171168
  %v13513 = vunpack.c.0.s8 %v13512
  %v13514 = vlaneseq
  %v13515 = vshrl.u32 %v13514, 7
  %v13516 = vsub.s32 %v13513, %v13515
  %v13517 = vrot.slane %v13495, %v13516
  %v13519 = vunpack.c.l.s4 1966171168
  %v13520 = vunpack.c.0.s8 %v13519
  %v13521 = vlaneseq
  %v13522 = vshrl.u32 %v13521, 7
  %v13523 = vsub.s32 %v13520, %v13522
  %v13524 = vrot.slane %v13496, %v13523
  %v13525 = vcombine.low %v13503, %v13510
  %v13526 = vcombine.low %v13517, %v13524
  %v13528 = vunpack.c.l.s4 1966171168
  %v13529 = vunpack.c.0.s8 %v13528
  %v13530 = vlaneseq
  %v13531 = vshrl.u32 %v13530, 7
  %v13532 = vsub.s32 %v13529, %v13531
  %v13533 = vrot.slane %v13525, %v13532
  %v13535 = vunpack.c.l.s4 1966171168
  %v13536 = vunpack.c.0.s8 %v13535
  %v13537 = vlaneseq
  %v13538 = vshrl.u32 %v13537, 7
  %v13539 = vsub.s32 %v13536, %v13538
  %v13540 = vrot.slane %v13526, %v13539
  %v13541 = vcombine.low %v13533, %v13540
  %v13542 = vcombine.low %v11330, %v13472
  %v13543 = vcombine.low %v13473, %v9078
  %v13544 = vcombine.low %v11332, %v13474
  %v13545 = vcombine.low %v9079, %v11333
  %v13547 = vunpack.c.l.s4 1966171168
  %v13548 = vunpack.c.0.s8 %v13547
  %v13549 = vlaneseq
  %v13550 = vshrl.u32 %v13549, 7
  %v13551 = vsub.s32 %v13548, %v13550
  %v13552 = vrot.slane %v13542, %v13551
  %v13554 = vunpack.c.l.s4 1966171168
  %v13555 = vunpack.c.0.s8 %v13554
  %v13556 = vlaneseq
  %v13557 = vshrl.u32 %v13556, 7
  %v13558 = vsub.s32 %v13555, %v13557
  %v13559 = vrot.slane %v13543, %v13558
  %v13561 = vunpack.c.l.s4 1966171168
  %v13562 = vunpack.c.0.s8 %v13561
  %v13563 = vlaneseq
  %v13564 = vshrl.u32 %v13563, 7
  %v13565 = vsub.s32 %v13562, %v13564
  %v13566 = vrot.slane %v13544, %v13565
  %v13568 = vunpack.c.l.s4 1966171168
  %v13569 = vunpack.c.0.s8 %v13568
  %v13570 = vlaneseq
  %v13571 = vshrl.u32 %v13570, 7
  %v13572 = vsub.s32 %v13569, %v13571
  %v13573 = vrot.slane %v13545, %v13572
  %v13574 = vcombine.low %v13552, %v13559
  %v13575 = vcombine.low %v13566, %v13573
  %v13577 = vunpack.c.l.s4 1966171168
  %v13578 = vunpack.c.0.s8 %v13577
  %v13579 = vlaneseq
  %v13580 = vshrl.u32 %v13579, 7
  %v13581 = vsub.s32 %v13578, %v13580
  %v13582 = vrot.slane %v13574, %v13581
  %v13584 = vunpack.c.l.s4 1966171168
  %v13585 = vunpack.c.0.s8 %v13584
  %v13586 = vlaneseq
  %v13587 = vshrl.u32 %v13586, 7
  %v13588 = vsub.s32 %v13585, %v13587
  %v13589 = vrot.slane %v13575, %v13588
  %v13590 = vcombine.low %v13582, %v13589
  %v13591 = vcombine.low %v13475, %v13476
  %v13592 = vcombine.low %v9081, %v11335
  %v13593 = vcombine.low %v13477, %v9082
  %v13594 = vcombine.low %v11336, %v13478
  %v13596 = vunpack.c.l.s4 1966171168
  %v13597 = vunpack.c.0.s8 %v13596
  %v13598 = vlaneseq
  %v13599 = vshrl.u32 %v13598, 7
  %v13600 = vsub.s32 %v13597, %v13599
  %v13601 = vrot.slane %v13591, %v13600
  %v13603 = vunpack.c.l.s4 1966171168
  %v13604 = vunpack.c.0.s8 %v13603
  %v13605 = vlaneseq
  %v13606 = vshrl.u32 %v13605, 7
  %v13607 = vsub.s32 %v13604, %v13606
  %v13608 = vrot.slane %v13592, %v13607
  %v13610 = vunpack.c.l.s4 1966171168
  %v13611 = vunpack.c.0.s8 %v13610
  %v13612 = vlaneseq
  %v13613 = vshrl.u32 %v13612, 7
  %v13614 = vsub.s32 %v13611, %v13613
  %v13615 = vrot.slane %v13593, %v13614
  %v13617 = vunpack.c.l.s4 1966171168
  %v13618 = vunpack.c.0.s8 %v13617
  %v13619 = vlaneseq
  %v13620 = vshrl.u32 %v13619, 7
  %v13621 = vsub.s32 %v13618, %v13620
  %v13622 = vrot.slane %v13594, %v13621
  %v13623 = vcombine.low %v13601, %v13608
  %v13624 = vcombine.low %v13615, %v13622
  %v13626 = vunpack.c.l.s4 1966171168
  %v13627 = vunpack.c.0.s8 %v13626
  %v13628 = vlaneseq
  %v13629 = vshrl.u32 %v13628, 7
  %v13630 = vsub.s32 %v13627, %v13629
  %v13631 = vrot.slane %v13623, %v13630
  %v13633 = vunpack.c.l.s4 1966171168
  %v13634 = vunpack.c.0.s8 %v13633
  %v13635 = vlaneseq
  %v13636 = vshrl.u32 %v13635, 7
  %v13637 = vsub.s32 %v13634, %v13636
  %v13638 = vrot.slane %v13624, %v13637
  %v13639 = vcombine.low %v13631, %v13638
  %v13640 = vcombine.low %v13479, %v9084
  %v13641 = vcombine.low %v11338, %v13480
  %v13642 = vcombine.low %v9085, %v11339
  %v13643 = vcombine.low %v13481, %v13482
  %v13645 = vunpack.c.l.s4 1966171168
  %v13646 = vunpack.c.0.s8 %v13645
  %v13647 = vlaneseq
  %v13648 = vshrl.u32 %v13647, 7
  %v13649 = vsub.s32 %v13646, %v13648
  %v13650 = vrot.slane %v13640, %v13649
  %v13652 = vunpack.c.l.s4 1966171168
  %v13653 = vunpack.c.0.s8 %v13652
  %v13654 = vlaneseq
  %v13655 = vshrl.u32 %v13654, 7
  %v13656 = vsub.s32 %v13653, %v13655
  %v13657 = vrot.slane %v13641, %v13656
  %v13659 = vunpack.c.l.s4 1966171168
  %v13660 = vunpack.c.0.s8 %v13659
  %v13661 = vlaneseq
  %v13662 = vshrl.u32 %v13661, 7
  %v13663 = vsub.s32 %v13660, %v13662
  %v13664 = vrot.slane %v13642, %v13663
  %v13666 = vunpack.c.l.s4 1966171168
  %v13667 = vunpack.c.0.s8 %v13666
  %v13668 = vlaneseq
  %v13669 = vshrl.u32 %v13668, 7
  %v13670 = vsub.s32 %v13667, %v13669
  %v13671 = vrot.slane %v13643, %v13670
  %v13672 = vcombine.low %v13650, %v13657
  %v13673 = vcombine.low %v13664, %v13671
  %v13675 = vunpack.c.l.s4 1966171168
  %v13676 = vunpack.c.0.s8 %v13675
  %v13677 = vlaneseq
  %v13678 = vshrl.u32 %v13677, 7
  %v13679 = vsub.s32 %v13676, %v13678
  %v13680 = vrot.slane %v13672, %v13679
  %v13682 = vunpack.c.l.s4 1966171168
  %v13683 = vunpack.c.0.s8 %v13682
  %v13684 = vlaneseq
  %v13685 = vshrl.u32 %v13684, 7
  %v13686 = vsub.s32 %v13683, %v13685
  %v13687 = vrot.slane %v13673, %v13686
  %v13688 = vcombine.low %v13680, %v13687
  %v13689 = vcombine.low %v9087, %v11341
  %v13690 = vcombine.low %v13483, %v9088
  %v13691 = vcombine.low %v11342, %v13484
  %v13692 = vcombine.low %v13485, %v9090
  %v13694 = vunpack.c.l.s4 1966171168
  %v13695 = vunpack.c.0.s8 %v13694
  %v13696 = vlaneseq
  %v13697 = vshrl.u32 %v13696, 7
  %v13698 = vsub.s32 %v13695, %v13697
  %v13699 = vrot.slane %v13689, %v13698
  %v13701 = vunpack.c.l.s4 1966171168
  %v13702 = vunpack.c.0.s8 %v13701
  %v13703 = vlaneseq
  %v13704 = vshrl.u32 %v13703, 7
  %v13705 = vsub.s32 %v13702, %v13704
  %v13706 = vrot.slane %v13690, %v13705
  %v13708 = vunpack.c.l.s4 1966171168
  %v13709 = vunpack.c.0.s8 %v13708
  %v13710 = vlaneseq
  %v13711 = vshrl.u32 %v13710, 7
  %v13712 = vsub.s32 %v13709, %v13711
  %v13713 = vrot.slane %v13691, %v13712
  %v13715 = vunpack.c.l.s4 1966171168
  %v13716 = vunpack.c.0.s8 %v13715
  %v13717 = vlaneseq
  %v13718 = vshrl.u32 %v13717, 7
  %v13719 = vsub.s32 %v13716, %v13718
  %v13720 = vrot.slane %v13692, %v13719
  %v13721 = vcombine.low %v13699, %v13706
  %v13722 = vcombine.low %v13713, %v13720
  %v13724 = vunpack.c.l.s4 1966171168
  %v13725 = vunpack.c.0.s8 %v13724
  %v13726 = vlaneseq
  %v13727 = vshrl.u32 %v13726, 7
  %v13728 = vsub.s32 %v13725, %v13727
  %v13729 = vrot.slane %v13721, %v13728
  %v13731 = vunpack.c.l.s4 1966171168
  %v13732 = vunpack.c.0.s8 %v13731
  %v13733 = vlaneseq
  %v13734 = vshrl.u32 %v13733, 7
  %v13735 = vsub.s32 %v13732, %v13734
  %v13736 = vrot.slane %v13722, %v13735
  %v13737 = vcombine.low %v13729, %v13736
  %v13738 = vcombine.low %v11344, %v13486
  %v13739 = vcombine.low %v9091, %v11345
  %v13740 = vcombine.low %v13487, %v13488
  %v13741 = vcombine.low %v9093, %v11347
  %v13743 = vunpack.c.l.s4 1966171168
  %v13744 = vunpack.c.0.s8 %v13743
  %v13745 = vlaneseq
  %v13746 = vshrl.u32 %v13745, 7
  %v13747 = vsub.s32 %v13744, %v13746
  %v13748 = vrot.slane %v13738, %v13747
  %v13750 = vunpack.c.l.s4 1966171168
  %v13751 = vunpack.c.0.s8 %v13750
  %v13752 = vlaneseq
  %v13753 = vshrl.u32 %v13752, 7
  %v13754 = vsub.s32 %v13751, %v13753
  %v13755 = vrot.slane %v13739, %v13754
  %v13757 = vunpack.c.l.s4 1966171168
  %v13758 = vunpack.c.0.s8 %v13757
  %v13759 = vlaneseq
  %v13760 = vshrl.u32 %v13759, 7
  %v13761 = vsub.s32 %v13758, %v13760
  %v13762 = vrot.slane %v13740, %v13761
  %v13764 = vunpack.c.l.s4 1966171168
  %v13765 = vunpack.c.0.s8 %v13764
  %v13766 = vlaneseq
  %v13767 = vshrl.u32 %v13766, 7
  %v13768 = vsub.s32 %v13765, %v13767
  %v13769 = vrot.slane %v13741, %v13768
  %v13770 = vcombine.low %v13748, %v13755
  %v13771 = vcombine.low %v13762, %v13769
  %v13773 = vunpack.c.l.s4 1966171168
  %v13774 = vunpack.c.0.s8 %v13773
  %v13775 = vlaneseq
  %v13776 = vshrl.u32 %v13775, 7
  %v13777 = vsub.s32 %v13774, %v13776
  %v13778 = vrot.slane %v13770, %v13777
  %v13780 = vunpack.c.l.s4 1966171168
  %v13781 = vunpack.c.0.s8 %v13780
  %v13782 = vlaneseq
  %v13783 = vshrl.u32 %v13782, 7
  %v13784 = vsub.s32 %v13781, %v13783
  %v13785 = vrot.slane %v13771, %v13784
  %v13786 = vcombine.low %v13778, %v13785
  %v13787 = vcombine.low %v13489, %v9094
  %v13788 = vcombine.low %v11348, %v13490
  %v13789 = vcombine.low %v13491, %v9096
  %v13790 = vcombine.low %v11350, %v13492
  %v13792 = vunpack.c.l.s4 1966171168
  %v13793 = vunpack.c.0.s8 %v13792
  %v13794 = vlaneseq
  %v13795 = vshrl.u32 %v13794, 7
  %v13796 = vsub.s32 %v13793, %v13795
  %v13797 = vrot.slane %v13787, %v13796
  %v13799 = vunpack.c.l.s4 1966171168
  %v13800 = vunpack.c.0.s8 %v13799
  %v13801 = vlaneseq
  %v13802 = vshrl.u32 %v13801, 7
  %v13803 = vsub.s32 %v13800, %v13802
  %v13804 = vrot.slane %v13788, %v13803
  %v13806 = vunpack.c.l.s4 1966171168
  %v13807 = vunpack.c.0.s8 %v13806
  %v13808 = vlaneseq
  %v13809 = vshrl.u32 %v13808, 7
  %v13810 = vsub.s32 %v13807, %v13809
  %v13811 = vrot.slane %v13789, %v13810
  %v13813 = vunpack.c.l.s4 1966171168
  %v13814 = vunpack.c.0.s8 %v13813
  %v13815 = vlaneseq
  %v13816 = vshrl.u32 %v13815, 7
  %v13817 = vsub.s32 %v13814, %v13816
  %v13818 = vrot.slane %v13790, %v13817
  %v13819 = vcombine.low %v13797, %v13804
  %v13820 = vcombine.low %v13811, %v13818
  %v13822 = vunpack.c.l.s4 1966171168
  %v13823 = vunpack.c.0.s8 %v13822
  %v13824 = vlaneseq
  %v13825 = vshrl.u32 %v13824, 7
  %v13826 = vsub.s32 %v13823, %v13825
  %v13827 = vrot.slane %v13819, %v13826
  %v13829 = vunpack.c.l.s4 1966171168
  %v13830 = vunpack.c.0.s8 %v13829
  %v13831 = vlaneseq
  %v13832 = vshrl.u32 %v13831, 7
  %v13833 = vsub.s32 %v13830, %v13832
  %v13834 = vrot.slane %v13820, %v13833
  %v13835 = vcombine.low %v13827, %v13834
  %v13837 = vsel %vm982, %v13541, 0
  %v13840 = vsel %vm982, %v13590, 0
  %v13843 = vsel %vm982, %v13639, 0
  %v13846 = vsel %vm982, %v13688, 0
  %v13849 = vsel %vm982, %v13737, 0
  %v13852 = vsel %vm982, %v13786, 0
  %v13855 = vsel %vm982, %v13835, 0
  %v13858 = vsel %vm1004, %v13308, 0
  %13860 = vmatprep.subr.bf16.mxu0 0
  %13861 = vmatpush1.bf16.msra.mxu0 %v13858
  %13862 = vmatprep.subr.bf16.mxu0 0
  %13863 = vmatpush1.bf16.msra.mxu0 0
  %13864 = vmatprep.subr.bf16.mxu0 0
  %13865 = vmatpush1.bf16.msra.mxu0 0
  %13866 = vmatprep.subr.bf16.mxu0 0
  %13867 = vmatpush1.bf16.msra.mxu0 0
  %13868 = vmatprep.subr.bf16.mxu0 0
  %13869 = vmatpush1.bf16.msra.mxu0 0
  %13870 = vmatprep.subr.bf16.mxu0 0
  %13871 = vmatpush1.bf16.msra.mxu0 0
  %13872 = vmatprep.subr.bf16.mxu0 0
  %13873 = vmatpush1.bf16.msra.mxu0 0
  %13874 = vmatprep.subr.bf16.mxu0 0
  %13875 = vmatpush1.bf16.msra.mxu0 0
  %13876 = vmatprep.subr.bf16.mxu0 0
  %13877 = vmatpush1.bf16.msra.mxu0 0
  %13878 = vmatprep.subr.bf16.mxu0 0
  %13879 = vmatpush1.bf16.msra.mxu0 0
  %13880 = vmatprep.subr.bf16.mxu0 0
  %13881 = vmatpush1.bf16.msra.mxu0 0
  %13882 = vmatprep.subr.bf16.mxu0 0
  %13883 = vmatpush1.bf16.msra.mxu0 0
  %13884 = vmatprep.subr.bf16.mxu0 0
  %13885 = vmatpush1.bf16.msra.mxu0 0
  %13886 = vmatprep.subr.bf16.mxu0 0
  %13887 = vmatpush1.bf16.msra.mxu0 0
  %13888 = vmatprep.subr.bf16.mxu0 0
  %13889 = vmatpush1.bf16.msra.mxu0 0
  %13890 = vmatprep.subr.bf16.mxu0 0
  %13891 = vmatpush1.bf16.msra.mxu0 0
  %13892 = vmatprep.mubr.bf16.mxu0 0
  %13893 = vmatmul.mubr.bf16.gmra.mrb[0].mxu0 %v13837
  %v13894 = vpop.f32.mrb[0].mxu0
  %v13895 = vadd.f32 0.0, %v13894
  %v13896 = vpop.f32.mrb[0].mxu0
  %v13897 = vpop.f32.mrb[0].mxu0
  %v13898 = vadd.f32 0.0, %v13897
  %v13899 = vpop.f32.mrb[0].mxu0
  %13900 = vmatprep.mubr.bf16.mxu0 0
  %13901 = vmatmul.mubr.bf16.gmra.mrb[0].mxu0 %v13840
  %v13902 = vpop.f32.mrb[0].mxu0
  %v13903 = vadd.f32 0.0, %v13902
  %v13904 = vpop.f32.mrb[0].mxu0
  %v13905 = vpop.f32.mrb[0].mxu0
  %v13906 = vadd.f32 0.0, %v13905
  %v13907 = vpop.f32.mrb[0].mxu0
  %13908 = vmatprep.mubr.bf16.mxu0 0
  %13909 = vmatmul.mubr.bf16.gmra.mrb[0].mxu0 %v13843
  %v13910 = vpop.f32.mrb[0].mxu0
  %v13911 = vadd.f32 0.0, %v13910
  %v13912 = vpop.f32.mrb[0].mxu0
  %v13913 = vpop.f32.mrb[0].mxu0
  %v13914 = vadd.f32 0.0, %v13913
  %v13915 = vpop.f32.mrb[0].mxu0
  %13916 = vmatprep.mubr.bf16.mxu0 0
  %13917 = vmatmul.mubr.bf16.gmra.mrb[0].mxu0 %v13846
  %v13918 = vpop.f32.mrb[0].mxu0
  %v13919 = vadd.f32 0.0, %v13918
  %v13920 = vpop.f32.mrb[0].mxu0
  %v13921 = vpop.f32.mrb[0].mxu0
  %v13922 = vadd.f32 0.0, %v13921
  %v13923 = vpop.f32.mrb[0].mxu0
  %13924 = vmatprep.mubr.bf16.mxu0 0
  %13925 = vmatmul.mubr.bf16.gmra.mrb[0].mxu0 %v13849
  %v13926 = vpop.f32.mrb[0].mxu0
  %v13927 = vadd.f32 0.0, %v13926
  %v13928 = vpop.f32.mrb[0].mxu0
  %v13929 = vpop.f32.mrb[0].mxu0
  %v13930 = vadd.f32 0.0, %v13929
  %v13931 = vpop.f32.mrb[0].mxu0
  %13932 = vmatprep.mubr.bf16.mxu0 0
  %13933 = vmatmul.mubr.bf16.gmra.mrb[0].mxu0 %v13852
  %v13934 = vpop.f32.mrb[0].mxu0
  %v13935 = vadd.f32 0.0, %v13934
  %v13936 = vpop.f32.mrb[0].mxu0
  %v13937 = vpop.f32.mrb[0].mxu0
  %v13938 = vadd.f32 0.0, %v13937
  %v13939 = vpop.f32.mrb[0].mxu0
  %13940 = vmatprep.mubr.bf16.mxu0 0
  %13941 = vmatmul.mubr.bf16.gmra.mrb[0].mxu0 %v13855
  %v13942 = vpop.f32.mrb[0].mxu0
  %v13943 = vadd.f32 0.0, %v13942
  %v13944 = vpop.f32.mrb[0].mxu0
  %v13945 = vpop.f32.mrb[0].mxu0
  %v13946 = vadd.f32 0.0, %v13945
  %v13947 = vpop.f32.mrb[0].mxu0
  %13948 = vdwg.mxu0
  %v13963 = vcombine.high %v13895, %v13895
  %v13965 = vunpack.c.l.s4 1966171168
  %v13966 = vunpack.c.0.s8 %v13965
  %v13967 = vlaneseq
  %v13968 = vshrl.u32 %v13967, 7
  %v13969 = vsub.s32 %v13966, %v13968
  %v13970 = vrot.slane %v13895, %v13969
  %v13972 = vunpack.c.l.s4 1966171168
  %v13973 = vunpack.c.0.s8 %v13972
  %v13974 = vlaneseq
  %v13975 = vshrl.u32 %v13974, 7
  %v13976 = vsub.s32 %v13973, %v13975
  %v13977 = vrot.slane %v13963, %v13976
  %v13978 = vcombine.high %v13970, %v13970
  %v13979 = vcombine.high %v13977, %v13977
  %v13981 = vunpack.c.l.s4 1966171168
  %v13982 = vunpack.c.0.s8 %v13981
  %v13983 = vlaneseq
  %v13984 = vshrl.u32 %v13983, 7
  %v13985 = vsub.s32 %v13982, %v13984
  %v13986 = vrot.slane %v13970, %v13985
  %v13988 = vunpack.c.l.s4 1966171168
  %v13989 = vunpack.c.0.s8 %v13988
  %v13990 = vlaneseq
  %v13991 = vshrl.u32 %v13990, 7
  %v13992 = vsub.s32 %v13989, %v13991
  %v13993 = vrot.slane %v13977, %v13992
  %v13995 = vunpack.c.l.s4 1966171168
  %v13996 = vunpack.c.0.s8 %v13995
  %v13997 = vlaneseq
  %v13998 = vshrl.u32 %v13997, 7
  %v13999 = vsub.s32 %v13996, %v13998
  %v14000 = vrot.slane %v13978, %v13999
  %v14002 = vunpack.c.l.s4 1966171168
  %v14003 = vunpack.c.0.s8 %v14002
  %v14004 = vlaneseq
  %v14005 = vshrl.u32 %v14004, 7
  %v14006 = vsub.s32 %v14003, %v14005
  %v14007 = vrot.slane %v13979, %v14006
  %v14008 = vcombine.high %v13986, %v13986
  %v14009 = vcombine.high %v13993, %v13993
  %v14010 = vcombine.high %v14000, %v14000
  %v14011 = vcombine.high %v14007, %v14007
  %v14012 = vcombine.high %v13898, %v13898
  %v14014 = vunpack.c.l.s4 1966171168
  %v14015 = vunpack.c.0.s8 %v14014
  %v14016 = vlaneseq
  %v14017 = vshrl.u32 %v14016, 7
  %v14018 = vsub.s32 %v14015, %v14017
  %v14019 = vrot.slane %v13898, %v14018
  %v14021 = vunpack.c.l.s4 1966171168
  %v14022 = vunpack.c.0.s8 %v14021
  %v14023 = vlaneseq
  %v14024 = vshrl.u32 %v14023, 7
  %v14025 = vsub.s32 %v14022, %v14024
  %v14026 = vrot.slane %v14012, %v14025
  %v14027 = vcombine.high %v14019, %v14019
  %v14028 = vcombine.high %v14026, %v14026
  %v14030 = vunpack.c.l.s4 1966171168
  %v14031 = vunpack.c.0.s8 %v14030
  %v14032 = vlaneseq
  %v14033 = vshrl.u32 %v14032, 7
  %v14034 = vsub.s32 %v14031, %v14033
  %v14035 = vrot.slane %v14019, %v14034
  %v14037 = vunpack.c.l.s4 1966171168
  %v14038 = vunpack.c.0.s8 %v14037
  %v14039 = vlaneseq
  %v14040 = vshrl.u32 %v14039, 7
  %v14041 = vsub.s32 %v14038, %v14040
  %v14042 = vrot.slane %v14026, %v14041
  %v14044 = vunpack.c.l.s4 1966171168
  %v14045 = vunpack.c.0.s8 %v14044
  %v14046 = vlaneseq
  %v14047 = vshrl.u32 %v14046, 7
  %v14048 = vsub.s32 %v14045, %v14047
  %v14049 = vrot.slane %v14027, %v14048
  %v14051 = vunpack.c.l.s4 1966171168
  %v14052 = vunpack.c.0.s8 %v14051
  %v14053 = vlaneseq
  %v14054 = vshrl.u32 %v14053, 7
  %v14055 = vsub.s32 %v14052, %v14054
  %v14056 = vrot.slane %v14028, %v14055
  %v14057 = vcombine.high %v14035, %v14035
  %v14058 = vcombine.high %v14042, %v14042
  %v14059 = vcombine.high %v14049, %v14049
  %v14060 = vcombine.high %v14056, %v14056
  %v14061 = vcombine.high %v13903, %v13903
  %v14063 = vunpack.c.l.s4 1966171168
  %v14064 = vunpack.c.0.s8 %v14063
  %v14065 = vlaneseq
  %v14066 = vshrl.u32 %v14065, 7
  %v14067 = vsub.s32 %v14064, %v14066
  %v14068 = vrot.slane %v13903, %v14067
  %v14070 = vunpack.c.l.s4 1966171168
  %v14071 = vunpack.c.0.s8 %v14070
  %v14072 = vlaneseq
  %v14073 = vshrl.u32 %v14072, 7
  %v14074 = vsub.s32 %v14071, %v14073
  %v14075 = vrot.slane %v14061, %v14074
  %v14076 = vcombine.high %v14068, %v14068
  %v14077 = vcombine.high %v14075, %v14075
  %v14079 = vunpack.c.l.s4 1966171168
  %v14080 = vunpack.c.0.s8 %v14079
  %v14081 = vlaneseq
  %v14082 = vshrl.u32 %v14081, 7
  %v14083 = vsub.s32 %v14080, %v14082
  %v14084 = vrot.slane %v14068, %v14083
  %v14086 = vunpack.c.l.s4 1966171168
  %v14087 = vunpack.c.0.s8 %v14086
  %v14088 = vlaneseq
  %v14089 = vshrl.u32 %v14088, 7
  %v14090 = vsub.s32 %v14087, %v14089
  %v14091 = vrot.slane %v14075, %v14090
  %v14093 = vunpack.c.l.s4 1966171168
  %v14094 = vunpack.c.0.s8 %v14093
  %v14095 = vlaneseq
  %v14096 = vshrl.u32 %v14095, 7
  %v14097 = vsub.s32 %v14094, %v14096
  %v14098 = vrot.slane %v14076, %v14097
  %v14100 = vunpack.c.l.s4 1966171168
  %v14101 = vunpack.c.0.s8 %v14100
  %v14102 = vlaneseq
  %v14103 = vshrl.u32 %v14102, 7
  %v14104 = vsub.s32 %v14101, %v14103
  %v14105 = vrot.slane %v14077, %v14104
  %v14106 = vcombine.high %v14084, %v14084
  %v14107 = vcombine.high %v14091, %v14091
  %v14108 = vcombine.high %v14098, %v14098
  %v14109 = vcombine.high %v14105, %v14105
  %v14110 = vcombine.high %v13906, %v13906
  %v14112 = vunpack.c.l.s4 1966171168
  %v14113 = vunpack.c.0.s8 %v14112
  %v14114 = vlaneseq
  %v14115 = vshrl.u32 %v14114, 7
  %v14116 = vsub.s32 %v14113, %v14115
  %v14117 = vrot.slane %v13906, %v14116
  %v14119 = vunpack.c.l.s4 1966171168
  %v14120 = vunpack.c.0.s8 %v14119
  %v14121 = vlaneseq
  %v14122 = vshrl.u32 %v14121, 7
  %v14123 = vsub.s32 %v14120, %v14122
  %v14124 = vrot.slane %v14110, %v14123
  %v14125 = vcombine.high %v14117, %v14117
  %v14126 = vcombine.high %v14124, %v14124
  %v14128 = vunpack.c.l.s4 1966171168
  %v14129 = vunpack.c.0.s8 %v14128
  %v14130 = vlaneseq
  %v14131 = vshrl.u32 %v14130, 7
  %v14132 = vsub.s32 %v14129, %v14131
  %v14133 = vrot.slane %v14117, %v14132
  %v14135 = vunpack.c.l.s4 1966171168
  %v14136 = vunpack.c.0.s8 %v14135
  %v14137 = vlaneseq
  %v14138 = vshrl.u32 %v14137, 7
  %v14139 = vsub.s32 %v14136, %v14138
  %v14140 = vrot.slane %v14124, %v14139
  %v14142 = vunpack.c.l.s4 1966171168
  %v14143 = vunpack.c.0.s8 %v14142
  %v14144 = vlaneseq
  %v14145 = vshrl.u32 %v14144, 7
  %v14146 = vsub.s32 %v14143, %v14145
  %v14147 = vrot.slane %v14125, %v14146
  %v14149 = vunpack.c.l.s4 1966171168
  %v14150 = vunpack.c.0.s8 %v14149
  %v14151 = vlaneseq
  %v14152 = vshrl.u32 %v14151, 7
  %v14153 = vsub.s32 %v14150, %v14152
  %v14154 = vrot.slane %v14126, %v14153
  %v14155 = vcombine.high %v14133, %v14133
  %v14156 = vcombine.high %v14140, %v14140
  %v14157 = vcombine.high %v14147, %v14147
  %v14158 = vcombine.high %v14154, %v14154
  %v14159 = vcombine.high %v13911, %v13911
  %v14161 = vunpack.c.l.s4 1966171168
  %v14162 = vunpack.c.0.s8 %v14161
  %v14163 = vlaneseq
  %v14164 = vshrl.u32 %v14163, 7
  %v14165 = vsub.s32 %v14162, %v14164
  %v14166 = vrot.slane %v13911, %v14165
  %v14168 = vunpack.c.l.s4 1966171168
  %v14169 = vunpack.c.0.s8 %v14168
  %v14170 = vlaneseq
  %v14171 = vshrl.u32 %v14170, 7
  %v14172 = vsub.s32 %v14169, %v14171
  %v14173 = vrot.slane %v14159, %v14172
  %v14174 = vcombine.high %v14166, %v14166
  %v14175 = vcombine.high %v14173, %v14173
  %v14177 = vunpack.c.l.s4 1966171168
  %v14178 = vunpack.c.0.s8 %v14177
  %v14179 = vlaneseq
  %v14180 = vshrl.u32 %v14179, 7
  %v14181 = vsub.s32 %v14178, %v14180
  %v14182 = vrot.slane %v14166, %v14181
  %v14184 = vunpack.c.l.s4 1966171168
  %v14185 = vunpack.c.0.s8 %v14184
  %v14186 = vlaneseq
  %v14187 = vshrl.u32 %v14186, 7
  %v14188 = vsub.s32 %v14185, %v14187
  %v14189 = vrot.slane %v14173, %v14188
  %v14191 = vunpack.c.l.s4 1966171168
  %v14192 = vunpack.c.0.s8 %v14191
  %v14193 = vlaneseq
  %v14194 = vshrl.u32 %v14193, 7
  %v14195 = vsub.s32 %v14192, %v14194
  %v14196 = vrot.slane %v14174, %v14195
  %v14198 = vunpack.c.l.s4 1966171168
  %v14199 = vunpack.c.0.s8 %v14198
  %v14200 = vlaneseq
  %v14201 = vshrl.u32 %v14200, 7
  %v14202 = vsub.s32 %v14199, %v14201
  %v14203 = vrot.slane %v14175, %v14202
  %v14204 = vcombine.high %v14182, %v14182
  %v14205 = vcombine.high %v14189, %v14189
  %v14206 = vcombine.high %v14196, %v14196
  %v14207 = vcombine.high %v14203, %v14203
  %v14208 = vcombine.high %v13914, %v13914
  %v14210 = vunpack.c.l.s4 1966171168
  %v14211 = vunpack.c.0.s8 %v14210
  %v14212 = vlaneseq
  %v14213 = vshrl.u32 %v14212, 7
  %v14214 = vsub.s32 %v14211, %v14213
  %v14215 = vrot.slane %v13914, %v14214
  %v14217 = vunpack.c.l.s4 1966171168
  %v14218 = vunpack.c.0.s8 %v14217
  %v14219 = vlaneseq
  %v14220 = vshrl.u32 %v14219, 7
  %v14221 = vsub.s32 %v14218, %v14220
  %v14222 = vrot.slane %v14208, %v14221
  %v14223 = vcombine.high %v14215, %v14215
  %v14224 = vcombine.high %v14222, %v14222
  %v14226 = vunpack.c.l.s4 1966171168
  %v14227 = vunpack.c.0.s8 %v14226
  %v14228 = vlaneseq
  %v14229 = vshrl.u32 %v14228, 7
  %v14230 = vsub.s32 %v14227, %v14229
  %v14231 = vrot.slane %v14215, %v14230
  %v14233 = vunpack.c.l.s4 1966171168
  %v14234 = vunpack.c.0.s8 %v14233
  %v14235 = vlaneseq
  %v14236 = vshrl.u32 %v14235, 7
  %v14237 = vsub.s32 %v14234, %v14236
  %v14238 = vrot.slane %v14222, %v14237
  %v14240 = vunpack.c.l.s4 1966171168
  %v14241 = vunpack.c.0.s8 %v14240
  %v14242 = vlaneseq
  %v14243 = vshrl.u32 %v14242, 7
  %v14244 = vsub.s32 %v14241, %v14243
  %v14245 = vrot.slane %v14223, %v14244
  %v14247 = vunpack.c.l.s4 1966171168
  %v14248 = vunpack.c.0.s8 %v14247
  %v14249 = vlaneseq
  %v14250 = vshrl.u32 %v14249, 7
  %v14251 = vsub.s32 %v14248, %v14250
  %v14252 = vrot.slane %v14224, %v14251
  %v14253 = vcombine.high %v14231, %v14231
  %v14254 = vcombine.high %v14238, %v14238
  %v14255 = vcombine.high %v14245, %v14245
  %v14256 = vcombine.high %v14252, %v14252
  %v14257 = vcombine.high %v13919, %v13919
  %v14259 = vunpack.c.l.s4 1966171168
  %v14260 = vunpack.c.0.s8 %v14259
  %v14261 = vlaneseq
  %v14262 = vshrl.u32 %v14261, 7
  %v14263 = vsub.s32 %v14260, %v14262
  %v14264 = vrot.slane %v13919, %v14263
  %v14266 = vunpack.c.l.s4 1966171168
  %v14267 = vunpack.c.0.s8 %v14266
  %v14268 = vlaneseq
  %v14269 = vshrl.u32 %v14268, 7
  %v14270 = vsub.s32 %v14267, %v14269
  %v14271 = vrot.slane %v14257, %v14270
  %v14272 = vcombine.high %v14264, %v14264
  %v14273 = vcombine.high %v14271, %v14271
  %v14275 = vunpack.c.l.s4 1966171168
  %v14276 = vunpack.c.0.s8 %v14275
  %v14277 = vlaneseq
  %v14278 = vshrl.u32 %v14277, 7
  %v14279 = vsub.s32 %v14276, %v14278
  %v14280 = vrot.slane %v14264, %v14279
  %v14282 = vunpack.c.l.s4 1966171168
  %v14283 = vunpack.c.0.s8 %v14282
  %v14284 = vlaneseq
  %v14285 = vshrl.u32 %v14284, 7
  %v14286 = vsub.s32 %v14283, %v14285
  %v14287 = vrot.slane %v14271, %v14286
  %v14289 = vunpack.c.l.s4 1966171168
  %v14290 = vunpack.c.0.s8 %v14289
  %v14291 = vlaneseq
  %v14292 = vshrl.u32 %v14291, 7
  %v14293 = vsub.s32 %v14290, %v14292
  %v14294 = vrot.slane %v14272, %v14293
  %v14296 = vunpack.c.l.s4 1966171168
  %v14297 = vunpack.c.0.s8 %v14296
  %v14298 = vlaneseq
  %v14299 = vshrl.u32 %v14298, 7
  %v14300 = vsub.s32 %v14297, %v14299
  %v14301 = vrot.slane %v14273, %v14300
  %v14302 = vcombine.high %v14280, %v14280
  %v14303 = vcombine.high %v14287, %v14287
  %v14304 = vcombine.high %v14294, %v14294
  %v14305 = vcombine.high %v14301, %v14301
  %v14306 = vcombine.high %v13922, %v13922
  %v14308 = vunpack.c.l.s4 1966171168
  %v14309 = vunpack.c.0.s8 %v14308
  %v14310 = vlaneseq
  %v14311 = vshrl.u32 %v14310, 7
  %v14312 = vsub.s32 %v14309, %v14311
  %v14313 = vrot.slane %v13922, %v14312
  %v14315 = vunpack.c.l.s4 1966171168
  %v14316 = vunpack.c.0.s8 %v14315
  %v14317 = vlaneseq
  %v14318 = vshrl.u32 %v14317, 7
  %v14319 = vsub.s32 %v14316, %v14318
  %v14320 = vrot.slane %v14306, %v14319
  %v14321 = vcombine.high %v14313, %v14313
  %v14322 = vcombine.high %v14320, %v14320
  %v14324 = vunpack.c.l.s4 1966171168
  %v14325 = vunpack.c.0.s8 %v14324
  %v14326 = vlaneseq
  %v14327 = vshrl.u32 %v14326, 7
  %v14328 = vsub.s32 %v14325, %v14327
  %v14329 = vrot.slane %v14313, %v14328
  %v14331 = vunpack.c.l.s4 1966171168
  %v14332 = vunpack.c.0.s8 %v14331
  %v14333 = vlaneseq
  %v14334 = vshrl.u32 %v14333, 7
  %v14335 = vsub.s32 %v14332, %v14334
  %v14336 = vrot.slane %v14320, %v14335
  %v14338 = vunpack.c.l.s4 1966171168
  %v14339 = vunpack.c.0.s8 %v14338
  %v14340 = vlaneseq
  %v14341 = vshrl.u32 %v14340, 7
  %v14342 = vsub.s32 %v14339, %v14341
  %v14343 = vrot.slane %v14321, %v14342
  %v14345 = vunpack.c.l.s4 1966171168
  %v14346 = vunpack.c.0.s8 %v14345
  %v14347 = vlaneseq
  %v14348 = vshrl.u32 %v14347, 7
  %v14349 = vsub.s32 %v14346, %v14348
  %v14350 = vrot.slane %v14322, %v14349
  %v14351 = vcombine.high %v14329, %v14329
  %v14352 = vcombine.high %v14336, %v14336
  %v14353 = vcombine.high %v14343, %v14343
  %v14354 = vcombine.high %v14350, %v14350
  %v14355 = vcombine.high %v13927, %v13927
  %v14357 = vunpack.c.l.s4 1966171168
  %v14358 = vunpack.c.0.s8 %v14357
  %v14359 = vlaneseq
  %v14360 = vshrl.u32 %v14359, 7
  %v14361 = vsub.s32 %v14358, %v14360
  %v14362 = vrot.slane %v13927, %v14361
  %v14364 = vunpack.c.l.s4 1966171168
  %v14365 = vunpack.c.0.s8 %v14364
  %v14366 = vlaneseq
  %v14367 = vshrl.u32 %v14366, 7
  %v14368 = vsub.s32 %v14365, %v14367
  %v14369 = vrot.slane %v14355, %v14368
  %v14370 = vcombine.high %v14362, %v14362
  %v14371 = vcombine.high %v14369, %v14369
  %v14373 = vunpack.c.l.s4 1966171168
  %v14374 = vunpack.c.0.s8 %v14373
  %v14375 = vlaneseq
  %v14376 = vshrl.u32 %v14375, 7
  %v14377 = vsub.s32 %v14374, %v14376
  %v14378 = vrot.slane %v14362, %v14377
  %v14380 = vunpack.c.l.s4 1966171168
  %v14381 = vunpack.c.0.s8 %v14380
  %v14382 = vlaneseq
  %v14383 = vshrl.u32 %v14382, 7
  %v14384 = vsub.s32 %v14381, %v14383
  %v14385 = vrot.slane %v14369, %v14384
  %v14387 = vunpack.c.l.s4 1966171168
  %v14388 = vunpack.c.0.s8 %v14387
  %v14389 = vlaneseq
  %v14390 = vshrl.u32 %v14389, 7
  %v14391 = vsub.s32 %v14388, %v14390
  %v14392 = vrot.slane %v14370, %v14391
  %v14394 = vunpack.c.l.s4 1966171168
  %v14395 = vunpack.c.0.s8 %v14394
  %v14396 = vlaneseq
  %v14397 = vshrl.u32 %v14396, 7
  %v14398 = vsub.s32 %v14395, %v14397
  %v14399 = vrot.slane %v14371, %v14398
  %v14400 = vcombine.high %v14378, %v14378
  %v14401 = vcombine.high %v14385, %v14385
  %v14402 = vcombine.high %v14392, %v14392
  %v14403 = vcombine.high %v14399, %v14399
  %v14404 = vcombine.high %v13930, %v13930
  %v14406 = vunpack.c.l.s4 1966171168
  %v14407 = vunpack.c.0.s8 %v14406
  %v14408 = vlaneseq
  %v14409 = vshrl.u32 %v14408, 7
  %v14410 = vsub.s32 %v14407, %v14409
  %v14411 = vrot.slane %v13930, %v14410
  %v14413 = vunpack.c.l.s4 1966171168
  %v14414 = vunpack.c.0.s8 %v14413
  %v14415 = vlaneseq
  %v14416 = vshrl.u32 %v14415, 7
  %v14417 = vsub.s32 %v14414, %v14416
  %v14418 = vrot.slane %v14404, %v14417
  %v14419 = vcombine.high %v14411, %v14411
  %v14420 = vcombine.high %v14418, %v14418
  %v14422 = vunpack.c.l.s4 1966171168
  %v14423 = vunpack.c.0.s8 %v14422
  %v14424 = vlaneseq
  %v14425 = vshrl.u32 %v14424, 7
  %v14426 = vsub.s32 %v14423, %v14425
  %v14427 = vrot.slane %v14411, %v14426
  %v14429 = vunpack.c.l.s4 1966171168
  %v14430 = vunpack.c.0.s8 %v14429
  %v14431 = vlaneseq
  %v14432 = vshrl.u32 %v14431, 7
  %v14433 = vsub.s32 %v14430, %v14432
  %v14434 = vrot.slane %v14418, %v14433
  %v14436 = vunpack.c.l.s4 1966171168
  %v14437 = vunpack.c.0.s8 %v14436
  %v14438 = vlaneseq
  %v14439 = vshrl.u32 %v14438, 7
  %v14440 = vsub.s32 %v14437, %v14439
  %v14441 = vrot.slane %v14419, %v14440
  %v14443 = vunpack.c.l.s4 1966171168
  %v14444 = vunpack.c.0.s8 %v14443
  %v14445 = vlaneseq
  %v14446 = vshrl.u32 %v14445, 7
  %v14447 = vsub.s32 %v14444, %v14446
  %v14448 = vrot.slane %v14420, %v14447
  %v14449 = vcombine.high %v14427, %v14427
  %v14450 = vcombine.high %v14434, %v14434
  %v14451 = vcombine.high %v14441, %v14441
  %v14452 = vcombine.high %v14448, %v14448
  %v14453 = vcombine.high %v13935, %v13935
  %v14455 = vunpack.c.l.s4 1966171168
  %v14456 = vunpack.c.0.s8 %v14455
  %v14457 = vlaneseq
  %v14458 = vshrl.u32 %v14457, 7
  %v14459 = vsub.s32 %v14456, %v14458
  %v14460 = vrot.slane %v13935, %v14459
  %v14462 = vunpack.c.l.s4 1966171168
  %v14463 = vunpack.c.0.s8 %v14462
  %v14464 = vlaneseq
  %v14465 = vshrl.u32 %v14464, 7
  %v14466 = vsub.s32 %v14463, %v14465
  %v14467 = vrot.slane %v14453, %v14466
  %v14468 = vcombine.high %v14460, %v14460
  %v14469 = vcombine.high %v14467, %v14467
  %v14471 = vunpack.c.l.s4 1966171168
  %v14472 = vunpack.c.0.s8 %v14471
  %v14473 = vlaneseq
  %v14474 = vshrl.u32 %v14473, 7
  %v14475 = vsub.s32 %v14472, %v14474
  %v14476 = vrot.slane %v14460, %v14475
  %v14478 = vunpack.c.l.s4 1966171168
  %v14479 = vunpack.c.0.s8 %v14478
  %v14480 = vlaneseq
  %v14481 = vshrl.u32 %v14480, 7
  %v14482 = vsub.s32 %v14479, %v14481
  %v14483 = vrot.slane %v14467, %v14482
  %v14485 = vunpack.c.l.s4 1966171168
  %v14486 = vunpack.c.0.s8 %v14485
  %v14487 = vlaneseq
  %v14488 = vshrl.u32 %v14487, 7
  %v14489 = vsub.s32 %v14486, %v14488
  %v14490 = vrot.slane %v14468, %v14489
  %v14492 = vunpack.c.l.s4 1966171168
  %v14493 = vunpack.c.0.s8 %v14492
  %v14494 = vlaneseq
  %v14495 = vshrl.u32 %v14494, 7
  %v14496 = vsub.s32 %v14493, %v14495
  %v14497 = vrot.slane %v14469, %v14496
  %v14498 = vcombine.high %v14476, %v14476
  %v14499 = vcombine.high %v14483, %v14483
  %v14500 = vcombine.high %v14490, %v14490
  %v14501 = vcombine.high %v14497, %v14497
  %v14502 = vcombine.high %v13938, %v13938
  %v14504 = vunpack.c.l.s4 1966171168
  %v14505 = vunpack.c.0.s8 %v14504
  %v14506 = vlaneseq
  %v14507 = vshrl.u32 %v14506, 7
  %v14508 = vsub.s32 %v14505, %v14507
  %v14509 = vrot.slane %v13938, %v14508
  %v14511 = vunpack.c.l.s4 1966171168
  %v14512 = vunpack.c.0.s8 %v14511
  %v14513 = vlaneseq
  %v14514 = vshrl.u32 %v14513, 7
  %v14515 = vsub.s32 %v14512, %v14514
  %v14516 = vrot.slane %v14502, %v14515
  %v14517 = vcombine.high %v14509, %v14509
  %v14518 = vcombine.high %v14516, %v14516
  %v14520 = vunpack.c.l.s4 1966171168
  %v14521 = vunpack.c.0.s8 %v14520
  %v14522 = vlaneseq
  %v14523 = vshrl.u32 %v14522, 7
  %v14524 = vsub.s32 %v14521, %v14523
  %v14525 = vrot.slane %v14509, %v14524
  %v14527 = vunpack.c.l.s4 1966171168
  %v14528 = vunpack.c.0.s8 %v14527
  %v14529 = vlaneseq
  %v14530 = vshrl.u32 %v14529, 7
  %v14531 = vsub.s32 %v14528, %v14530
  %v14532 = vrot.slane %v14516, %v14531
  %v14534 = vunpack.c.l.s4 1966171168
  %v14535 = vunpack.c.0.s8 %v14534
  %v14536 = vlaneseq
  %v14537 = vshrl.u32 %v14536, 7
  %v14538 = vsub.s32 %v14535, %v14537
  %v14539 = vrot.slane %v14517, %v14538
  %v14541 = vunpack.c.l.s4 1966171168
  %v14542 = vunpack.c.0.s8 %v14541
  %v14543 = vlaneseq
  %v14544 = vshrl.u32 %v14543, 7
  %v14545 = vsub.s32 %v14542, %v14544
  %v14546 = vrot.slane %v14518, %v14545
  %v14547 = vcombine.high %v14525, %v14525
  %v14548 = vcombine.high %v14532, %v14532
  %v14549 = vcombine.high %v14539, %v14539
  %v14550 = vcombine.high %v14546, %v14546
  %v14551 = vcombine.high %v13943, %v13943
  %v14553 = vunpack.c.l.s4 1966171168
  %v14554 = vunpack.c.0.s8 %v14553
  %v14555 = vlaneseq
  %v14556 = vshrl.u32 %v14555, 7
  %v14557 = vsub.s32 %v14554, %v14556
  %v14558 = vrot.slane %v13943, %v14557
  %v14560 = vunpack.c.l.s4 1966171168
  %v14561 = vunpack.c.0.s8 %v14560
  %v14562 = vlaneseq
  %v14563 = vshrl.u32 %v14562, 7
  %v14564 = vsub.s32 %v14561, %v14563
  %v14565 = vrot.slane %v14551, %v14564
  %v14566 = vcombine.high %v14558, %v14558
  %v14567 = vcombine.high %v14565, %v14565
  %v14569 = vunpack.c.l.s4 1966171168
  %v14570 = vunpack.c.0.s8 %v14569
  %v14571 = vlaneseq
  %v14572 = vshrl.u32 %v14571, 7
  %v14573 = vsub.s32 %v14570, %v14572
  %v14574 = vrot.slane %v14558, %v14573
  %v14576 = vunpack.c.l.s4 1966171168
  %v14577 = vunpack.c.0.s8 %v14576
  %v14578 = vlaneseq
  %v14579 = vshrl.u32 %v14578, 7
  %v14580 = vsub.s32 %v14577, %v14579
  %v14581 = vrot.slane %v14565, %v14580
  %v14583 = vunpack.c.l.s4 1966171168
  %v14584 = vunpack.c.0.s8 %v14583
  %v14585 = vlaneseq
  %v14586 = vshrl.u32 %v14585, 7
  %v14587 = vsub.s32 %v14584, %v14586
  %v14588 = vrot.slane %v14566, %v14587
  %v14590 = vunpack.c.l.s4 1966171168
  %v14591 = vunpack.c.0.s8 %v14590
  %v14592 = vlaneseq
  %v14593 = vshrl.u32 %v14592, 7
  %v14594 = vsub.s32 %v14591, %v14593
  %v14595 = vrot.slane %v14567, %v14594
  %v14596 = vcombine.high %v14574, %v14574
  %v14597 = vcombine.high %v14581, %v14581
  %v14598 = vcombine.high %v14588, %v14588
  %v14599 = vcombine.high %v14595, %v14595
  %v14600 = vcombine.high %v13946, %v13946
  %v14602 = vunpack.c.l.s4 1966171168
  %v14603 = vunpack.c.0.s8 %v14602
  %v14604 = vlaneseq
  %v14605 = vshrl.u32 %v14604, 7
  %v14606 = vsub.s32 %v14603, %v14605
  %v14607 = vrot.slane %v13946, %v14606
  %v14609 = vunpack.c.l.s4 1966171168
  %v14610 = vunpack.c.0.s8 %v14609
  %v14611 = vlaneseq
  %v14612 = vshrl.u32 %v14611, 7
  %v14613 = vsub.s32 %v14610, %v14612
  %v14614 = vrot.slane %v14600, %v14613
  %v14615 = vcombine.high %v14607, %v14607
  %v14616 = vcombine.high %v14614, %v14614
  %v14618 = vunpack.c.l.s4 1966171168
  %v14619 = vunpack.c.0.s8 %v14618
  %v14620 = vlaneseq
  %v14621 = vshrl.u32 %v14620, 7
  %v14622 = vsub.s32 %v14619, %v14621
  %v14623 = vrot.slane %v14607, %v14622
  %v14625 = vunpack.c.l.s4 1966171168
  %v14626 = vunpack.c.0.s8 %v14625
  %v14627 = vlaneseq
  %v14628 = vshrl.u32 %v14627, 7
  %v14629 = vsub.s32 %v14626, %v14628
  %v14630 = vrot.slane %v14614, %v14629
  %v14632 = vunpack.c.l.s4 1966171168
  %v14633 = vunpack.c.0.s8 %v14632
  %v14634 = vlaneseq
  %v14635 = vshrl.u32 %v14634, 7
  %v14636 = vsub.s32 %v14633, %v14635
  %v14637 = vrot.slane %v14615, %v14636
  %v14639 = vunpack.c.l.s4 1966171168
  %v14640 = vunpack.c.0.s8 %v14639
  %v14641 = vlaneseq
  %v14642 = vshrl.u32 %v14641, 7
  %v14643 = vsub.s32 %v14640, %v14642
  %v14644 = vrot.slane %v14616, %v14643
  %v14645 = vcombine.high %v14623, %v14623
  %v14646 = vcombine.high %v14630, %v14630
  %v14647 = vcombine.high %v14637, %v14637
  %v14648 = vcombine.high %v14644, %v14644
  %v14649 = vcombine.low %v13986, %v14000
  %v14650 = vcombine.low %v14008, %v14010
  %v14651 = vcombine.low %v13993, %v14007
  %v14653 = vunpack.c.l.s4 1966171168
  %v14654 = vunpack.c.0.s8 %v14653
  %v14655 = vlaneseq
  %v14656 = vshrl.u32 %v14655, 7
  %v14657 = vsub.s32 %v14654, %v14656
  %v14658 = vrot.slane %v14649, %v14657
  %v14660 = vunpack.c.l.s4 1966171168
  %v14661 = vunpack.c.0.s8 %v14660
  %v14662 = vlaneseq
  %v14663 = vshrl.u32 %v14662, 7
  %v14664 = vsub.s32 %v14661, %v14663
  %v14665 = vrot.slane %v14650, %v14664
  %v14667 = vunpack.c.l.s4 1966171168
  %v14668 = vunpack.c.0.s8 %v14667
  %v14669 = vlaneseq
  %v14670 = vshrl.u32 %v14669, 7
  %v14671 = vsub.s32 %v14668, %v14670
  %v14672 = vrot.slane %v14651, %v14671
  %v14674 = vunpack.c.l.s4 1966171168
  %v14675 = vunpack.c.0.s8 %v14674
  %v14676 = vlaneseq
  %v14677 = vshrl.u32 %v14676, 7
  %v14678 = vsub.s32 %v14675, %v14677
  %v14679 = vrot.slane %v14009, %v14678
  %v14680 = vcombine.low %v14658, %v14665
  %v14681 = vcombine.low %v14672, %v14679
  %v14683 = vunpack.c.l.s4 1966171168
  %v14684 = vunpack.c.0.s8 %v14683
  %v14685 = vlaneseq
  %v14686 = vshrl.u32 %v14685, 7
  %v14687 = vsub.s32 %v14684, %v14686
  %v14688 = vrot.slane %v14680, %v14687
  %v14690 = vunpack.c.l.s4 1966171168
  %v14691 = vunpack.c.0.s8 %v14690
  %v14692 = vlaneseq
  %v14693 = vshrl.u32 %v14692, 7
  %v14694 = vsub.s32 %v14691, %v14693
  %v14695 = vrot.slane %v14681, %v14694
  %v14696 = vcombine.low %v14688, %v14695
  %v14697 = vcombine.low %v14011, %v14035
  %v14698 = vcombine.low %v14049, %v14057
  %v14699 = vcombine.low %v14059, %v14042
  %v14701 = vunpack.c.l.s4 1966171168
  %v14702 = vunpack.c.0.s8 %v14701
  %v14703 = vlaneseq
  %v14704 = vshrl.u32 %v14703, 7
  %v14705 = vsub.s32 %v14702, %v14704
  %v14706 = vrot.slane %v14697, %v14705
  %v14708 = vunpack.c.l.s4 1966171168
  %v14709 = vunpack.c.0.s8 %v14708
  %v14710 = vlaneseq
  %v14711 = vshrl.u32 %v14710, 7
  %v14712 = vsub.s32 %v14709, %v14711
  %v14713 = vrot.slane %v14698, %v14712
  %v14715 = vunpack.c.l.s4 1966171168
  %v14716 = vunpack.c.0.s8 %v14715
  %v14717 = vlaneseq
  %v14718 = vshrl.u32 %v14717, 7
  %v14719 = vsub.s32 %v14716, %v14718
  %v14720 = vrot.slane %v14699, %v14719
  %v14722 = vunpack.c.l.s4 1966171168
  %v14723 = vunpack.c.0.s8 %v14722
  %v14724 = vlaneseq
  %v14725 = vshrl.u32 %v14724, 7
  %v14726 = vsub.s32 %v14723, %v14725
  %v14727 = vrot.slane %v14056, %v14726
  %v14728 = vcombine.low %v14706, %v14713
  %v14729 = vcombine.low %v14720, %v14727
  %v14731 = vunpack.c.l.s4 1966171168
  %v14732 = vunpack.c.0.s8 %v14731
  %v14733 = vlaneseq
  %v14734 = vshrl.u32 %v14733, 7
  %v14735 = vsub.s32 %v14732, %v14734
  %v14736 = vrot.slane %v14728, %v14735
  %v14738 = vunpack.c.l.s4 1966171168
  %v14739 = vunpack.c.0.s8 %v14738
  %v14740 = vlaneseq
  %v14741 = vshrl.u32 %v14740, 7
  %v14742 = vsub.s32 %v14739, %v14741
  %v14743 = vrot.slane %v14729, %v14742
  %v14744 = vcombine.low %v14736, %v14743
  %v14745 = vcombine.low %v14058, %v14060
  %v14746 = vcombine.low %v14084, %v14098
  %v14747 = vcombine.low %v14106, %v14108
  %v14749 = vunpack.c.l.s4 1966171168
  %v14750 = vunpack.c.0.s8 %v14749
  %v14751 = vlaneseq
  %v14752 = vshrl.u32 %v14751, 7
  %v14753 = vsub.s32 %v14750, %v14752
  %v14754 = vrot.slane %v14745, %v14753
  %v14756 = vunpack.c.l.s4 1966171168
  %v14757 = vunpack.c.0.s8 %v14756
  %v14758 = vlaneseq
  %v14759 = vshrl.u32 %v14758, 7
  %v14760 = vsub.s32 %v14757, %v14759
  %v14761 = vrot.slane %v14746, %v14760
  %v14763 = vunpack.c.l.s4 1966171168
  %v14764 = vunpack.c.0.s8 %v14763
  %v14765 = vlaneseq
  %v14766 = vshrl.u32 %v14765, 7
  %v14767 = vsub.s32 %v14764, %v14766
  %v14768 = vrot.slane %v14747, %v14767
  %v14770 = vunpack.c.l.s4 1966171168
  %v14771 = vunpack.c.0.s8 %v14770
  %v14772 = vlaneseq
  %v14773 = vshrl.u32 %v14772, 7
  %v14774 = vsub.s32 %v14771, %v14773
  %v14775 = vrot.slane %v14091, %v14774
  %v14776 = vcombine.low %v14754, %v14761
  %v14777 = vcombine.low %v14768, %v14775
  %v14779 = vunpack.c.l.s4 1966171168
  %v14780 = vunpack.c.0.s8 %v14779
  %v14781 = vlaneseq
  %v14782 = vshrl.u32 %v14781, 7
  %v14783 = vsub.s32 %v14780, %v14782
  %v14784 = vrot.slane %v14776, %v14783
  %v14786 = vunpack.c.l.s4 1966171168
  %v14787 = vunpack.c.0.s8 %v14786
  %v14788 = vlaneseq
  %v14789 = vshrl.u32 %v14788, 7
  %v14790 = vsub.s32 %v14787, %v14789
  %v14791 = vrot.slane %v14777, %v14790
  %v14792 = vcombine.low %v14784, %v14791
  %v14793 = vcombine.low %v14105, %v14107
  %v14794 = vcombine.low %v14109, %v14133
  %v14795 = vcombine.low %v14147, %v14155
  %v14797 = vunpack.c.l.s4 1966171168
  %v14798 = vunpack.c.0.s8 %v14797
  %v14799 = vlaneseq
  %v14800 = vshrl.u32 %v14799, 7
  %v14801 = vsub.s32 %v14798, %v14800
  %v14802 = vrot.slane %v14793, %v14801
  %v14804 = vunpack.c.l.s4 1966171168
  %v14805 = vunpack.c.0.s8 %v14804
  %v14806 = vlaneseq
  %v14807 = vshrl.u32 %v14806, 7
  %v14808 = vsub.s32 %v14805, %v14807
  %v14809 = vrot.slane %v14794, %v14808
  %v14811 = vunpack.c.l.s4 1966171168
  %v14812 = vunpack.c.0.s8 %v14811
  %v14813 = vlaneseq
  %v14814 = vshrl.u32 %v14813, 7
  %v14815 = vsub.s32 %v14812, %v14814
  %v14816 = vrot.slane %v14795, %v14815
  %v14818 = vunpack.c.l.s4 1966171168
  %v14819 = vunpack.c.0.s8 %v14818
  %v14820 = vlaneseq
  %v14821 = vshrl.u32 %v14820, 7
  %v14822 = vsub.s32 %v14819, %v14821
  %v14823 = vrot.slane %v14157, %v14822
  %v14824 = vcombine.low %v14802, %v14809
  %v14825 = vcombine.low %v14816, %v14823
  %v14827 = vunpack.c.l.s4 1966171168
  %v14828 = vunpack.c.0.s8 %v14827
  %v14829 = vlaneseq
  %v14830 = vshrl.u32 %v14829, 7
  %v14831 = vsub.s32 %v14828, %v14830
  %v14832 = vrot.slane %v14824, %v14831
  %v14834 = vunpack.c.l.s4 1966171168
  %v14835 = vunpack.c.0.s8 %v14834
  %v14836 = vlaneseq
  %v14837 = vshrl.u32 %v14836, 7
  %v14838 = vsub.s32 %v14835, %v14837
  %v14839 = vrot.slane %v14825, %v14838
  %v14840 = vcombine.low %v14832, %v14839
  %v14841 = vcombine.low %v14140, %v14154
  %v14842 = vcombine.low %v14156, %v14158
  %v14843 = vcombine.low %v14182, %v14196
  %v14845 = vunpack.c.l.s4 1966171168
  %v14846 = vunpack.c.0.s8 %v14845
  %v14847 = vlaneseq
  %v14848 = vshrl.u32 %v14847, 7
  %v14849 = vsub.s32 %v14846, %v14848
  %v14850 = vrot.slane %v14841, %v14849
  %v14852 = vunpack.c.l.s4 1966171168
  %v14853 = vunpack.c.0.s8 %v14852
  %v14854 = vlaneseq
  %v14855 = vshrl.u32 %v14854, 7
  %v14856 = vsub.s32 %v14853, %v14855
  %v14857 = vrot.slane %v14842, %v14856
  %v14859 = vunpack.c.l.s4 1966171168
  %v14860 = vunpack.c.0.s8 %v14859
  %v14861 = vlaneseq
  %v14862 = vshrl.u32 %v14861, 7
  %v14863 = vsub.s32 %v14860, %v14862
  %v14864 = vrot.slane %v14843, %v14863
  %v14866 = vunpack.c.l.s4 1966171168
  %v14867 = vunpack.c.0.s8 %v14866
  %v14868 = vlaneseq
  %v14869 = vshrl.u32 %v14868, 7
  %v14870 = vsub.s32 %v14867, %v14869
  %v14871 = vrot.slane %v14204, %v14870
  %v14872 = vcombine.low %v14850, %v14857
  %v14873 = vcombine.low %v14864, %v14871
  %v14875 = vunpack.c.l.s4 1966171168
  %v14876 = vunpack.c.0.s8 %v14875
  %v14877 = vlaneseq
  %v14878 = vshrl.u32 %v14877, 7
  %v14879 = vsub.s32 %v14876, %v14878
  %v14880 = vrot.slane %v14872, %v14879
  %v14882 = vunpack.c.l.s4 1966171168
  %v14883 = vunpack.c.0.s8 %v14882
  %v14884 = vlaneseq
  %v14885 = vshrl.u32 %v14884, 7
  %v14886 = vsub.s32 %v14883, %v14885
  %v14887 = vrot.slane %v14873, %v14886
  %v14888 = vcombine.low %v14880, %v14887
  %v14889 = vcombine.low %v14206, %v14189
  %v14890 = vcombine.low %v14203, %v14205
  %v14891 = vcombine.low %v14207, %v14231
  %v14893 = vunpack.c.l.s4 1966171168
  %v14894 = vunpack.c.0.s8 %v14893
  %v14895 = vlaneseq
  %v14896 = vshrl.u32 %v14895, 7
  %v14897 = vsub.s32 %v14894, %v14896
  %v14898 = vrot.slane %v14889, %v14897
  %v14900 = vunpack.c.l.s4 1966171168
  %v14901 = vunpack.c.0.s8 %v14900
  %v14902 = vlaneseq
  %v14903 = vshrl.u32 %v14902, 7
  %v14904 = vsub.s32 %v14901, %v14903
  %v14905 = vrot.slane %v14890, %v14904
  %v14907 = vunpack.c.l.s4 1966171168
  %v14908 = vunpack.c.0.s8 %v14907
  %v14909 = vlaneseq
  %v14910 = vshrl.u32 %v14909, 7
  %v14911 = vsub.s32 %v14908, %v14910
  %v14912 = vrot.slane %v14891, %v14911
  %v14914 = vunpack.c.l.s4 1966171168
  %v14915 = vunpack.c.0.s8 %v14914
  %v14916 = vlaneseq
  %v14917 = vshrl.u32 %v14916, 7
  %v14918 = vsub.s32 %v14915, %v14917
  %v14919 = vrot.slane %v14245, %v14918
  %v14920 = vcombine.low %v14898, %v14905
  %v14921 = vcombine.low %v14912, %v14919
  %v14923 = vunpack.c.l.s4 1966171168
  %v14924 = vunpack.c.0.s8 %v14923
  %v14925 = vlaneseq
  %v14926 = vshrl.u32 %v14925, 7
  %v14927 = vsub.s32 %v14924, %v14926
  %v14928 = vrot.slane %v14920, %v14927
  %v14930 = vunpack.c.l.s4 1966171168
  %v14931 = vunpack.c.0.s8 %v14930
  %v14932 = vlaneseq
  %v14933 = vshrl.u32 %v14932, 7
  %v14934 = vsub.s32 %v14931, %v14933
  %v14935 = vrot.slane %v14921, %v14934
  %v14936 = vcombine.low %v14928, %v14935
  %v14937 = vcombine.low %v14253, %v14255
  %v14938 = vcombine.low %v14238, %v14252
  %v14939 = vcombine.low %v14254, %v14256
  %v14941 = vunpack.c.l.s4 1966171168
  %v14942 = vunpack.c.0.s8 %v14941
  %v14943 = vlaneseq
  %v14944 = vshrl.u32 %v14943, 7
  %v14945 = vsub.s32 %v14942, %v14944
  %v14946 = vrot.slane %v14937, %v14945
  %v14948 = vunpack.c.l.s4 1966171168
  %v14949 = vunpack.c.0.s8 %v14948
  %v14950 = vlaneseq
  %v14951 = vshrl.u32 %v14950, 7
  %v14952 = vsub.s32 %v14949, %v14951
  %v14953 = vrot.slane %v14938, %v14952
  %v14955 = vunpack.c.l.s4 1966171168
  %v14956 = vunpack.c.0.s8 %v14955
  %v14957 = vlaneseq
  %v14958 = vshrl.u32 %v14957, 7
  %v14959 = vsub.s32 %v14956, %v14958
  %v14960 = vrot.slane %v14939, %v14959
  %v14962 = vunpack.c.l.s4 1966171168
  %v14963 = vunpack.c.0.s8 %v14962
  %v14964 = vlaneseq
  %v14965 = vshrl.u32 %v14964, 7
  %v14966 = vsub.s32 %v14963, %v14965
  %v14967 = vrot.slane %v14280, %v14966
  %v14968 = vcombine.low %v14946, %v14953
  %v14969 = vcombine.low %v14960, %v14967
  %v14971 = vunpack.c.l.s4 1966171168
  %v14972 = vunpack.c.0.s8 %v14971
  %v14973 = vlaneseq
  %v14974 = vshrl.u32 %v14973, 7
  %v14975 = vsub.s32 %v14972, %v14974
  %v14976 = vrot.slane %v14968, %v14975
  %v14978 = vunpack.c.l.s4 1966171168
  %v14979 = vunpack.c.0.s8 %v14978
  %v14980 = vlaneseq
  %v14981 = vshrl.u32 %v14980, 7
  %v14982 = vsub.s32 %v14979, %v14981
  %v14983 = vrot.slane %v14969, %v14982
  %v14984 = vcombine.low %v14976, %v14983
  %v14985 = vcombine.low %v14294, %v14302
  %v14986 = vcombine.low %v14304, %v14287
  %v14987 = vcombine.low %v14301, %v14303
  %v14989 = vunpack.c.l.s4 1966171168
  %v14990 = vunpack.c.0.s8 %v14989
  %v14991 = vlaneseq
  %v14992 = vshrl.u32 %v14991, 7
  %v14993 = vsub.s32 %v14990, %v14992
  %v14994 = vrot.slane %v14985, %v14993
  %v14996 = vunpack.c.l.s4 1966171168
  %v14997 = vunpack.c.0.s8 %v14996
  %v14998 = vlaneseq
  %v14999 = vshrl.u32 %v14998, 7
  %v15000 = vsub.s32 %v14997, %v14999
  %v15001 = vrot.slane %v14986, %v15000
  %v15003 = vunpack.c.l.s4 1966171168
  %v15004 = vunpack.c.0.s8 %v15003
  %v15005 = vlaneseq
  %v15006 = vshrl.u32 %v15005, 7
  %v15007 = vsub.s32 %v15004, %v15006
  %v15008 = vrot.slane %v14987, %v15007
  %v15010 = vunpack.c.l.s4 1966171168
  %v15011 = vunpack.c.0.s8 %v15010
  %v15012 = vlaneseq
  %v15013 = vshrl.u32 %v15012, 7
  %v15014 = vsub.s32 %v15011, %v15013
  %v15015 = vrot.slane %v14305, %v15014
  %v15016 = vcombine.low %v14994, %v15001
  %v15017 = vcombine.low %v15008, %v15015
  %v15019 = vunpack.c.l.s4 1966171168
  %v15020 = vunpack.c.0.s8 %v15019
  %v15021 = vlaneseq
  %v15022 = vshrl.u32 %v15021, 7
  %v15023 = vsub.s32 %v15020, %v15022
  %v15024 = vrot.slane %v15016, %v15023
  %v15026 = vunpack.c.l.s4 1966171168
  %v15027 = vunpack.c.0.s8 %v15026
  %v15028 = vlaneseq
  %v15029 = vshrl.u32 %v15028, 7
  %v15030 = vsub.s32 %v15027, %v15029
  %v15031 = vrot.slane %v15017, %v15030
  %v15032 = vcombine.low %v15024, %v15031
  %v15033 = vcombine.low %v14329, %v14343
  %v15034 = vcombine.low %v14351, %v14353
  %v15035 = vcombine.low %v14336, %v14350
  %v15037 = vunpack.c.l.s4 1966171168
  %v15038 = vunpack.c.0.s8 %v15037
  %v15039 = vlaneseq
  %v15040 = vshrl.u32 %v15039, 7
  %v15041 = vsub.s32 %v15038, %v15040
  %v15042 = vrot.slane %v15033, %v15041
  %v15044 = vunpack.c.l.s4 1966171168
  %v15045 = vunpack.c.0.s8 %v15044
  %v15046 = vlaneseq
  %v15047 = vshrl.u32 %v15046, 7
  %v15048 = vsub.s32 %v15045, %v15047
  %v15049 = vrot.slane %v15034, %v15048
  %v15051 = vunpack.c.l.s4 1966171168
  %v15052 = vunpack.c.0.s8 %v15051
  %v15053 = vlaneseq
  %v15054 = vshrl.u32 %v15053, 7
  %v15055 = vsub.s32 %v15052, %v15054
  %v15056 = vrot.slane %v15035, %v15055
  %v15058 = vunpack.c.l.s4 1966171168
  %v15059 = vunpack.c.0.s8 %v15058
  %v15060 = vlaneseq
  %v15061 = vshrl.u32 %v15060, 7
  %v15062 = vsub.s32 %v15059, %v15061
  %v15063 = vrot.slane %v14352, %v15062
  %v15064 = vcombine.low %v15042, %v15049
  %v15065 = vcombine.low %v15056, %v15063
  %v15067 = vunpack.c.l.s4 1966171168
  %v15068 = vunpack.c.0.s8 %v15067
  %v15069 = vlaneseq
  %v15070 = vshrl.u32 %v15069, 7
  %v15071 = vsub.s32 %v15068, %v15070
  %v15072 = vrot.slane %v15064, %v15071
  %v15074 = vunpack.c.l.s4 1966171168
  %v15075 = vunpack.c.0.s8 %v15074
  %v15076 = vlaneseq
  %v15077 = vshrl.u32 %v15076, 7
  %v15078 = vsub.s32 %v15075, %v15077
  %v15079 = vrot.slane %v15065, %v15078
  %v15080 = vcombine.low %v15072, %v15079
  %v15081 = vcombine.low %v14354, %v14378
  %v15082 = vcombine.low %v14392, %v14400
  %v15083 = vcombine.low %v14402, %v14385
  %v15085 = vunpack.c.l.s4 1966171168
  %v15086 = vunpack.c.0.s8 %v15085
  %v15087 = vlaneseq
  %v15088 = vshrl.u32 %v15087, 7
  %v15089 = vsub.s32 %v15086, %v15088
  %v15090 = vrot.slane %v15081, %v15089
  %v15092 = vunpack.c.l.s4 1966171168
  %v15093 = vunpack.c.0.s8 %v15092
  %v15094 = vlaneseq
  %v15095 = vshrl.u32 %v15094, 7
  %v15096 = vsub.s32 %v15093, %v15095
  %v15097 = vrot.slane %v15082, %v15096
  %v15099 = vunpack.c.l.s4 1966171168
  %v15100 = vunpack.c.0.s8 %v15099
  %v15101 = vlaneseq
  %v15102 = vshrl.u32 %v15101, 7
  %v15103 = vsub.s32 %v15100, %v15102
  %v15104 = vrot.slane %v15083, %v15103
  %v15106 = vunpack.c.l.s4 1966171168
  %v15107 = vunpack.c.0.s8 %v15106
  %v15108 = vlaneseq
  %v15109 = vshrl.u32 %v15108, 7
  %v15110 = vsub.s32 %v15107, %v15109
  %v15111 = vrot.slane %v14399, %v15110
  %v15112 = vcombine.low %v15090, %v15097
  %v15113 = vcombine.low %v15104, %v15111
  %v15115 = vunpack.c.l.s4 1966171168
  %v15116 = vunpack.c.0.s8 %v15115
  %v15117 = vlaneseq
  %v15118 = vshrl.u32 %v15117, 7
  %v15119 = vsub.s32 %v15116, %v15118
  %v15120 = vrot.slane %v15112, %v15119
  %v15122 = vunpack.c.l.s4 1966171168
  %v15123 = vunpack.c.0.s8 %v15122
  %v15124 = vlaneseq
  %v15125 = vshrl.u32 %v15124, 7
  %v15126 = vsub.s32 %v15123, %v15125
  %v15127 = vrot.slane %v15113, %v15126
  %v15128 = vcombine.low %v15120, %v15127
  %v15129 = vcombine.low %v14401, %v14403
  %v15130 = vcombine.low %v14427, %v14441
  %v15131 = vcombine.low %v14449, %v14451
  %v15133 = vunpack.c.l.s4 1966171168
  %v15134 = vunpack.c.0.s8 %v15133
  %v15135 = vlaneseq
  %v15136 = vshrl.u32 %v15135, 7
  %v15137 = vsub.s32 %v15134, %v15136
  %v15138 = vrot.slane %v15129, %v15137
  %v15140 = vunpack.c.l.s4 1966171168
  %v15141 = vunpack.c.0.s8 %v15140
  %v15142 = vlaneseq
  %v15143 = vshrl.u32 %v15142, 7
  %v15144 = vsub.s32 %v15141, %v15143
  %v15145 = vrot.slane %v15130, %v15144
  %v15147 = vunpack.c.l.s4 1966171168
  %v15148 = vunpack.c.0.s8 %v15147
  %v15149 = vlaneseq
  %v15150 = vshrl.u32 %v15149, 7
  %v15151 = vsub.s32 %v15148, %v15150
  %v15152 = vrot.slane %v15131, %v15151
  %v15154 = vunpack.c.l.s4 1966171168
  %v15155 = vunpack.c.0.s8 %v15154
  %v15156 = vlaneseq
  %v15157 = vshrl.u32 %v15156, 7
  %v15158 = vsub.s32 %v15155, %v15157
  %v15159 = vrot.slane %v14434, %v15158
  %v15160 = vcombine.low %v15138, %v15145
  %v15161 = vcombine.low %v15152, %v15159
  %v15163 = vunpack.c.l.s4 1966171168
  %v15164 = vunpack.c.0.s8 %v15163
  %v15165 = vlaneseq
  %v15166 = vshrl.u32 %v15165, 7
  %v15167 = vsub.s32 %v15164, %v15166
  %v15168 = vrot.slane %v15160, %v15167
  %v15170 = vunpack.c.l.s4 1966171168
  %v15171 = vunpack.c.0.s8 %v15170
  %v15172 = vlaneseq
  %v15173 = vshrl.u32 %v15172, 7
  %v15174 = vsub.s32 %v15171, %v15173
  %v15175 = vrot.slane %v15161, %v15174
  %v15176 = vcombine.low %v15168, %v15175
  %v15177 = vcombine.low %v14448, %v14450
  %v15178 = vcombine.low %v14452, %v14476
  %v15179 = vcombine.low %v14490, %v14498
  %v15181 = vunpack.c.l.s4 1966171168
  %v15182 = vunpack.c.0.s8 %v15181
  %v15183 = vlaneseq
  %v15184 = vshrl.u32 %v15183, 7
  %v15185 = vsub.s32 %v15182, %v15184
  %v15186 = vrot.slane %v15177, %v15185
  %v15188 = vunpack.c.l.s4 1966171168
  %v15189 = vunpack.c.0.s8 %v15188
  %v15190 = vlaneseq
  %v15191 = vshrl.u32 %v15190, 7
  %v15192 = vsub.s32 %v15189, %v15191
  %v15193 = vrot.slane %v15178, %v15192
  %v15195 = vunpack.c.l.s4 1966171168
  %v15196 = vunpack.c.0.s8 %v15195
  %v15197 = vlaneseq
  %v15198 = vshrl.u32 %v15197, 7
  %v15199 = vsub.s32 %v15196, %v15198
  %v15200 = vrot.slane %v15179, %v15199
  %v15202 = vunpack.c.l.s4 1966171168
  %v15203 = vunpack.c.0.s8 %v15202
  %v15204 = vlaneseq
  %v15205 = vshrl.u32 %v15204, 7
  %v15206 = vsub.s32 %v15203, %v15205
  %v15207 = vrot.slane %v14500, %v15206
  %v15208 = vcombine.low %v15186, %v15193
  %v15209 = vcombine.low %v15200, %v15207
  %v15211 = vunpack.c.l.s4 1966171168
  %v15212 = vunpack.c.0.s8 %v15211
  %v15213 = vlaneseq
  %v15214 = vshrl.u32 %v15213, 7
  %v15215 = vsub.s32 %v15212, %v15214
  %v15216 = vrot.slane %v15208, %v15215
  %v15218 = vunpack.c.l.s4 1966171168
  %v15219 = vunpack.c.0.s8 %v15218
  %v15220 = vlaneseq
  %v15221 = vshrl.u32 %v15220, 7
  %v15222 = vsub.s32 %v15219, %v15221
  %v15223 = vrot.slane %v15209, %v15222
  %v15224 = vcombine.low %v15216, %v15223
  %v15225 = vcombine.low %v14483, %v14497
  %v15226 = vcombine.low %v14499, %v14501
  %v15227 = vcombine.low %v14525, %v14539
  %v15229 = vunpack.c.l.s4 1966171168
  %v15230 = vunpack.c.0.s8 %v15229
  %v15231 = vlaneseq
  %v15232 = vshrl.u32 %v15231, 7
  %v15233 = vsub.s32 %v15230, %v15232
  %v15234 = vrot.slane %v15225, %v15233
  %v15236 = vunpack.c.l.s4 1966171168
  %v15237 = vunpack.c.0.s8 %v15236
  %v15238 = vlaneseq
  %v15239 = vshrl.u32 %v15238, 7
  %v15240 = vsub.s32 %v15237, %v15239
  %v15241 = vrot.slane %v15226, %v15240
  %v15243 = vunpack.c.l.s4 1966171168
  %v15244 = vunpack.c.0.s8 %v15243
  %v15245 = vlaneseq
  %v15246 = vshrl.u32 %v15245, 7
  %v15247 = vsub.s32 %v15244, %v15246
  %v15248 = vrot.slane %v15227, %v15247
  %v15250 = vunpack.c.l.s4 1966171168
  %v15251 = vunpack.c.0.s8 %v15250
  %v15252 = vlaneseq
  %v15253 = vshrl.u32 %v15252, 7
  %v15254 = vsub.s32 %v15251, %v15253
  %v15255 = vrot.slane %v14547, %v15254
  %v15256 = vcombine.low %v15234, %v15241
  %v15257 = vcombine.low %v15248, %v15255
  %v15259 = vunpack.c.l.s4 1966171168
  %v15260 = vunpack.c.0.s8 %v15259
  %v15261 = vlaneseq
  %v15262 = vshrl.u32 %v15261, 7
  %v15263 = vsub.s32 %v15260, %v15262
  %v15264 = vrot.slane %v15256, %v15263
  %v15266 = vunpack.c.l.s4 1966171168
  %v15267 = vunpack.c.0.s8 %v15266
  %v15268 = vlaneseq
  %v15269 = vshrl.u32 %v15268, 7
  %v15270 = vsub.s32 %v15267, %v15269
  %v15271 = vrot.slane %v15257, %v15270
  %v15272 = vcombine.low %v15264, %v15271
  %v15273 = vcombine.low %v14549, %v14532
  %v15274 = vcombine.low %v14546, %v14548
  %v15275 = vcombine.low %v14550, %v14574
  %v15277 = vunpack.c.l.s4 1966171168
  %v15278 = vunpack.c.0.s8 %v15277
  %v15279 = vlaneseq
  %v15280 = vshrl.u32 %v15279, 7
  %v15281 = vsub.s32 %v15278, %v15280
  %v15282 = vrot.slane %v15273, %v15281
  %v15284 = vunpack.c.l.s4 1966171168
  %v15285 = vunpack.c.0.s8 %v15284
  %v15286 = vlaneseq
  %v15287 = vshrl.u32 %v15286, 7
  %v15288 = vsub.s32 %v15285, %v15287
  %v15289 = vrot.slane %v15274, %v15288
  %v15291 = vunpack.c.l.s4 1966171168
  %v15292 = vunpack.c.0.s8 %v15291
  %v15293 = vlaneseq
  %v15294 = vshrl.u32 %v15293, 7
  %v15295 = vsub.s32 %v15292, %v15294
  %v15296 = vrot.slane %v15275, %v15295
  %v15298 = vunpack.c.l.s4 1966171168
  %v15299 = vunpack.c.0.s8 %v15298
  %v15300 = vlaneseq
  %v15301 = vshrl.u32 %v15300, 7
  %v15302 = vsub.s32 %v15299, %v15301
  %v15303 = vrot.slane %v14588, %v15302
  %v15304 = vcombine.low %v15282, %v15289
  %v15305 = vcombine.low %v15296, %v15303
  %v15307 = vunpack.c.l.s4 1966171168
  %v15308 = vunpack.c.0.s8 %v15307
  %v15309 = vlaneseq
  %v15310 = vshrl.u32 %v15309, 7
  %v15311 = vsub.s32 %v15308, %v15310
  %v15312 = vrot.slane %v15304, %v15311
  %v15314 = vunpack.c.l.s4 1966171168
  %v15315 = vunpack.c.0.s8 %v15314
  %v15316 = vlaneseq
  %v15317 = vshrl.u32 %v15316, 7
  %v15318 = vsub.s32 %v15315, %v15317
  %v15319 = vrot.slane %v15305, %v15318
  %v15320 = vcombine.low %v15312, %v15319
  %v15321 = vcombine.low %v14596, %v14598
  %v15322 = vcombine.low %v14581, %v14595
  %v15323 = vcombine.low %v14597, %v14599
  %v15325 = vunpack.c.l.s4 1966171168
  %v15326 = vunpack.c.0.s8 %v15325
  %v15327 = vlaneseq
  %v15328 = vshrl.u32 %v15327, 7
  %v15329 = vsub.s32 %v15326, %v15328
  %v15330 = vrot.slane %v15321, %v15329
  %v15332 = vunpack.c.l.s4 1966171168
  %v15333 = vunpack.c.0.s8 %v15332
  %v15334 = vlaneseq
  %v15335 = vshrl.u32 %v15334, 7
  %v15336 = vsub.s32 %v15333, %v15335
  %v15337 = vrot.slane %v15322, %v15336
  %v15339 = vunpack.c.l.s4 1966171168
  %v15340 = vunpack.c.0.s8 %v15339
  %v15341 = vlaneseq
  %v15342 = vshrl.u32 %v15341, 7
  %v15343 = vsub.s32 %v15340, %v15342
  %v15344 = vrot.slane %v15323, %v15343
  %v15346 = vunpack.c.l.s4 1966171168
  %v15347 = vunpack.c.0.s8 %v15346
  %v15348 = vlaneseq
  %v15349 = vshrl.u32 %v15348, 7
  %v15350 = vsub.s32 %v15347, %v15349
  %v15351 = vrot.slane %v14623, %v15350
  %v15352 = vcombine.low %v15330, %v15337
  %v15353 = vcombine.low %v15344, %v15351
  %v15355 = vunpack.c.l.s4 1966171168
  %v15356 = vunpack.c.0.s8 %v15355
  %v15357 = vlaneseq
  %v15358 = vshrl.u32 %v15357, 7
  %v15359 = vsub.s32 %v15356, %v15358
  %v15360 = vrot.slane %v15352, %v15359
  %v15362 = vunpack.c.l.s4 1966171168
  %v15363 = vunpack.c.0.s8 %v15362
  %v15364 = vlaneseq
  %v15365 = vshrl.u32 %v15364, 7
  %v15366 = vsub.s32 %v15363, %v15365
  %v15367 = vrot.slane %v15353, %v15366
  %v15368 = vcombine.low %v15360, %v15367
  %v15369 = vcombine.low %v14637, %v14645
  %v15370 = vcombine.low %v14647, %v14630
  %v15371 = vcombine.low %v14644, %v14646
  %v15373 = vunpack.c.l.s4 1966171168
  %v15374 = vunpack.c.0.s8 %v15373
  %v15375 = vlaneseq
  %v15376 = vshrl.u32 %v15375, 7
  %v15377 = vsub.s32 %v15374, %v15376
  %v15378 = vrot.slane %v15369, %v15377
  %v15380 = vunpack.c.l.s4 1966171168
  %v15381 = vunpack.c.0.s8 %v15380
  %v15382 = vlaneseq
  %v15383 = vshrl.u32 %v15382, 7
  %v15384 = vsub.s32 %v15381, %v15383
  %v15385 = vrot.slane %v15370, %v15384
  %v15387 = vunpack.c.l.s4 1966171168
  %v15388 = vunpack.c.0.s8 %v15387
  %v15389 = vlaneseq
  %v15390 = vshrl.u32 %v15389, 7
  %v15391 = vsub.s32 %v15388, %v15390
  %v15392 = vrot.slane %v15371, %v15391
  %v15394 = vunpack.c.l.s4 1966171168
  %v15395 = vunpack.c.0.s8 %v15394
  %v15396 = vlaneseq
  %v15397 = vshrl.u32 %v15396, 7
  %v15398 = vsub.s32 %v15395, %v15397
  %v15399 = vrot.slane %v14648, %v15398
  %v15400 = vcombine.low %v15378, %v15385
  %v15401 = vcombine.low %v15392, %v15399
  %v15403 = vunpack.c.l.s4 1966171168
  %v15404 = vunpack.c.0.s8 %v15403
  %v15405 = vlaneseq
  %v15406 = vshrl.u32 %v15405, 7
  %v15407 = vsub.s32 %v15404, %v15406
  %v15408 = vrot.slane %v15400, %v15407
  %v15410 = vunpack.c.l.s4 1966171168
  %v15411 = vunpack.c.0.s8 %v15410
  %v15412 = vlaneseq
  %v15413 = vshrl.u32 %v15412, 7
  %v15414 = vsub.s32 %v15411, %v15413
  %v15415 = vrot.slane %v15401, %v15414
  %v15416 = vcombine.low %v15408, %v15415
  %v15433 = vadd.f32 %v13291, %v14696
  %v15434 = vadd.f32 %v13292, %v14744
  %v15435 = vadd.f32 %v13293, %v14792
  %v15436 = vadd.f32 %v13294, %v14840
  %v15437 = vadd.f32 %v13295, %v14888
  %v15438 = vadd.f32 %v13296, %v14936
  %v15439 = vadd.f32 %v13297, %v14984
  %v15440 = vadd.f32 %v13298, %v15032
  %v15441 = vadd.f32 %v13299, %v15080
  %v15442 = vadd.f32 %v13300, %v15128
  %v15443 = vadd.f32 %v13301, %v15176
  %v15444 = vadd.f32 %v13302, %v15224
  %v15445 = vadd.f32 %v13303, %v15272
  %v15446 = vadd.f32 %v13304, %v15320
  %v15447 = vadd.f32 %v13305, %v15368
  %v15448 = vadd.f32 %v13306, %v15416
  %vm15449 = vcmask 63488
  %15450 = vst.msk [vmem:[%s3] sm:$0x7f] %vm15449, %v15433
  %15451 = vst.msk [vmem:[%s3 + $0x8] sm:$0x7f] %vm15449, %v15434
  %15452 = vst.msk [vmem:[%s3 + $0x10] sm:$0x7f] %vm15449, %v15435
  %15453 = vst.msk [vmem:[%s3 + $0x18] sm:$0x7f] %vm15449, %v15436
  %15454 = vst.msk [vmem:[%s3 + $0x20] sm:$0x7f] %vm15449, %v15437
  %15455 = vst.msk [vmem:[%s3 + $0x28] sm:$0x7f] %vm15449, %v15438
  %15456 = vst.msk [vmem:[%s3 + $0x30] sm:$0x7f] %vm15449, %v15439
  %15457 = vst.msk [vmem:[%s3 + $0x38] sm:$0x7f] %vm15449, %v15440
  %15458 = vst.msk [vmem:[%s3 + $0x40] sm:$0x7f] %vm15449, %v15441
  %15459 = vst.msk [vmem:[%s3 + $0x48] sm:$0x7f] %vm15449, %v15442
  %15460 = vst.msk [vmem:[%s3 + $0x50] sm:$0x7f] %vm15449, %v15443
  %15461 = vst.msk [vmem:[%s3 + $0x58] sm:$0x7f] %vm15449, %v15444
  %15462 = vst.msk [vmem:[%s3 + $0x60] sm:$0x7f] %vm15449, %v15445
  %15463 = vst.msk [vmem:[%s3 + $0x68] sm:$0x7f] %vm15449, %v15446
  %15464 = vst.msk [vmem:[%s3 + $0x70] sm:$0x7f] %vm15449, %v15447
  %15465 = vst.msk [vmem:[%s3 + $0x78] sm:$0x7f] %vm15449, %v15448
  // Predicated region
  $region14: #{tpu_custom_call.1} parent=0 // pred_check
    _
  $region15: #{tpu_custom_call.1} parent=0 // pred_check_branch
    %15467 = sbr.rel (0) target = $region17
  $region16: #{tpu_custom_call.1} parent=0 // pred_region
    _
  $region17: #{tpu_custom_call.1} parent=0 // pred_fallthru
    _
  // Predicated region
  $region18: #{tpu_custom_call.1} parent=0 // pred_check
    _
  $region19: #{tpu_custom_call.1} parent=0 // pred_check_branch
    %15469 = sbr.rel (0) target = $region21
  $region20: #{tpu_custom_call.1} parent=0 // pred_region
    _
  $region21: #{tpu_custom_call.1} parent=0 // pred_fallthru
    _

</llo_original>
